<compile_context>
chip_gen: v7x
topology: tpu7x:2x2x1
jax: 0.10.0
libtpu: 0.0.40
codegen_flags: <defaults>
</compile_context>

<pallas_src>
import functools

import jax
import jax.numpy as jnp
from jax.experimental import pallas as pl
from jax.experimental.pallas import tpu as pltpu

NEG_SLOPE = 0.1     # nn.LeakyReLU(negative_slope=0.1) in the BasicBlock
BN_EPS = 1e-5       # nn.BatchNorm2d default eps


def _leaky(y):
    return jnp.where(y > 0, y, NEG_SLOPE * y)


def _fold_bn(bn):
    """Eval-mode BatchNorm folded to per-channel scale / bias."""
    gamma, beta, mean, var = bn
    scale = gamma / jnp.sqrt(var + BN_EPS)
    return scale, beta - mean * scale


# ------------------------- fused BasicBlock kernel ---------------------------

def _make_block_kernel(nb, h, w, cin, cout, stride, equal, abr):
    """Fused pre-activation BasicBlock (eval mode); one batch tile per grid step.

    All stages run on VMEM-resident values; each 3x3 conv is a band-free
    row GEMM: 9 accumulating dots with M = nb*Ho*Wo and K = Cin, bf16 MXU
    inputs with f32 accumulation."""
    ho = (h - 1) // stride + 1
    wo = (w - 1) // stride + 1
    act1 = equal or abr                      # is BN1+LReLU output actually consumed?
    n_in = (1 if stride == 1 else 4) + 6 + (0 if equal else 1)
    m_out = nb * ho * wo

    def conv3x3_s1(x4, w_ref, pad_ref):
        """3x3 conv, stride 1, pad 1 of an in-kernel value.
        x4: (nb, hh, ww, c) f32; w_ref: (9, c, co) bf16; pad_ref: padded scratch."""
        _, hh, ww, c = x4.shape
        m = nb * hh * ww
        pad_ref[...] = jnp.zeros(pad_ref.shape, pad_ref.dtype)   # zero border
        pad_ref[:, 1:hh + 1, 1:ww + 1, :] = x4                   # interior
        acc = None
        for kh in range(3):
            for kw in range(3):
                a = pad_ref[:, kh:kh + hh, kw:kw + ww, :]
                a = a.reshape(m, c).astype(jnp.bfloat16)
                d = jnp.dot(a, w_ref[kh * 3 + kw],
                            preferred_element_type=jnp.float32)
                acc = d if acc is None else acc + d
        return acc                                               # (m, co) f32

    def dot9(taps, w_ref):
        """Band-free 3x3 contraction from 9 prebuilt taps (nb, ho, wo, c)."""
        c = taps[0].shape[-1]
        acc = None
        for k in range(9):
            a = taps[k].reshape(m_out, c).astype(jnp.bfloat16)
            d = jnp.dot(a, w_ref[k], preferred_element_type=jnp.float32)
            acc = d if acc is None else acc + d
        return acc                                               # (m_out, co) f32

    def kernel(*refs):
        ins, o_ref, scratch = refs[:n_in], refs[n_in], refs[n_in + 1:]
        it = iter(ins)
        if stride == 1:
            x = next(it)[...]                       # (nb, h, w, cin) f32
        else:
            ee = next(it)[...]                      # (nb, ho,   wo,   cin)
            eo = next(it)[...]                      # (nb, ho,   wo+1, cin)
            oe = next(it)[...]                      # (nb, ho+1, wo,   cin)
            oo = next(it)[...]                      # (nb, ho+1, wo+1, cin)
        s1 = next(it)[...]                          # (1, 1, 1, cin) f32
        b1 = next(it)[...]
        w1_ref = next(it)                           # (9, cin, cout) bf16
        s2 = next(it)[...]                          # (1, cout) f32
        b2 = next(it)[...]
        w2_ref = next(it)                           # (9, cout, cout) bf16
        wsc_ref = None if equal else next(it)       # (cin, cout) bf16

        # ---- BN1(eval) + LeakyReLU and the conv1 taps ------------------
        if stride == 1:
            a1 = _leaky(x * s1 + b1) if act1 else x
            h1 = conv3x3_s1(a1, w1_ref, scratch[0])            # (m_out, cout)
            sc_in = None if equal else (a1 if abr else x)
            pad2_ref = scratch[1]
        else:
            def act_slab(v, zero_row, zero_col):
                if not act1:
                    return v                        # raw slabs: borders already 0
                y = _leaky(v * s1 + b1)
                if zero_row:                        # re-zero the padded border row
                    r = jax.lax.broadcasted_iota(jnp.int32, v.shape, 1)
                    y = jnp.where(r == 0, 0.0, y)
                if zero_col:
                    c_ = jax.lax.broadcasted_iota(jnp.int32, v.shape, 2)
                    y = jnp.where(c_ == 0, 0.0, y)
                return y

            v_ee = act_slab(ee, False, False)
            v_eo = act_slab(eo, False, True)
            v_oe = act_slab(oe, True, False)
            v_oo = act_slab(oo, True, True)
            taps = [                                # index = kh*3 + kw
                v_oo[:, 0:ho, 0:wo, :], v_oe[:, 0:ho, :, :], v_oo[:, 0:ho, 1:wo + 1, :],
                v_eo[:, :, 0:wo, :],    v_ee,                v_eo[:, :, 1:wo + 1, :],
                v_oo[:, 1:ho + 1, 0:wo, :], v_oe[:, 1:ho + 1, :, :],
                v_oo[:, 1:ho + 1, 1:wo + 1, :],
            ]
            h1 = dot9(taps, w1_ref)                            # (m_out, cout)
            sc_in = v_ee if abr else ee                        # (nb, ho, wo, cin)
            pad2_ref = scratch[0]

        # ---- BN2(eval) + LeakyReLU epilogue on the conv1 GEMM result -----
        a2 = _leaky(h1 * s2 + b2)
        # dropRate == 0.0 -> F.dropout is the identity.
        # TODO(synk): dropout with dropRate > 0 (training mode) not implemented.

        # ---- conv2 (3x3, stride 1, pad 1) --------------------------------
        h2 = conv3x3_s1(a2.reshape(nb, ho, wo, cout), w2_ref, pad2_ref)

        # ---- shortcut (fused) + residual add ------------------------------
        if equal:
            short = x.reshape(m_out, cout)                      # identity
        else:
            short = jnp.dot(sc_in.reshape(m_out, cin).astype(jnp.bfloat16),
                            wsc_ref[...], preferred_element_type=jnp.float32)
        o_ref[...] = (short + h2).reshape(nb, ho, wo, cout)

    if stride == 1:
        scratch_shapes = [pltpu.VMEM((nb, h + 2, w + 2, cin), jnp.float32),
                          pltpu.VMEM((nb, ho + 2, wo + 2, cout), jnp.float32)]
    else:
        scratch_shapes = [pltpu.VMEM((nb, ho + 2, wo + 2, cout), jnp.float32)]
    return kernel, scratch_shapes


def basic_block_forward(p, x):
    """One fused pre-activation BasicBlock (eval mode).
    x: (N, H, W, Cin) f32 NHWC -> (N, Ho, Wo, Cout) f32."""
    n, h, w, cin = x.shape
    cout = p["conv1"].shape[0]
    stride, equal, abr = p["stride"], p["equal"], p["abr"]
    assert stride in (1, 2)
    assert equal == (cin == cout)
    assert (not equal) or stride == 1, "identity shortcut requires stride 1"
    assert h % stride == 0 and w % stride == 0
    ho = (h - 1) // stride + 1
    wo = (w - 1) // stride + 1

    s1, b1 = _fold_bn(p["bn1"])
    s1 = s1.reshape(1, 1, 1, cin).astype(jnp.float32)
    b1 = b1.reshape(1, 1, 1, cin).astype(jnp.float32)
    s2, b2 = _fold_bn(p["bn2"])
    s2 = s2.reshape(1, cout).astype(jnp.float32)
    b2 = b2.reshape(1, cout).astype(jnp.float32)
    # (Cout,Cin,3,3) -> (9, Cin, Cout) bf16, tap-major (kh, kw)
    w1 = jnp.transpose(p["conv1"], (2, 3, 1, 0)).reshape(9, cin, cout).astype(jnp.bfloat16)
    w2 = jnp.transpose(p["conv2"], (2, 3, 1, 0)).reshape(9, cout, cout).astype(jnp.bfloat16)

    # batch tile: GEMM M = bt*Ho*Wo targets ~128 rows, keeping >1 grid step
    # (v7x megacore) whenever the batch allows it.
    want = max(1, -(-128 // (ho * wo)))
    bt = 1
    for cand in range(min(n, want), 0, -1):
        if n % cand == 0:
            bt = cand
            break
    grid = (n // bt,)

    def _bspec(shape):              # batch-blocked activation input
        return pl.BlockSpec((bt,) + tuple(shape[1:]),
                            lambda i: (i,) + (0,) * (len(shape) - 1))

    def _pspec(shape):              # grid-invariant parameter
        return pl.BlockSpec(tuple(shape), lambda i: (0,) * len(shape))

    operands, in_specs = [], []
    if stride == 1:
        operands.append(x)
        in_specs.append(_bspec(x.shape))
    else:
        # 2x2 parity pre-split of the raw input (wrapper-side, tiny XLA ops) so
        # every stride-2 conv tap is a static window of a slab.  eo/oe/oo carry
        # a leading zero col/row for the kw=0 / kh=0 taps.
        ee = x[:, 0::2, 0::2, :]
        eo = jnp.pad(x[:, 0::2, 1::2, :], ((0, 0), (0, 0), (1, 0), (0, 0)))
        oe = jnp.pad(x[:, 1::2, 0::2, :], ((0, 0), (1, 0), (0, 0), (0, 0)))
        oo = jnp.pad(x[:, 1::2, 1::2, :], ((0, 0), (1, 0), (1, 0), (0, 0)))
        for slab in (ee, eo, oe, oo):
            operands.append(slab)
            in_specs.append(_bspec(slab.shape))
    operands += [s1, b1, w1, s2, b2, w2]
    in_specs += [_pspec(s1.shape), _pspec(b1.shape), _pspec(w1.shape),
                 _pspec(s2.shape), _pspec(b2.shape), _pspec(w2.shape)]
    if not equal:
        wsc = p["conv_sc"].reshape(cout, cin).T.astype(jnp.bfloat16)
        operands.append(wsc)
        in_specs.append(_pspec(wsc.shape))

    kernel, scratch_shapes = _make_block_kernel(bt, h, w, cin, cout, stride, equal, abr)
    return pl.pallas_call(
        kernel,
        out_shape=jax.ShapeDtypeStruct((n, ho, wo, cout), jnp.float32),
        grid=grid,
        in_specs=in_specs,
        out_specs=pl.BlockSpec((bt, ho, wo, cout), lambda i: (i, 0, 0, 0)),
        scratch_shapes=scratch_shapes,
        compiler_params=pltpu.CompilerParams(
            dimension_semantics=("parallel",)),
    )(*operands)


# ------------------------------ module semantics ------------------------------

def init_basic_block(key, in_planes, out_planes, stride, activate_before_residual):
    ks = jax.random.split(key, 5)

    def conv_w(k, cout, cin, ksz):
        fan = ksz * ksz * cout                      # WRN init: N(0, sqrt(2/n))
        return jax.random.normal(k, (cout, cin, ksz, ksz), jnp.float32) * jnp.sqrt(2.0 / fan)

    def bn_p(k, c):
        k1, k2, k3, k4 = jax.random.split(k, 4)
        gamma = 1.0 + 0.1 * jax.random.normal(k1, (c,), jnp.float32)
        beta = 0.1 * jax.random.normal(k2, (c,), jnp.float32)
        mean = 0.1 * jax.random.normal(k3, (c,), jnp.float32)
        var = 1.0 + 0.1 * jax.random.uniform(k4, (c,), jnp.float32)
        return gamma, beta, mean, var

    p = {
        "bn1": bn_p(ks[0], in_planes),
        "conv1": conv_w(ks[1], out_planes, in_planes, 3),
        "bn2": bn_p(ks[2], out_planes),
        "conv2": conv_w(ks[3], out_planes, out_planes, 3),
        "equal": in_planes == out_planes,
        "stride": stride,
        "abr": activate_before_residual,
    }
    if not p["equal"]:
        p["conv_sc"] = conv_w(ks[4], out_planes, in_planes, 1)
    return p


def init_network_block(key, nb_layers, in_planes, out_planes, stride,
                       dropRate=0.0, activate_before_residual=False):
    keys = jax.random.split(key, int(nb_layers))
    blocks = []
    for i in range(int(nb_layers)):
        blocks.append(init_basic_block(
            keys[i],
            in_planes if i == 0 else out_planes,
            out_planes,
            stride if i == 0 else 1,
            activate_before_residual))
    return blocks


def network_block_forward(blocks, x_nchw):
    """NetworkBlock forward (inference).  NCHW in/out like PyTorch; NHWC inside."""
    x = jnp.transpose(x_nchw, (0, 2, 3, 1)).astype(jnp.float32)
    for p in blocks:
        x = basic_block_forward(p, x)
    return jnp.transpose(x, (0, 3, 1, 2))


# ------------------------------ pure-JAX reference ----------------------------

def _ref_conv(x, w, stride, padding):
    # bf16-matched reference: the Pallas kernels feed bf16 to the MXU with f32
    # accumulation, so the reference rounds its inputs the same way.
    xb = x.astype(jnp.bfloat16).astype(jnp.float32)
    wb = w.astype(jnp.bfloat16).astype(jnp.float32)
    return jax.lax.conv_general_dilated(
        xb, jnp.transpose(wb, (2, 3, 1, 0)),
        window_strides=(stride, stride),
        padding=[(padding, padding), (padding, padding)],
        dimension_numbers=("NHWC", "HWIO", "NHWC"),
        precision=jax.lax.Precision.HIGHEST)


def _ref_bn_act(x, bn):
    gamma, beta, mean, var = bn
    y = (x - mean) / jnp.sqrt(var + BN_EPS) * gamma + beta
    return jnp.where(y > 0, y, NEG_SLOPE * y)


def _ref_block(p, x):
    equal, abr, stride = p["equal"], p["abr"], p["stride"]
    if (not equal) and abr:
        x = _ref_bn_act(x, p["bn1"])
        conv1_in = x
    elif equal:
        conv1_in = _ref_bn_act(x, p["bn1"])
    else:
        conv1_in = x
    out = _ref_conv(conv1_in, p["conv1"], stride, 1)
    out = _ref_bn_act(out, p["bn2"])
    out = _ref_conv(out, p["conv2"], 1, 1)
    shortcut = x if equal else _ref_conv(x, p["conv_sc"], stride, 0)
    return shortcut + out


def ref_network_block(blocks, x_nchw):
    x = jnp.transpose(x_nchw, (0, 2, 3, 1)).astype(jnp.float32)
    for p in blocks:
        x = _ref_block(p, x)
    return jnp.transpose(x, (0, 3, 1, 2))


# ------------------------------------ main ------------------------------------

if __name__ == "__main__":
    key = jax.random.PRNGKey(0)
    kx, kp = jax.random.split(key)

    # NetworkBlock(nb_layers=2, in_planes=4, out_planes=8, block=BasicBlock,
    #              stride=2, dropRate=0.0, activate_before_residual=True)
    x = jax.random.normal(kx, (2, 4, 16, 16), jnp.float32)   # NCHW, like PyTorch
    blocks = init_network_block(kp, nb_layers=2, in_planes=4, out_planes=8,
                                stride=2, dropRate=0.0,
                                activate_before_residual=True)

    fwd = jax.jit(functools.partial(network_block_forward, blocks))
    out = jax.block_until_ready(fwd(x))
    assert out.shape == (2, 8, 8, 8), out.shape              # (N, out_planes, H/2, W/2)

    ref = jax.block_until_ready(ref_network_block(blocks, x))
    err = float(jnp.max(jnp.abs(out - ref)))
    assert jnp.allclose(out, ref, atol=3e-2, rtol=3e-2), f"max abs err = {err}"

    print("KERNEL_OK")
</pallas_src>

<mosaic_0001>
module attributes {stable_mosaic.version = 11 : i64} {
  func.func @kernel(%arg0: i32, %arg1: memref<2x8x8x4xf32, #tpu.memory_space<vmem>>, %arg2: memref<2x8x9x4xf32, #tpu.memory_space<vmem>>, %arg3: memref<2x9x8x4xf32, #tpu.memory_space<vmem>>, %arg4: memref<2x9x9x4xf32, #tpu.memory_space<vmem>>, %arg5: memref<1x1x1x4xf32, #tpu.memory_space<vmem>>, %arg6: memref<1x1x1x4xf32, #tpu.memory_space<vmem>>, %arg7: memref<9x4x8xbf16, #tpu.memory_space<vmem>>, %arg8: memref<1x8xf32, #tpu.memory_space<vmem>>, %arg9: memref<1x8xf32, #tpu.memory_space<vmem>>, %arg10: memref<9x8x8xbf16, #tpu.memory_space<vmem>>, %arg11: memref<4x8xbf16, #tpu.memory_space<vmem>>, %arg12: memref<2x8x8x8xf32, #tpu.memory_space<vmem>>, %arg13: memref<2x10x10x8xf32, #tpu.memory_space<vmem>>) attributes {dimension_semantics = [#tpu.dimension_semantics<parallel>], iteration_bounds = array<i64: 1>, scalar_prefetch = 0 : i64, scratch_operands = 1 : i64, tpu.core_type = #tpu.core_type<tc>, window_params = [{transform_indices = @transform_0, window_bounds = array<i64: 2, 8, 8, 4>}, {transform_indices = @transform_1, window_bounds = array<i64: 2, 8, 9, 4>}, {transform_indices = @transform_2, window_bounds = array<i64: 2, 9, 8, 4>}, {transform_indices = @transform_3, window_bounds = array<i64: 2, 9, 9, 4>}, {pipeline_mode = #tpu.pipeline_mode<synchronous>, transform_indices = @transform_4, window_bounds = array<i64: 1, 1, 1, 4>}, {pipeline_mode = #tpu.pipeline_mode<synchronous>, transform_indices = @transform_5, window_bounds = array<i64: 1, 1, 1, 4>}, {pipeline_mode = #tpu.pipeline_mode<synchronous>, transform_indices = @transform_6, window_bounds = array<i64: 9, 4, 8>}, {pipeline_mode = #tpu.pipeline_mode<synchronous>, transform_indices = @transform_7, window_bounds = array<i64: 1, 8>}, {pipeline_mode = #tpu.pipeline_mode<synchronous>, transform_indices = @transform_8, window_bounds = array<i64: 1, 8>}, {pipeline_mode = #tpu.pipeline_mode<synchronous>, transform_indices = @transform_9, window_bounds = array<i64: 9, 8, 8>}, {pipeline_mode = #tpu.pipeline_mode<synchronous>, transform_indices = @transform_10, window_bounds = array<i64: 4, 8>}, {transform_indices = @transform_11, window_bounds = array<i64: 2, 8, 8, 8>}]} {
    %c0 = arith.constant 0 : index
    %c0_0 = arith.constant 0 : index
    %c0_1 = arith.constant 0 : index
    %c0_2 = arith.constant 0 : index
    %0 = vector.load %arg1[%c0, %c0_0, %c0_1, %c0_2] : memref<2x8x8x4xf32, #tpu.memory_space<vmem>>, vector<2x8x8x4xf32>
    %c0_3 = arith.constant 0 : index
    %c0_4 = arith.constant 0 : index
    %c0_5 = arith.constant 0 : index
    %c0_6 = arith.constant 0 : index
    %1 = vector.load %arg2[%c0_3, %c0_4, %c0_5, %c0_6] : memref<2x8x9x4xf32, #tpu.memory_space<vmem>>, vector<2x8x9x4xf32>
    %c0_7 = arith.constant 0 : index
    %c0_8 = arith.constant 0 : index
    %c0_9 = arith.constant 0 : index
    %c0_10 = arith.constant 0 : index
    %2 = vector.load %arg3[%c0_7, %c0_8, %c0_9, %c0_10] : memref<2x9x8x4xf32, #tpu.memory_space<vmem>>, vector<2x9x8x4xf32>
    %c0_11 = arith.constant 0 : index
    %c0_12 = arith.constant 0 : index
    %c0_13 = arith.constant 0 : index
    %c0_14 = arith.constant 0 : index
    %3 = vector.load %arg4[%c0_11, %c0_12, %c0_13, %c0_14] : memref<2x9x9x4xf32, #tpu.memory_space<vmem>>, vector<2x9x9x4xf32>
    %c0_15 = arith.constant 0 : index
    %c0_16 = arith.constant 0 : index
    %c0_17 = arith.constant 0 : index
    %c0_18 = arith.constant 0 : index
    %4 = vector.load %arg5[%c0_15, %c0_16, %c0_17, %c0_18] : memref<1x1x1x4xf32, #tpu.memory_space<vmem>>, vector<1x1x1x4xf32>
    %c0_19 = arith.constant 0 : index
    %c0_20 = arith.constant 0 : index
    %c0_21 = arith.constant 0 : index
    %c0_22 = arith.constant 0 : index
    %5 = vector.load %arg6[%c0_19, %c0_20, %c0_21, %c0_22] : memref<1x1x1x4xf32, #tpu.memory_space<vmem>>, vector<1x1x1x4xf32>
    %c0_23 = arith.constant 0 : index
    %c0_24 = arith.constant 0 : index
    %6 = vector.load %arg8[%c0_23, %c0_24] : memref<1x8xf32, #tpu.memory_space<vmem>>, vector<1x8xf32>
    %c0_25 = arith.constant 0 : index
    %c0_26 = arith.constant 0 : index
    %7 = vector.load %arg9[%c0_25, %c0_26] : memref<1x8xf32, #tpu.memory_space<vmem>>, vector<1x8xf32>
    %8 = vector.broadcast %4 : vector<1x1x1x4xf32> to vector<2x8x8x4xf32>
    %9 = arith.mulf %0, %8 : vector<2x8x8x4xf32>
    %10 = vector.broadcast %5 : vector<1x1x1x4xf32> to vector<2x8x8x4xf32>
    %11 = arith.addf %9, %10 : vector<2x8x8x4xf32>
    %cst = arith.constant 0.000000e+00 : f32
    %12 = vector.broadcast %cst : f32 to vector<2x8x8x4xf32>
    %13 = arith.cmpf ogt, %11, %12 : vector<2x8x8x4xf32>
    %cst_27 = arith.constant 1.000000e-01 : f32
    %14 = vector.broadcast %cst_27 : f32 to vector<2x8x8x4xf32>
    %15 = arith.mulf %14, %11 : vector<2x8x8x4xf32>
    %16 = arith.select %13, %11, %15 : vector<2x8x8x4xi1>, vector<2x8x8x4xf32>
    %17 = vector.broadcast %4 : vector<1x1x1x4xf32> to vector<2x8x9x4xf32>
    %18 = arith.mulf %1, %17 : vector<2x8x9x4xf32>
    %19 = vector.broadcast %5 : vector<1x1x1x4xf32> to vector<2x8x9x4xf32>
    %20 = arith.addf %18, %19 : vector<2x8x9x4xf32>
    %cst_28 = arith.constant 0.000000e+00 : f32
    %21 = vector.broadcast %cst_28 : f32 to vector<2x8x9x4xf32>
    %22 = arith.cmpf ogt, %20, %21 : vector<2x8x9x4xf32>
    %cst_29 = arith.constant 1.000000e-01 : f32
    %23 = vector.broadcast %cst_29 : f32 to vector<2x8x9x4xf32>
    %24 = arith.mulf %23, %20 : vector<2x8x9x4xf32>
    %25 = arith.select %22, %20, %24 : vector<2x8x9x4xi1>, vector<2x8x9x4xf32>
    %26 = tpu.iota {dimensions = array<i32: 2>} : vector<2x8x9x4xi32>
    %c0_i32 = arith.constant 0 : i32
    %27 = vector.broadcast %c0_i32 : i32 to vector<2x8x9x4xi32>
    %28 = arith.cmpi eq, %26, %27 : vector<2x8x9x4xi32>
    %cst_30 = arith.constant 0.000000e+00 : f32
    %29 = vector.broadcast %cst_30 : f32 to vector<2x8x9x4xf32>
    %30 = arith.select %28, %29, %25 : vector<2x8x9x4xi1>, vector<2x8x9x4xf32>
    %31 = vector.broadcast %4 : vector<1x1x1x4xf32> to vector<2x9x8x4xf32>
    %32 = arith.mulf %2, %31 : vector<2x9x8x4xf32>
    %33 = vector.broadcast %5 : vector<1x1x1x4xf32> to vector<2x9x8x4xf32>
    %34 = arith.addf %32, %33 : vector<2x9x8x4xf32>
    %cst_31 = arith.constant 0.000000e+00 : f32
    %35 = vector.broadcast %cst_31 : f32 to vector<2x9x8x4xf32>
    %36 = arith.cmpf ogt, %34, %35 : vector<2x9x8x4xf32>
    %cst_32 = arith.constant 1.000000e-01 : f32
    %37 = vector.broadcast %cst_32 : f32 to vector<2x9x8x4xf32>
    %38 = arith.mulf %37, %34 : vector<2x9x8x4xf32>
    %39 = arith.select %36, %34, %38 : vector<2x9x8x4xi1>, vector<2x9x8x4xf32>
    %40 = tpu.iota {dimensions = array<i32: 1>} : vector<2x9x8x4xi32>
    %c0_i32_33 = arith.constant 0 : i32
    %41 = vector.broadcast %c0_i32_33 : i32 to vector<2x9x8x4xi32>
    %42 = arith.cmpi eq, %40, %41 : vector<2x9x8x4xi32>
    %cst_34 = arith.constant 0.000000e+00 : f32
    %43 = vector.broadcast %cst_34 : f32 to vector<2x9x8x4xf32>
    %44 = arith.select %42, %43, %39 : vector<2x9x8x4xi1>, vector<2x9x8x4xf32>
    %45 = vector.broadcast %4 : vector<1x1x1x4xf32> to vector<2x9x9x4xf32>
    %46 = arith.mulf %3, %45 : vector<2x9x9x4xf32>
    %47 = vector.broadcast %5 : vector<1x1x1x4xf32> to vector<2x9x9x4xf32>
    %48 = arith.addf %46, %47 : vector<2x9x9x4xf32>
    %cst_35 = arith.constant 0.000000e+00 : f32
    %49 = vector.broadcast %cst_35 : f32 to vector<2x9x9x4xf32>
    %50 = arith.cmpf ogt, %48, %49 : vector<2x9x9x4xf32>
    %cst_36 = arith.constant 1.000000e-01 : f32
    %51 = vector.broadcast %cst_36 : f32 to vector<2x9x9x4xf32>
    %52 = arith.mulf %51, %48 : vector<2x9x9x4xf32>
    %53 = arith.select %50, %48, %52 : vector<2x9x9x4xi1>, vector<2x9x9x4xf32>
    %54 = tpu.iota {dimensions = array<i32: 1>} : vector<2x9x9x4xi32>
    %c0_i32_37 = arith.constant 0 : i32
    %55 = vector.broadcast %c0_i32_37 : i32 to vector<2x9x9x4xi32>
    %56 = arith.cmpi eq, %54, %55 : vector<2x9x9x4xi32>
    %cst_38 = arith.constant 0.000000e+00 : f32
    %57 = vector.broadcast %cst_38 : f32 to vector<2x9x9x4xf32>
    %58 = arith.select %56, %57, %53 : vector<2x9x9x4xi1>, vector<2x9x9x4xf32>
    %59 = tpu.iota {dimensions = array<i32: 2>} : vector<2x9x9x4xi32>
    %c0_i32_39 = arith.constant 0 : i32
    %60 = vector.broadcast %c0_i32_39 : i32 to vector<2x9x9x4xi32>
    %61 = arith.cmpi eq, %59, %60 : vector<2x9x9x4xi32>
    %cst_40 = arith.constant 0.000000e+00 : f32
    %62 = vector.broadcast %cst_40 : f32 to vector<2x9x9x4xf32>
    %63 = arith.select %61, %62, %58 : vector<2x9x9x4xi1>, vector<2x9x9x4xf32>
    %64 = vector.extract_strided_slice %63 {offsets = [0, 0, 0, 0], sizes = [2, 8, 8, 4], strides = [1, 1, 1, 1]} : vector<2x9x9x4xf32> to vector<2x8x8x4xf32>
    %65 = vector.extract_strided_slice %44 {offsets = [0, 0, 0, 0], sizes = [2, 8, 8, 4], strides = [1, 1, 1, 1]} : vector<2x9x8x4xf32> to vector<2x8x8x4xf32>
    %66 = vector.extract_strided_slice %63 {offsets = [0, 0, 1, 0], sizes = [2, 8, 8, 4], strides = [1, 1, 1, 1]} : vector<2x9x9x4xf32> to vector<2x8x8x4xf32>
    %67 = vector.extract_strided_slice %30 {offsets = [0, 0, 0, 0], sizes = [2, 8, 8, 4], strides = [1, 1, 1, 1]} : vector<2x8x9x4xf32> to vector<2x8x8x4xf32>
    %68 = vector.extract_strided_slice %30 {offsets = [0, 0, 1, 0], sizes = [2, 8, 8, 4], strides = [1, 1, 1, 1]} : vector<2x8x9x4xf32> to vector<2x8x8x4xf32>
    %69 = vector.extract_strided_slice %63 {offsets = [0, 1, 0, 0], sizes = [2, 8, 8, 4], strides = [1, 1, 1, 1]} : vector<2x9x9x4xf32> to vector<2x8x8x4xf32>
    %70 = vector.extract_strided_slice %44 {offsets = [0, 1, 0, 0], sizes = [2, 8, 8, 4], strides = [1, 1, 1, 1]} : vector<2x9x8x4xf32> to vector<2x8x8x4xf32>
    %71 = vector.extract_strided_slice %63 {offsets = [0, 1, 1, 0], sizes = [2, 8, 8, 4], strides = [1, 1, 1, 1]} : vector<2x9x9x4xf32> to vector<2x8x8x4xf32>
    %72 = vector.shape_cast %64 : vector<2x8x8x4xf32> to vector<128x4xf32>
    %73 = arith.truncf %72 : vector<128x4xf32> to vector<128x4xbf16>
    %c0_41 = arith.constant 0 : index
    %c0_42 = arith.constant 0 : index
    %c0_43 = arith.constant 0 : index
    %74 = vector.load %arg7[%c0_41, %c0_42, %c0_43] : memref<9x4x8xbf16, #tpu.memory_space<vmem>>, vector<1x4x8xbf16>
    %75 = vector.shape_cast %74 : vector<1x4x8xbf16> to vector<4x8xbf16>
    %cst_44 = arith.constant dense<0.000000e+00> : vector<128x8xf32>
    %76 = tpu.matmul %73, %75, %cst_44 {dimension_numbers = #tpu.dot_dimension_numbers<[1], [0], [0], [1], [0, 0, 1, 1], [], []>} : vector<128x4xbf16>, vector<4x8xbf16>, vector<128x8xf32> -> vector<128x8xf32>
    %77 = vector.shape_cast %65 : vector<2x8x8x4xf32> to vector<128x4xf32>
    %78 = arith.truncf %77 : vector<128x4xf32> to vector<128x4xbf16>
    %c1 = arith.constant 1 : index
    %c0_45 = arith.constant 0 : index
    %c0_46 = arith.constant 0 : index
    %79 = vector.load %arg7[%c1, %c0_45, %c0_46] : memref<9x4x8xbf16, #tpu.memory_space<vmem>>, vector<1x4x8xbf16>
    %80 = vector.shape_cast %79 : vector<1x4x8xbf16> to vector<4x8xbf16>
    %cst_47 = arith.constant dense<0.000000e+00> : vector<128x8xf32>
    %81 = tpu.matmul %78, %80, %cst_47 {dimension_numbers = #tpu.dot_dimension_numbers<[1], [0], [0], [1], [0, 0, 1, 1], [], []>} : vector<128x4xbf16>, vector<4x8xbf16>, vector<128x8xf32> -> vector<128x8xf32>
    %82 = arith.addf %76, %81 : vector<128x8xf32>
    %83 = vector.shape_cast %66 : vector<2x8x8x4xf32> to vector<128x4xf32>
    %84 = arith.truncf %83 : vector<128x4xf32> to vector<128x4xbf16>
    %c2 = arith.constant 2 : index
    %c0_48 = arith.constant 0 : index
    %c0_49 = arith.constant 0 : index
    %85 = vector.load %arg7[%c2, %c0_48, %c0_49] : memref<9x4x8xbf16, #tpu.memory_space<vmem>>, vector<1x4x8xbf16>
    %86 = vector.shape_cast %85 : vector<1x4x8xbf16> to vector<4x8xbf16>
    %cst_50 = arith.constant dense<0.000000e+00> : vector<128x8xf32>
    %87 = tpu.matmul %84, %86, %cst_50 {dimension_numbers = #tpu.dot_dimension_numbers<[1], [0], [0], [1], [0, 0, 1, 1], [], []>} : vector<128x4xbf16>, vector<4x8xbf16>, vector<128x8xf32> -> vector<128x8xf32>
    %88 = arith.addf %82, %87 : vector<128x8xf32>
    %89 = vector.shape_cast %67 : vector<2x8x8x4xf32> to vector<128x4xf32>
    %90 = arith.truncf %89 : vector<128x4xf32> to vector<128x4xbf16>
    %c3 = arith.constant 3 : index
    %c0_51 = arith.constant 0 : index
    %c0_52 = arith.constant 0 : index
    %91 = vector.load %arg7[%c3, %c0_51, %c0_52] : memref<9x4x8xbf16, #tpu.memory_space<vmem>>, vector<1x4x8xbf16>
    %92 = vector.shape_cast %91 : vector<1x4x8xbf16> to vector<4x8xbf16>
    %cst_53 = arith.constant dense<0.000000e+00> : vector<128x8xf32>
    %93 = tpu.matmul %90, %92, %cst_53 {dimension_numbers = #tpu.dot_dimension_numbers<[1], [0], [0], [1], [0, 0, 1, 1], [], []>} : vector<128x4xbf16>, vector<4x8xbf16>, vector<128x8xf32> -> vector<128x8xf32>
    %94 = arith.addf %88, %93 : vector<128x8xf32>
    %95 = vector.shape_cast %16 : vector<2x8x8x4xf32> to vector<128x4xf32>
    %96 = arith.truncf %95 : vector<128x4xf32> to vector<128x4xbf16>
    %c4 = arith.constant 4 : index
    %c0_54 = arith.constant 0 : index
    %c0_55 = arith.constant 0 : index
    %97 = vector.load %arg7[%c4, %c0_54, %c0_55] : memref<9x4x8xbf16, #tpu.memory_space<vmem>>, vector<1x4x8xbf16>
    %98 = vector.shape_cast %97 : vector<1x4x8xbf16> to vector<4x8xbf16>
    %cst_56 = arith.constant dense<0.000000e+00> : vector<128x8xf32>
    %99 = tpu.matmul %96, %98, %cst_56 {dimension_numbers = #tpu.dot_dimension_numbers<[1], [0], [0], [1], [0, 0, 1, 1], [], []>} : vector<128x4xbf16>, vector<4x8xbf16>, vector<128x8xf32> -> vector<128x8xf32>
    %100 = arith.addf %94, %99 : vector<128x8xf32>
    %101 = vector.shape_cast %68 : vector<2x8x8x4xf32> to vector<128x4xf32>
    %102 = arith.truncf %101 : vector<128x4xf32> to vector<128x4xbf16>
    %c5 = arith.constant 5 : index
    %c0_57 = arith.constant 0 : index
    %c0_58 = arith.constant 0 : index
    %103 = vector.load %arg7[%c5, %c0_57, %c0_58] : memref<9x4x8xbf16, #tpu.memory_space<vmem>>, vector<1x4x8xbf16>
    %104 = vector.shape_cast %103 : vector<1x4x8xbf16> to vector<4x8xbf16>
    %cst_59 = arith.constant dense<0.000000e+00> : vector<128x8xf32>
    %105 = tpu.matmul %102, %104, %cst_59 {dimension_numbers = #tpu.dot_dimension_numbers<[1], [0], [0], [1], [0, 0, 1, 1], [], []>} : vector<128x4xbf16>, vector<4x8xbf16>, vector<128x8xf32> -> vector<128x8xf32>
    %106 = arith.addf %100, %105 : vector<128x8xf32>
    %107 = vector.shape_cast %69 : vector<2x8x8x4xf32> to vector<128x4xf32>
    %108 = arith.truncf %107 : vector<128x4xf32> to vector<128x4xbf16>
    %c6 = arith.constant 6 : index
    %c0_60 = arith.constant 0 : index
    %c0_61 = arith.constant 0 : index
    %109 = vector.load %arg7[%c6, %c0_60, %c0_61] : memref<9x4x8xbf16, #tpu.memory_space<vmem>>, vector<1x4x8xbf16>
    %110 = vector.shape_cast %109 : vector<1x4x8xbf16> to vector<4x8xbf16>
    %cst_62 = arith.constant dense<0.000000e+00> : vector<128x8xf32>
    %111 = tpu.matmul %108, %110, %cst_62 {dimension_numbers = #tpu.dot_dimension_numbers<[1], [0], [0], [1], [0, 0, 1, 1], [], []>} : vector<128x4xbf16>, vector<4x8xbf16>, vector<128x8xf32> -> vector<128x8xf32>
    %112 = arith.addf %106, %111 : vector<128x8xf32>
    %113 = vector.shape_cast %70 : vector<2x8x8x4xf32> to vector<128x4xf32>
    %114 = arith.truncf %113 : vector<128x4xf32> to vector<128x4xbf16>
    %c7 = arith.constant 7 : index
    %c0_63 = arith.constant 0 : index
    %c0_64 = arith.constant 0 : index
    %115 = vector.load %arg7[%c7, %c0_63, %c0_64] : memref<9x4x8xbf16, #tpu.memory_space<vmem>>, vector<1x4x8xbf16>
    %116 = vector.shape_cast %115 : vector<1x4x8xbf16> to vector<4x8xbf16>
    %cst_65 = arith.constant dense<0.000000e+00> : vector<128x8xf32>
    %117 = tpu.matmul %114, %116, %cst_65 {dimension_numbers = #tpu.dot_dimension_numbers<[1], [0], [0], [1], [0, 0, 1, 1], [], []>} : vector<128x4xbf16>, vector<4x8xbf16>, vector<128x8xf32> -> vector<128x8xf32>
    %118 = arith.addf %112, %117 : vector<128x8xf32>
    %119 = vector.shape_cast %71 : vector<2x8x8x4xf32> to vector<128x4xf32>
    %120 = arith.truncf %119 : vector<128x4xf32> to vector<128x4xbf16>
    %c8 = arith.constant 8 : index
    %c0_66 = arith.constant 0 : index
    %c0_67 = arith.constant 0 : index
    %121 = vector.load %arg7[%c8, %c0_66, %c0_67] : memref<9x4x8xbf16, #tpu.memory_space<vmem>>, vector<1x4x8xbf16>
    %122 = vector.shape_cast %121 : vector<1x4x8xbf16> to vector<4x8xbf16>
    %cst_68 = arith.constant dense<0.000000e+00> : vector<128x8xf32>
    %123 = tpu.matmul %120, %122, %cst_68 {dimension_numbers = #tpu.dot_dimension_numbers<[1], [0], [0], [1], [0, 0, 1, 1], [], []>} : vector<128x4xbf16>, vector<4x8xbf16>, vector<128x8xf32> -> vector<128x8xf32>
    %124 = arith.addf %118, %123 : vector<128x8xf32>
    %125 = vector.broadcast %6 : vector<1x8xf32> to vector<128x8xf32>
    %126 = arith.mulf %124, %125 : vector<128x8xf32>
    %127 = vector.broadcast %7 : vector<1x8xf32> to vector<128x8xf32>
    %128 = arith.addf %126, %127 : vector<128x8xf32>
    %cst_69 = arith.constant 0.000000e+00 : f32
    %129 = vector.broadcast %cst_69 : f32 to vector<128x8xf32>
    %130 = arith.cmpf ogt, %128, %129 : vector<128x8xf32>
    %cst_70 = arith.constant 1.000000e-01 : f32
    %131 = vector.broadcast %cst_70 : f32 to vector<128x8xf32>
    %132 = arith.mulf %131, %128 : vector<128x8xf32>
    %133 = arith.select %130, %128, %132 : vector<128x8xi1>, vector<128x8xf32>
    %134 = vector.shape_cast %133 : vector<128x8xf32> to vector<2x8x8x8xf32>
    %cst_71 = arith.constant 0.000000e+00 : f32
    %135 = vector.broadcast %cst_71 : f32 to vector<2x10x10x8xf32>
    %c0_72 = arith.constant 0 : index
    %c0_73 = arith.constant 0 : index
    %c0_74 = arith.constant 0 : index
    %c0_75 = arith.constant 0 : index
    %136 = vector.load %arg13[%c0_72, %c0_73, %c0_74, %c0_75] : memref<2x10x10x8xf32, #tpu.memory_space<vmem>>, vector<2x10x10x8xf32>
    tpu.vector_store %arg13[%c0_72, %c0_73, %c0_74, %c0_75], %135 {strides = array<i32>} : memref<2x10x10x8xf32, #tpu.memory_space<vmem>>, vector<2x10x10x8xf32>,
    %c0_76 = arith.constant 0 : index
    %c1_77 = arith.constant 1 : index
    %c1_78 = arith.constant 1 : index
    %c0_79 = arith.constant 0 : index
    %137 = vector.load %arg13[%c0_76, %c1_77, %c1_78, %c0_79] : memref<2x10x10x8xf32, #tpu.memory_space<vmem>>, vector<2x8x8x8xf32>
    tpu.vector_store %arg13[%c0_76, %c1_77, %c1_78, %c0_79], %134 {strides = array<i32>} : memref<2x10x10x8xf32, #tpu.memory_space<vmem>>, vector<2x8x8x8xf32>,
    %c0_80 = arith.constant 0 : index
    %c0_81 = arith.constant 0 : index
    %c0_82 = arith.constant 0 : index
    %c0_83 = arith.constant 0 : index
    %138 = vector.load %arg13[%c0_80, %c0_81, %c0_82, %c0_83] : memref<2x10x10x8xf32, #tpu.memory_space<vmem>>, vector<2x8x8x8xf32>
    %139 = vector.shape_cast %138 : vector<2x8x8x8xf32> to vector<128x8xf32>
    %140 = arith.truncf %139 : vector<128x8xf32> to vector<128x8xbf16>
    %c0_84 = arith.constant 0 : index
    %c0_85 = arith.constant 0 : index
    %c0_86 = arith.constant 0 : index
    %141 = vector.load %arg10[%c0_84, %c0_85, %c0_86] : memref<9x8x8xbf16, #tpu.memory_space<vmem>>, vector<1x8x8xbf16>
    %142 = vector.shape_cast %141 : vector<1x8x8xbf16> to vector<8x8xbf16>
    %cst_87 = arith.constant dense<0.000000e+00> : vector<128x8xf32>
    %143 = tpu.matmul %140, %142, %cst_87 {dimension_numbers = #tpu.dot_dimension_numbers<[1], [0], [0], [1], [0, 0, 1, 1], [], []>} : vector<128x8xbf16>, vector<8x8xbf16>, vector<128x8xf32> -> vector<128x8xf32>
    %c0_88 = arith.constant 0 : index
    %c0_89 = arith.constant 0 : index
    %c1_90 = arith.constant 1 : index
    %c0_91 = arith.constant 0 : index
    %144 = vector.load %arg13[%c0_88, %c0_89, %c1_90, %c0_91] : memref<2x10x10x8xf32, #tpu.memory_space<vmem>>, vector<2x8x8x8xf32>
    %145 = vector.shape_cast %144 : vector<2x8x8x8xf32> to vector<128x8xf32>
    %146 = arith.truncf %145 : vector<128x8xf32> to vector<128x8xbf16>
    %c1_92 = arith.constant 1 : index
    %c0_93 = arith.constant 0 : index
    %c0_94 = arith.constant 0 : index
    %147 = vector.load %arg10[%c1_92, %c0_93, %c0_94] : memref<9x8x8xbf16, #tpu.memory_space<vmem>>, vector<1x8x8xbf16>
    %148 = vector.shape_cast %147 : vector<1x8x8xbf16> to vector<8x8xbf16>
    %cst_95 = arith.constant dense<0.000000e+00> : vector<128x8xf32>
    %149 = tpu.matmul %146, %148, %cst_95 {dimension_numbers = #tpu.dot_dimension_numbers<[1], [0], [0], [1], [0, 0, 1, 1], [], []>} : vector<128x8xbf16>, vector<8x8xbf16>, vector<128x8xf32> -> vector<128x8xf32>
    %150 = arith.addf %143, %149 : vector<128x8xf32>
    %c0_96 = arith.constant 0 : index
    %c0_97 = arith.constant 0 : index
    %c2_98 = arith.constant 2 : index
    %c0_99 = arith.constant 0 : index
    %151 = vector.load %arg13[%c0_96, %c0_97, %c2_98, %c0_99] : memref<2x10x10x8xf32, #tpu.memory_space<vmem>>, vector<2x8x8x8xf32>
    %152 = vector.shape_cast %151 : vector<2x8x8x8xf32> to vector<128x8xf32>
    %153 = arith.truncf %152 : vector<128x8xf32> to vector<128x8xbf16>
    %c2_100 = arith.constant 2 : index
    %c0_101 = arith.constant 0 : index
    %c0_102 = arith.constant 0 : index
    %154 = vector.load %arg10[%c2_100, %c0_101, %c0_102] : memref<9x8x8xbf16, #tpu.memory_space<vmem>>, vector<1x8x8xbf16>
    %155 = vector.shape_cast %154 : vector<1x8x8xbf16> to vector<8x8xbf16>
    %cst_103 = arith.constant dense<0.000000e+00> : vector<128x8xf32>
    %156 = tpu.matmul %153, %155, %cst_103 {dimension_numbers = #tpu.dot_dimension_numbers<[1], [0], [0], [1], [0, 0, 1, 1], [], []>} : vector<128x8xbf16>, vector<8x8xbf16>, vector<128x8xf32> -> vector<128x8xf32>
    %157 = arith.addf %150, %156 : vector<128x8xf32>
    %c0_104 = arith.constant 0 : index
    %c1_105 = arith.constant 1 : index
    %c0_106 = arith.constant 0 : index
    %c0_107 = arith.constant 0 : index
    %158 = vector.load %arg13[%c0_104, %c1_105, %c0_106, %c0_107] : memref<2x10x10x8xf32, #tpu.memory_space<vmem>>, vector<2x8x8x8xf32>
    %159 = vector.shape_cast %158 : vector<2x8x8x8xf32> to vector<128x8xf32>
    %160 = arith.truncf %159 : vector<128x8xf32> to vector<128x8xbf16>
    %c3_108 = arith.constant 3 : index
    %c0_109 = arith.constant 0 : index
    %c0_110 = arith.constant 0 : index
    %161 = vector.load %arg10[%c3_108, %c0_109, %c0_110] : memref<9x8x8xbf16, #tpu.memory_space<vmem>>, vector<1x8x8xbf16>
    %162 = vector.shape_cast %161 : vector<1x8x8xbf16> to vector<8x8xbf16>
    %cst_111 = arith.constant dense<0.000000e+00> : vector<128x8xf32>
    %163 = tpu.matmul %160, %162, %cst_111 {dimension_numbers = #tpu.dot_dimension_numbers<[1], [0], [0], [1], [0, 0, 1, 1], [], []>} : vector<128x8xbf16>, vector<8x8xbf16>, vector<128x8xf32> -> vector<128x8xf32>
    %164 = arith.addf %157, %163 : vector<128x8xf32>
    %c0_112 = arith.constant 0 : index
    %c1_113 = arith.constant 1 : index
    %c1_114 = arith.constant 1 : index
    %c0_115 = arith.constant 0 : index
    %165 = vector.load %arg13[%c0_112, %c1_113, %c1_114, %c0_115] : memref<2x10x10x8xf32, #tpu.memory_space<vmem>>, vector<2x8x8x8xf32>
    %166 = vector.shape_cast %165 : vector<2x8x8x8xf32> to vector<128x8xf32>
    %167 = arith.truncf %166 : vector<128x8xf32> to vector<128x8xbf16>
    %c4_116 = arith.constant 4 : index
    %c0_117 = arith.constant 0 : index
    %c0_118 = arith.constant 0 : index
    %168 = vector.load %arg10[%c4_116, %c0_117, %c0_118] : memref<9x8x8xbf16, #tpu.memory_space<vmem>>, vector<1x8x8xbf16>
    %169 = vector.shape_cast %168 : vector<1x8x8xbf16> to vector<8x8xbf16>
    %cst_119 = arith.constant dense<0.000000e+00> : vector<128x8xf32>
    %170 = tpu.matmul %167, %169, %cst_119 {dimension_numbers = #tpu.dot_dimension_numbers<[1], [0], [0], [1], [0, 0, 1, 1], [], []>} : vector<128x8xbf16>, vector<8x8xbf16>, vector<128x8xf32> -> vector<128x8xf32>
    %171 = arith.addf %164, %170 : vector<128x8xf32>
    %c0_120 = arith.constant 0 : index
    %c1_121 = arith.constant 1 : index
    %c2_122 = arith.constant 2 : index
    %c0_123 = arith.constant 0 : index
    %172 = vector.load %arg13[%c0_120, %c1_121, %c2_122, %c0_123] : memref<2x10x10x8xf32, #tpu.memory_space<vmem>>, vector<2x8x8x8xf32>
    %173 = vector.shape_cast %172 : vector<2x8x8x8xf32> to vector<128x8xf32>
    %174 = arith.truncf %173 : vector<128x8xf32> to vector<128x8xbf16>
    %c5_124 = arith.constant 5 : index
    %c0_125 = arith.constant 0 : index
    %c0_126 = arith.constant 0 : index
    %175 = vector.load %arg10[%c5_124, %c0_125, %c0_126] : memref<9x8x8xbf16, #tpu.memory_space<vmem>>, vector<1x8x8xbf16>
    %176 = vector.shape_cast %175 : vector<1x8x8xbf16> to vector<8x8xbf16>
    %cst_127 = arith.constant dense<0.000000e+00> : vector<128x8xf32>
    %177 = tpu.matmul %174, %176, %cst_127 {dimension_numbers = #tpu.dot_dimension_numbers<[1], [0], [0], [1], [0, 0, 1, 1], [], []>} : vector<128x8xbf16>, vector<8x8xbf16>, vector<128x8xf32> -> vector<128x8xf32>
    %178 = arith.addf %171, %177 : vector<128x8xf32>
    %c0_128 = arith.constant 0 : index
    %c2_129 = arith.constant 2 : index
    %c0_130 = arith.constant 0 : index
    %c0_131 = arith.constant 0 : index
    %179 = vector.load %arg13[%c0_128, %c2_129, %c0_130, %c0_131] : memref<2x10x10x8xf32, #tpu.memory_space<vmem>>, vector<2x8x8x8xf32>
    %180 = vector.shape_cast %179 : vector<2x8x8x8xf32> to vector<128x8xf32>
    %181 = arith.truncf %180 : vector<128x8xf32> to vector<128x8xbf16>
    %c6_132 = arith.constant 6 : index
    %c0_133 = arith.constant 0 : index
    %c0_134 = arith.constant 0 : index
    %182 = vector.load %arg10[%c6_132, %c0_133, %c0_134] : memref<9x8x8xbf16, #tpu.memory_space<vmem>>, vector<1x8x8xbf16>
    %183 = vector.shape_cast %182 : vector<1x8x8xbf16> to vector<8x8xbf16>
    %cst_135 = arith.constant dense<0.000000e+00> : vector<128x8xf32>
    %184 = tpu.matmul %181, %183, %cst_135 {dimension_numbers = #tpu.dot_dimension_numbers<[1], [0], [0], [1], [0, 0, 1, 1], [], []>} : vector<128x8xbf16>, vector<8x8xbf16>, vector<128x8xf32> -> vector<128x8xf32>
    %185 = arith.addf %178, %184 : vector<128x8xf32>
    %c0_136 = arith.constant 0 : index
    %c2_137 = arith.constant 2 : index
    %c1_138 = arith.constant 1 : index
    %c0_139 = arith.constant 0 : index
    %186 = vector.load %arg13[%c0_136, %c2_137, %c1_138, %c0_139] : memref<2x10x10x8xf32, #tpu.memory_space<vmem>>, vector<2x8x8x8xf32>
    %187 = vector.shape_cast %186 : vector<2x8x8x8xf32> to vector<128x8xf32>
    %188 = arith.truncf %187 : vector<128x8xf32> to vector<128x8xbf16>
    %c7_140 = arith.constant 7 : index
    %c0_141 = arith.constant 0 : index
    %c0_142 = arith.constant 0 : index
    %189 = vector.load %arg10[%c7_140, %c0_141, %c0_142] : memref<9x8x8xbf16, #tpu.memory_space<vmem>>, vector<1x8x8xbf16>
    %190 = vector.shape_cast %189 : vector<1x8x8xbf16> to vector<8x8xbf16>
    %cst_143 = arith.constant dense<0.000000e+00> : vector<128x8xf32>
    %191 = tpu.matmul %188, %190, %cst_143 {dimension_numbers = #tpu.dot_dimension_numbers<[1], [0], [0], [1], [0, 0, 1, 1], [], []>} : vector<128x8xbf16>, vector<8x8xbf16>, vector<128x8xf32> -> vector<128x8xf32>
    %192 = arith.addf %185, %191 : vector<128x8xf32>
    %c0_144 = arith.constant 0 : index
    %c2_145 = arith.constant 2 : index
    %c2_146 = arith.constant 2 : index
    %c0_147 = arith.constant 0 : index
    %193 = vector.load %arg13[%c0_144, %c2_145, %c2_146, %c0_147] : memref<2x10x10x8xf32, #tpu.memory_space<vmem>>, vector<2x8x8x8xf32>
    %194 = vector.shape_cast %193 : vector<2x8x8x8xf32> to vector<128x8xf32>
    %195 = arith.truncf %194 : vector<128x8xf32> to vector<128x8xbf16>
    %c8_148 = arith.constant 8 : index
    %c0_149 = arith.constant 0 : index
    %c0_150 = arith.constant 0 : index
    %196 = vector.load %arg10[%c8_148, %c0_149, %c0_150] : memref<9x8x8xbf16, #tpu.memory_space<vmem>>, vector<1x8x8xbf16>
    %197 = vector.shape_cast %196 : vector<1x8x8xbf16> to vector<8x8xbf16>
    %cst_151 = arith.constant dense<0.000000e+00> : vector<128x8xf32>
    %198 = tpu.matmul %195, %197, %cst_151 {dimension_numbers = #tpu.dot_dimension_numbers<[1], [0], [0], [1], [0, 0, 1, 1], [], []>} : vector<128x8xbf16>, vector<8x8xbf16>, vector<128x8xf32> -> vector<128x8xf32>
    %199 = arith.addf %192, %198 : vector<128x8xf32>
    %200 = vector.shape_cast %16 : vector<2x8x8x4xf32> to vector<128x4xf32>
    %201 = arith.truncf %200 : vector<128x4xf32> to vector<128x4xbf16>
    %c0_152 = arith.constant 0 : index
    %c0_153 = arith.constant 0 : index
    %202 = vector.load %arg11[%c0_152, %c0_153] : memref<4x8xbf16, #tpu.memory_space<vmem>>, vector<4x8xbf16>
    %cst_154 = arith.constant dense<0.000000e+00> : vector<128x8xf32>
    %203 = tpu.matmul %201, %202, %cst_154 {dimension_numbers = #tpu.dot_dimension_numbers<[1], [0], [0], [1], [0, 0, 1, 1], [], []>} : vector<128x4xbf16>, vector<4x8xbf16>, vector<128x8xf32> -> vector<128x8xf32>
    %204 = arith.addf %203, %199 : vector<128x8xf32>
    %205 = vector.shape_cast %204 : vector<128x8xf32> to vector<2x8x8x8xf32>
    %c0_155 = arith.constant 0 : index
    %c0_156 = arith.constant 0 : index
    %c0_157 = arith.constant 0 : index
    %c0_158 = arith.constant 0 : index
    %206 = vector.load %arg12[%c0_155, %c0_156, %c0_157, %c0_158] : memref<2x8x8x8xf32, #tpu.memory_space<vmem>>, vector<2x8x8x8xf32>
    tpu.vector_store %arg12[%c0_155, %c0_156, %c0_157, %c0_158], %205 {strides = array<i32>} : memref<2x8x8x8xf32, #tpu.memory_space<vmem>>, vector<2x8x8x8xf32>,
    return
  }
  func.func @transform_0(%arg0: i32) -> (i32, i32, i32, i32) {
    %c0_i32 = arith.constant 0 : i32
    %c0_i32_0 = arith.constant 0 : i32
    %c0_i32_1 = arith.constant 0 : i32
    %c0_i32_2 = arith.constant 0 : i32
    return %arg0, %c0_i32, %c0_i32_0, %c0_i32_1 : i32, i32, i32, i32
  }
  func.func @transform_1(%arg0: i32) -> (i32, i32, i32, i32) {
    %c0_i32 = arith.constant 0 : i32
    %c0_i32_0 = arith.constant 0 : i32
    %c0_i32_1 = arith.constant 0 : i32
    %c0_i32_2 = arith.constant 0 : i32
    return %arg0, %c0_i32, %c0_i32_0, %c0_i32_1 : i32, i32, i32, i32
  }
  func.func @transform_2(%arg0: i32) -> (i32, i32, i32, i32) {
    %c0_i32 = arith.constant 0 : i32
    %c0_i32_0 = arith.constant 0 : i32
    %c0_i32_1 = arith.constant 0 : i32
    %c0_i32_2 = arith.constant 0 : i32
    return %arg0, %c0_i32, %c0_i32_0, %c0_i32_1 : i32, i32, i32, i32
  }
  func.func @transform_3(%arg0: i32) -> (i32, i32, i32, i32) {
    %c0_i32 = arith.constant 0 : i32
    %c0_i32_0 = arith.constant 0 : i32
    %c0_i32_1 = arith.constant 0 : i32
    %c0_i32_2 = arith.constant 0 : i32
    return %arg0, %c0_i32, %c0_i32_0, %c0_i32_1 : i32, i32, i32, i32
  }
  func.func @transform_4(%arg0: i32) -> (i32, i32, i32, i32) {
    %c0_i32 = arith.constant 0 : i32
    %c0_i32_0 = arith.constant 0 : i32
    %c0_i32_1 = arith.constant 0 : i32
    %c0_i32_2 = arith.constant 0 : i32
    %c0_i32_3 = arith.constant 0 : i32
    return %c0_i32, %c0_i32_0, %c0_i32_1, %c0_i32_2 : i32, i32, i32, i32
  }
  func.func @transform_5(%arg0: i32) -> (i32, i32, i32, i32) {
    %c0_i32 = arith.constant 0 : i32
    %c0_i32_0 = arith.constant 0 : i32
    %c0_i32_1 = arith.constant 0 : i32
    %c0_i32_2 = arith.constant 0 : i32
    %c0_i32_3 = arith.constant 0 : i32
    return %c0_i32, %c0_i32_0, %c0_i32_1, %c0_i32_2 : i32, i32, i32, i32
  }
  func.func @transform_6(%arg0: i32) -> (i32, i32, i32) {
    %c0_i32 = arith.constant 0 : i32
    %c0_i32_0 = arith.constant 0 : i32
    %c0_i32_1 = arith.constant 0 : i32
    %c0_i32_2 = arith.constant 0 : i32
    return %c0_i32, %c0_i32_0, %c0_i32_1 : i32, i32, i32
  }
  func.func @transform_7(%arg0: i32) -> (i32, i32) {
    %c0_i32 = arith.constant 0 : i32
    %c0_i32_0 = arith.constant 0 : i32
    %c0_i32_1 = arith.constant 0 : i32
    return %c0_i32, %c0_i32_0 : i32, i32
  }
  func.func @transform_8(%arg0: i32) -> (i32, i32) {
    %c0_i32 = arith.constant 0 : i32
    %c0_i32_0 = arith.constant 0 : i32
    %c0_i32_1 = arith.constant 0 : i32
    return %c0_i32, %c0_i32_0 : i32, i32
  }
  func.func @transform_9(%arg0: i32) -> (i32, i32, i32) {
    %c0_i32 = arith.constant 0 : i32
    %c0_i32_0 = arith.constant 0 : i32
    %c0_i32_1 = arith.constant 0 : i32
    %c0_i32_2 = arith.constant 0 : i32
    return %c0_i32, %c0_i32_0, %c0_i32_1 : i32, i32, i32
  }
  func.func @transform_10(%arg0: i32) -> (i32, i32) {
    %c0_i32 = arith.constant 0 : i32
    %c0_i32_0 = arith.constant 0 : i32
    %c0_i32_1 = arith.constant 0 : i32
    return %c0_i32, %c0_i32_0 : i32, i32
  }
  func.func @transform_11(%arg0: i32) -> (i32, i32, i32, i32) {
    %c0_i32 = arith.constant 0 : i32
    %c0_i32_0 = arith.constant 0 : i32
    %c0_i32_1 = arith.constant 0 : i32
    %c0_i32_2 = arith.constant 0 : i32
    return %arg0, %c0_i32, %c0_i32_0, %c0_i32_1 : i32, i32, i32, i32
  }
}

module attributes {stable_mosaic.version = 11 : i64} {
  func.func @kernel(%arg0: i32, %arg1: memref<2x8x8x8xf32, #tpu.memory_space<vmem>>, %arg2: memref<1x1x1x8xf32, #tpu.memory_space<vmem>>, %arg3: memref<1x1x1x8xf32, #tpu.memory_space<vmem>>, %arg4: memref<9x8x8xbf16, #tpu.memory_space<vmem>>, %arg5: memref<1x8xf32, #tpu.memory_space<vmem>>, %arg6: memref<1x8xf32, #tpu.memory_space<vmem>>, %arg7: memref<9x8x8xbf16, #tpu.memory_space<vmem>>, %arg8: memref<2x8x8x8xf32, #tpu.memory_space<vmem>>, %arg9: memref<2x10x10x8xf32, #tpu.memory_space<vmem>>, %arg10: memref<2x10x10x8xf32, #tpu.memory_space<vmem>>) attributes {dimension_semantics = [#tpu.dimension_semantics<parallel>], iteration_bounds = array<i64: 1>, scalar_prefetch = 0 : i64, scratch_operands = 2 : i64, tpu.core_type = #tpu.core_type<tc>, window_params = [{transform_indices = @transform_0, window_bounds = array<i64: 2, 8, 8, 8>}, {pipeline_mode = #tpu.pipeline_mode<synchronous>, transform_indices = @transform_1, window_bounds = array<i64: 1, 1, 1, 8>}, {pipeline_mode = #tpu.pipeline_mode<synchronous>, transform_indices = @transform_2, window_bounds = array<i64: 1, 1, 1, 8>}, {pipeline_mode = #tpu.pipeline_mode<synchronous>, transform_indices = @transform_3, window_bounds = array<i64: 9, 8, 8>}, {pipeline_mode = #tpu.pipeline_mode<synchronous>, transform_indices = @transform_4, window_bounds = array<i64: 1, 8>}, {pipeline_mode = #tpu.pipeline_mode<synchronous>, transform_indices = @transform_5, window_bounds = array<i64: 1, 8>}, {pipeline_mode = #tpu.pipeline_mode<synchronous>, transform_indices = @transform_6, window_bounds = array<i64: 9, 8, 8>}, {transform_indices = @transform_7, window_bounds = array<i64: 2, 8, 8, 8>}]} {
    %c0 = arith.constant 0 : index
    %c0_0 = arith.constant 0 : index
    %c0_1 = arith.constant 0 : index
    %c0_2 = arith.constant 0 : index
    %0 = vector.load %arg1[%c0, %c0_0, %c0_1, %c0_2] : memref<2x8x8x8xf32, #tpu.memory_space<vmem>>, vector<2x8x8x8xf32>
    %c0_3 = arith.constant 0 : index
    %c0_4 = arith.constant 0 : index
    %c0_5 = arith.constant 0 : index
    %c0_6 = arith.constant 0 : index
    %1 = vector.load %arg2[%c0_3, %c0_4, %c0_5, %c0_6] : memref<1x1x1x8xf32, #tpu.memory_space<vmem>>, vector<1x1x1x8xf32>
    %c0_7 = arith.constant 0 : index
    %c0_8 = arith.constant 0 : index
    %c0_9 = arith.constant 0 : index
    %c0_10 = arith.constant 0 : index
    %2 = vector.load %arg3[%c0_7, %c0_8, %c0_9, %c0_10] : memref<1x1x1x8xf32, #tpu.memory_space<vmem>>, vector<1x1x1x8xf32>
    %c0_11 = arith.constant 0 : index
    %c0_12 = arith.constant 0 : index
    %3 = vector.load %arg5[%c0_11, %c0_12] : memref<1x8xf32, #tpu.memory_space<vmem>>, vector<1x8xf32>
    %c0_13 = arith.constant 0 : index
    %c0_14 = arith.constant 0 : index
    %4 = vector.load %arg6[%c0_13, %c0_14] : memref<1x8xf32, #tpu.memory_space<vmem>>, vector<1x8xf32>
    %5 = vector.broadcast %1 : vector<1x1x1x8xf32> to vector<2x8x8x8xf32>
    %6 = arith.mulf %0, %5 : vector<2x8x8x8xf32>
    %7 = vector.broadcast %2 : vector<1x1x1x8xf32> to vector<2x8x8x8xf32>
    %8 = arith.addf %6, %7 : vector<2x8x8x8xf32>
    %cst = arith.constant 0.000000e+00 : f32
    %9 = vector.broadcast %cst : f32 to vector<2x8x8x8xf32>
    %10 = arith.cmpf ogt, %8, %9 : vector<2x8x8x8xf32>
    %cst_15 = arith.constant 1.000000e-01 : f32
    %11 = vector.broadcast %cst_15 : f32 to vector<2x8x8x8xf32>
    %12 = arith.mulf %11, %8 : vector<2x8x8x8xf32>
    %13 = arith.select %10, %8, %12 : vector<2x8x8x8xi1>, vector<2x8x8x8xf32>
    %cst_16 = arith.constant 0.000000e+00 : f32
    %14 = vector.broadcast %cst_16 : f32 to vector<2x10x10x8xf32>
    %c0_17 = arith.constant 0 : index
    %c0_18 = arith.constant 0 : index
    %c0_19 = arith.constant 0 : index
    %c0_20 = arith.constant 0 : index
    %15 = vector.load %arg9[%c0_17, %c0_18, %c0_19, %c0_20] : memref<2x10x10x8xf32, #tpu.memory_space<vmem>>, vector<2x10x10x8xf32>
    tpu.vector_store %arg9[%c0_17, %c0_18, %c0_19, %c0_20], %14 {strides = array<i32>} : memref<2x10x10x8xf32, #tpu.memory_space<vmem>>, vector<2x10x10x8xf32>,
    %c0_21 = arith.constant 0 : index
    %c1 = arith.constant 1 : index
    %c1_22 = arith.constant 1 : index
    %c0_23 = arith.constant 0 : index
    %16 = vector.load %arg9[%c0_21, %c1, %c1_22, %c0_23] : memref<2x10x10x8xf32, #tpu.memory_space<vmem>>, vector<2x8x8x8xf32>
    tpu.vector_store %arg9[%c0_21, %c1, %c1_22, %c0_23], %13 {strides = array<i32>} : memref<2x10x10x8xf32, #tpu.memory_space<vmem>>, vector<2x8x8x8xf32>,
    %c0_24 = arith.constant 0 : index
    %c0_25 = arith.constant 0 : index
    %c0_26 = arith.constant 0 : index
    %c0_27 = arith.constant 0 : index
    %17 = vector.load %arg9[%c0_24, %c0_25, %c0_26, %c0_27] : memref<2x10x10x8xf32, #tpu.memory_space<vmem>>, vector<2x8x8x8xf32>
    %18 = vector.shape_cast %17 : vector<2x8x8x8xf32> to vector<128x8xf32>
    %19 = arith.truncf %18 : vector<128x8xf32> to vector<128x8xbf16>
    %c0_28 = arith.constant 0 : index
    %c0_29 = arith.constant 0 : index
    %c0_30 = arith.constant 0 : index
    %20 = vector.load %arg4[%c0_28, %c0_29, %c0_30] : memref<9x8x8xbf16, #tpu.memory_space<vmem>>, vector<1x8x8xbf16>
    %21 = vector.shape_cast %20 : vector<1x8x8xbf16> to vector<8x8xbf16>
    %cst_31 = arith.constant dense<0.000000e+00> : vector<128x8xf32>
    %22 = tpu.matmul %19, %21, %cst_31 {dimension_numbers = #tpu.dot_dimension_numbers<[1], [0], [0], [1], [0, 0, 1, 1], [], []>} : vector<128x8xbf16>, vector<8x8xbf16>, vector<128x8xf32> -> vector<128x8xf32>
    %c0_32 = arith.constant 0 : index
    %c0_33 = arith.constant 0 : index
    %c1_34 = arith.constant 1 : index
    %c0_35 = arith.constant 0 : index
    %23 = vector.load %arg9[%c0_32, %c0_33, %c1_34, %c0_35] : memref<2x10x10x8xf32, #tpu.memory_space<vmem>>, vector<2x8x8x8xf32>
    %24 = vector.shape_cast %23 : vector<2x8x8x8xf32> to vector<128x8xf32>
    %25 = arith.truncf %24 : vector<128x8xf32> to vector<128x8xbf16>
    %c1_36 = arith.constant 1 : index
    %c0_37 = arith.constant 0 : index
    %c0_38 = arith.constant 0 : index
    %26 = vector.load %arg4[%c1_36, %c0_37, %c0_38] : memref<9x8x8xbf16, #tpu.memory_space<vmem>>, vector<1x8x8xbf16>
    %27 = vector.shape_cast %26 : vector<1x8x8xbf16> to vector<8x8xbf16>
    %cst_39 = arith.constant dense<0.000000e+00> : vector<128x8xf32>
    %28 = tpu.matmul %25, %27, %cst_39 {dimension_numbers = #tpu.dot_dimension_numbers<[1], [0], [0], [1], [0, 0, 1, 1], [], []>} : vector<128x8xbf16>, vector<8x8xbf16>, vector<128x8xf32> -> vector<128x8xf32>
    %29 = arith.addf %22, %28 : vector<128x8xf32>
    %c0_40 = arith.constant 0 : index
    %c0_41 = arith.constant 0 : index
    %c2 = arith.constant 2 : index
    %c0_42 = arith.constant 0 : index
    %30 = vector.load %arg9[%c0_40, %c0_41, %c2, %c0_42] : memref<2x10x10x8xf32, #tpu.memory_space<vmem>>, vector<2x8x8x8xf32>
    %31 = vector.shape_cast %30 : vector<2x8x8x8xf32> to vector<128x8xf32>
    %32 = arith.truncf %31 : vector<128x8xf32> to vector<128x8xbf16>
    %c2_43 = arith.constant 2 : index
    %c0_44 = arith.constant 0 : index
    %c0_45 = arith.constant 0 : index
    %33 = vector.load %arg4[%c2_43, %c0_44, %c0_45] : memref<9x8x8xbf16, #tpu.memory_space<vmem>>, vector<1x8x8xbf16>
    %34 = vector.shape_cast %33 : vector<1x8x8xbf16> to vector<8x8xbf16>
    %cst_46 = arith.constant dense<0.000000e+00> : vector<128x8xf32>
    %35 = tpu.matmul %32, %34, %cst_46 {dimension_numbers = #tpu.dot_dimension_numbers<[1], [0], [0], [1], [0, 0, 1, 1], [], []>} : vector<128x8xbf16>, vector<8x8xbf16>, vector<128x8xf32> -> vector<128x8xf32>
    %36 = arith.addf %29, %35 : vector<128x8xf32>
    %c0_47 = arith.constant 0 : index
    %c1_48 = arith.constant 1 : index
    %c0_49 = arith.constant 0 : index
    %c0_50 = arith.constant 0 : index
    %37 = vector.load %arg9[%c0_47, %c1_48, %c0_49, %c0_50] : memref<2x10x10x8xf32, #tpu.memory_space<vmem>>, vector<2x8x8x8xf32>
    %38 = vector.shape_cast %37 : vector<2x8x8x8xf32> to vector<128x8xf32>
    %39 = arith.truncf %38 : vector<128x8xf32> to vector<128x8xbf16>
    %c3 = arith.constant 3 : index
    %c0_51 = arith.constant 0 : index
    %c0_52 = arith.constant 0 : index
    %40 = vector.load %arg4[%c3, %c0_51, %c0_52] : memref<9x8x8xbf16, #tpu.memory_space<vmem>>, vector<1x8x8xbf16>
    %41 = vector.shape_cast %40 : vector<1x8x8xbf16> to vector<8x8xbf16>
    %cst_53 = arith.constant dense<0.000000e+00> : vector<128x8xf32>
    %42 = tpu.matmul %39, %41, %cst_53 {dimension_numbers = #tpu.dot_dimension_numbers<[1], [0], [0], [1], [0, 0, 1, 1], [], []>} : vector<128x8xbf16>, vector<8x8xbf16>, vector<128x8xf32> -> vector<128x8xf32>
    %43 = arith.addf %36, %42 : vector<128x8xf32>
    %c0_54 = arith.constant 0 : index
    %c1_55 = arith.constant 1 : index
    %c1_56 = arith.constant 1 : index
    %c0_57 = arith.constant 0 : index
    %44 = vector.load %arg9[%c0_54, %c1_55, %c1_56, %c0_57] : memref<2x10x10x8xf32, #tpu.memory_space<vmem>>, vector<2x8x8x8xf32>
    %45 = vector.shape_cast %44 : vector<2x8x8x8xf32> to vector<128x8xf32>
    %46 = arith.truncf %45 : vector<128x8xf32> to vector<128x8xbf16>
    %c4 = arith.constant 4 : index
    %c0_58 = arith.constant 0 : index
    %c0_59 = arith.constant 0 : index
    %47 = vector.load %arg4[%c4, %c0_58, %c0_59] : memref<9x8x8xbf16, #tpu.memory_space<vmem>>, vector<1x8x8xbf16>
    %48 = vector.shape_cast %47 : vector<1x8x8xbf16> to vector<8x8xbf16>
    %cst_60 = arith.constant dense<0.000000e+00> : vector<128x8xf32>
    %49 = tpu.matmul %46, %48, %cst_60 {dimension_numbers = #tpu.dot_dimension_numbers<[1], [0], [0], [1], [0, 0, 1, 1], [], []>} : vector<128x8xbf16>, vector<8x8xbf16>, vector<128x8xf32> -> vector<128x8xf32>
    %50 = arith.addf %43, %49 : vector<128x8xf32>
    %c0_61 = arith.constant 0 : index
    %c1_62 = arith.constant 1 : index
    %c2_63 = arith.constant 2 : index
    %c0_64 = arith.constant 0 : index
    %51 = vector.load %arg9[%c0_61, %c1_62, %c2_63, %c0_64] : memref<2x10x10x8xf32, #tpu.memory_space<vmem>>, vector<2x8x8x8xf32>
    %52 = vector.shape_cast %51 : vector<2x8x8x8xf32> to vector<128x8xf32>
    %53 = arith.truncf %52 : vector<128x8xf32> to vector<128x8xbf16>
    %c5 = arith.constant 5 : index
    %c0_65 = arith.constant 0 : index
    %c0_66 = arith.constant 0 : index
    %54 = vector.load %arg4[%c5, %c0_65, %c0_66] : memref<9x8x8xbf16, #tpu.memory_space<vmem>>, vector<1x8x8xbf16>
    %55 = vector.shape_cast %54 : vector<1x8x8xbf16> to vector<8x8xbf16>
    %cst_67 = arith.constant dense<0.000000e+00> : vector<128x8xf32>
    %56 = tpu.matmul %53, %55, %cst_67 {dimension_numbers = #tpu.dot_dimension_numbers<[1], [0], [0], [1], [0, 0, 1, 1], [], []>} : vector<128x8xbf16>, vector<8x8xbf16>, vector<128x8xf32> -> vector<128x8xf32>
    %57 = arith.addf %50, %56 : vector<128x8xf32>
    %c0_68 = arith.constant 0 : index
    %c2_69 = arith.constant 2 : index
    %c0_70 = arith.constant 0 : index
    %c0_71 = arith.constant 0 : index
    %58 = vector.load %arg9[%c0_68, %c2_69, %c0_70, %c0_71] : memref<2x10x10x8xf32, #tpu.memory_space<vmem>>, vector<2x8x8x8xf32>
    %59 = vector.shape_cast %58 : vector<2x8x8x8xf32> to vector<128x8xf32>
    %60 = arith.truncf %59 : vector<128x8xf32> to vector<128x8xbf16>
    %c6 = arith.constant 6 : index
    %c0_72 = arith.constant 0 : index
    %c0_73 = arith.constant 0 : index
    %61 = vector.load %arg4[%c6, %c0_72, %c0_73] : memref<9x8x8xbf16, #tpu.memory_space<vmem>>, vector<1x8x8xbf16>
    %62 = vector.shape_cast %61 : vector<1x8x8xbf16> to vector<8x8xbf16>
    %cst_74 = arith.constant dense<0.000000e+00> : vector<128x8xf32>
    %63 = tpu.matmul %60, %62, %cst_74 {dimension_numbers = #tpu.dot_dimension_numbers<[1], [0], [0], [1], [0, 0, 1, 1], [], []>} : vector<128x8xbf16>, vector<8x8xbf16>, vector<128x8xf32> -> vector<128x8xf32>
    %64 = arith.addf %57, %63 : vector<128x8xf32>
    %c0_75 = arith.constant 0 : index
    %c2_76 = arith.constant 2 : index
    %c1_77 = arith.constant 1 : index
    %c0_78 = arith.constant 0 : index
    %65 = vector.load %arg9[%c0_75, %c2_76, %c1_77, %c0_78] : memref<2x10x10x8xf32, #tpu.memory_space<vmem>>, vector<2x8x8x8xf32>
    %66 = vector.shape_cast %65 : vector<2x8x8x8xf32> to vector<128x8xf32>
    %67 = arith.truncf %66 : vector<128x8xf32> to vector<128x8xbf16>
    %c7 = arith.constant 7 : index
    %c0_79 = arith.constant 0 : index
    %c0_80 = arith.constant 0 : index
    %68 = vector.load %arg4[%c7, %c0_79, %c0_80] : memref<9x8x8xbf16, #tpu.memory_space<vmem>>, vector<1x8x8xbf16>
    %69 = vector.shape_cast %68 : vector<1x8x8xbf16> to vector<8x8xbf16>
    %cst_81 = arith.constant dense<0.000000e+00> : vector<128x8xf32>
    %70 = tpu.matmul %67, %69, %cst_81 {dimension_numbers = #tpu.dot_dimension_numbers<[1], [0], [0], [1], [0, 0, 1, 1], [], []>} : vector<128x8xbf16>, vector<8x8xbf16>, vector<128x8xf32> -> vector<128x8xf32>
    %71 = arith.addf %64, %70 : vector<128x8xf32>
    %c0_82 = arith.constant 0 : index
    %c2_83 = arith.constant 2 : index
    %c2_84 = arith.constant 2 : index
    %c0_85 = arith.constant 0 : index
    %72 = vector.load %arg9[%c0_82, %c2_83, %c2_84, %c0_85] : memref<2x10x10x8xf32, #tpu.memory_space<vmem>>, vector<2x8x8x8xf32>
    %73 = vector.shape_cast %72 : vector<2x8x8x8xf32> to vector<128x8xf32>
    %74 = arith.truncf %73 : vector<128x8xf32> to vector<128x8xbf16>
    %c8 = arith.constant 8 : index
    %c0_86 = arith.constant 0 : index
    %c0_87 = arith.constant 0 : index
    %75 = vector.load %arg4[%c8, %c0_86, %c0_87] : memref<9x8x8xbf16, #tpu.memory_space<vmem>>, vector<1x8x8xbf16>
    %76 = vector.shape_cast %75 : vector<1x8x8xbf16> to vector<8x8xbf16>
    %cst_88 = arith.constant dense<0.000000e+00> : vector<128x8xf32>
    %77 = tpu.matmul %74, %76, %cst_88 {dimension_numbers = #tpu.dot_dimension_numbers<[1], [0], [0], [1], [0, 0, 1, 1], [], []>} : vector<128x8xbf16>, vector<8x8xbf16>, vector<128x8xf32> -> vector<128x8xf32>
    %78 = arith.addf %71, %77 : vector<128x8xf32>
    %79 = vector.broadcast %3 : vector<1x8xf32> to vector<128x8xf32>
    %80 = arith.mulf %78, %79 : vector<128x8xf32>
    %81 = vector.broadcast %4 : vector<1x8xf32> to vector<128x8xf32>
    %82 = arith.addf %80, %81 : vector<128x8xf32>
    %cst_89 = arith.constant 0.000000e+00 : f32
    %83 = vector.broadcast %cst_89 : f32 to vector<128x8xf32>
    %84 = arith.cmpf ogt, %82, %83 : vector<128x8xf32>
    %cst_90 = arith.constant 1.000000e-01 : f32
    %85 = vector.broadcast %cst_90 : f32 to vector<128x8xf32>
    %86 = arith.mulf %85, %82 : vector<128x8xf32>
    %87 = arith.select %84, %82, %86 : vector<128x8xi1>, vector<128x8xf32>
    %88 = vector.shape_cast %87 : vector<128x8xf32> to vector<2x8x8x8xf32>
    %cst_91 = arith.constant 0.000000e+00 : f32
    %89 = vector.broadcast %cst_91 : f32 to vector<2x10x10x8xf32>
    %c0_92 = arith.constant 0 : index
    %c0_93 = arith.constant 0 : index
    %c0_94 = arith.constant 0 : index
    %c0_95 = arith.constant 0 : index
    %90 = vector.load %arg10[%c0_92, %c0_93, %c0_94, %c0_95] : memref<2x10x10x8xf32, #tpu.memory_space<vmem>>, vector<2x10x10x8xf32>
    tpu.vector_store %arg10[%c0_92, %c0_93, %c0_94, %c0_95], %89 {strides = array<i32>} : memref<2x10x10x8xf32, #tpu.memory_space<vmem>>, vector<2x10x10x8xf32>,
    %c0_96 = arith.constant 0 : index
    %c1_97 = arith.constant 1 : index
    %c1_98 = arith.constant 1 : index
    %c0_99 = arith.constant 0 : index
    %91 = vector.load %arg10[%c0_96, %c1_97, %c1_98, %c0_99] : memref<2x10x10x8xf32, #tpu.memory_space<vmem>>, vector<2x8x8x8xf32>
    tpu.vector_store %arg10[%c0_96, %c1_97, %c1_98, %c0_99], %88 {strides = array<i32>} : memref<2x10x10x8xf32, #tpu.memory_space<vmem>>, vector<2x8x8x8xf32>,
    %c0_100 = arith.constant 0 : index
    %c0_101 = arith.constant 0 : index
    %c0_102 = arith.constant 0 : index
    %c0_103 = arith.constant 0 : index
    %92 = vector.load %arg10[%c0_100, %c0_101, %c0_102, %c0_103] : memref<2x10x10x8xf32, #tpu.memory_space<vmem>>, vector<2x8x8x8xf32>
    %93 = vector.shape_cast %92 : vector<2x8x8x8xf32> to vector<128x8xf32>
    %94 = arith.truncf %93 : vector<128x8xf32> to vector<128x8xbf16>
    %c0_104 = arith.constant 0 : index
    %c0_105 = arith.constant 0 : index
    %c0_106 = arith.constant 0 : index
    %95 = vector.load %arg7[%c0_104, %c0_105, %c0_106] : memref<9x8x8xbf16, #tpu.memory_space<vmem>>, vector<1x8x8xbf16>
    %96 = vector.shape_cast %95 : vector<1x8x8xbf16> to vector<8x8xbf16>
    %cst_107 = arith.constant dense<0.000000e+00> : vector<128x8xf32>
    %97 = tpu.matmul %94, %96, %cst_107 {dimension_numbers = #tpu.dot_dimension_numbers<[1], [0], [0], [1], [0, 0, 1, 1], [], []>} : vector<128x8xbf16>, vector<8x8xbf16>, vector<128x8xf32> -> vector<128x8xf32>
    %c0_108 = arith.constant 0 : index
    %c0_109 = arith.constant 0 : index
    %c1_110 = arith.constant 1 : index
    %c0_111 = arith.constant 0 : index
    %98 = vector.load %arg10[%c0_108, %c0_109, %c1_110, %c0_111] : memref<2x10x10x8xf32, #tpu.memory_space<vmem>>, vector<2x8x8x8xf32>
    %99 = vector.shape_cast %98 : vector<2x8x8x8xf32> to vector<128x8xf32>
    %100 = arith.truncf %99 : vector<128x8xf32> to vector<128x8xbf16>
    %c1_112 = arith.constant 1 : index
    %c0_113 = arith.constant 0 : index
    %c0_114 = arith.constant 0 : index
    %101 = vector.load %arg7[%c1_112, %c0_113, %c0_114] : memref<9x8x8xbf16, #tpu.memory_space<vmem>>, vector<1x8x8xbf16>
    %102 = vector.shape_cast %101 : vector<1x8x8xbf16> to vector<8x8xbf16>
    %cst_115 = arith.constant dense<0.000000e+00> : vector<128x8xf32>
    %103 = tpu.matmul %100, %102, %cst_115 {dimension_numbers = #tpu.dot_dimension_numbers<[1], [0], [0], [1], [0, 0, 1, 1], [], []>} : vector<128x8xbf16>, vector<8x8xbf16>, vector<128x8xf32> -> vector<128x8xf32>
    %104 = arith.addf %97, %103 : vector<128x8xf32>
    %c0_116 = arith.constant 0 : index
    %c0_117 = arith.constant 0 : index
    %c2_118 = arith.constant 2 : index
    %c0_119 = arith.constant 0 : index
    %105 = vector.load %arg10[%c0_116, %c0_117, %c2_118, %c0_119] : memref<2x10x10x8xf32, #tpu.memory_space<vmem>>, vector<2x8x8x8xf32>
    %106 = vector.shape_cast %105 : vector<2x8x8x8xf32> to vector<128x8xf32>
    %107 = arith.truncf %106 : vector<128x8xf32> to vector<128x8xbf16>
    %c2_120 = arith.constant 2 : index
    %c0_121 = arith.constant 0 : index
    %c0_122 = arith.constant 0 : index
    %108 = vector.load %arg7[%c2_120, %c0_121, %c0_122] : memref<9x8x8xbf16, #tpu.memory_space<vmem>>, vector<1x8x8xbf16>
    %109 = vector.shape_cast %108 : vector<1x8x8xbf16> to vector<8x8xbf16>
    %cst_123 = arith.constant dense<0.000000e+00> : vector<128x8xf32>
    %110 = tpu.matmul %107, %109, %cst_123 {dimension_numbers = #tpu.dot_dimension_numbers<[1], [0], [0], [1], [0, 0, 1, 1], [], []>} : vector<128x8xbf16>, vector<8x8xbf16>, vector<128x8xf32> -> vector<128x8xf32>
    %111 = arith.addf %104, %110 : vector<128x8xf32>
    %c0_124 = arith.constant 0 : index
    %c1_125 = arith.constant 1 : index
    %c0_126 = arith.constant 0 : index
    %c0_127 = arith.constant 0 : index
    %112 = vector.load %arg10[%c0_124, %c1_125, %c0_126, %c0_127] : memref<2x10x10x8xf32, #tpu.memory_space<vmem>>, vector<2x8x8x8xf32>
    %113 = vector.shape_cast %112 : vector<2x8x8x8xf32> to vector<128x8xf32>
    %114 = arith.truncf %113 : vector<128x8xf32> to vector<128x8xbf16>
    %c3_128 = arith.constant 3 : index
    %c0_129 = arith.constant 0 : index
    %c0_130 = arith.constant 0 : index
    %115 = vector.load %arg7[%c3_128, %c0_129, %c0_130] : memref<9x8x8xbf16, #tpu.memory_space<vmem>>, vector<1x8x8xbf16>
    %116 = vector.shape_cast %115 : vector<1x8x8xbf16> to vector<8x8xbf16>
    %cst_131 = arith.constant dense<0.000000e+00> : vector<128x8xf32>
    %117 = tpu.matmul %114, %116, %cst_131 {dimension_numbers = #tpu.dot_dimension_numbers<[1], [0], [0], [1], [0, 0, 1, 1], [], []>} : vector<128x8xbf16>, vector<8x8xbf16>, vector<128x8xf32> -> vector<128x8xf32>
    %118 = arith.addf %111, %117 : vector<128x8xf32>
    %c0_132 = arith.constant 0 : index
    %c1_133 = arith.constant 1 : index
    %c1_134 = arith.constant 1 : index
    %c0_135 = arith.constant 0 : index
    %119 = vector.load %arg10[%c0_132, %c1_133, %c1_134, %c0_135] : memref<2x10x10x8xf32, #tpu.memory_space<vmem>>, vector<2x8x8x8xf32>
    %120 = vector.shape_cast %119 : vector<2x8x8x8xf32> to vector<128x8xf32>
    %121 = arith.truncf %120 : vector<128x8xf32> to vector<128x8xbf16>
    %c4_136 = arith.constant 4 : index
    %c0_137 = arith.constant 0 : index
    %c0_138 = arith.constant 0 : index
    %122 = vector.load %arg7[%c4_136, %c0_137, %c0_138] : memref<9x8x8xbf16, #tpu.memory_space<vmem>>, vector<1x8x8xbf16>
    %123 = vector.shape_cast %122 : vector<1x8x8xbf16> to vector<8x8xbf16>
    %cst_139 = arith.constant dense<0.000000e+00> : vector<128x8xf32>
    %124 = tpu.matmul %121, %123, %cst_139 {dimension_numbers = #tpu.dot_dimension_numbers<[1], [0], [0], [1], [0, 0, 1, 1], [], []>} : vector<128x8xbf16>, vector<8x8xbf16>, vector<128x8xf32> -> vector<128x8xf32>
    %125 = arith.addf %118, %124 : vector<128x8xf32>
    %c0_140 = arith.constant 0 : index
    %c1_141 = arith.constant 1 : index
    %c2_142 = arith.constant 2 : index
    %c0_143 = arith.constant 0 : index
    %126 = vector.load %arg10[%c0_140, %c1_141, %c2_142, %c0_143] : memref<2x10x10x8xf32, #tpu.memory_space<vmem>>, vector<2x8x8x8xf32>
    %127 = vector.shape_cast %126 : vector<2x8x8x8xf32> to vector<128x8xf32>
    %128 = arith.truncf %127 : vector<128x8xf32> to vector<128x8xbf16>
    %c5_144 = arith.constant 5 : index
    %c0_145 = arith.constant 0 : index
    %c0_146 = arith.constant 0 : index
    %129 = vector.load %arg7[%c5_144, %c0_145, %c0_146] : memref<9x8x8xbf16, #tpu.memory_space<vmem>>, vector<1x8x8xbf16>
    %130 = vector.shape_cast %129 : vector<1x8x8xbf16> to vector<8x8xbf16>
    %cst_147 = arith.constant dense<0.000000e+00> : vector<128x8xf32>
    %131 = tpu.matmul %128, %130, %cst_147 {dimension_numbers = #tpu.dot_dimension_numbers<[1], [0], [0], [1], [0, 0, 1, 1], [], []>} : vector<128x8xbf16>, vector<8x8xbf16>, vector<128x8xf32> -> vector<128x8xf32>
    %132 = arith.addf %125, %131 : vector<128x8xf32>
    %c0_148 = arith.constant 0 : index
    %c2_149 = arith.constant 2 : index
    %c0_150 = arith.constant 0 : index
    %c0_151 = arith.constant 0 : index
    %133 = vector.load %arg10[%c0_148, %c2_149, %c0_150, %c0_151] : memref<2x10x10x8xf32, #tpu.memory_space<vmem>>, vector<2x8x8x8xf32>
    %134 = vector.shape_cast %133 : vector<2x8x8x8xf32> to vector<128x8xf32>
    %135 = arith.truncf %134 : vector<128x8xf32> to vector<128x8xbf16>
    %c6_152 = arith.constant 6 : index
    %c0_153 = arith.constant 0 : index
    %c0_154 = arith.constant 0 : index
    %136 = vector.load %arg7[%c6_152, %c0_153, %c0_154] : memref<9x8x8xbf16, #tpu.memory_space<vmem>>, vector<1x8x8xbf16>
    %137 = vector.shape_cast %136 : vector<1x8x8xbf16> to vector<8x8xbf16>
    %cst_155 = arith.constant dense<0.000000e+00> : vector<128x8xf32>
    %138 = tpu.matmul %135, %137, %cst_155 {dimension_numbers = #tpu.dot_dimension_numbers<[1], [0], [0], [1], [0, 0, 1, 1], [], []>} : vector<128x8xbf16>, vector<8x8xbf16>, vector<128x8xf32> -> vector<128x8xf32>
    %139 = arith.addf %132, %138 : vector<128x8xf32>
    %c0_156 = arith.constant 0 : index
    %c2_157 = arith.constant 2 : index
    %c1_158 = arith.constant 1 : index
    %c0_159 = arith.constant 0 : index
    %140 = vector.load %arg10[%c0_156, %c2_157, %c1_158, %c0_159] : memref<2x10x10x8xf32, #tpu.memory_space<vmem>>, vector<2x8x8x8xf32>
    %141 = vector.shape_cast %140 : vector<2x8x8x8xf32> to vector<128x8xf32>
    %142 = arith.truncf %141 : vector<128x8xf32> to vector<128x8xbf16>
    %c7_160 = arith.constant 7 : index
    %c0_161 = arith.constant 0 : index
    %c0_162 = arith.constant 0 : index
    %143 = vector.load %arg7[%c7_160, %c0_161, %c0_162] : memref<9x8x8xbf16, #tpu.memory_space<vmem>>, vector<1x8x8xbf16>
    %144 = vector.shape_cast %143 : vector<1x8x8xbf16> to vector<8x8xbf16>
    %cst_163 = arith.constant dense<0.000000e+00> : vector<128x8xf32>
    %145 = tpu.matmul %142, %144, %cst_163 {dimension_numbers = #tpu.dot_dimension_numbers<[1], [0], [0], [1], [0, 0, 1, 1], [], []>} : vector<128x8xbf16>, vector<8x8xbf16>, vector<128x8xf32> -> vector<128x8xf32>
    %146 = arith.addf %139, %145 : vector<128x8xf32>
    %c0_164 = arith.constant 0 : index
    %c2_165 = arith.constant 2 : index
    %c2_166 = arith.constant 2 : index
    %c0_167 = arith.constant 0 : index
    %147 = vector.load %arg10[%c0_164, %c2_165, %c2_166, %c0_167] : memref<2x10x10x8xf32, #tpu.memory_space<vmem>>, vector<2x8x8x8xf32>
    %148 = vector.shape_cast %147 : vector<2x8x8x8xf32> to vector<128x8xf32>
    %149 = arith.truncf %148 : vector<128x8xf32> to vector<128x8xbf16>
    %c8_168 = arith.constant 8 : index
    %c0_169 = arith.constant 0 : index
    %c0_170 = arith.constant 0 : index
    %150 = vector.load %arg7[%c8_168, %c0_169, %c0_170] : memref<9x8x8xbf16, #tpu.memory_space<vmem>>, vector<1x8x8xbf16>
    %151 = vector.shape_cast %150 : vector<1x8x8xbf16> to vector<8x8xbf16>
    %cst_171 = arith.constant dense<0.000000e+00> : vector<128x8xf32>
    %152 = tpu.matmul %149, %151, %cst_171 {dimension_numbers = #tpu.dot_dimension_numbers<[1], [0], [0], [1], [0, 0, 1, 1], [], []>} : vector<128x8xbf16>, vector<8x8xbf16>, vector<128x8xf32> -> vector<128x8xf32>
    %153 = arith.addf %146, %152 : vector<128x8xf32>
    %154 = vector.shape_cast %0 : vector<2x8x8x8xf32> to vector<128x8xf32>
    %155 = arith.addf %154, %153 : vector<128x8xf32>
    %156 = vector.shape_cast %155 : vector<128x8xf32> to vector<2x8x8x8xf32>
    %c0_172 = arith.constant 0 : index
    %c0_173 = arith.constant 0 : index
    %c0_174 = arith.constant 0 : index
    %c0_175 = arith.constant 0 : index
    %157 = vector.load %arg8[%c0_172, %c0_173, %c0_174, %c0_175] : memref<2x8x8x8xf32, #tpu.memory_space<vmem>>, vector<2x8x8x8xf32>
    tpu.vector_store %arg8[%c0_172, %c0_173, %c0_174, %c0_175], %156 {strides = array<i32>} : memref<2x8x8x8xf32, #tpu.memory_space<vmem>>, vector<2x8x8x8xf32>,
    return
  }
  func.func @transform_0(%arg0: i32) -> (i32, i32, i32, i32) {
    %c0_i32 = arith.constant 0 : i32
    %c0_i32_0 = arith.constant 0 : i32
    %c0_i32_1 = arith.constant 0 : i32
    %c0_i32_2 = arith.constant 0 : i32
    return %arg0, %c0_i32, %c0_i32_0, %c0_i32_1 : i32, i32, i32, i32
  }
  func.func @transform_1(%arg0: i32) -> (i32, i32, i32, i32) {
    %c0_i32 = arith.constant 0 : i32
    %c0_i32_0 = arith.constant 0 : i32
    %c0_i32_1 = arith.constant 0 : i32
    %c0_i32_2 = arith.constant 0 : i32
    %c0_i32_3 = arith.constant 0 : i32
    return %c0_i32, %c0_i32_0, %c0_i32_1, %c0_i32_2 : i32, i32, i32, i32
  }
  func.func @transform_2(%arg0: i32) -> (i32, i32, i32, i32) {
    %c0_i32 = arith.constant 0 : i32
    %c0_i32_0 = arith.constant 0 : i32
    %c0_i32_1 = arith.constant 0 : i32
    %c0_i32_2 = arith.constant 0 : i32
    %c0_i32_3 = arith.constant 0 : i32
    return %c0_i32, %c0_i32_0, %c0_i32_1, %c0_i32_2 : i32, i32, i32, i32
  }
  func.func @transform_3(%arg0: i32) -> (i32, i32, i32) {
    %c0_i32 = arith.constant 0 : i32
    %c0_i32_0 = arith.constant 0 : i32
    %c0_i32_1 = arith.constant 0 : i32
    %c0_i32_2 = arith.constant 0 : i32
    return %c0_i32, %c0_i32_0, %c0_i32_1 : i32, i32, i32
  }
  func.func @transform_4(%arg0: i32) -> (i32, i32) {
    %c0_i32 = arith.constant 0 : i32
    %c0_i32_0 = arith.constant 0 : i32
    %c0_i32_1 = arith.constant 0 : i32
    return %c0_i32, %c0_i32_0 : i32, i32
  }
  func.func @transform_5(%arg0: i32) -> (i32, i32) {
    %c0_i32 = arith.constant 0 : i32
    %c0_i32_0 = arith.constant 0 : i32
    %c0_i32_1 = arith.constant 0 : i32
    return %c0_i32, %c0_i32_0 : i32, i32
  }
  func.func @transform_6(%arg0: i32) -> (i32, i32, i32) {
    %c0_i32 = arith.constant 0 : i32
    %c0_i32_0 = arith.constant 0 : i32
    %c0_i32_1 = arith.constant 0 : i32
    %c0_i32_2 = arith.constant 0 : i32
    return %c0_i32, %c0_i32_0, %c0_i32_1 : i32, i32, i32
  }
  func.func @transform_7(%arg0: i32) -> (i32, i32, i32, i32) {
    %c0_i32 = arith.constant 0 : i32
    %c0_i32_0 = arith.constant 0 : i32
    %c0_i32_1 = arith.constant 0 : i32
    %c0_i32_2 = arith.constant 0 : i32
    return %arg0, %c0_i32, %c0_i32_0, %c0_i32_1 : i32, i32, i32, i32
  }
}

</mosaic_0001>

<llo_original>
// kernel: network_block_forward.3
$region0: #{network_block_forward.3}
  #allocation0 [shape = 'u32[]', space=smem, size = 0x4, offset = 0x4, fixed_abs, tag = 'smem constant byte address 0x4 - core index']
  #allocation1 [shape = 'u32[144,128]{1,0:T(1,128)}', space=vmem, size = 0x12000, scoped, tag = 'internal scratch']
  #allocation2 [shape = 'f32[2,10,10,8]{3,2,1,0:T(8,128)}', space=vmem, size = 0x28000, scoped, tag = 'scratch operand']
  #allocation3 [shape = 'f32[2,10,10,8]{3,2,1,0:T(8,128)}', space=vmem, size = 0x28000, scoped, tag = 'scratch operand']
  %s0 = inlined_call_operand.vmem [shape: f32[2,8,8,8], index: 0, kind: input, shape index: {}]
  %s1 = inlined_call_operand.vmem [shape: f32[1,1,1,8], index: 1, kind: input, shape index: {}]
  %s2 = inlined_call_operand.vmem [shape: f32[1,1,1,8], index: 2, kind: input, shape index: {}]
  %s3 = inlined_call_operand.vmem [shape: bf16[9,8,8], index: 3, kind: input, shape index: {}]
  %s4 = inlined_call_operand.vmem [shape: f32[1,8], index: 4, kind: input, shape index: {}]
  %s5 = inlined_call_operand.vmem [shape: f32[1,8], index: 5, kind: input, shape index: {}]
  %s6 = inlined_call_operand.vmem [shape: bf16[9,8,8], index: 6, kind: input, shape index: {}]
  %s7 = inlined_call_operand.vmem [shape: f32[2,8,8,8], index: 7, kind: output, shape index: {}]
  %s8 = sld [smem:[#allocation0]]
  $region38: #{network_block_forward.3} parent=0
    _
  %s10 = ssub.s32 1, %s8
  %s11 = scalar_select 0, %s10, %s8
  // Predicated region
  $region2: #{network_block_forward.3} parent=0 // pred_check
    _
  $region3: #{network_block_forward.3} parent=0 // pred_check_branch
    %13 = sbr.rel (0) target = $region5
  $region4: #{network_block_forward.3} parent=0 // pred_region
    _
  $region5: #{network_block_forward.3} parent=0 // pred_fallthru
    _
  // Predicated region
  $region6: #{network_block_forward.3} parent=0 // pred_check
    _
  $region7: #{network_block_forward.3} parent=0 // pred_check_branch
    %15 = sbr.rel (0) target = $region9
  $region8: #{network_block_forward.3} parent=0 // pred_region
    _
  $region9: #{network_block_forward.3} parent=0 // pred_fallthru
    _
  // Predicated region
  $region10: #{network_block_forward.3} parent=0 // pred_check
    _
  $region11: #{network_block_forward.3} parent=0 // pred_check_branch
    %17 = sbr.rel (0) target = $region13
  $region12: #{network_block_forward.3} parent=0 // pred_region
    _
  $region13: #{network_block_forward.3} parent=0 // pred_fallthru
    _
  // Predicated region
  $region14: #{network_block_forward.3} parent=0 // pred_check
    _
  $region15: #{network_block_forward.3} parent=0 // pred_check_branch
    %19 = sbr.rel (0) target = $region17
  $region16: #{network_block_forward.3} parent=0 // pred_region
    _
  $region17: #{network_block_forward.3} parent=0 // pred_fallthru
    _
  // Predicated region
  $region18: #{network_block_forward.3} parent=0 // pred_check
    _
  $region19: #{network_block_forward.3} parent=0 // pred_check_branch
    %21 = sbr.rel (0) target = $region21
  $region20: #{network_block_forward.3} parent=0 // pred_region
    _
  $region21: #{network_block_forward.3} parent=0 // pred_fallthru
    _
  // Predicated region
  $region22: #{network_block_forward.3} parent=0 // pred_check
    _
  $region23: #{network_block_forward.3} parent=0 // pred_check_branch
    %23 = sbr.rel (0) target = $region25
  $region24: #{network_block_forward.3} parent=0 // pred_region
    _
  $region25: #{network_block_forward.3} parent=0 // pred_fallthru
    _
  // Predicated region
  $region26: #{network_block_forward.3} parent=0 // pred_check
    _
  $region27: #{network_block_forward.3} parent=0 // pred_check_branch
    %25 = sbr.rel (0) target = $region29
  $region28: #{network_block_forward.3} parent=0 // pred_region
    _
  $region29: #{network_block_forward.3} parent=0 // pred_fallthru
    _
  %v27 = vld [vmem:[%s0] sm:$0xff]
  %v28 = vld [vmem:[%s0 + $0x8] sm:$0xff]
  %v29 = vld [vmem:[%s0 + $0x10] sm:$0xff]
  %v30 = vld [vmem:[%s0 + $0x18] sm:$0xff]
  %v31 = vld [vmem:[%s0 + $0x20] sm:$0xff]
  %v32 = vld [vmem:[%s0 + $0x28] sm:$0xff]
  %v33 = vld [vmem:[%s0 + $0x30] sm:$0xff]
  %v34 = vld [vmem:[%s0 + $0x38] sm:$0xff]
  %v35 = vld [vmem:[%s0 + $0x40] sm:$0xff]
  %v36 = vld [vmem:[%s0 + $0x48] sm:$0xff]
  %v37 = vld [vmem:[%s0 + $0x50] sm:$0xff]
  %v38 = vld [vmem:[%s0 + $0x58] sm:$0xff]
  %v39 = vld [vmem:[%s0 + $0x60] sm:$0xff]
  %v40 = vld [vmem:[%s0 + $0x68] sm:$0xff]
  %v41 = vld [vmem:[%s0 + $0x70] sm:$0xff]
  %v42 = vld [vmem:[%s0 + $0x78] sm:$0xff]
  %v43 = vld [vmem:[%s1] sm:$0x1]
  %v44 = vld [vmem:[%s2] sm:$0x1]
  %v45 = vld [vmem:[%s4] sm:$0x1]
  %v46 = vld [vmem:[%s5] sm:$0x1]
  %v48 = vlaneseq
  %v49 = vshrl.u32 %v48, 7
  %v50 = vsub.s32 0, %v49
  %v51 = vrot.slane %v43, %v50
  %v53 = vmul.f32 %v27, %v51
  %v54 = vmul.f32 %v28, %v51
  %v55 = vmul.f32 %v29, %v51
  %v56 = vmul.f32 %v30, %v51
  %v57 = vmul.f32 %v31, %v51
  %v58 = vmul.f32 %v32, %v51
  %v59 = vmul.f32 %v33, %v51
  %v60 = vmul.f32 %v34, %v51
  %v61 = vmul.f32 %v35, %v51
  %v62 = vmul.f32 %v36, %v51
  %v63 = vmul.f32 %v37, %v51
  %v64 = vmul.f32 %v38, %v51
  %v65 = vmul.f32 %v39, %v51
  %v66 = vmul.f32 %v40, %v51
  %v67 = vmul.f32 %v41, %v51
  %v68 = vmul.f32 %v42, %v51
  %v70 = vlaneseq
  %v71 = vshrl.u32 %v70, 7
  %v72 = vsub.s32 0, %v71
  %v73 = vrot.slane %v44, %v72
  %v75 = vadd.f32 %v53, %v73
  %v76 = vadd.f32 %v54, %v73
  %v77 = vadd.f32 %v55, %v73
  %v78 = vadd.f32 %v56, %v73
  %v79 = vadd.f32 %v57, %v73
  %v80 = vadd.f32 %v58, %v73
  %v81 = vadd.f32 %v59, %v73
  %v82 = vadd.f32 %v60, %v73
  %v83 = vadd.f32 %v61, %v73
  %v84 = vadd.f32 %v62, %v73
  %v85 = vadd.f32 %v63, %v73
  %v86 = vadd.f32 %v64, %v73
  %v87 = vadd.f32 %v65, %v73
  %v88 = vadd.f32 %v66, %v73
  %v89 = vadd.f32 %v67, %v73
  %v90 = vadd.f32 %v68, %v73
  %vm91 = vcmp.gt.f32.partialorder %v75, 0.0
  %vm92 = vcmp.gt.f32.partialorder %v76, 0.0
  %vm93 = vcmp.gt.f32.partialorder %v77, 0.0
  %vm94 = vcmp.gt.f32.partialorder %v78, 0.0
  %vm95 = vcmp.gt.f32.partialorder %v79, 0.0
  %vm96 = vcmp.gt.f32.partialorder %v80, 0.0
  %vm97 = vcmp.gt.f32.partialorder %v81, 0.0
  %vm98 = vcmp.gt.f32.partialorder %v82, 0.0
  %vm99 = vcmp.gt.f32.partialorder %v83, 0.0
  %vm100 = vcmp.gt.f32.partialorder %v84, 0.0
  %vm101 = vcmp.gt.f32.partialorder %v85, 0.0
  %vm102 = vcmp.gt.f32.partialorder %v86, 0.0
  %vm103 = vcmp.gt.f32.partialorder %v87, 0.0
  %vm104 = vcmp.gt.f32.partialorder %v88, 0.0
  %vm105 = vcmp.gt.f32.partialorder %v89, 0.0
  %vm106 = vcmp.gt.f32.partialorder %v90, 0.0
  %v107 = vmul.f32 %v75, 0.1
  %v108 = vmul.f32 %v76, 0.1
  %v109 = vmul.f32 %v77, 0.1
  %v110 = vmul.f32 %v78, 0.1
  %v111 = vmul.f32 %v79, 0.1
  %v112 = vmul.f32 %v80, 0.1
  %v113 = vmul.f32 %v81, 0.1
  %v114 = vmul.f32 %v82, 0.1
  %v115 = vmul.f32 %v83, 0.1
  %v116 = vmul.f32 %v84, 0.1
  %v117 = vmul.f32 %v85, 0.1
  %v118 = vmul.f32 %v86, 0.1
  %v119 = vmul.f32 %v87, 0.1
  %v120 = vmul.f32 %v88, 0.1
  %v121 = vmul.f32 %v89, 0.1
  %v122 = vmul.f32 %v90, 0.1
  %v123 = vsel %vm91, %v75, %v107
  %v124 = vsel %vm92, %v76, %v108
  %v125 = vsel %vm93, %v77, %v109
  %v126 = vsel %vm94, %v78, %v110
  %v127 = vsel %vm95, %v79, %v111
  %v128 = vsel %vm96, %v80, %v112
  %v129 = vsel %vm97, %v81, %v113
  %v130 = vsel %vm98, %v82, %v114
  %v131 = vsel %vm99, %v83, %v115
  %v132 = vsel %vm100, %v84, %v116
  %v133 = vsel %vm101, %v85, %v117
  %v134 = vsel %vm102, %v86, %v118
  %v135 = vsel %vm103, %v87, %v119
  %v136 = vsel %vm104, %v88, %v120
  %v137 = vsel %vm105, %v89, %v121
  %v138 = vsel %vm106, %v90, %v122
  %vm139 = vcmask 64512
  %140 = vst.msk [vmem:[#allocation2] sm:$0xff] %vm139, 0.0
  %vm141 = vcmask 58368
  %142 = vst.msk [vmem:[#allocation2 + $0x8] sm:$0x3] %vm141, 0.0
  %143 = vst.msk [vmem:[#allocation2 + $0x10] sm:$0xff] %vm139, 0.0
  %144 = vst.msk [vmem:[#allocation2 + $0x18] sm:$0x3] %vm141, 0.0
  %145 = vst.msk [vmem:[#allocation2 + $0x20] sm:$0xff] %vm139, 0.0
  %146 = vst.msk [vmem:[#allocation2 + $0x28] sm:$0x3] %vm141, 0.0
  %147 = vst.msk [vmem:[#allocation2 + $0x30] sm:$0xff] %vm139, 0.0
  %148 = vst.msk [vmem:[#allocation2 + $0x38] sm:$0x3] %vm141, 0.0
  %149 = vst.msk [vmem:[#allocation2 + $0x40] sm:$0xff] %vm139, 0.0
  %150 = vst.msk [vmem:[#allocation2 + $0x48] sm:$0x3] %vm141, 0.0
  %151 = vst.msk [vmem:[#allocation2 + $0x50] sm:$0xff] %vm139, 0.0
  %152 = vst.msk [vmem:[#allocation2 + $0x58] sm:$0x3] %vm141, 0.0
  %153 = vst.msk [vmem:[#allocation2 + $0x60] sm:$0xff] %vm139, 0.0
  %154 = vst.msk [vmem:[#allocation2 + $0x68] sm:$0x3] %vm141, 0.0
  %155 = vst.msk [vmem:[#allocation2 + $0x70] sm:$0xff] %vm139, 0.0
  %156 = vst.msk [vmem:[#allocation2 + $0x78] sm:$0x3] %vm141, 0.0
  %157 = vst.msk [vmem:[#allocation2 + $0x80] sm:$0xff] %vm139, 0.0
  %158 = vst.msk [vmem:[#allocation2 + $0x88] sm:$0x3] %vm141, 0.0
  %159 = vst.msk [vmem:[#allocation2 + $0x90] sm:$0xff] %vm139, 0.0
  %160 = vst.msk [vmem:[#allocation2 + $0x98] sm:$0x3] %vm141, 0.0
  %161 = vst.msk [vmem:[#allocation2 + $0xa0] sm:$0xff] %vm139, 0.0
  %162 = vst.msk [vmem:[#allocation2 + $0xa8] sm:$0x3] %vm141, 0.0
  %163 = vst.msk [vmem:[#allocation2 + $0xb0] sm:$0xff] %vm139, 0.0
  %164 = vst.msk [vmem:[#allocation2 + $0xb8] sm:$0x3] %vm141, 0.0
  %165 = vst.msk [vmem:[#allocation2 + $0xc0] sm:$0xff] %vm139, 0.0
  %166 = vst.msk [vmem:[#allocation2 + $0xc8] sm:$0x3] %vm141, 0.0
  %167 = vst.msk [vmem:[#allocation2 + $0xd0] sm:$0xff] %vm139, 0.0
  %168 = vst.msk [vmem:[#allocation2 + $0xd8] sm:$0x3] %vm141, 0.0
  %169 = vst.msk [vmem:[#allocation2 + $0xe0] sm:$0xff] %vm139, 0.0
  %170 = vst.msk [vmem:[#allocation2 + $0xe8] sm:$0x3] %vm141, 0.0
  %171 = vst.msk [vmem:[#allocation2 + $0xf0] sm:$0xff] %vm139, 0.0
  %172 = vst.msk [vmem:[#allocation2 + $0xf8] sm:$0x3] %vm141, 0.0
  %173 = vst.msk [vmem:[#allocation2 + $0x100] sm:$0xff] %vm139, 0.0
  %174 = vst.msk [vmem:[#allocation2 + $0x108] sm:$0x3] %vm141, 0.0
  %175 = vst.msk [vmem:[#allocation2 + $0x110] sm:$0xff] %vm139, 0.0
  %176 = vst.msk [vmem:[#allocation2 + $0x118] sm:$0x3] %vm141, 0.0
  %177 = vst.msk [vmem:[#allocation2 + $0x120] sm:$0xff] %vm139, 0.0
  %178 = vst.msk [vmem:[#allocation2 + $0x128] sm:$0x3] %vm141, 0.0
  %179 = vst.msk [vmem:[#allocation2 + $0x130] sm:$0xff] %vm139, 0.0
  %180 = vst.msk [vmem:[#allocation2 + $0x138] sm:$0x3] %vm141, 0.0
  %s181 = scalar_lea.vmem [#allocation2], 16
  %182 = vst.msk [vmem:[%s181 + $0x1] sm:$0xff] %vm139, %v123
  %183 = vst.msk [vmem:[%s181 + $0x11] sm:$0xff] %vm139, %v124
  %184 = vst.msk [vmem:[%s181 + $0x21] sm:$0xff] %vm139, %v125
  %185 = vst.msk [vmem:[%s181 + $0x31] sm:$0xff] %vm139, %v126
  %186 = vst.msk [vmem:[%s181 + $0x41] sm:$0xff] %vm139, %v127
  %187 = vst.msk [vmem:[%s181 + $0x51] sm:$0xff] %vm139, %v128
  %188 = vst.msk [vmem:[%s181 + $0x61] sm:$0xff] %vm139, %v129
  %189 = vst.msk [vmem:[%s181 + $0x71] sm:$0xff] %vm139, %v130
  %190 = vst.msk [vmem:[%s181 + $0xa1] sm:$0xff] %vm139, %v131
  %191 = vst.msk [vmem:[%s181 + $0xb1] sm:$0xff] %vm139, %v132
  %192 = vst.msk [vmem:[%s181 + $0xc1] sm:$0xff] %vm139, %v133
  %193 = vst.msk [vmem:[%s181 + $0xd1] sm:$0xff] %vm139, %v134
  %194 = vst.msk [vmem:[%s181 + $0xe1] sm:$0xff] %vm139, %v135
  %195 = vst.msk [vmem:[%s181 + $0xf1] sm:$0xff] %vm139, %v136
  %196 = vst.msk [vmem:[%s181 + $0x101] sm:$0xff] %vm139, %v137
  %197 = vst.msk [vmem:[%s181 + $0x111] sm:$0xff] %vm139, %v138
  %v198 = vld [vmem:[#allocation2] sm:$0xff]
  %v199 = vld [vmem:[#allocation2 + $0x10] sm:$0xff]
  %v200 = vld [vmem:[#allocation2 + $0x20] sm:$0xff]
  %v201 = vld [vmem:[#allocation2 + $0x30] sm:$0xff]
  %v202 = vld [vmem:[#allocation2 + $0x40] sm:$0xff]
  %v203 = vld [vmem:[#allocation2 + $0x50] sm:$0xff]
  %v204 = vld [vmem:[#allocation2 + $0x60] sm:$0xff]
  %v205 = vld [vmem:[#allocation2 + $0x70] sm:$0xff]
  %v206 = vld [vmem:[#allocation2 + $0xa0] sm:$0xff]
  %v207 = vld [vmem:[#allocation2 + $0xb0] sm:$0xff]
  %v208 = vld [vmem:[#allocation2 + $0xc0] sm:$0xff]
  %v209 = vld [vmem:[#allocation2 + $0xd0] sm:$0xff]
  %v210 = vld [vmem:[#allocation2 + $0xe0] sm:$0xff]
  %v211 = vld [vmem:[#allocation2 + $0xf0] sm:$0xff]
  %v212 = vld [vmem:[#allocation2 + $0x100] sm:$0xff]
  %v213 = vld [vmem:[#allocation2 + $0x110] sm:$0xff]
  %v214 = vpack.c.bf16 %v199, %v198
  %v215 = vpack.c.bf16 %v201, %v200
  %v216 = vpack.c.bf16 %v203, %v202
  %v217 = vpack.c.bf16 %v205, %v204
  %v218 = vpack.c.bf16 %v207, %v206
  %v219 = vpack.c.bf16 %v209, %v208
  %v220 = vpack.c.bf16 %v211, %v210
  %v221 = vpack.c.bf16 %v213, %v212
  %v222 = vld [vmem:[%s3] sm:$0xf]
  %v223 = vld [vmem:[#allocation2 + $0x1] sm:$0xff]
  %v224 = vld [vmem:[#allocation2 + $0x11] sm:$0xff]
  %v225 = vld [vmem:[#allocation2 + $0x21] sm:$0xff]
  %v226 = vld [vmem:[#allocation2 + $0x31] sm:$0xff]
  %v227 = vld [vmem:[#allocation2 + $0x41] sm:$0xff]
  %v228 = vld [vmem:[#allocation2 + $0x51] sm:$0xff]
  %v229 = vld [vmem:[#allocation2 + $0x61] sm:$0xff]
  %v230 = vld [vmem:[#allocation2 + $0x71] sm:$0xff]
  %v231 = vld [vmem:[#allocation2 + $0xa1] sm:$0xff]
  %v232 = vld [vmem:[#allocation2 + $0xb1] sm:$0xff]
  %v233 = vld [vmem:[#allocation2 + $0xc1] sm:$0xff]
  %v234 = vld [vmem:[#allocation2 + $0xd1] sm:$0xff]
  %v235 = vld [vmem:[#allocation2 + $0xe1] sm:$0xff]
  %v236 = vld [vmem:[#allocation2 + $0xf1] sm:$0xff]
  %v237 = vld [vmem:[#allocation2 + $0x101] sm:$0xff]
  %v238 = vld [vmem:[#allocation2 + $0x111] sm:$0xff]
  %v239 = vpack.c.bf16 %v224, %v223
  %v240 = vpack.c.bf16 %v226, %v225
  %v241 = vpack.c.bf16 %v228, %v227
  %v242 = vpack.c.bf16 %v230, %v229
  %v243 = vpack.c.bf16 %v232, %v231
  %v244 = vpack.c.bf16 %v234, %v233
  %v245 = vpack.c.bf16 %v236, %v235
  %v246 = vpack.c.bf16 %v238, %v237
  %s247 = scalar_lea.vmem %s3, 4
  %v248 = vld [vmem:[%s247] sm:$0xf]
  %v250 = vsel %vm139, %v239, 0
  %v253 = vsel %vm139, %v240, 0
  %v256 = vsel %vm139, %v241, 0
  %v259 = vsel %vm139, %v242, 0
  %v262 = vsel %vm139, %v243, 0
  %v265 = vsel %vm139, %v244, 0
  %v268 = vsel %vm139, %v245, 0
  %v271 = vsel %vm139, %v246, 0
  %vm273 = vcmask 1043456
  %v275 = vsel %vm273, %v248, 0
  %277 = vmatprep.subr.bf16.mxu0 0
  %278 = vmatpush1.bf16.msra.mxu0 %v275
  %279 = vmatprep.subr.bf16.mxu0 0
  %280 = vmatpush1.bf16.msra.mxu0 0
  %281 = vmatprep.subr.bf16.mxu0 0
  %282 = vmatpush1.bf16.msra.mxu0 0
  %283 = vmatprep.subr.bf16.mxu0 0
  %284 = vmatpush1.bf16.msra.mxu0 0
  %285 = vmatprep.subr.bf16.mxu0 0
  %286 = vmatpush1.bf16.msra.mxu0 0
  %287 = vmatprep.subr.bf16.mxu0 0
  %288 = vmatpush1.bf16.msra.mxu0 0
  %289 = vmatprep.subr.bf16.mxu0 0
  %290 = vmatpush1.bf16.msra.mxu0 0
  %291 = vmatprep.subr.bf16.mxu0 0
  %292 = vmatpush1.bf16.msra.mxu0 0
  %293 = vmatprep.subr.bf16.mxu0 0
  %294 = vmatpush1.bf16.msra.mxu0 0
  %295 = vmatprep.subr.bf16.mxu0 0
  %296 = vmatpush1.bf16.msra.mxu0 0
  %297 = vmatprep.subr.bf16.mxu0 0
  %298 = vmatpush1.bf16.msra.mxu0 0
  %299 = vmatprep.subr.bf16.mxu0 0
  %300 = vmatpush1.bf16.msra.mxu0 0
  %301 = vmatprep.subr.bf16.mxu0 0
  %302 = vmatpush1.bf16.msra.mxu0 0
  %303 = vmatprep.subr.bf16.mxu0 0
  %304 = vmatpush1.bf16.msra.mxu0 0
  %305 = vmatprep.subr.bf16.mxu0 0
  %306 = vmatpush1.bf16.msra.mxu0 0
  %307 = vmatprep.subr.bf16.mxu0 0
  %308 = vmatpush1.bf16.msra.mxu0 0
  %309 = vmatprep.mubr.bf16.mxu0 0
  %310 = vmatmul.mubr.bf16.gmra.mrb[0].mxu0 %v250
  %v311 = vpop.f32.mrb[0].mxu0
  %v312 = vadd.f32 0.0, %v311
  %v313 = vpop.f32.mrb[0].mxu0
  %v314 = vpop.f32.mrb[0].mxu0
  %v315 = vadd.f32 0.0, %v314
  %v316 = vpop.f32.mrb[0].mxu0
  %317 = vmatprep.mubr.bf16.mxu0 0
  %318 = vmatmul.mubr.bf16.gmra.mrb[0].mxu0 %v253
  %v319 = vpop.f32.mrb[0].mxu0
  %v320 = vadd.f32 0.0, %v319
  %v321 = vpop.f32.mrb[0].mxu0
  %v322 = vpop.f32.mrb[0].mxu0
  %v323 = vadd.f32 0.0, %v322
  %v324 = vpop.f32.mrb[0].mxu0
  %325 = vmatprep.mubr.bf16.mxu0 0
  %326 = vmatmul.mubr.bf16.gmra.mrb[0].mxu0 %v256
  %v327 = vpop.f32.mrb[0].mxu0
  %v328 = vadd.f32 0.0, %v327
  %v329 = vpop.f32.mrb[0].mxu0
  %v330 = vpop.f32.mrb[0].mxu0
  %v331 = vadd.f32 0.0, %v330
  %v332 = vpop.f32.mrb[0].mxu0
  %333 = vmatprep.mubr.bf16.mxu0 0
  %334 = vmatmul.mubr.bf16.gmra.mrb[0].mxu0 %v259
  %v335 = vpop.f32.mrb[0].mxu0
  %v336 = vadd.f32 0.0, %v335
  %v337 = vpop.f32.mrb[0].mxu0
  %v338 = vpop.f32.mrb[0].mxu0
  %v339 = vadd.f32 0.0, %v338
  %v340 = vpop.f32.mrb[0].mxu0
  %341 = vmatprep.mubr.bf16.mxu0 0
  %342 = vmatmul.mubr.bf16.gmra.mrb[0].mxu0 %v262
  %v343 = vpop.f32.mrb[0].mxu0
  %v344 = vadd.f32 0.0, %v343
  %v345 = vpop.f32.mrb[0].mxu0
  %v346 = vpop.f32.mrb[0].mxu0
  %v347 = vadd.f32 0.0, %v346
  %v348 = vpop.f32.mrb[0].mxu0
  %349 = vmatprep.mubr.bf16.mxu0 0
  %350 = vmatmul.mubr.bf16.gmra.mrb[0].mxu0 %v265
  %v351 = vpop.f32.mrb[0].mxu0
  %v352 = vadd.f32 0.0, %v351
  %v353 = vpop.f32.mrb[0].mxu0
  %v354 = vpop.f32.mrb[0].mxu0
  %v355 = vadd.f32 0.0, %v354
  %v356 = vpop.f32.mrb[0].mxu0
  %357 = vmatprep.mubr.bf16.mxu0 0
  %358 = vmatmul.mubr.bf16.gmra.mrb[0].mxu0 %v268
  %v359 = vpop.f32.mrb[0].mxu0
  %v360 = vadd.f32 0.0, %v359
  %v361 = vpop.f32.mrb[0].mxu0
  %v362 = vpop.f32.mrb[0].mxu0
  %v363 = vadd.f32 0.0, %v362
  %v364 = vpop.f32.mrb[0].mxu0
  %365 = vmatprep.mubr.bf16.mxu0 0
  %366 = vmatmul.mubr.bf16.gmra.mrb[0].mxu0 %v271
  %v367 = vpop.f32.mrb[0].mxu0
  %v368 = vadd.f32 0.0, %v367
  %v369 = vpop.f32.mrb[0].mxu0
  %v370 = vpop.f32.mrb[0].mxu0
  %v371 = vadd.f32 0.0, %v370
  %v372 = vpop.f32.mrb[0].mxu0
  %373 = vdwg.mxu0
  %v375 = vsel %vm139, %v214, 0
  %v378 = vsel %vm139, %v215, 0
  %v381 = vsel %vm139, %v216, 0
  %v384 = vsel %vm139, %v217, 0
  %v387 = vsel %vm139, %v218, 0
  %v390 = vsel %vm139, %v219, 0
  %v393 = vsel %vm139, %v220, 0
  %v396 = vsel %vm139, %v221, 0
  %v399 = vsel %vm273, %v222, 0
  %401 = vmatprep.subr.bf16.mxu0 0
  %402 = vmatpush1.bf16.msra.mxu0 %v399
  %403 = vmatprep.subr.bf16.mxu0 0
  %404 = vmatpush1.bf16.msra.mxu0 0
  %405 = vmatprep.subr.bf16.mxu0 0
  %406 = vmatpush1.bf16.msra.mxu0 0
  %407 = vmatprep.subr.bf16.mxu0 0
  %408 = vmatpush1.bf16.msra.mxu0 0
  %409 = vmatprep.subr.bf16.mxu0 0
  %410 = vmatpush1.bf16.msra.mxu0 0
  %411 = vmatprep.subr.bf16.mxu0 0
  %412 = vmatpush1.bf16.msra.mxu0 0
  %413 = vmatprep.subr.bf16.mxu0 0
  %414 = vmatpush1.bf16.msra.mxu0 0
  %415 = vmatprep.subr.bf16.mxu0 0
  %416 = vmatpush1.bf16.msra.mxu0 0
  %417 = vmatprep.subr.bf16.mxu0 0
  %418 = vmatpush1.bf16.msra.mxu0 0
  %419 = vmatprep.subr.bf16.mxu0 0
  %420 = vmatpush1.bf16.msra.mxu0 0
  %421 = vmatprep.subr.bf16.mxu0 0
  %422 = vmatpush1.bf16.msra.mxu0 0
  %423 = vmatprep.subr.bf16.mxu0 0
  %424 = vmatpush1.bf16.msra.mxu0 0
  %425 = vmatprep.subr.bf16.mxu0 0
  %426 = vmatpush1.bf16.msra.mxu0 0
  %427 = vmatprep.subr.bf16.mxu0 0
  %428 = vmatpush1.bf16.msra.mxu0 0
  %429 = vmatprep.subr.bf16.mxu0 0
  %430 = vmatpush1.bf16.msra.mxu0 0
  %431 = vmatprep.subr.bf16.mxu0 0
  %432 = vmatpush1.bf16.msra.mxu0 0
  %433 = vmatprep.mubr.bf16.mxu0 0
  %434 = vmatmul.mubr.bf16.gmra.mrb[0].mxu0 %v375
  %v435 = vpop.f32.mrb[0].mxu0
  %v436 = vadd.f32 %v312, %v435
  %v437 = vpop.f32.mrb[0].mxu0
  %v438 = vpop.f32.mrb[0].mxu0
  %v439 = vadd.f32 %v315, %v438
  %v440 = vpop.f32.mrb[0].mxu0
  %441 = vmatprep.mubr.bf16.mxu0 0
  %442 = vmatmul.mubr.bf16.gmra.mrb[0].mxu0 %v378
  %v443 = vpop.f32.mrb[0].mxu0
  %v444 = vadd.f32 %v320, %v443
  %v445 = vpop.f32.mrb[0].mxu0
  %v446 = vpop.f32.mrb[0].mxu0
  %v447 = vadd.f32 %v323, %v446
  %v448 = vpop.f32.mrb[0].mxu0
  %449 = vmatprep.mubr.bf16.mxu0 0
  %450 = vmatmul.mubr.bf16.gmra.mrb[0].mxu0 %v381
  %v451 = vpop.f32.mrb[0].mxu0
  %v452 = vadd.f32 %v328, %v451
  %v453 = vpop.f32.mrb[0].mxu0
  %v454 = vpop.f32.mrb[0].mxu0
  %v455 = vadd.f32 %v331, %v454
  %v456 = vpop.f32.mrb[0].mxu0
  %457 = vmatprep.mubr.bf16.mxu0 0
  %458 = vmatmul.mubr.bf16.gmra.mrb[0].mxu0 %v384
  %v459 = vpop.f32.mrb[0].mxu0
  %v460 = vadd.f32 %v336, %v459
  %v461 = vpop.f32.mrb[0].mxu0
  %v462 = vpop.f32.mrb[0].mxu0
  %v463 = vadd.f32 %v339, %v462
  %v464 = vpop.f32.mrb[0].mxu0
  %465 = vmatprep.mubr.bf16.mxu0 0
  %466 = vmatmul.mubr.bf16.gmra.mrb[0].mxu0 %v387
  %v467 = vpop.f32.mrb[0].mxu0
  %v468 = vadd.f32 %v344, %v467
  %v469 = vpop.f32.mrb[0].mxu0
  %v470 = vpop.f32.mrb[0].mxu0
  %v471 = vadd.f32 %v347, %v470
  %v472 = vpop.f32.mrb[0].mxu0
  %473 = vmatprep.mubr.bf16.mxu0 0
  %474 = vmatmul.mubr.bf16.gmra.mrb[0].mxu0 %v390
  %v475 = vpop.f32.mrb[0].mxu0
  %v476 = vadd.f32 %v352, %v475
  %v477 = vpop.f32.mrb[0].mxu0
  %v478 = vpop.f32.mrb[0].mxu0
  %v479 = vadd.f32 %v355, %v478
  %v480 = vpop.f32.mrb[0].mxu0
  %481 = vmatprep.mubr.bf16.mxu0 0
  %482 = vmatmul.mubr.bf16.gmra.mrb[0].mxu0 %v393
  %v483 = vpop.f32.mrb[0].mxu0
  %v484 = vadd.f32 %v360, %v483
  %v485 = vpop.f32.mrb[0].mxu0
  %v486 = vpop.f32.mrb[0].mxu0
  %v487 = vadd.f32 %v363, %v486
  %v488 = vpop.f32.mrb[0].mxu0
  %489 = vmatprep.mubr.bf16.mxu0 0
  %490 = vmatmul.mubr.bf16.gmra.mrb[0].mxu0 %v396
  %v491 = vpop.f32.mrb[0].mxu0
  %v492 = vadd.f32 %v368, %v491
  %v493 = vpop.f32.mrb[0].mxu0
  %v494 = vpop.f32.mrb[0].mxu0
  %v495 = vadd.f32 %v371, %v494
  %v496 = vpop.f32.mrb[0].mxu0
  %497 = vdwg.mxu0
  %v498 = vld [vmem:[#allocation2 + $0x2] sm:$0xff]
  %v499 = vld [vmem:[#allocation2 + $0x12] sm:$0xff]
  %v500 = vld [vmem:[#allocation2 + $0x22] sm:$0xff]
  %v501 = vld [vmem:[#allocation2 + $0x32] sm:$0xff]
  %v502 = vld [vmem:[#allocation2 + $0x42] sm:$0xff]
  %v503 = vld [vmem:[#allocation2 + $0x52] sm:$0xff]
  %v504 = vld [vmem:[#allocation2 + $0x62] sm:$0xff]
  %v505 = vld [vmem:[#allocation2 + $0x72] sm:$0xff]
  %v506 = vld [vmem:[#allocation2 + $0xa2] sm:$0xff]
  %v507 = vld [vmem:[#allocation2 + $0xb2] sm:$0xff]
  %v508 = vld [vmem:[#allocation2 + $0xc2] sm:$0xff]
  %v509 = vld [vmem:[#allocation2 + $0xd2] sm:$0xff]
  %v510 = vld [vmem:[#allocation2 + $0xe2] sm:$0xff]
  %v511 = vld [vmem:[#allocation2 + $0xf2] sm:$0xff]
  %v512 = vld [vmem:[#allocation2 + $0x102] sm:$0xff]
  %v513 = vld [vmem:[#allocation2 + $0x112] sm:$0xff]
  %v514 = vpack.c.bf16 %v499, %v498
  %v515 = vpack.c.bf16 %v501, %v500
  %v516 = vpack.c.bf16 %v503, %v502
  %v517 = vpack.c.bf16 %v505, %v504
  %v518 = vpack.c.bf16 %v507, %v506
  %v519 = vpack.c.bf16 %v509, %v508
  %v520 = vpack.c.bf16 %v511, %v510
  %v521 = vpack.c.bf16 %v513, %v512
  %s522 = scalar_lea.vmem %s3, 8
  %v523 = vld [vmem:[%s522] sm:$0xf]
  %v525 = vsel %vm139, %v514, 0
  %v528 = vsel %vm139, %v515, 0
  %v531 = vsel %vm139, %v516, 0
  %v534 = vsel %vm139, %v517, 0
  %v537 = vsel %vm139, %v518, 0
  %v540 = vsel %vm139, %v519, 0
  %v543 = vsel %vm139, %v520, 0
  %v546 = vsel %vm139, %v521, 0
  %v549 = vsel %vm273, %v523, 0
  %551 = vmatprep.subr.bf16.mxu0 0
  %552 = vmatpush1.bf16.msra.mxu0 %v549
  %553 = vmatprep.subr.bf16.mxu0 0
  %554 = vmatpush1.bf16.msra.mxu0 0
  %555 = vmatprep.subr.bf16.mxu0 0
  %556 = vmatpush1.bf16.msra.mxu0 0
  %557 = vmatprep.subr.bf16.mxu0 0
  %558 = vmatpush1.bf16.msra.mxu0 0
  %559 = vmatprep.subr.bf16.mxu0 0
  %560 = vmatpush1.bf16.msra.mxu0 0
  %561 = vmatprep.subr.bf16.mxu0 0
  %562 = vmatpush1.bf16.msra.mxu0 0
  %563 = vmatprep.subr.bf16.mxu0 0
  %564 = vmatpush1.bf16.msra.mxu0 0
  %565 = vmatprep.subr.bf16.mxu0 0
  %566 = vmatpush1.bf16.msra.mxu0 0
  %567 = vmatprep.subr.bf16.mxu0 0
  %568 = vmatpush1.bf16.msra.mxu0 0
  %569 = vmatprep.subr.bf16.mxu0 0
  %570 = vmatpush1.bf16.msra.mxu0 0
  %571 = vmatprep.subr.bf16.mxu0 0
  %572 = vmatpush1.bf16.msra.mxu0 0
  %573 = vmatprep.subr.bf16.mxu0 0
  %574 = vmatpush1.bf16.msra.mxu0 0
  %575 = vmatprep.subr.bf16.mxu0 0
  %576 = vmatpush1.bf16.msra.mxu0 0
  %577 = vmatprep.subr.bf16.mxu0 0
  %578 = vmatpush1.bf16.msra.mxu0 0
  %579 = vmatprep.subr.bf16.mxu0 0
  %580 = vmatpush1.bf16.msra.mxu0 0
  %581 = vmatprep.subr.bf16.mxu0 0
  %582 = vmatpush1.bf16.msra.mxu0 0
  %583 = vmatprep.mubr.bf16.mxu0 0
  %584 = vmatmul.mubr.bf16.gmra.mrb[0].mxu0 %v525
  %v585 = vpop.f32.mrb[0].mxu0
  %v586 = vadd.f32 0.0, %v585
  %v587 = vpop.f32.mrb[0].mxu0
  %v588 = vpop.f32.mrb[0].mxu0
  %v589 = vadd.f32 0.0, %v588
  %v590 = vpop.f32.mrb[0].mxu0
  %591 = vmatprep.mubr.bf16.mxu0 0
  %592 = vmatmul.mubr.bf16.gmra.mrb[0].mxu0 %v528
  %v593 = vpop.f32.mrb[0].mxu0
  %v594 = vadd.f32 0.0, %v593
  %v595 = vpop.f32.mrb[0].mxu0
  %v596 = vpop.f32.mrb[0].mxu0
  %v597 = vadd.f32 0.0, %v596
  %v598 = vpop.f32.mrb[0].mxu0
  %599 = vmatprep.mubr.bf16.mxu0 0
  %600 = vmatmul.mubr.bf16.gmra.mrb[0].mxu0 %v531
  %v601 = vpop.f32.mrb[0].mxu0
  %v602 = vadd.f32 0.0, %v601
  %v603 = vpop.f32.mrb[0].mxu0
  %v604 = vpop.f32.mrb[0].mxu0
  %v605 = vadd.f32 0.0, %v604
  %v606 = vpop.f32.mrb[0].mxu0
  %607 = vmatprep.mubr.bf16.mxu0 0
  %608 = vmatmul.mubr.bf16.gmra.mrb[0].mxu0 %v534
  %v609 = vpop.f32.mrb[0].mxu0
  %v610 = vadd.f32 0.0, %v609
  %v611 = vpop.f32.mrb[0].mxu0
  %v612 = vpop.f32.mrb[0].mxu0
  %v613 = vadd.f32 0.0, %v612
  %v614 = vpop.f32.mrb[0].mxu0
  %615 = vmatprep.mubr.bf16.mxu0 0
  %616 = vmatmul.mubr.bf16.gmra.mrb[0].mxu0 %v537
  %v617 = vpop.f32.mrb[0].mxu0
  %v618 = vadd.f32 0.0, %v617
  %v619 = vpop.f32.mrb[0].mxu0
  %v620 = vpop.f32.mrb[0].mxu0
  %v621 = vadd.f32 0.0, %v620
  %v622 = vpop.f32.mrb[0].mxu0
  %623 = vmatprep.mubr.bf16.mxu0 0
  %624 = vmatmul.mubr.bf16.gmra.mrb[0].mxu0 %v540
  %v625 = vpop.f32.mrb[0].mxu0
  %v626 = vadd.f32 0.0, %v625
  %v627 = vpop.f32.mrb[0].mxu0
  %v628 = vpop.f32.mrb[0].mxu0
  %v629 = vadd.f32 0.0, %v628
  %v630 = vpop.f32.mrb[0].mxu0
  %631 = vmatprep.mubr.bf16.mxu0 0
  %632 = vmatmul.mubr.bf16.gmra.mrb[0].mxu0 %v543
  %v633 = vpop.f32.mrb[0].mxu0
  %v634 = vadd.f32 0.0, %v633
  %v635 = vpop.f32.mrb[0].mxu0
  %v636 = vpop.f32.mrb[0].mxu0
  %v637 = vadd.f32 0.0, %v636
  %v638 = vpop.f32.mrb[0].mxu0
  %639 = vmatprep.mubr.bf16.mxu0 0
  %640 = vmatmul.mubr.bf16.gmra.mrb[0].mxu0 %v546
  %v641 = vpop.f32.mrb[0].mxu0
  %v642 = vadd.f32 0.0, %v641
  %v643 = vpop.f32.mrb[0].mxu0
  %v644 = vpop.f32.mrb[0].mxu0
  %v645 = vadd.f32 0.0, %v644
  %v646 = vpop.f32.mrb[0].mxu0
  %647 = vdwg.mxu0
  %v648 = vadd.f32 %v436, %v586
  %v649 = vadd.f32 %v439, %v589
  %v650 = vadd.f32 %v444, %v594
  %v651 = vadd.f32 %v447, %v597
  %v652 = vadd.f32 %v452, %v602
  %v653 = vadd.f32 %v455, %v605
  %v654 = vadd.f32 %v460, %v610
  %v655 = vadd.f32 %v463, %v613
  %v656 = vadd.f32 %v468, %v618
  %v657 = vadd.f32 %v471, %v621
  %v658 = vadd.f32 %v476, %v626
  %v659 = vadd.f32 %v479, %v629
  %v660 = vadd.f32 %v484, %v634
  %v661 = vadd.f32 %v487, %v637
  %v662 = vadd.f32 %v492, %v642
  %v663 = vadd.f32 %v495, %v645
  %v664 = vld [vmem:[%s181] sm:$0xff]
  %v665 = vld [vmem:[%s181 + $0x10] sm:$0xff]
  %v666 = vld [vmem:[%s181 + $0x20] sm:$0xff]
  %v667 = vld [vmem:[%s181 + $0x30] sm:$0xff]
  %v668 = vld [vmem:[%s181 + $0x40] sm:$0xff]
  %v669 = vld [vmem:[%s181 + $0x50] sm:$0xff]
  %v670 = vld [vmem:[%s181 + $0x60] sm:$0xff]
  %v671 = vld [vmem:[%s181 + $0x70] sm:$0xff]
  %v672 = vld [vmem:[%s181 + $0xa0] sm:$0xff]
  %v673 = vld [vmem:[%s181 + $0xb0] sm:$0xff]
  %v674 = vld [vmem:[%s181 + $0xc0] sm:$0xff]
  %v675 = vld [vmem:[%s181 + $0xd0] sm:$0xff]
  %v676 = vld [vmem:[%s181 + $0xe0] sm:$0xff]
  %v677 = vld [vmem:[%s181 + $0xf0] sm:$0xff]
  %v678 = vld [vmem:[%s181 + $0x100] sm:$0xff]
  %v679 = vld [vmem:[%s181 + $0x110] sm:$0xff]
  %v680 = vpack.c.bf16 %v665, %v664
  %v681 = vpack.c.bf16 %v667, %v666
  %v682 = vpack.c.bf16 %v669, %v668
  %v683 = vpack.c.bf16 %v671, %v670
  %v684 = vpack.c.bf16 %v673, %v672
  %v685 = vpack.c.bf16 %v675, %v674
  %v686 = vpack.c.bf16 %v677, %v676
  %v687 = vpack.c.bf16 %v679, %v678
  %s688 = scalar_lea.vmem %s3, 12
  %v689 = vld [vmem:[%s688] sm:$0xf]
  %v691 = vsel %vm139, %v680, 0
  %v694 = vsel %vm139, %v681, 0
  %v697 = vsel %vm139, %v682, 0
  %v700 = vsel %vm139, %v683, 0
  %v703 = vsel %vm139, %v684, 0
  %v706 = vsel %vm139, %v685, 0
  %v709 = vsel %vm139, %v686, 0
  %v712 = vsel %vm139, %v687, 0
  %v715 = vsel %vm273, %v689, 0
  %717 = vmatprep.subr.bf16.mxu0 0
  %718 = vmatpush1.bf16.msra.mxu0 %v715
  %719 = vmatprep.subr.bf16.mxu0 0
  %720 = vmatpush1.bf16.msra.mxu0 0
  %721 = vmatprep.subr.bf16.mxu0 0
  %722 = vmatpush1.bf16.msra.mxu0 0
  %723 = vmatprep.subr.bf16.mxu0 0
  %724 = vmatpush1.bf16.msra.mxu0 0
  %725 = vmatprep.subr.bf16.mxu0 0
  %726 = vmatpush1.bf16.msra.mxu0 0
  %727 = vmatprep.subr.bf16.mxu0 0
  %728 = vmatpush1.bf16.msra.mxu0 0
  %729 = vmatprep.subr.bf16.mxu0 0
  %730 = vmatpush1.bf16.msra.mxu0 0
  %731 = vmatprep.subr.bf16.mxu0 0
  %732 = vmatpush1.bf16.msra.mxu0 0
  %733 = vmatprep.subr.bf16.mxu0 0
  %734 = vmatpush1.bf16.msra.mxu0 0
  %735 = vmatprep.subr.bf16.mxu0 0
  %736 = vmatpush1.bf16.msra.mxu0 0
  %737 = vmatprep.subr.bf16.mxu0 0
  %738 = vmatpush1.bf16.msra.mxu0 0
  %739 = vmatprep.subr.bf16.mxu0 0
  %740 = vmatpush1.bf16.msra.mxu0 0
  %741 = vmatprep.subr.bf16.mxu0 0
  %742 = vmatpush1.bf16.msra.mxu0 0
  %743 = vmatprep.subr.bf16.mxu0 0
  %744 = vmatpush1.bf16.msra.mxu0 0
  %745 = vmatprep.subr.bf16.mxu0 0
  %746 = vmatpush1.bf16.msra.mxu0 0
  %747 = vmatprep.subr.bf16.mxu0 0
  %748 = vmatpush1.bf16.msra.mxu0 0
  %749 = vmatprep.mubr.bf16.mxu0 0
  %750 = vmatmul.mubr.bf16.gmra.mrb[0].mxu0 %v691
  %v751 = vpop.f32.mrb[0].mxu0
  %v752 = vadd.f32 0.0, %v751
  %v753 = vpop.f32.mrb[0].mxu0
  %v754 = vpop.f32.mrb[0].mxu0
  %v755 = vadd.f32 0.0, %v754
  %v756 = vpop.f32.mrb[0].mxu0
  %757 = vmatprep.mubr.bf16.mxu0 0
  %758 = vmatmul.mubr.bf16.gmra.mrb[0].mxu0 %v694
  %v759 = vpop.f32.mrb[0].mxu0
  %v760 = vadd.f32 0.0, %v759
  %v761 = vpop.f32.mrb[0].mxu0
  %v762 = vpop.f32.mrb[0].mxu0
  %v763 = vadd.f32 0.0, %v762
  %v764 = vpop.f32.mrb[0].mxu0
  %765 = vmatprep.mubr.bf16.mxu0 0
  %766 = vmatmul.mubr.bf16.gmra.mrb[0].mxu0 %v697
  %v767 = vpop.f32.mrb[0].mxu0
  %v768 = vadd.f32 0.0, %v767
  %v769 = vpop.f32.mrb[0].mxu0
  %v770 = vpop.f32.mrb[0].mxu0
  %v771 = vadd.f32 0.0, %v770
  %v772 = vpop.f32.mrb[0].mxu0
  %773 = vmatprep.mubr.bf16.mxu0 0
  %774 = vmatmul.mubr.bf16.gmra.mrb[0].mxu0 %v700
  %v775 = vpop.f32.mrb[0].mxu0
  %v776 = vadd.f32 0.0, %v775
  %v777 = vpop.f32.mrb[0].mxu0
  %v778 = vpop.f32.mrb[0].mxu0
  %v779 = vadd.f32 0.0, %v778
  %v780 = vpop.f32.mrb[0].mxu0
  %781 = vmatprep.mubr.bf16.mxu0 0
  %782 = vmatmul.mubr.bf16.gmra.mrb[0].mxu0 %v703
  %v783 = vpop.f32.mrb[0].mxu0
  %v784 = vadd.f32 0.0, %v783
  %v785 = vpop.f32.mrb[0].mxu0
  %v786 = vpop.f32.mrb[0].mxu0
  %v787 = vadd.f32 0.0, %v786
  %v788 = vpop.f32.mrb[0].mxu0
  %789 = vmatprep.mubr.bf16.mxu0 0
  %790 = vmatmul.mubr.bf16.gmra.mrb[0].mxu0 %v706
  %v791 = vpop.f32.mrb[0].mxu0
  %v792 = vadd.f32 0.0, %v791
  %v793 = vpop.f32.mrb[0].mxu0
  %v794 = vpop.f32.mrb[0].mxu0
  %v795 = vadd.f32 0.0, %v794
  %v796 = vpop.f32.mrb[0].mxu0
  %797 = vmatprep.mubr.bf16.mxu0 0
  %798 = vmatmul.mubr.bf16.gmra.mrb[0].mxu0 %v709
  %v799 = vpop.f32.mrb[0].mxu0
  %v800 = vadd.f32 0.0, %v799
  %v801 = vpop.f32.mrb[0].mxu0
  %v802 = vpop.f32.mrb[0].mxu0
  %v803 = vadd.f32 0.0, %v802
  %v804 = vpop.f32.mrb[0].mxu0
  %805 = vmatprep.mubr.bf16.mxu0 0
  %806 = vmatmul.mubr.bf16.gmra.mrb[0].mxu0 %v712
  %v807 = vpop.f32.mrb[0].mxu0
  %v808 = vadd.f32 0.0, %v807
  %v809 = vpop.f32.mrb[0].mxu0
  %v810 = vpop.f32.mrb[0].mxu0
  %v811 = vadd.f32 0.0, %v810
  %v812 = vpop.f32.mrb[0].mxu0
  %813 = vdwg.mxu0
  %v814 = vadd.f32 %v648, %v752
  %v815 = vadd.f32 %v649, %v755
  %v816 = vadd.f32 %v650, %v760
  %v817 = vadd.f32 %v651, %v763
  %v818 = vadd.f32 %v652, %v768
  %v819 = vadd.f32 %v653, %v771
  %v820 = vadd.f32 %v654, %v776
  %v821 = vadd.f32 %v655, %v779
  %v822 = vadd.f32 %v656, %v784
  %v823 = vadd.f32 %v657, %v787
  %v824 = vadd.f32 %v658, %v792
  %v825 = vadd.f32 %v659, %v795
  %v826 = vadd.f32 %v660, %v800
  %v827 = vadd.f32 %v661, %v803
  %v828 = vadd.f32 %v662, %v808
  %v829 = vadd.f32 %v663, %v811
  %v830 = vld [vmem:[%s181 + $0x1] sm:$0xff]
  %v831 = vld [vmem:[%s181 + $0x11] sm:$0xff]
  %v832 = vld [vmem:[%s181 + $0x21] sm:$0xff]
  %v833 = vld [vmem:[%s181 + $0x31] sm:$0xff]
  %v834 = vld [vmem:[%s181 + $0x41] sm:$0xff]
  %v835 = vld [vmem:[%s181 + $0x51] sm:$0xff]
  %v836 = vld [vmem:[%s181 + $0x61] sm:$0xff]
  %v837 = vld [vmem:[%s181 + $0x71] sm:$0xff]
  %v838 = vld [vmem:[%s181 + $0xa1] sm:$0xff]
  %v839 = vld [vmem:[%s181 + $0xb1] sm:$0xff]
  %v840 = vld [vmem:[%s181 + $0xc1] sm:$0xff]
  %v841 = vld [vmem:[%s181 + $0xd1] sm:$0xff]
  %v842 = vld [vmem:[%s181 + $0xe1] sm:$0xff]
  %v843 = vld [vmem:[%s181 + $0xf1] sm:$0xff]
  %v844 = vld [vmem:[%s181 + $0x101] sm:$0xff]
  %v845 = vld [vmem:[%s181 + $0x111] sm:$0xff]
  %v846 = vpack.c.bf16 %v831, %v830
  %v847 = vpack.c.bf16 %v833, %v832
  %v848 = vpack.c.bf16 %v835, %v834
  %v849 = vpack.c.bf16 %v837, %v836
  %v850 = vpack.c.bf16 %v839, %v838
  %v851 = vpack.c.bf16 %v841, %v840
  %v852 = vpack.c.bf16 %v843, %v842
  %v853 = vpack.c.bf16 %v845, %v844
  %s854 = scalar_lea.vmem %s3, 16
  %v855 = vld [vmem:[%s854] sm:$0xf]
  %v857 = vsel %vm139, %v846, 0
  %v860 = vsel %vm139, %v847, 0
  %v863 = vsel %vm139, %v848, 0
  %v866 = vsel %vm139, %v849, 0
  %v869 = vsel %vm139, %v850, 0
  %v872 = vsel %vm139, %v851, 0
  %v875 = vsel %vm139, %v852, 0
  %v878 = vsel %vm139, %v853, 0
  %v881 = vsel %vm273, %v855, 0
  %883 = vmatprep.subr.bf16.mxu0 0
  %884 = vmatpush1.bf16.msra.mxu0 %v881
  %885 = vmatprep.subr.bf16.mxu0 0
  %886 = vmatpush1.bf16.msra.mxu0 0
  %887 = vmatprep.subr.bf16.mxu0 0
  %888 = vmatpush1.bf16.msra.mxu0 0
  %889 = vmatprep.subr.bf16.mxu0 0
  %890 = vmatpush1.bf16.msra.mxu0 0
  %891 = vmatprep.subr.bf16.mxu0 0
  %892 = vmatpush1.bf16.msra.mxu0 0
  %893 = vmatprep.subr.bf16.mxu0 0
  %894 = vmatpush1.bf16.msra.mxu0 0
  %895 = vmatprep.subr.bf16.mxu0 0
  %896 = vmatpush1.bf16.msra.mxu0 0
  %897 = vmatprep.subr.bf16.mxu0 0
  %898 = vmatpush1.bf16.msra.mxu0 0
  %899 = vmatprep.subr.bf16.mxu0 0
  %900 = vmatpush1.bf16.msra.mxu0 0
  %901 = vmatprep.subr.bf16.mxu0 0
  %902 = vmatpush1.bf16.msra.mxu0 0
  %903 = vmatprep.subr.bf16.mxu0 0
  %904 = vmatpush1.bf16.msra.mxu0 0
  %905 = vmatprep.subr.bf16.mxu0 0
  %906 = vmatpush1.bf16.msra.mxu0 0
  %907 = vmatprep.subr.bf16.mxu0 0
  %908 = vmatpush1.bf16.msra.mxu0 0
  %909 = vmatprep.subr.bf16.mxu0 0
  %910 = vmatpush1.bf16.msra.mxu0 0
  %911 = vmatprep.subr.bf16.mxu0 0
  %912 = vmatpush1.bf16.msra.mxu0 0
  %913 = vmatprep.subr.bf16.mxu0 0
  %914 = vmatpush1.bf16.msra.mxu0 0
  %915 = vmatprep.mubr.bf16.mxu0 0
  %916 = vmatmul.mubr.bf16.gmra.mrb[0].mxu0 %v857
  %v917 = vpop.f32.mrb[0].mxu0
  %v918 = vadd.f32 0.0, %v917
  %v919 = vpop.f32.mrb[0].mxu0
  %v920 = vpop.f32.mrb[0].mxu0
  %v921 = vadd.f32 0.0, %v920
  %v922 = vpop.f32.mrb[0].mxu0
  %923 = vmatprep.mubr.bf16.mxu0 0
  %924 = vmatmul.mubr.bf16.gmra.mrb[0].mxu0 %v860
  %v925 = vpop.f32.mrb[0].mxu0
  %v926 = vadd.f32 0.0, %v925
  %v927 = vpop.f32.mrb[0].mxu0
  %v928 = vpop.f32.mrb[0].mxu0
  %v929 = vadd.f32 0.0, %v928
  %v930 = vpop.f32.mrb[0].mxu0
  %931 = vmatprep.mubr.bf16.mxu0 0
  %932 = vmatmul.mubr.bf16.gmra.mrb[0].mxu0 %v863
  %v933 = vpop.f32.mrb[0].mxu0
  %v934 = vadd.f32 0.0, %v933
  %v935 = vpop.f32.mrb[0].mxu0
  %v936 = vpop.f32.mrb[0].mxu0
  %v937 = vadd.f32 0.0, %v936
  %v938 = vpop.f32.mrb[0].mxu0
  %939 = vmatprep.mubr.bf16.mxu0 0
  %940 = vmatmul.mubr.bf16.gmra.mrb[0].mxu0 %v866
  %v941 = vpop.f32.mrb[0].mxu0
  %v942 = vadd.f32 0.0, %v941
  %v943 = vpop.f32.mrb[0].mxu0
  %v944 = vpop.f32.mrb[0].mxu0
  %v945 = vadd.f32 0.0, %v944
  %v946 = vpop.f32.mrb[0].mxu0
  %947 = vmatprep.mubr.bf16.mxu0 0
  %948 = vmatmul.mubr.bf16.gmra.mrb[0].mxu0 %v869
  %v949 = vpop.f32.mrb[0].mxu0
  %v950 = vadd.f32 0.0, %v949
  %v951 = vpop.f32.mrb[0].mxu0
  %v952 = vpop.f32.mrb[0].mxu0
  %v953 = vadd.f32 0.0, %v952
  %v954 = vpop.f32.mrb[0].mxu0
  %955 = vmatprep.mubr.bf16.mxu0 0
  %956 = vmatmul.mubr.bf16.gmra.mrb[0].mxu0 %v872
  %v957 = vpop.f32.mrb[0].mxu0
  %v958 = vadd.f32 0.0, %v957
  %v959 = vpop.f32.mrb[0].mxu0
  %v960 = vpop.f32.mrb[0].mxu0
  %v961 = vadd.f32 0.0, %v960
  %v962 = vpop.f32.mrb[0].mxu0
  %963 = vmatprep.mubr.bf16.mxu0 0
  %964 = vmatmul.mubr.bf16.gmra.mrb[0].mxu0 %v875
  %v965 = vpop.f32.mrb[0].mxu0
  %v966 = vadd.f32 0.0, %v965
  %v967 = vpop.f32.mrb[0].mxu0
  %v968 = vpop.f32.mrb[0].mxu0
  %v969 = vadd.f32 0.0, %v968
  %v970 = vpop.f32.mrb[0].mxu0
  %971 = vmatprep.mubr.bf16.mxu0 0
  %972 = vmatmul.mubr.bf16.gmra.mrb[0].mxu0 %v878
  %v973 = vpop.f32.mrb[0].mxu0
  %v974 = vadd.f32 0.0, %v973
  %v975 = vpop.f32.mrb[0].mxu0
  %v976 = vpop.f32.mrb[0].mxu0
  %v977 = vadd.f32 0.0, %v976
  %v978 = vpop.f32.mrb[0].mxu0
  %979 = vdwg.mxu0
  %v980 = vadd.f32 %v814, %v918
  %v981 = vadd.f32 %v815, %v921
  %v982 = vadd.f32 %v816, %v926
  %v983 = vadd.f32 %v817, %v929
  %v984 = vadd.f32 %v818, %v934
  %v985 = vadd.f32 %v819, %v937
  %v986 = vadd.f32 %v820, %v942
  %v987 = vadd.f32 %v821, %v945
  %v988 = vadd.f32 %v822, %v950
  %v989 = vadd.f32 %v823, %v953
  %v990 = vadd.f32 %v824, %v958
  %v991 = vadd.f32 %v825, %v961
  %v992 = vadd.f32 %v826, %v966
  %v993 = vadd.f32 %v827, %v969
  %v994 = vadd.f32 %v828, %v974
  %v995 = vadd.f32 %v829, %v977
  %v996 = vld [vmem:[%s181 + $0x2] sm:$0xff]
  %v997 = vld [vmem:[%s181 + $0x12] sm:$0xff]
  %v998 = vld [vmem:[%s181 + $0x22] sm:$0xff]
  %v999 = vld [vmem:[%s181 + $0x32] sm:$0xff]
  %v1000 = vld [vmem:[%s181 + $0x42] sm:$0xff]
  %v1001 = vld [vmem:[%s181 + $0x52] sm:$0xff]
  %v1002 = vld [vmem:[%s181 + $0x62] sm:$0xff]
  %v1003 = vld [vmem:[%s181 + $0x72] sm:$0xff]
  %v1004 = vld [vmem:[%s181 + $0xa2] sm:$0xff]
  %v1005 = vld [vmem:[%s181 + $0xb2] sm:$0xff]
  %v1006 = vld [vmem:[%s181 + $0xc2] sm:$0xff]
  %v1007 = vld [vmem:[%s181 + $0xd2] sm:$0xff]
  %v1008 = vld [vmem:[%s181 + $0xe2] sm:$0xff]
  %v1009 = vld [vmem:[%s181 + $0xf2] sm:$0xff]
  %v1010 = vld [vmem:[%s181 + $0x102] sm:$0xff]
  %v1011 = vld [vmem:[%s181 + $0x112] sm:$0xff]
  %v1012 = vpack.c.bf16 %v997, %v996
  %v1013 = vpack.c.bf16 %v999, %v998
  %v1014 = vpack.c.bf16 %v1001, %v1000
  %v1015 = vpack.c.bf16 %v1003, %v1002
  %v1016 = vpack.c.bf16 %v1005, %v1004
  %v1017 = vpack.c.bf16 %v1007, %v1006
  %v1018 = vpack.c.bf16 %v1009, %v1008
  %v1019 = vpack.c.bf16 %v1011, %v1010
  %s1020 = scalar_lea.vmem %s3, 20
  %v1021 = vld [vmem:[%s1020] sm:$0xf]
  %v1023 = vsel %vm139, %v1012, 0
  %v1026 = vsel %vm139, %v1013, 0
  %v1029 = vsel %vm139, %v1014, 0
  %v1032 = vsel %vm139, %v1015, 0
  %v1035 = vsel %vm139, %v1016, 0
  %v1038 = vsel %vm139, %v1017, 0
  %v1041 = vsel %vm139, %v1018, 0
  %v1044 = vsel %vm139, %v1019, 0
  %v1047 = vsel %vm273, %v1021, 0
  %1049 = vmatprep.subr.bf16.mxu0 0
  %1050 = vmatpush1.bf16.msra.mxu0 %v1047
  %1051 = vmatprep.subr.bf16.mxu0 0
  %1052 = vmatpush1.bf16.msra.mxu0 0
  %1053 = vmatprep.subr.bf16.mxu0 0
  %1054 = vmatpush1.bf16.msra.mxu0 0
  %1055 = vmatprep.subr.bf16.mxu0 0
  %1056 = vmatpush1.bf16.msra.mxu0 0
  %1057 = vmatprep.subr.bf16.mxu0 0
  %1058 = vmatpush1.bf16.msra.mxu0 0
  %1059 = vmatprep.subr.bf16.mxu0 0
  %1060 = vmatpush1.bf16.msra.mxu0 0
  %1061 = vmatprep.subr.bf16.mxu0 0
  %1062 = vmatpush1.bf16.msra.mxu0 0
  %1063 = vmatprep.subr.bf16.mxu0 0
  %1064 = vmatpush1.bf16.msra.mxu0 0
  %1065 = vmatprep.subr.bf16.mxu0 0
  %1066 = vmatpush1.bf16.msra.mxu0 0
  %1067 = vmatprep.subr.bf16.mxu0 0
  %1068 = vmatpush1.bf16.msra.mxu0 0
  %1069 = vmatprep.subr.bf16.mxu0 0
  %1070 = vmatpush1.bf16.msra.mxu0 0
  %1071 = vmatprep.subr.bf16.mxu0 0
  %1072 = vmatpush1.bf16.msra.mxu0 0
  %1073 = vmatprep.subr.bf16.mxu0 0
  %1074 = vmatpush1.bf16.msra.mxu0 0
  %1075 = vmatprep.subr.bf16.mxu0 0
  %1076 = vmatpush1.bf16.msra.mxu0 0
  %1077 = vmatprep.subr.bf16.mxu0 0
  %1078 = vmatpush1.bf16.msra.mxu0 0
  %1079 = vmatprep.subr.bf16.mxu0 0
  %1080 = vmatpush1.bf16.msra.mxu0 0
  %1081 = vmatprep.mubr.bf16.mxu0 0
  %1082 = vmatmul.mubr.bf16.gmra.mrb[0].mxu0 %v1023
  %v1083 = vpop.f32.mrb[0].mxu0
  %v1084 = vadd.f32 0.0, %v1083
  %v1085 = vpop.f32.mrb[0].mxu0
  %v1086 = vpop.f32.mrb[0].mxu0
  %v1087 = vadd.f32 0.0, %v1086
  %v1088 = vpop.f32.mrb[0].mxu0
  %1089 = vmatprep.mubr.bf16.mxu0 0
  %1090 = vmatmul.mubr.bf16.gmra.mrb[0].mxu0 %v1026
  %v1091 = vpop.f32.mrb[0].mxu0
  %v1092 = vadd.f32 0.0, %v1091
  %v1093 = vpop.f32.mrb[0].mxu0
  %v1094 = vpop.f32.mrb[0].mxu0
  %v1095 = vadd.f32 0.0, %v1094
  %v1096 = vpop.f32.mrb[0].mxu0
  %1097 = vmatprep.mubr.bf16.mxu0 0
  %1098 = vmatmul.mubr.bf16.gmra.mrb[0].mxu0 %v1029
  %v1099 = vpop.f32.mrb[0].mxu0
  %v1100 = vadd.f32 0.0, %v1099
  %v1101 = vpop.f32.mrb[0].mxu0
  %v1102 = vpop.f32.mrb[0].mxu0
  %v1103 = vadd.f32 0.0, %v1102
  %v1104 = vpop.f32.mrb[0].mxu0
  %1105 = vmatprep.mubr.bf16.mxu0 0
  %1106 = vmatmul.mubr.bf16.gmra.mrb[0].mxu0 %v1032
  %v1107 = vpop.f32.mrb[0].mxu0
  %v1108 = vadd.f32 0.0, %v1107
  %v1109 = vpop.f32.mrb[0].mxu0
  %v1110 = vpop.f32.mrb[0].mxu0
  %v1111 = vadd.f32 0.0, %v1110
  %v1112 = vpop.f32.mrb[0].mxu0
  %1113 = vmatprep.mubr.bf16.mxu0 0
  %1114 = vmatmul.mubr.bf16.gmra.mrb[0].mxu0 %v1035
  %v1115 = vpop.f32.mrb[0].mxu0
  %v1116 = vadd.f32 0.0, %v1115
  %v1117 = vpop.f32.mrb[0].mxu0
  %v1118 = vpop.f32.mrb[0].mxu0
  %v1119 = vadd.f32 0.0, %v1118
  %v1120 = vpop.f32.mrb[0].mxu0
  %1121 = vmatprep.mubr.bf16.mxu0 0
  %1122 = vmatmul.mubr.bf16.gmra.mrb[0].mxu0 %v1038
  %v1123 = vpop.f32.mrb[0].mxu0
  %v1124 = vadd.f32 0.0, %v1123
  %v1125 = vpop.f32.mrb[0].mxu0
  %v1126 = vpop.f32.mrb[0].mxu0
  %v1127 = vadd.f32 0.0, %v1126
  %v1128 = vpop.f32.mrb[0].mxu0
  %1129 = vmatprep.mubr.bf16.mxu0 0
  %1130 = vmatmul.mubr.bf16.gmra.mrb[0].mxu0 %v1041
  %v1131 = vpop.f32.mrb[0].mxu0
  %v1132 = vadd.f32 0.0, %v1131
  %v1133 = vpop.f32.mrb[0].mxu0
  %v1134 = vpop.f32.mrb[0].mxu0
  %v1135 = vadd.f32 0.0, %v1134
  %v1136 = vpop.f32.mrb[0].mxu0
  %1137 = vmatprep.mubr.bf16.mxu0 0
  %1138 = vmatmul.mubr.bf16.gmra.mrb[0].mxu0 %v1044
  %v1139 = vpop.f32.mrb[0].mxu0
  %v1140 = vadd.f32 0.0, %v1139
  %v1141 = vpop.f32.mrb[0].mxu0
  %v1142 = vpop.f32.mrb[0].mxu0
  %v1143 = vadd.f32 0.0, %v1142
  %v1144 = vpop.f32.mrb[0].mxu0
  %1145 = vdwg.mxu0
  %v1146 = vadd.f32 %v980, %v1084
  %v1147 = vadd.f32 %v981, %v1087
  %v1148 = vadd.f32 %v982, %v1092
  %v1149 = vadd.f32 %v983, %v1095
  %v1150 = vadd.f32 %v984, %v1100
  %v1151 = vadd.f32 %v985, %v1103
  %v1152 = vadd.f32 %v986, %v1108
  %v1153 = vadd.f32 %v987, %v1111
  %v1154 = vadd.f32 %v988, %v1116
  %v1155 = vadd.f32 %v989, %v1119
  %v1156 = vadd.f32 %v990, %v1124
  %v1157 = vadd.f32 %v991, %v1127
  %v1158 = vadd.f32 %v992, %v1132
  %v1159 = vadd.f32 %v993, %v1135
  %v1160 = vadd.f32 %v994, %v1140
  %v1161 = vadd.f32 %v995, %v1143
  %s1162 = scalar_lea.vmem [#allocation2], 32
  %v1163 = vld [vmem:[%s1162] sm:$0xff]
  %v1164 = vld [vmem:[%s1162 + $0x10] sm:$0xff]
  %v1165 = vld [vmem:[%s1162 + $0x20] sm:$0xff]
  %v1166 = vld [vmem:[%s1162 + $0x30] sm:$0xff]
  %v1167 = vld [vmem:[%s1162 + $0x40] sm:$0xff]
  %v1168 = vld [vmem:[%s1162 + $0x50] sm:$0xff]
  %v1169 = vld [vmem:[%s1162 + $0x60] sm:$0xff]
  %v1170 = vld [vmem:[%s1162 + $0x70] sm:$0xff]
  %v1171 = vld [vmem:[%s1162 + $0xa0] sm:$0xff]
  %v1172 = vld [vmem:[%s1162 + $0xb0] sm:$0xff]
  %v1173 = vld [vmem:[%s1162 + $0xc0] sm:$0xff]
  %v1174 = vld [vmem:[%s1162 + $0xd0] sm:$0xff]
  %v1175 = vld [vmem:[%s1162 + $0xe0] sm:$0xff]
  %v1176 = vld [vmem:[%s1162 + $0xf0] sm:$0xff]
  %v1177 = vld [vmem:[%s1162 + $0x100] sm:$0xff]
  %v1178 = vld [vmem:[%s1162 + $0x110] sm:$0xff]
  %v1179 = vpack.c.bf16 %v1164, %v1163
  %v1180 = vpack.c.bf16 %v1166, %v1165
  %v1181 = vpack.c.bf16 %v1168, %v1167
  %v1182 = vpack.c.bf16 %v1170, %v1169
  %v1183 = vpack.c.bf16 %v1172, %v1171
  %v1184 = vpack.c.bf16 %v1174, %v1173
  %v1185 = vpack.c.bf16 %v1176, %v1175
  %v1186 = vpack.c.bf16 %v1178, %v1177
  %s1187 = scalar_lea.vmem %s3, 24
  %v1188 = vld [vmem:[%s1187] sm:$0xf]
  %v1190 = vsel %vm139, %v1179, 0
  %v1193 = vsel %vm139, %v1180, 0
  %v1196 = vsel %vm139, %v1181, 0
  %v1199 = vsel %vm139, %v1182, 0
  %v1202 = vsel %vm139, %v1183, 0
  %v1205 = vsel %vm139, %v1184, 0
  %v1208 = vsel %vm139, %v1185, 0
  %v1211 = vsel %vm139, %v1186, 0
  %v1214 = vsel %vm273, %v1188, 0
  %1216 = vmatprep.subr.bf16.mxu0 0
  %1217 = vmatpush1.bf16.msra.mxu0 %v1214
  %1218 = vmatprep.subr.bf16.mxu0 0
  %1219 = vmatpush1.bf16.msra.mxu0 0
  %1220 = vmatprep.subr.bf16.mxu0 0
  %1221 = vmatpush1.bf16.msra.mxu0 0
  %1222 = vmatprep.subr.bf16.mxu0 0
  %1223 = vmatpush1.bf16.msra.mxu0 0
  %1224 = vmatprep.subr.bf16.mxu0 0
  %1225 = vmatpush1.bf16.msra.mxu0 0
  %1226 = vmatprep.subr.bf16.mxu0 0
  %1227 = vmatpush1.bf16.msra.mxu0 0
  %1228 = vmatprep.subr.bf16.mxu0 0
  %1229 = vmatpush1.bf16.msra.mxu0 0
  %1230 = vmatprep.subr.bf16.mxu0 0
  %1231 = vmatpush1.bf16.msra.mxu0 0
  %1232 = vmatprep.subr.bf16.mxu0 0
  %1233 = vmatpush1.bf16.msra.mxu0 0
  %1234 = vmatprep.subr.bf16.mxu0 0
  %1235 = vmatpush1.bf16.msra.mxu0 0
  %1236 = vmatprep.subr.bf16.mxu0 0
  %1237 = vmatpush1.bf16.msra.mxu0 0
  %1238 = vmatprep.subr.bf16.mxu0 0
  %1239 = vmatpush1.bf16.msra.mxu0 0
  %1240 = vmatprep.subr.bf16.mxu0 0
  %1241 = vmatpush1.bf16.msra.mxu0 0
  %1242 = vmatprep.subr.bf16.mxu0 0
  %1243 = vmatpush1.bf16.msra.mxu0 0
  %1244 = vmatprep.subr.bf16.mxu0 0
  %1245 = vmatpush1.bf16.msra.mxu0 0
  %1246 = vmatprep.subr.bf16.mxu0 0
  %1247 = vmatpush1.bf16.msra.mxu0 0
  %1248 = vmatprep.mubr.bf16.mxu0 0
  %1249 = vmatmul.mubr.bf16.gmra.mrb[0].mxu0 %v1190
  %v1250 = vpop.f32.mrb[0].mxu0
  %v1251 = vadd.f32 0.0, %v1250
  %v1252 = vpop.f32.mrb[0].mxu0
  %v1253 = vpop.f32.mrb[0].mxu0
  %v1254 = vadd.f32 0.0, %v1253
  %v1255 = vpop.f32.mrb[0].mxu0
  %1256 = vmatprep.mubr.bf16.mxu0 0
  %1257 = vmatmul.mubr.bf16.gmra.mrb[0].mxu0 %v1193
  %v1258 = vpop.f32.mrb[0].mxu0
  %v1259 = vadd.f32 0.0, %v1258
  %v1260 = vpop.f32.mrb[0].mxu0
  %v1261 = vpop.f32.mrb[0].mxu0
  %v1262 = vadd.f32 0.0, %v1261
  %v1263 = vpop.f32.mrb[0].mxu0
  %1264 = vmatprep.mubr.bf16.mxu0 0
  %1265 = vmatmul.mubr.bf16.gmra.mrb[0].mxu0 %v1196
  %v1266 = vpop.f32.mrb[0].mxu0
  %v1267 = vadd.f32 0.0, %v1266
  %v1268 = vpop.f32.mrb[0].mxu0
  %v1269 = vpop.f32.mrb[0].mxu0
  %v1270 = vadd.f32 0.0, %v1269
  %v1271 = vpop.f32.mrb[0].mxu0
  %1272 = vmatprep.mubr.bf16.mxu0 0
  %1273 = vmatmul.mubr.bf16.gmra.mrb[0].mxu0 %v1199
  %v1274 = vpop.f32.mrb[0].mxu0
  %v1275 = vadd.f32 0.0, %v1274
  %v1276 = vpop.f32.mrb[0].mxu0
  %v1277 = vpop.f32.mrb[0].mxu0
  %v1278 = vadd.f32 0.0, %v1277
  %v1279 = vpop.f32.mrb[0].mxu0
  %1280 = vmatprep.mubr.bf16.mxu0 0
  %1281 = vmatmul.mubr.bf16.gmra.mrb[0].mxu0 %v1202
  %v1282 = vpop.f32.mrb[0].mxu0
  %v1283 = vadd.f32 0.0, %v1282
  %v1284 = vpop.f32.mrb[0].mxu0
  %v1285 = vpop.f32.mrb[0].mxu0
  %v1286 = vadd.f32 0.0, %v1285
  %v1287 = vpop.f32.mrb[0].mxu0
  %1288 = vmatprep.mubr.bf16.mxu0 0
  %1289 = vmatmul.mubr.bf16.gmra.mrb[0].mxu0 %v1205
  %v1290 = vpop.f32.mrb[0].mxu0
  %v1291 = vadd.f32 0.0, %v1290
  %v1292 = vpop.f32.mrb[0].mxu0
  %v1293 = vpop.f32.mrb[0].mxu0
  %v1294 = vadd.f32 0.0, %v1293
  %v1295 = vpop.f32.mrb[0].mxu0
  %1296 = vmatprep.mubr.bf16.mxu0 0
  %1297 = vmatmul.mubr.bf16.gmra.mrb[0].mxu0 %v1208
  %v1298 = vpop.f32.mrb[0].mxu0
  %v1299 = vadd.f32 0.0, %v1298
  %v1300 = vpop.f32.mrb[0].mxu0
  %v1301 = vpop.f32.mrb[0].mxu0
  %v1302 = vadd.f32 0.0, %v1301
  %v1303 = vpop.f32.mrb[0].mxu0
  %1304 = vmatprep.mubr.bf16.mxu0 0
  %1305 = vmatmul.mubr.bf16.gmra.mrb[0].mxu0 %v1211
  %v1306 = vpop.f32.mrb[0].mxu0
  %v1307 = vadd.f32 0.0, %v1306
  %v1308 = vpop.f32.mrb[0].mxu0
  %v1309 = vpop.f32.mrb[0].mxu0
  %v1310 = vadd.f32 0.0, %v1309
  %v1311 = vpop.f32.mrb[0].mxu0
  %1312 = vdwg.mxu0
  %v1313 = vadd.f32 %v1146, %v1251
  %v1314 = vadd.f32 %v1147, %v1254
  %v1315 = vadd.f32 %v1148, %v1259
  %v1316 = vadd.f32 %v1149, %v1262
  %v1317 = vadd.f32 %v1150, %v1267
  %v1318 = vadd.f32 %v1151, %v1270
  %v1319 = vadd.f32 %v1152, %v1275
  %v1320 = vadd.f32 %v1153, %v1278
  %v1321 = vadd.f32 %v1154, %v1283
  %v1322 = vadd.f32 %v1155, %v1286
  %v1323 = vadd.f32 %v1156, %v1291
  %v1324 = vadd.f32 %v1157, %v1294
  %v1325 = vadd.f32 %v1158, %v1299
  %v1326 = vadd.f32 %v1159, %v1302
  %v1327 = vadd.f32 %v1160, %v1307
  %v1328 = vadd.f32 %v1161, %v1310
  %v1329 = vld [vmem:[%s1162 + $0x1] sm:$0xff]
  %v1330 = vld [vmem:[%s1162 + $0x11] sm:$0xff]
  %v1331 = vld [vmem:[%s1162 + $0x21] sm:$0xff]
  %v1332 = vld [vmem:[%s1162 + $0x31] sm:$0xff]
  %v1333 = vld [vmem:[%s1162 + $0x41] sm:$0xff]
  %v1334 = vld [vmem:[%s1162 + $0x51] sm:$0xff]
  %v1335 = vld [vmem:[%s1162 + $0x61] sm:$0xff]
  %v1336 = vld [vmem:[%s1162 + $0x71] sm:$0xff]
  %v1337 = vld [vmem:[%s1162 + $0xa1] sm:$0xff]
  %v1338 = vld [vmem:[%s1162 + $0xb1] sm:$0xff]
  %v1339 = vld [vmem:[%s1162 + $0xc1] sm:$0xff]
  %v1340 = vld [vmem:[%s1162 + $0xd1] sm:$0xff]
  %v1341 = vld [vmem:[%s1162 + $0xe1] sm:$0xff]
  %v1342 = vld [vmem:[%s1162 + $0xf1] sm:$0xff]
  %v1343 = vld [vmem:[%s1162 + $0x101] sm:$0xff]
  %v1344 = vld [vmem:[%s1162 + $0x111] sm:$0xff]
  %v1345 = vpack.c.bf16 %v1330, %v1329
  %v1346 = vpack.c.bf16 %v1332, %v1331
  %v1347 = vpack.c.bf16 %v1334, %v1333
  %v1348 = vpack.c.bf16 %v1336, %v1335
  %v1349 = vpack.c.bf16 %v1338, %v1337
  %v1350 = vpack.c.bf16 %v1340, %v1339
  %v1351 = vpack.c.bf16 %v1342, %v1341
  %v1352 = vpack.c.bf16 %v1344, %v1343
  %s1353 = scalar_lea.vmem %s3, 28
  %v1354 = vld [vmem:[%s1353] sm:$0xf]
  %v1356 = vsel %vm139, %v1345, 0
  %v1359 = vsel %vm139, %v1346, 0
  %v1362 = vsel %vm139, %v1347, 0
  %v1365 = vsel %vm139, %v1348, 0
  %v1368 = vsel %vm139, %v1349, 0
  %v1371 = vsel %vm139, %v1350, 0
  %v1374 = vsel %vm139, %v1351, 0
  %v1377 = vsel %vm139, %v1352, 0
  %v1380 = vsel %vm273, %v1354, 0
  %1382 = vmatprep.subr.bf16.mxu0 0
  %1383 = vmatpush1.bf16.msra.mxu0 %v1380
  %1384 = vmatprep.subr.bf16.mxu0 0
  %1385 = vmatpush1.bf16.msra.mxu0 0
  %1386 = vmatprep.subr.bf16.mxu0 0
  %1387 = vmatpush1.bf16.msra.mxu0 0
  %1388 = vmatprep.subr.bf16.mxu0 0
  %1389 = vmatpush1.bf16.msra.mxu0 0
  %1390 = vmatprep.subr.bf16.mxu0 0
  %1391 = vmatpush1.bf16.msra.mxu0 0
  %1392 = vmatprep.subr.bf16.mxu0 0
  %1393 = vmatpush1.bf16.msra.mxu0 0
  %1394 = vmatprep.subr.bf16.mxu0 0
  %1395 = vmatpush1.bf16.msra.mxu0 0
  %1396 = vmatprep.subr.bf16.mxu0 0
  %1397 = vmatpush1.bf16.msra.mxu0 0
  %1398 = vmatprep.subr.bf16.mxu0 0
  %1399 = vmatpush1.bf16.msra.mxu0 0
  %1400 = vmatprep.subr.bf16.mxu0 0
  %1401 = vmatpush1.bf16.msra.mxu0 0
  %1402 = vmatprep.subr.bf16.mxu0 0
  %1403 = vmatpush1.bf16.msra.mxu0 0
  %1404 = vmatprep.subr.bf16.mxu0 0
  %1405 = vmatpush1.bf16.msra.mxu0 0
  %1406 = vmatprep.subr.bf16.mxu0 0
  %1407 = vmatpush1.bf16.msra.mxu0 0
  %1408 = vmatprep.subr.bf16.mxu0 0
  %1409 = vmatpush1.bf16.msra.mxu0 0
  %1410 = vmatprep.subr.bf16.mxu0 0
  %1411 = vmatpush1.bf16.msra.mxu0 0
  %1412 = vmatprep.subr.bf16.mxu0 0
  %1413 = vmatpush1.bf16.msra.mxu0 0
  %1414 = vmatprep.mubr.bf16.mxu0 0
  %1415 = vmatmul.mubr.bf16.gmra.mrb[0].mxu0 %v1356
  %v1416 = vpop.f32.mrb[0].mxu0
  %v1417 = vadd.f32 0.0, %v1416
  %v1418 = vpop.f32.mrb[0].mxu0
  %v1419 = vpop.f32.mrb[0].mxu0
  %v1420 = vadd.f32 0.0, %v1419
  %v1421 = vpop.f32.mrb[0].mxu0
  %1422 = vmatprep.mubr.bf16.mxu0 0
  %1423 = vmatmul.mubr.bf16.gmra.mrb[0].mxu0 %v1359
  %v1424 = vpop.f32.mrb[0].mxu0
  %v1425 = vadd.f32 0.0, %v1424
  %v1426 = vpop.f32.mrb[0].mxu0
  %v1427 = vpop.f32.mrb[0].mxu0
  %v1428 = vadd.f32 0.0, %v1427
  %v1429 = vpop.f32.mrb[0].mxu0
  %1430 = vmatprep.mubr.bf16.mxu0 0
  %1431 = vmatmul.mubr.bf16.gmra.mrb[0].mxu0 %v1362
  %v1432 = vpop.f32.mrb[0].mxu0
  %v1433 = vadd.f32 0.0, %v1432
  %v1434 = vpop.f32.mrb[0].mxu0
  %v1435 = vpop.f32.mrb[0].mxu0
  %v1436 = vadd.f32 0.0, %v1435
  %v1437 = vpop.f32.mrb[0].mxu0
  %1438 = vmatprep.mubr.bf16.mxu0 0
  %1439 = vmatmul.mubr.bf16.gmra.mrb[0].mxu0 %v1365
  %v1440 = vpop.f32.mrb[0].mxu0
  %v1441 = vadd.f32 0.0, %v1440
  %v1442 = vpop.f32.mrb[0].mxu0
  %v1443 = vpop.f32.mrb[0].mxu0
  %v1444 = vadd.f32 0.0, %v1443
  %v1445 = vpop.f32.mrb[0].mxu0
  %1446 = vmatprep.mubr.bf16.mxu0 0
  %1447 = vmatmul.mubr.bf16.gmra.mrb[0].mxu0 %v1368
  %v1448 = vpop.f32.mrb[0].mxu0
  %v1449 = vadd.f32 0.0, %v1448
  %v1450 = vpop.f32.mrb[0].mxu0
  %v1451 = vpop.f32.mrb[0].mxu0
  %v1452 = vadd.f32 0.0, %v1451
  %v1453 = vpop.f32.mrb[0].mxu0
  %1454 = vmatprep.mubr.bf16.mxu0 0
  %1455 = vmatmul.mubr.bf16.gmra.mrb[0].mxu0 %v1371
  %v1456 = vpop.f32.mrb[0].mxu0
  %v1457 = vadd.f32 0.0, %v1456
  %v1458 = vpop.f32.mrb[0].mxu0
  %v1459 = vpop.f32.mrb[0].mxu0
  %v1460 = vadd.f32 0.0, %v1459
  %v1461 = vpop.f32.mrb[0].mxu0
  %1462 = vmatprep.mubr.bf16.mxu0 0
  %1463 = vmatmul.mubr.bf16.gmra.mrb[0].mxu0 %v1374
  %v1464 = vpop.f32.mrb[0].mxu0
  %v1465 = vadd.f32 0.0, %v1464
  %v1466 = vpop.f32.mrb[0].mxu0
  %v1467 = vpop.f32.mrb[0].mxu0
  %v1468 = vadd.f32 0.0, %v1467
  %v1469 = vpop.f32.mrb[0].mxu0
  %1470 = vmatprep.mubr.bf16.mxu0 0
  %1471 = vmatmul.mubr.bf16.gmra.mrb[0].mxu0 %v1377
  %v1472 = vpop.f32.mrb[0].mxu0
  %v1473 = vadd.f32 0.0, %v1472
  %v1474 = vpop.f32.mrb[0].mxu0
  %v1475 = vpop.f32.mrb[0].mxu0
  %v1476 = vadd.f32 0.0, %v1475
  %v1477 = vpop.f32.mrb[0].mxu0
  %1478 = vdwg.mxu0
  %v1479 = vadd.f32 %v1313, %v1417
  %v1480 = vadd.f32 %v1314, %v1420
  %v1481 = vadd.f32 %v1315, %v1425
  %v1482 = vadd.f32 %v1316, %v1428
  %v1483 = vadd.f32 %v1317, %v1433
  %v1484 = vadd.f32 %v1318, %v1436
  %v1485 = vadd.f32 %v1319, %v1441
  %v1486 = vadd.f32 %v1320, %v1444
  %v1487 = vadd.f32 %v1321, %v1449
  %v1488 = vadd.f32 %v1322, %v1452
  %v1489 = vadd.f32 %v1323, %v1457
  %v1490 = vadd.f32 %v1324, %v1460
  %v1491 = vadd.f32 %v1325, %v1465
  %v1492 = vadd.f32 %v1326, %v1468
  %v1493 = vadd.f32 %v1327, %v1473
  %v1494 = vadd.f32 %v1328, %v1476
  %v1495 = vld [vmem:[%s1162 + $0x2] sm:$0xff]
  %v1496 = vld [vmem:[%s1162 + $0x12] sm:$0xff]
  %v1497 = vld [vmem:[%s1162 + $0x22] sm:$0xff]
  %v1498 = vld [vmem:[%s1162 + $0x32] sm:$0xff]
  %v1499 = vld [vmem:[%s1162 + $0x42] sm:$0xff]
  %v1500 = vld [vmem:[%s1162 + $0x52] sm:$0xff]
  %v1501 = vld [vmem:[%s1162 + $0x62] sm:$0xff]
  %v1502 = vld [vmem:[%s1162 + $0x72] sm:$0xff]
  %v1503 = vld [vmem:[%s1162 + $0xa2] sm:$0xff]
  %v1504 = vld [vmem:[%s1162 + $0xb2] sm:$0xff]
  %v1505 = vld [vmem:[%s1162 + $0xc2] sm:$0xff]
  %v1506 = vld [vmem:[%s1162 + $0xd2] sm:$0xff]
  %v1507 = vld [vmem:[%s1162 + $0xe2] sm:$0xff]
  %v1508 = vld [vmem:[%s1162 + $0xf2] sm:$0xff]
  %v1509 = vld [vmem:[%s1162 + $0x102] sm:$0xff]
  %v1510 = vld [vmem:[%s1162 + $0x112] sm:$0xff]
  %v1511 = vpack.c.bf16 %v1496, %v1495
  %v1512 = vpack.c.bf16 %v1498, %v1497
  %v1513 = vpack.c.bf16 %v1500, %v1499
  %v1514 = vpack.c.bf16 %v1502, %v1501
  %v1515 = vpack.c.bf16 %v1504, %v1503
  %v1516 = vpack.c.bf16 %v1506, %v1505
  %v1517 = vpack.c.bf16 %v1508, %v1507
  %v1518 = vpack.c.bf16 %v1510, %v1509
  %s1519 = scalar_lea.vmem %s3, 32
  %v1520 = vld [vmem:[%s1519] sm:$0xf]
  %v1522 = vsel %vm139, %v1511, 0
  %v1525 = vsel %vm139, %v1512, 0
  %v1528 = vsel %vm139, %v1513, 0
  %v1531 = vsel %vm139, %v1514, 0
  %v1534 = vsel %vm139, %v1515, 0
  %v1537 = vsel %vm139, %v1516, 0
  %v1540 = vsel %vm139, %v1517, 0
  %v1543 = vsel %vm139, %v1518, 0
  %v1546 = vsel %vm273, %v1520, 0
  %1548 = vmatprep.subr.bf16.mxu0 0
  %1549 = vmatpush1.bf16.msra.mxu0 %v1546
  %1550 = vmatprep.subr.bf16.mxu0 0
  %1551 = vmatpush1.bf16.msra.mxu0 0
  %1552 = vmatprep.subr.bf16.mxu0 0
  %1553 = vmatpush1.bf16.msra.mxu0 0
  %1554 = vmatprep.subr.bf16.mxu0 0
  %1555 = vmatpush1.bf16.msra.mxu0 0
  %1556 = vmatprep.subr.bf16.mxu0 0
  %1557 = vmatpush1.bf16.msra.mxu0 0
  %1558 = vmatprep.subr.bf16.mxu0 0
  %1559 = vmatpush1.bf16.msra.mxu0 0
  %1560 = vmatprep.subr.bf16.mxu0 0
  %1561 = vmatpush1.bf16.msra.mxu0 0
  %1562 = vmatprep.subr.bf16.mxu0 0
  %1563 = vmatpush1.bf16.msra.mxu0 0
  %1564 = vmatprep.subr.bf16.mxu0 0
  %1565 = vmatpush1.bf16.msra.mxu0 0
  %1566 = vmatprep.subr.bf16.mxu0 0
  %1567 = vmatpush1.bf16.msra.mxu0 0
  %1568 = vmatprep.subr.bf16.mxu0 0
  %1569 = vmatpush1.bf16.msra.mxu0 0
  %1570 = vmatprep.subr.bf16.mxu0 0
  %1571 = vmatpush1.bf16.msra.mxu0 0
  %1572 = vmatprep.subr.bf16.mxu0 0
  %1573 = vmatpush1.bf16.msra.mxu0 0
  %1574 = vmatprep.subr.bf16.mxu0 0
  %1575 = vmatpush1.bf16.msra.mxu0 0
  %1576 = vmatprep.subr.bf16.mxu0 0
  %1577 = vmatpush1.bf16.msra.mxu0 0
  %1578 = vmatprep.subr.bf16.mxu0 0
  %1579 = vmatpush1.bf16.msra.mxu0 0
  %1580 = vmatprep.mubr.bf16.mxu0 0
  %1581 = vmatmul.mubr.bf16.gmra.mrb[0].mxu0 %v1522
  %v1582 = vpop.f32.mrb[0].mxu0
  %v1583 = vadd.f32 0.0, %v1582
  %v1584 = vpop.f32.mrb[0].mxu0
  %v1585 = vpop.f32.mrb[0].mxu0
  %v1586 = vadd.f32 0.0, %v1585
  %v1587 = vpop.f32.mrb[0].mxu0
  %1588 = vmatprep.mubr.bf16.mxu0 0
  %1589 = vmatmul.mubr.bf16.gmra.mrb[0].mxu0 %v1525
  %v1590 = vpop.f32.mrb[0].mxu0
  %v1591 = vadd.f32 0.0, %v1590
  %v1592 = vpop.f32.mrb[0].mxu0
  %v1593 = vpop.f32.mrb[0].mxu0
  %v1594 = vadd.f32 0.0, %v1593
  %v1595 = vpop.f32.mrb[0].mxu0
  %1596 = vmatprep.mubr.bf16.mxu0 0
  %1597 = vmatmul.mubr.bf16.gmra.mrb[0].mxu0 %v1528
  %v1598 = vpop.f32.mrb[0].mxu0
  %v1599 = vadd.f32 0.0, %v1598
  %v1600 = vpop.f32.mrb[0].mxu0
  %v1601 = vpop.f32.mrb[0].mxu0
  %v1602 = vadd.f32 0.0, %v1601
  %v1603 = vpop.f32.mrb[0].mxu0
  %1604 = vmatprep.mubr.bf16.mxu0 0
  %1605 = vmatmul.mubr.bf16.gmra.mrb[0].mxu0 %v1531
  %v1606 = vpop.f32.mrb[0].mxu0
  %v1607 = vadd.f32 0.0, %v1606
  %v1608 = vpop.f32.mrb[0].mxu0
  %v1609 = vpop.f32.mrb[0].mxu0
  %v1610 = vadd.f32 0.0, %v1609
  %v1611 = vpop.f32.mrb[0].mxu0
  %1612 = vmatprep.mubr.bf16.mxu0 0
  %1613 = vmatmul.mubr.bf16.gmra.mrb[0].mxu0 %v1534
  %v1614 = vpop.f32.mrb[0].mxu0
  %v1615 = vadd.f32 0.0, %v1614
  %v1616 = vpop.f32.mrb[0].mxu0
  %v1617 = vpop.f32.mrb[0].mxu0
  %v1618 = vadd.f32 0.0, %v1617
  %v1619 = vpop.f32.mrb[0].mxu0
  %1620 = vmatprep.mubr.bf16.mxu0 0
  %1621 = vmatmul.mubr.bf16.gmra.mrb[0].mxu0 %v1537
  %v1622 = vpop.f32.mrb[0].mxu0
  %v1623 = vadd.f32 0.0, %v1622
  %v1624 = vpop.f32.mrb[0].mxu0
  %v1625 = vpop.f32.mrb[0].mxu0
  %v1626 = vadd.f32 0.0, %v1625
  %v1627 = vpop.f32.mrb[0].mxu0
  %1628 = vmatprep.mubr.bf16.mxu0 0
  %1629 = vmatmul.mubr.bf16.gmra.mrb[0].mxu0 %v1540
  %v1630 = vpop.f32.mrb[0].mxu0
  %v1631 = vadd.f32 0.0, %v1630
  %v1632 = vpop.f32.mrb[0].mxu0
  %v1633 = vpop.f32.mrb[0].mxu0
  %v1634 = vadd.f32 0.0, %v1633
  %v1635 = vpop.f32.mrb[0].mxu0
  %1636 = vmatprep.mubr.bf16.mxu0 0
  %1637 = vmatmul.mubr.bf16.gmra.mrb[0].mxu0 %v1543
  %v1638 = vpop.f32.mrb[0].mxu0
  %v1639 = vadd.f32 0.0, %v1638
  %v1640 = vpop.f32.mrb[0].mxu0
  %v1641 = vpop.f32.mrb[0].mxu0
  %v1642 = vadd.f32 0.0, %v1641
  %v1643 = vpop.f32.mrb[0].mxu0
  %1644 = vdwg.mxu0
  %v1645 = vadd.f32 %v1479, %v1583
  %v1646 = vadd.f32 %v1480, %v1586
  %v1647 = vadd.f32 %v1481, %v1591
  %v1648 = vadd.f32 %v1482, %v1594
  %v1649 = vadd.f32 %v1483, %v1599
  %v1650 = vadd.f32 %v1484, %v1602
  %v1651 = vadd.f32 %v1485, %v1607
  %v1652 = vadd.f32 %v1486, %v1610
  %v1653 = vadd.f32 %v1487, %v1615
  %v1654 = vadd.f32 %v1488, %v1618
  %v1655 = vadd.f32 %v1489, %v1623
  %v1656 = vadd.f32 %v1490, %v1626
  %v1657 = vadd.f32 %v1491, %v1631
  %v1658 = vadd.f32 %v1492, %v1634
  %v1659 = vadd.f32 %v1493, %v1639
  %v1660 = vadd.f32 %v1494, %v1642
  %v1662 = vlaneseq
  %v1663 = vshrl.u32 %v1662, 7
  %v1664 = vsub.s32 0, %v1663
  %v1665 = vrot.slane %v45, %v1664
  %v1667 = vmul.f32 %v1645, %v1665
  %v1668 = vmul.f32 %v1646, %v1665
  %v1669 = vmul.f32 %v1647, %v1665
  %v1670 = vmul.f32 %v1648, %v1665
  %v1671 = vmul.f32 %v1649, %v1665
  %v1672 = vmul.f32 %v1650, %v1665
  %v1673 = vmul.f32 %v1651, %v1665
  %v1674 = vmul.f32 %v1652, %v1665
  %v1675 = vmul.f32 %v1653, %v1665
  %v1676 = vmul.f32 %v1654, %v1665
  %v1677 = vmul.f32 %v1655, %v1665
  %v1678 = vmul.f32 %v1656, %v1665
  %v1679 = vmul.f32 %v1657, %v1665
  %v1680 = vmul.f32 %v1658, %v1665
  %v1681 = vmul.f32 %v1659, %v1665
  %v1682 = vmul.f32 %v1660, %v1665
  %v1684 = vlaneseq
  %v1685 = vshrl.u32 %v1684, 7
  %v1686 = vsub.s32 0, %v1685
  %v1687 = vrot.slane %v46, %v1686
  %v1689 = vadd.f32 %v1667, %v1687
  %v1690 = vadd.f32 %v1668, %v1687
  %v1691 = vadd.f32 %v1669, %v1687
  %v1692 = vadd.f32 %v1670, %v1687
  %v1693 = vadd.f32 %v1671, %v1687
  %v1694 = vadd.f32 %v1672, %v1687
  %v1695 = vadd.f32 %v1673, %v1687
  %v1696 = vadd.f32 %v1674, %v1687
  %v1697 = vadd.f32 %v1675, %v1687
  %v1698 = vadd.f32 %v1676, %v1687
  %v1699 = vadd.f32 %v1677, %v1687
  %v1700 = vadd.f32 %v1678, %v1687
  %v1701 = vadd.f32 %v1679, %v1687
  %v1702 = vadd.f32 %v1680, %v1687
  %v1703 = vadd.f32 %v1681, %v1687
  %v1704 = vadd.f32 %v1682, %v1687
  %vm1705 = vcmp.gt.f32.partialorder %v1689, 0.0
  %vm1706 = vcmp.gt.f32.partialorder %v1690, 0.0
  %vm1707 = vcmp.gt.f32.partialorder %v1691, 0.0
  %vm1708 = vcmp.gt.f32.partialorder %v1692, 0.0
  %vm1709 = vcmp.gt.f32.partialorder %v1693, 0.0
  %vm1710 = vcmp.gt.f32.partialorder %v1694, 0.0
  %vm1711 = vcmp.gt.f32.partialorder %v1695, 0.0
  %vm1712 = vcmp.gt.f32.partialorder %v1696, 0.0
  %vm1713 = vcmp.gt.f32.partialorder %v1697, 0.0
  %vm1714 = vcmp.gt.f32.partialorder %v1698, 0.0
  %vm1715 = vcmp.gt.f32.partialorder %v1699, 0.0
  %vm1716 = vcmp.gt.f32.partialorder %v1700, 0.0
  %vm1717 = vcmp.gt.f32.partialorder %v1701, 0.0
  %vm1718 = vcmp.gt.f32.partialorder %v1702, 0.0
  %vm1719 = vcmp.gt.f32.partialorder %v1703, 0.0
  %vm1720 = vcmp.gt.f32.partialorder %v1704, 0.0
  %v1721 = vmul.f32 %v1689, 0.1
  %v1722 = vmul.f32 %v1690, 0.1
  %v1723 = vmul.f32 %v1691, 0.1
  %v1724 = vmul.f32 %v1692, 0.1
  %v1725 = vmul.f32 %v1693, 0.1
  %v1726 = vmul.f32 %v1694, 0.1
  %v1727 = vmul.f32 %v1695, 0.1
  %v1728 = vmul.f32 %v1696, 0.1
  %v1729 = vmul.f32 %v1697, 0.1
  %v1730 = vmul.f32 %v1698, 0.1
  %v1731 = vmul.f32 %v1699, 0.1
  %v1732 = vmul.f32 %v1700, 0.1
  %v1733 = vmul.f32 %v1701, 0.1
  %v1734 = vmul.f32 %v1702, 0.1
  %v1735 = vmul.f32 %v1703, 0.1
  %v1736 = vmul.f32 %v1704, 0.1
  %v1737 = vsel %vm1705, %v1689, %v1721
  %v1738 = vsel %vm1706, %v1690, %v1722
  %v1739 = vsel %vm1707, %v1691, %v1723
  %v1740 = vsel %vm1708, %v1692, %v1724
  %v1741 = vsel %vm1709, %v1693, %v1725
  %v1742 = vsel %vm1710, %v1694, %v1726
  %v1743 = vsel %vm1711, %v1695, %v1727
  %v1744 = vsel %vm1712, %v1696, %v1728
  %v1745 = vsel %vm1713, %v1697, %v1729
  %v1746 = vsel %vm1714, %v1698, %v1730
  %v1747 = vsel %vm1715, %v1699, %v1731
  %v1748 = vsel %vm1716, %v1700, %v1732
  %v1749 = vsel %vm1717, %v1701, %v1733
  %v1750 = vsel %vm1718, %v1702, %v1734
  %v1751 = vsel %vm1719, %v1703, %v1735
  %v1752 = vsel %vm1720, %v1704, %v1736
  %1753 = vst.msk [vmem:[#allocation3] sm:$0xff] %vm139, 0.0
  %1754 = vst.msk [vmem:[#allocation3 + $0x8] sm:$0x3] %vm141, 0.0
  %1755 = vst.msk [vmem:[#allocation3 + $0x10] sm:$0xff] %vm139, 0.0
  %1756 = vst.msk [vmem:[#allocation3 + $0x18] sm:$0x3] %vm141, 0.0
  %1757 = vst.msk [vmem:[#allocation3 + $0x20] sm:$0xff] %vm139, 0.0
  %1758 = vst.msk [vmem:[#allocation3 + $0x28] sm:$0x3] %vm141, 0.0
  %1759 = vst.msk [vmem:[#allocation3 + $0x30] sm:$0xff] %vm139, 0.0
  %1760 = vst.msk [vmem:[#allocation3 + $0x38] sm:$0x3] %vm141, 0.0
  %1761 = vst.msk [vmem:[#allocation3 + $0x40] sm:$0xff] %vm139, 0.0
  %1762 = vst.msk [vmem:[#allocation3 + $0x48] sm:$0x3] %vm141, 0.0
  %1763 = vst.msk [vmem:[#allocation3 + $0x50] sm:$0xff] %vm139, 0.0
  %1764 = vst.msk [vmem:[#allocation3 + $0x58] sm:$0x3] %vm141, 0.0
  %1765 = vst.msk [vmem:[#allocation3 + $0x60] sm:$0xff] %vm139, 0.0
  %1766 = vst.msk [vmem:[#allocation3 + $0x68] sm:$0x3] %vm141, 0.0
  %1767 = vst.msk [vmem:[#allocation3 + $0x70] sm:$0xff] %vm139, 0.0
  %1768 = vst.msk [vmem:[#allocation3 + $0x78] sm:$0x3] %vm141, 0.0
  %1769 = vst.msk [vmem:[#allocation3 + $0x80] sm:$0xff] %vm139, 0.0
  %1770 = vst.msk [vmem:[#allocation3 + $0x88] sm:$0x3] %vm141, 0.0
  %1771 = vst.msk [vmem:[#allocation3 + $0x90] sm:$0xff] %vm139, 0.0
  %1772 = vst.msk [vmem:[#allocation3 + $0x98] sm:$0x3] %vm141, 0.0
  %1773 = vst.msk [vmem:[#allocation3 + $0xa0] sm:$0xff] %vm139, 0.0
  %1774 = vst.msk [vmem:[#allocation3 + $0xa8] sm:$0x3] %vm141, 0.0
  %1775 = vst.msk [vmem:[#allocation3 + $0xb0] sm:$0xff] %vm139, 0.0
  %1776 = vst.msk [vmem:[#allocation3 + $0xb8] sm:$0x3] %vm141, 0.0
  %1777 = vst.msk [vmem:[#allocation3 + $0xc0] sm:$0xff] %vm139, 0.0
  %1778 = vst.msk [vmem:[#allocation3 + $0xc8] sm:$0x3] %vm141, 0.0
  %1779 = vst.msk [vmem:[#allocation3 + $0xd0] sm:$0xff] %vm139, 0.0
  %1780 = vst.msk [vmem:[#allocation3 + $0xd8] sm:$0x3] %vm141, 0.0
  %1781 = vst.msk [vmem:[#allocation3 + $0xe0] sm:$0xff] %vm139, 0.0
  %1782 = vst.msk [vmem:[#allocation3 + $0xe8] sm:$0x3] %vm141, 0.0
  %1783 = vst.msk [vmem:[#allocation3 + $0xf0] sm:$0xff] %vm139, 0.0
  %1784 = vst.msk [vmem:[#allocation3 + $0xf8] sm:$0x3] %vm141, 0.0
  %1785 = vst.msk [vmem:[#allocation3 + $0x100] sm:$0xff] %vm139, 0.0
  %1786 = vst.msk [vmem:[#allocation3 + $0x108] sm:$0x3] %vm141, 0.0
  %1787 = vst.msk [vmem:[#allocation3 + $0x110] sm:$0xff] %vm139, 0.0
  %1788 = vst.msk [vmem:[#allocation3 + $0x118] sm:$0x3] %vm141, 0.0
  %1789 = vst.msk [vmem:[#allocation3 + $0x120] sm:$0xff] %vm139, 0.0
  %1790 = vst.msk [vmem:[#allocation3 + $0x128] sm:$0x3] %vm141, 0.0
  %1791 = vst.msk [vmem:[#allocation3 + $0x130] sm:$0xff] %vm139, 0.0
  %1792 = vst.msk [vmem:[#allocation3 + $0x138] sm:$0x3] %vm141, 0.0
  %s1793 = scalar_lea.vmem [#allocation3], 16
  %1794 = vst.msk [vmem:[%s1793 + $0x1] sm:$0xff] %vm139, %v1737
  %1795 = vst.msk [vmem:[%s1793 + $0x11] sm:$0xff] %vm139, %v1738
  %1796 = vst.msk [vmem:[%s1793 + $0x21] sm:$0xff] %vm139, %v1739
  %1797 = vst.msk [vmem:[%s1793 + $0x31] sm:$0xff] %vm139, %v1740
  %1798 = vst.msk [vmem:[%s1793 + $0x41] sm:$0xff] %vm139, %v1741
  %1799 = vst.msk [vmem:[%s1793 + $0x51] sm:$0xff] %vm139, %v1742
  %1800 = vst.msk [vmem:[%s1793 + $0x61] sm:$0xff] %vm139, %v1743
  %1801 = vst.msk [vmem:[%s1793 + $0x71] sm:$0xff] %vm139, %v1744
  %1802 = vst.msk [vmem:[%s1793 + $0xa1] sm:$0xff] %vm139, %v1745
  %1803 = vst.msk [vmem:[%s1793 + $0xb1] sm:$0xff] %vm139, %v1746
  %1804 = vst.msk [vmem:[%s1793 + $0xc1] sm:$0xff] %vm139, %v1747
  %1805 = vst.msk [vmem:[%s1793 + $0xd1] sm:$0xff] %vm139, %v1748
  %1806 = vst.msk [vmem:[%s1793 + $0xe1] sm:$0xff] %vm139, %v1749
  %1807 = vst.msk [vmem:[%s1793 + $0xf1] sm:$0xff] %vm139, %v1750
  %1808 = vst.msk [vmem:[%s1793 + $0x101] sm:$0xff] %vm139, %v1751
  %1809 = vst.msk [vmem:[%s1793 + $0x111] sm:$0xff] %vm139, %v1752
  %v1810 = vld [vmem:[#allocation3] sm:$0xff]
  %v1811 = vld [vmem:[#allocation3 + $0x10] sm:$0xff]
  %v1812 = vld [vmem:[#allocation3 + $0x20] sm:$0xff]
  %v1813 = vld [vmem:[#allocation3 + $0x30] sm:$0xff]
  %v1814 = vld [vmem:[#allocation3 + $0x40] sm:$0xff]
  %v1815 = vld [vmem:[#allocation3 + $0x50] sm:$0xff]
  %v1816 = vld [vmem:[#allocation3 + $0x60] sm:$0xff]
  %v1817 = vld [vmem:[#allocation3 + $0x70] sm:$0xff]
  %v1818 = vld [vmem:[#allocation3 + $0xa0] sm:$0xff]
  %v1819 = vld [vmem:[#allocation3 + $0xb0] sm:$0xff]
  %v1820 = vld [vmem:[#allocation3 + $0xc0] sm:$0xff]
  %v1821 = vld [vmem:[#allocation3 + $0xd0] sm:$0xff]
  %v1822 = vld [vmem:[#allocation3 + $0xe0] sm:$0xff]
  %v1823 = vld [vmem:[#allocation3 + $0xf0] sm:$0xff]
  %v1824 = vld [vmem:[#allocation3 + $0x100] sm:$0xff]
  %v1825 = vld [vmem:[#allocation3 + $0x110] sm:$0xff]
  %v1826 = vpack.c.bf16 %v1811, %v1810
  %v1827 = vpack.c.bf16 %v1813, %v1812
  %v1828 = vpack.c.bf16 %v1815, %v1814
  %v1829 = vpack.c.bf16 %v1817, %v1816
  %v1830 = vpack.c.bf16 %v1819, %v1818
  %v1831 = vpack.c.bf16 %v1821, %v1820
  %v1832 = vpack.c.bf16 %v1823, %v1822
  %v1833 = vpack.c.bf16 %v1825, %v1824
  %v1834 = vld [vmem:[%s6] sm:$0xf]
  %v1835 = vld [vmem:[#allocation3 + $0x1] sm:$0xff]
  %v1836 = vld [vmem:[#allocation3 + $0x11] sm:$0xff]
  %v1837 = vld [vmem:[#allocation3 + $0x21] sm:$0xff]
  %v1838 = vld [vmem:[#allocation3 + $0x31] sm:$0xff]
  %v1839 = vld [vmem:[#allocation3 + $0x41] sm:$0xff]
  %v1840 = vld [vmem:[#allocation3 + $0x51] sm:$0xff]
  %v1841 = vld [vmem:[#allocation3 + $0x61] sm:$0xff]
  %v1842 = vld [vmem:[#allocation3 + $0x71] sm:$0xff]
  %v1843 = vld [vmem:[#allocation3 + $0xa1] sm:$0xff]
  %v1844 = vld [vmem:[#allocation3 + $0xb1] sm:$0xff]
  %v1845 = vld [vmem:[#allocation3 + $0xc1] sm:$0xff]
  %v1846 = vld [vmem:[#allocation3 + $0xd1] sm:$0xff]
  %v1847 = vld [vmem:[#allocation3 + $0xe1] sm:$0xff]
  %v1848 = vld [vmem:[#allocation3 + $0xf1] sm:$0xff]
  %v1849 = vld [vmem:[#allocation3 + $0x101] sm:$0xff]
  %v1850 = vld [vmem:[#allocation3 + $0x111] sm:$0xff]
  %v1851 = vpack.c.bf16 %v1836, %v1835
  %v1852 = vpack.c.bf16 %v1838, %v1837
  %v1853 = vpack.c.bf16 %v1840, %v1839
  %v1854 = vpack.c.bf16 %v1842, %v1841
  %v1855 = vpack.c.bf16 %v1844, %v1843
  %v1856 = vpack.c.bf16 %v1846, %v1845
  %v1857 = vpack.c.bf16 %v1848, %v1847
  %v1858 = vpack.c.bf16 %v1850, %v1849
  %s1859 = scalar_lea.vmem %s6, 4
  %v1860 = vld [vmem:[%s1859] sm:$0xf]
  %v1862 = vsel %vm139, %v1851, 0
  %v1865 = vsel %vm139, %v1852, 0
  %v1868 = vsel %vm139, %v1853, 0
  %v1871 = vsel %vm139, %v1854, 0
  %v1874 = vsel %vm139, %v1855, 0
  %v1877 = vsel %vm139, %v1856, 0
  %v1880 = vsel %vm139, %v1857, 0
  %v1883 = vsel %vm139, %v1858, 0
  %v1886 = vsel %vm273, %v1860, 0
  %1888 = vmatprep.subr.bf16.mxu0 0
  %1889 = vmatpush1.bf16.msra.mxu0 %v1886
  %1890 = vmatprep.subr.bf16.mxu0 0
  %1891 = vmatpush1.bf16.msra.mxu0 0
  %1892 = vmatprep.subr.bf16.mxu0 0
  %1893 = vmatpush1.bf16.msra.mxu0 0
  %1894 = vmatprep.subr.bf16.mxu0 0
  %1895 = vmatpush1.bf16.msra.mxu0 0
  %1896 = vmatprep.subr.bf16.mxu0 0
  %1897 = vmatpush1.bf16.msra.mxu0 0
  %1898 = vmatprep.subr.bf16.mxu0 0
  %1899 = vmatpush1.bf16.msra.mxu0 0
  %1900 = vmatprep.subr.bf16.mxu0 0
  %1901 = vmatpush1.bf16.msra.mxu0 0
  %1902 = vmatprep.subr.bf16.mxu0 0
  %1903 = vmatpush1.bf16.msra.mxu0 0
  %1904 = vmatprep.subr.bf16.mxu0 0
  %1905 = vmatpush1.bf16.msra.mxu0 0
  %1906 = vmatprep.subr.bf16.mxu0 0
  %1907 = vmatpush1.bf16.msra.mxu0 0
  %1908 = vmatprep.subr.bf16.mxu0 0
  %1909 = vmatpush1.bf16.msra.mxu0 0
  %1910 = vmatprep.subr.bf16.mxu0 0
  %1911 = vmatpush1.bf16.msra.mxu0 0
  %1912 = vmatprep.subr.bf16.mxu0 0
  %1913 = vmatpush1.bf16.msra.mxu0 0
  %1914 = vmatprep.subr.bf16.mxu0 0
  %1915 = vmatpush1.bf16.msra.mxu0 0
  %1916 = vmatprep.subr.bf16.mxu0 0
  %1917 = vmatpush1.bf16.msra.mxu0 0
  %1918 = vmatprep.subr.bf16.mxu0 0
  %1919 = vmatpush1.bf16.msra.mxu0 0
  %1920 = vmatprep.mubr.bf16.mxu0 0
  %1921 = vmatmul.mubr.bf16.gmra.mrb[0].mxu0 %v1862
  %v1922 = vpop.f32.mrb[0].mxu0
  %v1923 = vadd.f32 0.0, %v1922
  %v1924 = vpop.f32.mrb[0].mxu0
  %v1925 = vpop.f32.mrb[0].mxu0
  %v1926 = vadd.f32 0.0, %v1925
  %v1927 = vpop.f32.mrb[0].mxu0
  %1928 = vmatprep.mubr.bf16.mxu0 0
  %1929 = vmatmul.mubr.bf16.gmra.mrb[0].mxu0 %v1865
  %v1930 = vpop.f32.mrb[0].mxu0
  %v1931 = vadd.f32 0.0, %v1930
  %v1932 = vpop.f32.mrb[0].mxu0
  %v1933 = vpop.f32.mrb[0].mxu0
  %v1934 = vadd.f32 0.0, %v1933
  %v1935 = vpop.f32.mrb[0].mxu0
  %1936 = vmatprep.mubr.bf16.mxu0 0
  %1937 = vmatmul.mubr.bf16.gmra.mrb[0].mxu0 %v1868
  %v1938 = vpop.f32.mrb[0].mxu0
  %v1939 = vadd.f32 0.0, %v1938
  %v1940 = vpop.f32.mrb[0].mxu0
  %v1941 = vpop.f32.mrb[0].mxu0
  %v1942 = vadd.f32 0.0, %v1941
  %v1943 = vpop.f32.mrb[0].mxu0
  %1944 = vmatprep.mubr.bf16.mxu0 0
  %1945 = vmatmul.mubr.bf16.gmra.mrb[0].mxu0 %v1871
  %v1946 = vpop.f32.mrb[0].mxu0
  %v1947 = vadd.f32 0.0, %v1946
  %v1948 = vpop.f32.mrb[0].mxu0
  %v1949 = vpop.f32.mrb[0].mxu0
  %v1950 = vadd.f32 0.0, %v1949
  %v1951 = vpop.f32.mrb[0].mxu0
  %1952 = vmatprep.mubr.bf16.mxu0 0
  %1953 = vmatmul.mubr.bf16.gmra.mrb[0].mxu0 %v1874
  %v1954 = vpop.f32.mrb[0].mxu0
  %v1955 = vadd.f32 0.0, %v1954
  %v1956 = vpop.f32.mrb[0].mxu0
  %v1957 = vpop.f32.mrb[0].mxu0
  %v1958 = vadd.f32 0.0, %v1957
  %v1959 = vpop.f32.mrb[0].mxu0
  %1960 = vmatprep.mubr.bf16.mxu0 0
  %1961 = vmatmul.mubr.bf16.gmra.mrb[0].mxu0 %v1877
  %v1962 = vpop.f32.mrb[0].mxu0
  %v1963 = vadd.f32 0.0, %v1962
  %v1964 = vpop.f32.mrb[0].mxu0
  %v1965 = vpop.f32.mrb[0].mxu0
  %v1966 = vadd.f32 0.0, %v1965
  %v1967 = vpop.f32.mrb[0].mxu0
  %1968 = vmatprep.mubr.bf16.mxu0 0
  %1969 = vmatmul.mubr.bf16.gmra.mrb[0].mxu0 %v1880
  %v1970 = vpop.f32.mrb[0].mxu0
  %v1971 = vadd.f32 0.0, %v1970
  %v1972 = vpop.f32.mrb[0].mxu0
  %v1973 = vpop.f32.mrb[0].mxu0
  %v1974 = vadd.f32 0.0, %v1973
  %v1975 = vpop.f32.mrb[0].mxu0
  %1976 = vmatprep.mubr.bf16.mxu0 0
  %1977 = vmatmul.mubr.bf16.gmra.mrb[0].mxu0 %v1883
  %v1978 = vpop.f32.mrb[0].mxu0
  %v1979 = vadd.f32 0.0, %v1978
  %v1980 = vpop.f32.mrb[0].mxu0
  %v1981 = vpop.f32.mrb[0].mxu0
  %v1982 = vadd.f32 0.0, %v1981
  %v1983 = vpop.f32.mrb[0].mxu0
  %1984 = vdwg.mxu0
  %v1986 = vsel %vm139, %v1826, 0
  %v1989 = vsel %vm139, %v1827, 0
  %v1992 = vsel %vm139, %v1828, 0
  %v1995 = vsel %vm139, %v1829, 0
  %v1998 = vsel %vm139, %v1830, 0
  %v2001 = vsel %vm139, %v1831, 0
  %v2004 = vsel %vm139, %v1832, 0
  %v2007 = vsel %vm139, %v1833, 0
  %v2010 = vsel %vm273, %v1834, 0
  %2012 = vmatprep.subr.bf16.mxu0 0
  %2013 = vmatpush1.bf16.msra.mxu0 %v2010
  %2014 = vmatprep.subr.bf16.mxu0 0
  %2015 = vmatpush1.bf16.msra.mxu0 0
  %2016 = vmatprep.subr.bf16.mxu0 0
  %2017 = vmatpush1.bf16.msra.mxu0 0
  %2018 = vmatprep.subr.bf16.mxu0 0
  %2019 = vmatpush1.bf16.msra.mxu0 0
  %2020 = vmatprep.subr.bf16.mxu0 0
  %2021 = vmatpush1.bf16.msra.mxu0 0
  %2022 = vmatprep.subr.bf16.mxu0 0
  %2023 = vmatpush1.bf16.msra.mxu0 0
  %2024 = vmatprep.subr.bf16.mxu0 0
  %2025 = vmatpush1.bf16.msra.mxu0 0
  %2026 = vmatprep.subr.bf16.mxu0 0
  %2027 = vmatpush1.bf16.msra.mxu0 0
  %2028 = vmatprep.subr.bf16.mxu0 0
  %2029 = vmatpush1.bf16.msra.mxu0 0
  %2030 = vmatprep.subr.bf16.mxu0 0
  %2031 = vmatpush1.bf16.msra.mxu0 0
  %2032 = vmatprep.subr.bf16.mxu0 0
  %2033 = vmatpush1.bf16.msra.mxu0 0
  %2034 = vmatprep.subr.bf16.mxu0 0
  %2035 = vmatpush1.bf16.msra.mxu0 0
  %2036 = vmatprep.subr.bf16.mxu0 0
  %2037 = vmatpush1.bf16.msra.mxu0 0
  %2038 = vmatprep.subr.bf16.mxu0 0
  %2039 = vmatpush1.bf16.msra.mxu0 0
  %2040 = vmatprep.subr.bf16.mxu0 0
  %2041 = vmatpush1.bf16.msra.mxu0 0
  %2042 = vmatprep.subr.bf16.mxu0 0
  %2043 = vmatpush1.bf16.msra.mxu0 0
  %2044 = vmatprep.mubr.bf16.mxu0 0
  %2045 = vmatmul.mubr.bf16.gmra.mrb[0].mxu0 %v1986
  %v2046 = vpop.f32.mrb[0].mxu0
  %v2047 = vadd.f32 %v1923, %v2046
  %v2048 = vpop.f32.mrb[0].mxu0
  %v2049 = vpop.f32.mrb[0].mxu0
  %v2050 = vadd.f32 %v1926, %v2049
  %v2051 = vpop.f32.mrb[0].mxu0
  %2052 = vmatprep.mubr.bf16.mxu0 0
  %2053 = vmatmul.mubr.bf16.gmra.mrb[0].mxu0 %v1989
  %v2054 = vpop.f32.mrb[0].mxu0
  %v2055 = vadd.f32 %v1931, %v2054
  %v2056 = vpop.f32.mrb[0].mxu0
  %v2057 = vpop.f32.mrb[0].mxu0
  %v2058 = vadd.f32 %v1934, %v2057
  %v2059 = vpop.f32.mrb[0].mxu0
  %2060 = vmatprep.mubr.bf16.mxu0 0
  %2061 = vmatmul.mubr.bf16.gmra.mrb[0].mxu0 %v1992
  %v2062 = vpop.f32.mrb[0].mxu0
  %v2063 = vadd.f32 %v1939, %v2062
  %v2064 = vpop.f32.mrb[0].mxu0
  %v2065 = vpop.f32.mrb[0].mxu0
  %v2066 = vadd.f32 %v1942, %v2065
  %v2067 = vpop.f32.mrb[0].mxu0
  %2068 = vmatprep.mubr.bf16.mxu0 0
  %2069 = vmatmul.mubr.bf16.gmra.mrb[0].mxu0 %v1995
  %v2070 = vpop.f32.mrb[0].mxu0
  %v2071 = vadd.f32 %v1947, %v2070
  %v2072 = vpop.f32.mrb[0].mxu0
  %v2073 = vpop.f32.mrb[0].mxu0
  %v2074 = vadd.f32 %v1950, %v2073
  %v2075 = vpop.f32.mrb[0].mxu0
  %2076 = vmatprep.mubr.bf16.mxu0 0
  %2077 = vmatmul.mubr.bf16.gmra.mrb[0].mxu0 %v1998
  %v2078 = vpop.f32.mrb[0].mxu0
  %v2079 = vadd.f32 %v1955, %v2078
  %v2080 = vpop.f32.mrb[0].mxu0
  %v2081 = vpop.f32.mrb[0].mxu0
  %v2082 = vadd.f32 %v1958, %v2081
  %v2083 = vpop.f32.mrb[0].mxu0
  %2084 = vmatprep.mubr.bf16.mxu0 0
  %2085 = vmatmul.mubr.bf16.gmra.mrb[0].mxu0 %v2001
  %v2086 = vpop.f32.mrb[0].mxu0
  %v2087 = vadd.f32 %v1963, %v2086
  %v2088 = vpop.f32.mrb[0].mxu0
  %v2089 = vpop.f32.mrb[0].mxu0
  %v2090 = vadd.f32 %v1966, %v2089
  %v2091 = vpop.f32.mrb[0].mxu0
  %2092 = vmatprep.mubr.bf16.mxu0 0
  %2093 = vmatmul.mubr.bf16.gmra.mrb[0].mxu0 %v2004
  %v2094 = vpop.f32.mrb[0].mxu0
  %v2095 = vadd.f32 %v1971, %v2094
  %v2096 = vpop.f32.mrb[0].mxu0
  %v2097 = vpop.f32.mrb[0].mxu0
  %v2098 = vadd.f32 %v1974, %v2097
  %v2099 = vpop.f32.mrb[0].mxu0
  %2100 = vmatprep.mubr.bf16.mxu0 0
  %2101 = vmatmul.mubr.bf16.gmra.mrb[0].mxu0 %v2007
  %v2102 = vpop.f32.mrb[0].mxu0
  %v2103 = vadd.f32 %v1979, %v2102
  %v2104 = vpop.f32.mrb[0].mxu0
  %v2105 = vpop.f32.mrb[0].mxu0
  %v2106 = vadd.f32 %v1982, %v2105
  %v2107 = vpop.f32.mrb[0].mxu0
  %2108 = vdwg.mxu0
  %v2109 = vld [vmem:[#allocation3 + $0x2] sm:$0xff]
  %v2110 = vld [vmem:[#allocation3 + $0x12] sm:$0xff]
  %v2111 = vld [vmem:[#allocation3 + $0x22] sm:$0xff]
  %v2112 = vld [vmem:[#allocation3 + $0x32] sm:$0xff]
  %v2113 = vld [vmem:[#allocation3 + $0x42] sm:$0xff]
  %v2114 = vld [vmem:[#allocation3 + $0x52] sm:$0xff]
  %v2115 = vld [vmem:[#allocation3 + $0x62] sm:$0xff]
  %v2116 = vld [vmem:[#allocation3 + $0x72] sm:$0xff]
  %v2117 = vld [vmem:[#allocation3 + $0xa2] sm:$0xff]
  %v2118 = vld [vmem:[#allocation3 + $0xb2] sm:$0xff]
  %v2119 = vld [vmem:[#allocation3 + $0xc2] sm:$0xff]
  %v2120 = vld [vmem:[#allocation3 + $0xd2] sm:$0xff]
  %v2121 = vld [vmem:[#allocation3 + $0xe2] sm:$0xff]
  %v2122 = vld [vmem:[#allocation3 + $0xf2] sm:$0xff]
  %v2123 = vld [vmem:[#allocation3 + $0x102] sm:$0xff]
  %v2124 = vld [vmem:[#allocation3 + $0x112] sm:$0xff]
  %v2125 = vpack.c.bf16 %v2110, %v2109
  %v2126 = vpack.c.bf16 %v2112, %v2111
  %v2127 = vpack.c.bf16 %v2114, %v2113
  %v2128 = vpack.c.bf16 %v2116, %v2115
  %v2129 = vpack.c.bf16 %v2118, %v2117
  %v2130 = vpack.c.bf16 %v2120, %v2119
  %v2131 = vpack.c.bf16 %v2122, %v2121
  %v2132 = vpack.c.bf16 %v2124, %v2123
  %s2133 = scalar_lea.vmem %s6, 8
  %v2134 = vld [vmem:[%s2133] sm:$0xf]
  %v2136 = vsel %vm139, %v2125, 0
  %v2139 = vsel %vm139, %v2126, 0
  %v2142 = vsel %vm139, %v2127, 0
  %v2145 = vsel %vm139, %v2128, 0
  %v2148 = vsel %vm139, %v2129, 0
  %v2151 = vsel %vm139, %v2130, 0
  %v2154 = vsel %vm139, %v2131, 0
  %v2157 = vsel %vm139, %v2132, 0
  %v2160 = vsel %vm273, %v2134, 0
  %2162 = vmatprep.subr.bf16.mxu0 0
  %2163 = vmatpush1.bf16.msra.mxu0 %v2160
  %2164 = vmatprep.subr.bf16.mxu0 0
  %2165 = vmatpush1.bf16.msra.mxu0 0
  %2166 = vmatprep.subr.bf16.mxu0 0
  %2167 = vmatpush1.bf16.msra.mxu0 0
  %2168 = vmatprep.subr.bf16.mxu0 0
  %2169 = vmatpush1.bf16.msra.mxu0 0
  %2170 = vmatprep.subr.bf16.mxu0 0
  %2171 = vmatpush1.bf16.msra.mxu0 0
  %2172 = vmatprep.subr.bf16.mxu0 0
  %2173 = vmatpush1.bf16.msra.mxu0 0
  %2174 = vmatprep.subr.bf16.mxu0 0
  %2175 = vmatpush1.bf16.msra.mxu0 0
  %2176 = vmatprep.subr.bf16.mxu0 0
  %2177 = vmatpush1.bf16.msra.mxu0 0
  %2178 = vmatprep.subr.bf16.mxu0 0
  %2179 = vmatpush1.bf16.msra.mxu0 0
  %2180 = vmatprep.subr.bf16.mxu0 0
  %2181 = vmatpush1.bf16.msra.mxu0 0
  %2182 = vmatprep.subr.bf16.mxu0 0
  %2183 = vmatpush1.bf16.msra.mxu0 0
  %2184 = vmatprep.subr.bf16.mxu0 0
  %2185 = vmatpush1.bf16.msra.mxu0 0
  %2186 = vmatprep.subr.bf16.mxu0 0
  %2187 = vmatpush1.bf16.msra.mxu0 0
  %2188 = vmatprep.subr.bf16.mxu0 0
  %2189 = vmatpush1.bf16.msra.mxu0 0
  %2190 = vmatprep.subr.bf16.mxu0 0
  %2191 = vmatpush1.bf16.msra.mxu0 0
  %2192 = vmatprep.subr.bf16.mxu0 0
  %2193 = vmatpush1.bf16.msra.mxu0 0
  %2194 = vmatprep.mubr.bf16.mxu0 0
  %2195 = vmatmul.mubr.bf16.gmra.mrb[0].mxu0 %v2136
  %v2196 = vpop.f32.mrb[0].mxu0
  %v2197 = vadd.f32 0.0, %v2196
  %v2198 = vpop.f32.mrb[0].mxu0
  %v2199 = vpop.f32.mrb[0].mxu0
  %v2200 = vadd.f32 0.0, %v2199
  %v2201 = vpop.f32.mrb[0].mxu0
  %2202 = vmatprep.mubr.bf16.mxu0 0
  %2203 = vmatmul.mubr.bf16.gmra.mrb[0].mxu0 %v2139
  %v2204 = vpop.f32.mrb[0].mxu0
  %v2205 = vadd.f32 0.0, %v2204
  %v2206 = vpop.f32.mrb[0].mxu0
  %v2207 = vpop.f32.mrb[0].mxu0
  %v2208 = vadd.f32 0.0, %v2207
  %v2209 = vpop.f32.mrb[0].mxu0
  %2210 = vmatprep.mubr.bf16.mxu0 0
  %2211 = vmatmul.mubr.bf16.gmra.mrb[0].mxu0 %v2142
  %v2212 = vpop.f32.mrb[0].mxu0
  %v2213 = vadd.f32 0.0, %v2212
  %v2214 = vpop.f32.mrb[0].mxu0
  %v2215 = vpop.f32.mrb[0].mxu0
  %v2216 = vadd.f32 0.0, %v2215
  %v2217 = vpop.f32.mrb[0].mxu0
  %2218 = vmatprep.mubr.bf16.mxu0 0
  %2219 = vmatmul.mubr.bf16.gmra.mrb[0].mxu0 %v2145
  %v2220 = vpop.f32.mrb[0].mxu0
  %v2221 = vadd.f32 0.0, %v2220
  %v2222 = vpop.f32.mrb[0].mxu0
  %v2223 = vpop.f32.mrb[0].mxu0
  %v2224 = vadd.f32 0.0, %v2223
  %v2225 = vpop.f32.mrb[0].mxu0
  %2226 = vmatprep.mubr.bf16.mxu0 0
  %2227 = vmatmul.mubr.bf16.gmra.mrb[0].mxu0 %v2148
  %v2228 = vpop.f32.mrb[0].mxu0
  %v2229 = vadd.f32 0.0, %v2228
  %v2230 = vpop.f32.mrb[0].mxu0
  %v2231 = vpop.f32.mrb[0].mxu0
  %v2232 = vadd.f32 0.0, %v2231
  %v2233 = vpop.f32.mrb[0].mxu0
  %2234 = vmatprep.mubr.bf16.mxu0 0
  %2235 = vmatmul.mubr.bf16.gmra.mrb[0].mxu0 %v2151
  %v2236 = vpop.f32.mrb[0].mxu0
  %v2237 = vadd.f32 0.0, %v2236
  %v2238 = vpop.f32.mrb[0].mxu0
  %v2239 = vpop.f32.mrb[0].mxu0
  %v2240 = vadd.f32 0.0, %v2239
  %v2241 = vpop.f32.mrb[0].mxu0
  %2242 = vmatprep.mubr.bf16.mxu0 0
  %2243 = vmatmul.mubr.bf16.gmra.mrb[0].mxu0 %v2154
  %v2244 = vpop.f32.mrb[0].mxu0
  %v2245 = vadd.f32 0.0, %v2244
  %v2246 = vpop.f32.mrb[0].mxu0
  %v2247 = vpop.f32.mrb[0].mxu0
  %v2248 = vadd.f32 0.0, %v2247
  %v2249 = vpop.f32.mrb[0].mxu0
  %2250 = vmatprep.mubr.bf16.mxu0 0
  %2251 = vmatmul.mubr.bf16.gmra.mrb[0].mxu0 %v2157
  %v2252 = vpop.f32.mrb[0].mxu0
  %v2253 = vadd.f32 0.0, %v2252
  %v2254 = vpop.f32.mrb[0].mxu0
  %v2255 = vpop.f32.mrb[0].mxu0
  %v2256 = vadd.f32 0.0, %v2255
  %v2257 = vpop.f32.mrb[0].mxu0
  %2258 = vdwg.mxu0
  %v2259 = vadd.f32 %v2047, %v2197
  %v2260 = vadd.f32 %v2050, %v2200
  %v2261 = vadd.f32 %v2055, %v2205
  %v2262 = vadd.f32 %v2058, %v2208
  %v2263 = vadd.f32 %v2063, %v2213
  %v2264 = vadd.f32 %v2066, %v2216
  %v2265 = vadd.f32 %v2071, %v2221
  %v2266 = vadd.f32 %v2074, %v2224
  %v2267 = vadd.f32 %v2079, %v2229
  %v2268 = vadd.f32 %v2082, %v2232
  %v2269 = vadd.f32 %v2087, %v2237
  %v2270 = vadd.f32 %v2090, %v2240
  %v2271 = vadd.f32 %v2095, %v2245
  %v2272 = vadd.f32 %v2098, %v2248
  %v2273 = vadd.f32 %v2103, %v2253
  %v2274 = vadd.f32 %v2106, %v2256
  %v2275 = vld [vmem:[%s1793] sm:$0xff]
  %v2276 = vld [vmem:[%s1793 + $0x10] sm:$0xff]
  %v2277 = vld [vmem:[%s1793 + $0x20] sm:$0xff]
  %v2278 = vld [vmem:[%s1793 + $0x30] sm:$0xff]
  %v2279 = vld [vmem:[%s1793 + $0x40] sm:$0xff]
  %v2280 = vld [vmem:[%s1793 + $0x50] sm:$0xff]
  %v2281 = vld [vmem:[%s1793 + $0x60] sm:$0xff]
  %v2282 = vld [vmem:[%s1793 + $0x70] sm:$0xff]
  %v2283 = vld [vmem:[%s1793 + $0xa0] sm:$0xff]
  %v2284 = vld [vmem:[%s1793 + $0xb0] sm:$0xff]
  %v2285 = vld [vmem:[%s1793 + $0xc0] sm:$0xff]
  %v2286 = vld [vmem:[%s1793 + $0xd0] sm:$0xff]
  %v2287 = vld [vmem:[%s1793 + $0xe0] sm:$0xff]
  %v2288 = vld [vmem:[%s1793 + $0xf0] sm:$0xff]
  %v2289 = vld [vmem:[%s1793 + $0x100] sm:$0xff]
  %v2290 = vld [vmem:[%s1793 + $0x110] sm:$0xff]
  %v2291 = vpack.c.bf16 %v2276, %v2275
  %v2292 = vpack.c.bf16 %v2278, %v2277
  %v2293 = vpack.c.bf16 %v2280, %v2279
  %v2294 = vpack.c.bf16 %v2282, %v2281
  %v2295 = vpack.c.bf16 %v2284, %v2283
  %v2296 = vpack.c.bf16 %v2286, %v2285
  %v2297 = vpack.c.bf16 %v2288, %v2287
  %v2298 = vpack.c.bf16 %v2290, %v2289
  %s2299 = scalar_lea.vmem %s6, 12
  %v2300 = vld [vmem:[%s2299] sm:$0xf]
  %v2302 = vsel %vm139, %v2291, 0
  %v2305 = vsel %vm139, %v2292, 0
  %v2308 = vsel %vm139, %v2293, 0
  %v2311 = vsel %vm139, %v2294, 0
  %v2314 = vsel %vm139, %v2295, 0
  %v2317 = vsel %vm139, %v2296, 0
  %v2320 = vsel %vm139, %v2297, 0
  %v2323 = vsel %vm139, %v2298, 0
  %v2326 = vsel %vm273, %v2300, 0
  %2328 = vmatprep.subr.bf16.mxu0 0
  %2329 = vmatpush1.bf16.msra.mxu0 %v2326
  %2330 = vmatprep.subr.bf16.mxu0 0
  %2331 = vmatpush1.bf16.msra.mxu0 0
  %2332 = vmatprep.subr.bf16.mxu0 0
  %2333 = vmatpush1.bf16.msra.mxu0 0
  %2334 = vmatprep.subr.bf16.mxu0 0
  %2335 = vmatpush1.bf16.msra.mxu0 0
  %2336 = vmatprep.subr.bf16.mxu0 0
  %2337 = vmatpush1.bf16.msra.mxu0 0
  %2338 = vmatprep.subr.bf16.mxu0 0
  %2339 = vmatpush1.bf16.msra.mxu0 0
  %2340 = vmatprep.subr.bf16.mxu0 0
  %2341 = vmatpush1.bf16.msra.mxu0 0
  %2342 = vmatprep.subr.bf16.mxu0 0
  %2343 = vmatpush1.bf16.msra.mxu0 0
  %2344 = vmatprep.subr.bf16.mxu0 0
  %2345 = vmatpush1.bf16.msra.mxu0 0
  %2346 = vmatprep.subr.bf16.mxu0 0
  %2347 = vmatpush1.bf16.msra.mxu0 0
  %2348 = vmatprep.subr.bf16.mxu0 0
  %2349 = vmatpush1.bf16.msra.mxu0 0
  %2350 = vmatprep.subr.bf16.mxu0 0
  %2351 = vmatpush1.bf16.msra.mxu0 0
  %2352 = vmatprep.subr.bf16.mxu0 0
  %2353 = vmatpush1.bf16.msra.mxu0 0
  %2354 = vmatprep.subr.bf16.mxu0 0
  %2355 = vmatpush1.bf16.msra.mxu0 0
  %2356 = vmatprep.subr.bf16.mxu0 0
  %2357 = vmatpush1.bf16.msra.mxu0 0
  %2358 = vmatprep.subr.bf16.mxu0 0
  %2359 = vmatpush1.bf16.msra.mxu0 0
  %2360 = vmatprep.mubr.bf16.mxu0 0
  %2361 = vmatmul.mubr.bf16.gmra.mrb[0].mxu0 %v2302
  %v2362 = vpop.f32.mrb[0].mxu0
  %v2363 = vadd.f32 0.0, %v2362
  %v2364 = vpop.f32.mrb[0].mxu0
  %v2365 = vpop.f32.mrb[0].mxu0
  %v2366 = vadd.f32 0.0, %v2365
  %v2367 = vpop.f32.mrb[0].mxu0
  %2368 = vmatprep.mubr.bf16.mxu0 0
  %2369 = vmatmul.mubr.bf16.gmra.mrb[0].mxu0 %v2305
  %v2370 = vpop.f32.mrb[0].mxu0
  %v2371 = vadd.f32 0.0, %v2370
  %v2372 = vpop.f32.mrb[0].mxu0
  %v2373 = vpop.f32.mrb[0].mxu0
  %v2374 = vadd.f32 0.0, %v2373
  %v2375 = vpop.f32.mrb[0].mxu0
  %2376 = vmatprep.mubr.bf16.mxu0 0
  %2377 = vmatmul.mubr.bf16.gmra.mrb[0].mxu0 %v2308
  %v2378 = vpop.f32.mrb[0].mxu0
  %v2379 = vadd.f32 0.0, %v2378
  %v2380 = vpop.f32.mrb[0].mxu0
  %v2381 = vpop.f32.mrb[0].mxu0
  %v2382 = vadd.f32 0.0, %v2381
  %v2383 = vpop.f32.mrb[0].mxu0
  %2384 = vmatprep.mubr.bf16.mxu0 0
  %2385 = vmatmul.mubr.bf16.gmra.mrb[0].mxu0 %v2311
  %v2386 = vpop.f32.mrb[0].mxu0
  %v2387 = vadd.f32 0.0, %v2386
  %v2388 = vpop.f32.mrb[0].mxu0
  %v2389 = vpop.f32.mrb[0].mxu0
  %v2390 = vadd.f32 0.0, %v2389
  %v2391 = vpop.f32.mrb[0].mxu0
  %2392 = vmatprep.mubr.bf16.mxu0 0
  %2393 = vmatmul.mubr.bf16.gmra.mrb[0].mxu0 %v2314
  %v2394 = vpop.f32.mrb[0].mxu0
  %v2395 = vadd.f32 0.0, %v2394
  %v2396 = vpop.f32.mrb[0].mxu0
  %v2397 = vpop.f32.mrb[0].mxu0
  %v2398 = vadd.f32 0.0, %v2397
  %v2399 = vpop.f32.mrb[0].mxu0
  %2400 = vmatprep.mubr.bf16.mxu0 0
  %2401 = vmatmul.mubr.bf16.gmra.mrb[0].mxu0 %v2317
  %v2402 = vpop.f32.mrb[0].mxu0
  %v2403 = vadd.f32 0.0, %v2402
  %v2404 = vpop.f32.mrb[0].mxu0
  %v2405 = vpop.f32.mrb[0].mxu0
  %v2406 = vadd.f32 0.0, %v2405
  %v2407 = vpop.f32.mrb[0].mxu0
  %2408 = vmatprep.mubr.bf16.mxu0 0
  %2409 = vmatmul.mubr.bf16.gmra.mrb[0].mxu0 %v2320
  %v2410 = vpop.f32.mrb[0].mxu0
  %v2411 = vadd.f32 0.0, %v2410
  %v2412 = vpop.f32.mrb[0].mxu0
  %v2413 = vpop.f32.mrb[0].mxu0
  %v2414 = vadd.f32 0.0, %v2413
  %v2415 = vpop.f32.mrb[0].mxu0
  %2416 = vmatprep.mubr.bf16.mxu0 0
  %2417 = vmatmul.mubr.bf16.gmra.mrb[0].mxu0 %v2323
  %v2418 = vpop.f32.mrb[0].mxu0
  %v2419 = vadd.f32 0.0, %v2418
  %v2420 = vpop.f32.mrb[0].mxu0
  %v2421 = vpop.f32.mrb[0].mxu0
  %v2422 = vadd.f32 0.0, %v2421
  %v2423 = vpop.f32.mrb[0].mxu0
  %2424 = vdwg.mxu0
  %v2425 = vadd.f32 %v2259, %v2363
  %v2426 = vadd.f32 %v2260, %v2366
  %v2427 = vadd.f32 %v2261, %v2371
  %v2428 = vadd.f32 %v2262, %v2374
  %v2429 = vadd.f32 %v2263, %v2379
  %v2430 = vadd.f32 %v2264, %v2382
  %v2431 = vadd.f32 %v2265, %v2387
  %v2432 = vadd.f32 %v2266, %v2390
  %v2433 = vadd.f32 %v2267, %v2395
  %v2434 = vadd.f32 %v2268, %v2398
  %v2435 = vadd.f32 %v2269, %v2403
  %v2436 = vadd.f32 %v2270, %v2406
  %v2437 = vadd.f32 %v2271, %v2411
  %v2438 = vadd.f32 %v2272, %v2414
  %v2439 = vadd.f32 %v2273, %v2419
  %v2440 = vadd.f32 %v2274, %v2422
  %v2441 = vld [vmem:[%s1793 + $0x1] sm:$0xff]
  %v2442 = vld [vmem:[%s1793 + $0x11] sm:$0xff]
  %v2443 = vld [vmem:[%s1793 + $0x21] sm:$0xff]
  %v2444 = vld [vmem:[%s1793 + $0x31] sm:$0xff]
  %v2445 = vld [vmem:[%s1793 + $0x41] sm:$0xff]
  %v2446 = vld [vmem:[%s1793 + $0x51] sm:$0xff]
  %v2447 = vld [vmem:[%s1793 + $0x61] sm:$0xff]
  %v2448 = vld [vmem:[%s1793 + $0x71] sm:$0xff]
  %v2449 = vld [vmem:[%s1793 + $0xa1] sm:$0xff]
  %v2450 = vld [vmem:[%s1793 + $0xb1] sm:$0xff]
  %v2451 = vld [vmem:[%s1793 + $0xc1] sm:$0xff]
  %v2452 = vld [vmem:[%s1793 + $0xd1] sm:$0xff]
  %v2453 = vld [vmem:[%s1793 + $0xe1] sm:$0xff]
  %v2454 = vld [vmem:[%s1793 + $0xf1] sm:$0xff]
  %v2455 = vld [vmem:[%s1793 + $0x101] sm:$0xff]
  %v2456 = vld [vmem:[%s1793 + $0x111] sm:$0xff]
  %v2457 = vpack.c.bf16 %v2442, %v2441
  %v2458 = vpack.c.bf16 %v2444, %v2443
  %v2459 = vpack.c.bf16 %v2446, %v2445
  %v2460 = vpack.c.bf16 %v2448, %v2447
  %v2461 = vpack.c.bf16 %v2450, %v2449
  %v2462 = vpack.c.bf16 %v2452, %v2451
  %v2463 = vpack.c.bf16 %v2454, %v2453
  %v2464 = vpack.c.bf16 %v2456, %v2455
  %s2465 = scalar_lea.vmem %s6, 16
  %v2466 = vld [vmem:[%s2465] sm:$0xf]
  %v2468 = vsel %vm139, %v2457, 0
  %v2471 = vsel %vm139, %v2458, 0
  %v2474 = vsel %vm139, %v2459, 0
  %v2477 = vsel %vm139, %v2460, 0
  %v2480 = vsel %vm139, %v2461, 0
  %v2483 = vsel %vm139, %v2462, 0
  %v2486 = vsel %vm139, %v2463, 0
  %v2489 = vsel %vm139, %v2464, 0
  %v2492 = vsel %vm273, %v2466, 0
  %2494 = vmatprep.subr.bf16.mxu0 0
  %2495 = vmatpush1.bf16.msra.mxu0 %v2492
  %2496 = vmatprep.subr.bf16.mxu0 0
  %2497 = vmatpush1.bf16.msra.mxu0 0
  %2498 = vmatprep.subr.bf16.mxu0 0
  %2499 = vmatpush1.bf16.msra.mxu0 0
  %2500 = vmatprep.subr.bf16.mxu0 0
  %2501 = vmatpush1.bf16.msra.mxu0 0
  %2502 = vmatprep.subr.bf16.mxu0 0
  %2503 = vmatpush1.bf16.msra.mxu0 0
  %2504 = vmatprep.subr.bf16.mxu0 0
  %2505 = vmatpush1.bf16.msra.mxu0 0
  %2506 = vmatprep.subr.bf16.mxu0 0
  %2507 = vmatpush1.bf16.msra.mxu0 0
  %2508 = vmatprep.subr.bf16.mxu0 0
  %2509 = vmatpush1.bf16.msra.mxu0 0
  %2510 = vmatprep.subr.bf16.mxu0 0
  %2511 = vmatpush1.bf16.msra.mxu0 0
  %2512 = vmatprep.subr.bf16.mxu0 0
  %2513 = vmatpush1.bf16.msra.mxu0 0
  %2514 = vmatprep.subr.bf16.mxu0 0
  %2515 = vmatpush1.bf16.msra.mxu0 0
  %2516 = vmatprep.subr.bf16.mxu0 0
  %2517 = vmatpush1.bf16.msra.mxu0 0
  %2518 = vmatprep.subr.bf16.mxu0 0
  %2519 = vmatpush1.bf16.msra.mxu0 0
  %2520 = vmatprep.subr.bf16.mxu0 0
  %2521 = vmatpush1.bf16.msra.mxu0 0
  %2522 = vmatprep.subr.bf16.mxu0 0
  %2523 = vmatpush1.bf16.msra.mxu0 0
  %2524 = vmatprep.subr.bf16.mxu0 0
  %2525 = vmatpush1.bf16.msra.mxu0 0
  %2526 = vmatprep.mubr.bf16.mxu0 0
  %2527 = vmatmul.mubr.bf16.gmra.mrb[0].mxu0 %v2468
  %v2528 = vpop.f32.mrb[0].mxu0
  %v2529 = vadd.f32 0.0, %v2528
  %v2530 = vpop.f32.mrb[0].mxu0
  %v2531 = vpop.f32.mrb[0].mxu0
  %v2532 = vadd.f32 0.0, %v2531
  %v2533 = vpop.f32.mrb[0].mxu0
  %2534 = vmatprep.mubr.bf16.mxu0 0
  %2535 = vmatmul.mubr.bf16.gmra.mrb[0].mxu0 %v2471
  %v2536 = vpop.f32.mrb[0].mxu0
  %v2537 = vadd.f32 0.0, %v2536
  %v2538 = vpop.f32.mrb[0].mxu0
  %v2539 = vpop.f32.mrb[0].mxu0
  %v2540 = vadd.f32 0.0, %v2539
  %v2541 = vpop.f32.mrb[0].mxu0
  %2542 = vmatprep.mubr.bf16.mxu0 0
  %2543 = vmatmul.mubr.bf16.gmra.mrb[0].mxu0 %v2474
  %v2544 = vpop.f32.mrb[0].mxu0
  %v2545 = vadd.f32 0.0, %v2544
  %v2546 = vpop.f32.mrb[0].mxu0
  %v2547 = vpop.f32.mrb[0].mxu0
  %v2548 = vadd.f32 0.0, %v2547
  %v2549 = vpop.f32.mrb[0].mxu0
  %2550 = vmatprep.mubr.bf16.mxu0 0
  %2551 = vmatmul.mubr.bf16.gmra.mrb[0].mxu0 %v2477
  %v2552 = vpop.f32.mrb[0].mxu0
  %v2553 = vadd.f32 0.0, %v2552
  %v2554 = vpop.f32.mrb[0].mxu0
  %v2555 = vpop.f32.mrb[0].mxu0
  %v2556 = vadd.f32 0.0, %v2555
  %v2557 = vpop.f32.mrb[0].mxu0
  %2558 = vmatprep.mubr.bf16.mxu0 0
  %2559 = vmatmul.mubr.bf16.gmra.mrb[0].mxu0 %v2480
  %v2560 = vpop.f32.mrb[0].mxu0
  %v2561 = vadd.f32 0.0, %v2560
  %v2562 = vpop.f32.mrb[0].mxu0
  %v2563 = vpop.f32.mrb[0].mxu0
  %v2564 = vadd.f32 0.0, %v2563
  %v2565 = vpop.f32.mrb[0].mxu0
  %2566 = vmatprep.mubr.bf16.mxu0 0
  %2567 = vmatmul.mubr.bf16.gmra.mrb[0].mxu0 %v2483
  %v2568 = vpop.f32.mrb[0].mxu0
  %v2569 = vadd.f32 0.0, %v2568
  %v2570 = vpop.f32.mrb[0].mxu0
  %v2571 = vpop.f32.mrb[0].mxu0
  %v2572 = vadd.f32 0.0, %v2571
  %v2573 = vpop.f32.mrb[0].mxu0
  %2574 = vmatprep.mubr.bf16.mxu0 0
  %2575 = vmatmul.mubr.bf16.gmra.mrb[0].mxu0 %v2486
  %v2576 = vpop.f32.mrb[0].mxu0
  %v2577 = vadd.f32 0.0, %v2576
  %v2578 = vpop.f32.mrb[0].mxu0
  %v2579 = vpop.f32.mrb[0].mxu0
  %v2580 = vadd.f32 0.0, %v2579
  %v2581 = vpop.f32.mrb[0].mxu0
  %2582 = vmatprep.mubr.bf16.mxu0 0
  %2583 = vmatmul.mubr.bf16.gmra.mrb[0].mxu0 %v2489
  %v2584 = vpop.f32.mrb[0].mxu0
  %v2585 = vadd.f32 0.0, %v2584
  %v2586 = vpop.f32.mrb[0].mxu0
  %v2587 = vpop.f32.mrb[0].mxu0
  %v2588 = vadd.f32 0.0, %v2587
  %v2589 = vpop.f32.mrb[0].mxu0
  %2590 = vdwg.mxu0
  %v2591 = vadd.f32 %v2425, %v2529
  %v2592 = vadd.f32 %v2426, %v2532
  %v2593 = vadd.f32 %v2427, %v2537
  %v2594 = vadd.f32 %v2428, %v2540
  %v2595 = vadd.f32 %v2429, %v2545
  %v2596 = vadd.f32 %v2430, %v2548
  %v2597 = vadd.f32 %v2431, %v2553
  %v2598 = vadd.f32 %v2432, %v2556
  %v2599 = vadd.f32 %v2433, %v2561
  %v2600 = vadd.f32 %v2434, %v2564
  %v2601 = vadd.f32 %v2435, %v2569
  %v2602 = vadd.f32 %v2436, %v2572
  %v2603 = vadd.f32 %v2437, %v2577
  %v2604 = vadd.f32 %v2438, %v2580
  %v2605 = vadd.f32 %v2439, %v2585
  %v2606 = vadd.f32 %v2440, %v2588
  %v2607 = vld [vmem:[%s1793 + $0x2] sm:$0xff]
  %v2608 = vld [vmem:[%s1793 + $0x12] sm:$0xff]
  %v2609 = vld [vmem:[%s1793 + $0x22] sm:$0xff]
  %v2610 = vld [vmem:[%s1793 + $0x32] sm:$0xff]
  %v2611 = vld [vmem:[%s1793 + $0x42] sm:$0xff]
  %v2612 = vld [vmem:[%s1793 + $0x52] sm:$0xff]
  %v2613 = vld [vmem:[%s1793 + $0x62] sm:$0xff]
  %v2614 = vld [vmem:[%s1793 + $0x72] sm:$0xff]
  %v2615 = vld [vmem:[%s1793 + $0xa2] sm:$0xff]
  %v2616 = vld [vmem:[%s1793 + $0xb2] sm:$0xff]
  %v2617 = vld [vmem:[%s1793 + $0xc2] sm:$0xff]
  %v2618 = vld [vmem:[%s1793 + $0xd2] sm:$0xff]
  %v2619 = vld [vmem:[%s1793 + $0xe2] sm:$0xff]
  %v2620 = vld [vmem:[%s1793 + $0xf2] sm:$0xff]
  %v2621 = vld [vmem:[%s1793 + $0x102] sm:$0xff]
  %v2622 = vld [vmem:[%s1793 + $0x112] sm:$0xff]
  %v2623 = vpack.c.bf16 %v2608, %v2607
  %v2624 = vpack.c.bf16 %v2610, %v2609
  %v2625 = vpack.c.bf16 %v2612, %v2611
  %v2626 = vpack.c.bf16 %v2614, %v2613
  %v2627 = vpack.c.bf16 %v2616, %v2615
  %v2628 = vpack.c.bf16 %v2618, %v2617
  %v2629 = vpack.c.bf16 %v2620, %v2619
  %v2630 = vpack.c.bf16 %v2622, %v2621
  %s2631 = scalar_lea.vmem %s6, 20
  %v2632 = vld [vmem:[%s2631] sm:$0xf]
  %v2634 = vsel %vm139, %v2623, 0
  %v2637 = vsel %vm139, %v2624, 0
  %v2640 = vsel %vm139, %v2625, 0
  %v2643 = vsel %vm139, %v2626, 0
  %v2646 = vsel %vm139, %v2627, 0
  %v2649 = vsel %vm139, %v2628, 0
  %v2652 = vsel %vm139, %v2629, 0
  %v2655 = vsel %vm139, %v2630, 0
  %v2658 = vsel %vm273, %v2632, 0
  %2660 = vmatprep.subr.bf16.mxu0 0
  %2661 = vmatpush1.bf16.msra.mxu0 %v2658
  %2662 = vmatprep.subr.bf16.mxu0 0
  %2663 = vmatpush1.bf16.msra.mxu0 0
  %2664 = vmatprep.subr.bf16.mxu0 0
  %2665 = vmatpush1.bf16.msra.mxu0 0
  %2666 = vmatprep.subr.bf16.mxu0 0
  %2667 = vmatpush1.bf16.msra.mxu0 0
  %2668 = vmatprep.subr.bf16.mxu0 0
  %2669 = vmatpush1.bf16.msra.mxu0 0
  %2670 = vmatprep.subr.bf16.mxu0 0
  %2671 = vmatpush1.bf16.msra.mxu0 0
  %2672 = vmatprep.subr.bf16.mxu0 0
  %2673 = vmatpush1.bf16.msra.mxu0 0
  %2674 = vmatprep.subr.bf16.mxu0 0
  %2675 = vmatpush1.bf16.msra.mxu0 0
  %2676 = vmatprep.subr.bf16.mxu0 0
  %2677 = vmatpush1.bf16.msra.mxu0 0
  %2678 = vmatprep.subr.bf16.mxu0 0
  %2679 = vmatpush1.bf16.msra.mxu0 0
  %2680 = vmatprep.subr.bf16.mxu0 0
  %2681 = vmatpush1.bf16.msra.mxu0 0
  %2682 = vmatprep.subr.bf16.mxu0 0
  %2683 = vmatpush1.bf16.msra.mxu0 0
  %2684 = vmatprep.subr.bf16.mxu0 0
  %2685 = vmatpush1.bf16.msra.mxu0 0
  %2686 = vmatprep.subr.bf16.mxu0 0
  %2687 = vmatpush1.bf16.msra.mxu0 0
  %2688 = vmatprep.subr.bf16.mxu0 0
  %2689 = vmatpush1.bf16.msra.mxu0 0
  %2690 = vmatprep.subr.bf16.mxu0 0
  %2691 = vmatpush1.bf16.msra.mxu0 0
  %2692 = vmatprep.mubr.bf16.mxu0 0
  %2693 = vmatmul.mubr.bf16.gmra.mrb[0].mxu0 %v2634
  %v2694 = vpop.f32.mrb[0].mxu0
  %v2695 = vadd.f32 0.0, %v2694
  %v2696 = vpop.f32.mrb[0].mxu0
  %v2697 = vpop.f32.mrb[0].mxu0
  %v2698 = vadd.f32 0.0, %v2697
  %v2699 = vpop.f32.mrb[0].mxu0
  %2700 = vmatprep.mubr.bf16.mxu0 0
  %2701 = vmatmul.mubr.bf16.gmra.mrb[0].mxu0 %v2637
  %v2702 = vpop.f32.mrb[0].mxu0
  %v2703 = vadd.f32 0.0, %v2702
  %v2704 = vpop.f32.mrb[0].mxu0
  %v2705 = vpop.f32.mrb[0].mxu0
  %v2706 = vadd.f32 0.0, %v2705
  %v2707 = vpop.f32.mrb[0].mxu0
  %2708 = vmatprep.mubr.bf16.mxu0 0
  %2709 = vmatmul.mubr.bf16.gmra.mrb[0].mxu0 %v2640
  %v2710 = vpop.f32.mrb[0].mxu0
  %v2711 = vadd.f32 0.0, %v2710
  %v2712 = vpop.f32.mrb[0].mxu0
  %v2713 = vpop.f32.mrb[0].mxu0
  %v2714 = vadd.f32 0.0, %v2713
  %v2715 = vpop.f32.mrb[0].mxu0
  %2716 = vmatprep.mubr.bf16.mxu0 0
  %2717 = vmatmul.mubr.bf16.gmra.mrb[0].mxu0 %v2643
  %v2718 = vpop.f32.mrb[0].mxu0
  %v2719 = vadd.f32 0.0, %v2718
  %v2720 = vpop.f32.mrb[0].mxu0
  %v2721 = vpop.f32.mrb[0].mxu0
  %v2722 = vadd.f32 0.0, %v2721
  %v2723 = vpop.f32.mrb[0].mxu0
  %2724 = vmatprep.mubr.bf16.mxu0 0
  %2725 = vmatmul.mubr.bf16.gmra.mrb[0].mxu0 %v2646
  %v2726 = vpop.f32.mrb[0].mxu0
  %v2727 = vadd.f32 0.0, %v2726
  %v2728 = vpop.f32.mrb[0].mxu0
  %v2729 = vpop.f32.mrb[0].mxu0
  %v2730 = vadd.f32 0.0, %v2729
  %v2731 = vpop.f32.mrb[0].mxu0
  %2732 = vmatprep.mubr.bf16.mxu0 0
  %2733 = vmatmul.mubr.bf16.gmra.mrb[0].mxu0 %v2649
  %v2734 = vpop.f32.mrb[0].mxu0
  %v2735 = vadd.f32 0.0, %v2734
  %v2736 = vpop.f32.mrb[0].mxu0
  %v2737 = vpop.f32.mrb[0].mxu0
  %v2738 = vadd.f32 0.0, %v2737
  %v2739 = vpop.f32.mrb[0].mxu0
  %2740 = vmatprep.mubr.bf16.mxu0 0
  %2741 = vmatmul.mubr.bf16.gmra.mrb[0].mxu0 %v2652
  %v2742 = vpop.f32.mrb[0].mxu0
  %v2743 = vadd.f32 0.0, %v2742
  %v2744 = vpop.f32.mrb[0].mxu0
  %v2745 = vpop.f32.mrb[0].mxu0
  %v2746 = vadd.f32 0.0, %v2745
  %v2747 = vpop.f32.mrb[0].mxu0
  %2748 = vmatprep.mubr.bf16.mxu0 0
  %2749 = vmatmul.mubr.bf16.gmra.mrb[0].mxu0 %v2655
  %v2750 = vpop.f32.mrb[0].mxu0
  %v2751 = vadd.f32 0.0, %v2750
  %v2752 = vpop.f32.mrb[0].mxu0
  %v2753 = vpop.f32.mrb[0].mxu0
  %v2754 = vadd.f32 0.0, %v2753
  %v2755 = vpop.f32.mrb[0].mxu0
  %2756 = vdwg.mxu0
  %v2757 = vadd.f32 %v2591, %v2695
  %v2758 = vadd.f32 %v2592, %v2698
  %v2759 = vadd.f32 %v2593, %v2703
  %v2760 = vadd.f32 %v2594, %v2706
  %v2761 = vadd.f32 %v2595, %v2711
  %v2762 = vadd.f32 %v2596, %v2714
  %v2763 = vadd.f32 %v2597, %v2719
  %v2764 = vadd.f32 %v2598, %v2722
  %v2765 = vadd.f32 %v2599, %v2727
  %v2766 = vadd.f32 %v2600, %v2730
  %v2767 = vadd.f32 %v2601, %v2735
  %v2768 = vadd.f32 %v2602, %v2738
  %v2769 = vadd.f32 %v2603, %v2743
  %v2770 = vadd.f32 %v2604, %v2746
  %v2771 = vadd.f32 %v2605, %v2751
  %v2772 = vadd.f32 %v2606, %v2754
  %s2773 = scalar_lea.vmem [#allocation3], 32
  %v2774 = vld [vmem:[%s2773] sm:$0xff]
  %v2775 = vld [vmem:[%s2773 + $0x10] sm:$0xff]
  %v2776 = vld [vmem:[%s2773 + $0x20] sm:$0xff]
  %v2777 = vld [vmem:[%s2773 + $0x30] sm:$0xff]
  %v2778 = vld [vmem:[%s2773 + $0x40] sm:$0xff]
  %v2779 = vld [vmem:[%s2773 + $0x50] sm:$0xff]
  %v2780 = vld [vmem:[%s2773 + $0x60] sm:$0xff]
  %v2781 = vld [vmem:[%s2773 + $0x70] sm:$0xff]
  %v2782 = vld [vmem:[%s2773 + $0xa0] sm:$0xff]
  %v2783 = vld [vmem:[%s2773 + $0xb0] sm:$0xff]
  %v2784 = vld [vmem:[%s2773 + $0xc0] sm:$0xff]
  %v2785 = vld [vmem:[%s2773 + $0xd0] sm:$0xff]
  %v2786 = vld [vmem:[%s2773 + $0xe0] sm:$0xff]
  %v2787 = vld [vmem:[%s2773 + $0xf0] sm:$0xff]
  %v2788 = vld [vmem:[%s2773 + $0x100] sm:$0xff]
  %v2789 = vld [vmem:[%s2773 + $0x110] sm:$0xff]
  %v2790 = vpack.c.bf16 %v2775, %v2774
  %v2791 = vpack.c.bf16 %v2777, %v2776
  %v2792 = vpack.c.bf16 %v2779, %v2778
  %v2793 = vpack.c.bf16 %v2781, %v2780
  %v2794 = vpack.c.bf16 %v2783, %v2782
  %v2795 = vpack.c.bf16 %v2785, %v2784
  %v2796 = vpack.c.bf16 %v2787, %v2786
  %v2797 = vpack.c.bf16 %v2789, %v2788
  %s2798 = scalar_lea.vmem %s6, 24
  %v2799 = vld [vmem:[%s2798] sm:$0xf]
  %v2801 = vsel %vm139, %v2790, 0
  %v2804 = vsel %vm139, %v2791, 0
  %v2807 = vsel %vm139, %v2792, 0
  %v2810 = vsel %vm139, %v2793, 0
  %v2813 = vsel %vm139, %v2794, 0
  %v2816 = vsel %vm139, %v2795, 0
  %v2819 = vsel %vm139, %v2796, 0
  %v2822 = vsel %vm139, %v2797, 0
  %v2825 = vsel %vm273, %v2799, 0
  %2827 = vmatprep.subr.bf16.mxu0 0
  %2828 = vmatpush1.bf16.msra.mxu0 %v2825
  %2829 = vmatprep.subr.bf16.mxu0 0
  %2830 = vmatpush1.bf16.msra.mxu0 0
  %2831 = vmatprep.subr.bf16.mxu0 0
  %2832 = vmatpush1.bf16.msra.mxu0 0
  %2833 = vmatprep.subr.bf16.mxu0 0
  %2834 = vmatpush1.bf16.msra.mxu0 0
  %2835 = vmatprep.subr.bf16.mxu0 0
  %2836 = vmatpush1.bf16.msra.mxu0 0
  %2837 = vmatprep.subr.bf16.mxu0 0
  %2838 = vmatpush1.bf16.msra.mxu0 0
  %2839 = vmatprep.subr.bf16.mxu0 0
  %2840 = vmatpush1.bf16.msra.mxu0 0
  %2841 = vmatprep.subr.bf16.mxu0 0
  %2842 = vmatpush1.bf16.msra.mxu0 0
  %2843 = vmatprep.subr.bf16.mxu0 0
  %2844 = vmatpush1.bf16.msra.mxu0 0
  %2845 = vmatprep.subr.bf16.mxu0 0
  %2846 = vmatpush1.bf16.msra.mxu0 0
  %2847 = vmatprep.subr.bf16.mxu0 0
  %2848 = vmatpush1.bf16.msra.mxu0 0
  %2849 = vmatprep.subr.bf16.mxu0 0
  %2850 = vmatpush1.bf16.msra.mxu0 0
  %2851 = vmatprep.subr.bf16.mxu0 0
  %2852 = vmatpush1.bf16.msra.mxu0 0
  %2853 = vmatprep.subr.bf16.mxu0 0
  %2854 = vmatpush1.bf16.msra.mxu0 0
  %2855 = vmatprep.subr.bf16.mxu0 0
  %2856 = vmatpush1.bf16.msra.mxu0 0
  %2857 = vmatprep.subr.bf16.mxu0 0
  %2858 = vmatpush1.bf16.msra.mxu0 0
  %2859 = vmatprep.mubr.bf16.mxu0 0
  %2860 = vmatmul.mubr.bf16.gmra.mrb[0].mxu0 %v2801
  %v2861 = vpop.f32.mrb[0].mxu0
  %v2862 = vadd.f32 0.0, %v2861
  %v2863 = vpop.f32.mrb[0].mxu0
  %v2864 = vpop.f32.mrb[0].mxu0
  %v2865 = vadd.f32 0.0, %v2864
  %v2866 = vpop.f32.mrb[0].mxu0
  %2867 = vmatprep.mubr.bf16.mxu0 0
  %2868 = vmatmul.mubr.bf16.gmra.mrb[0].mxu0 %v2804
  %v2869 = vpop.f32.mrb[0].mxu0
  %v2870 = vadd.f32 0.0, %v2869
  %v2871 = vpop.f32.mrb[0].mxu0
  %v2872 = vpop.f32.mrb[0].mxu0
  %v2873 = vadd.f32 0.0, %v2872
  %v2874 = vpop.f32.mrb[0].mxu0
  %2875 = vmatprep.mubr.bf16.mxu0 0
  %2876 = vmatmul.mubr.bf16.gmra.mrb[0].mxu0 %v2807
  %v2877 = vpop.f32.mrb[0].mxu0
  %v2878 = vadd.f32 0.0, %v2877
  %v2879 = vpop.f32.mrb[0].mxu0
  %v2880 = vpop.f32.mrb[0].mxu0
  %v2881 = vadd.f32 0.0, %v2880
  %v2882 = vpop.f32.mrb[0].mxu0
  %2883 = vmatprep.mubr.bf16.mxu0 0
  %2884 = vmatmul.mubr.bf16.gmra.mrb[0].mxu0 %v2810
  %v2885 = vpop.f32.mrb[0].mxu0
  %v2886 = vadd.f32 0.0, %v2885
  %v2887 = vpop.f32.mrb[0].mxu0
  %v2888 = vpop.f32.mrb[0].mxu0
  %v2889 = vadd.f32 0.0, %v2888
  %v2890 = vpop.f32.mrb[0].mxu0
  %2891 = vmatprep.mubr.bf16.mxu0 0
  %2892 = vmatmul.mubr.bf16.gmra.mrb[0].mxu0 %v2813
  %v2893 = vpop.f32.mrb[0].mxu0
  %v2894 = vadd.f32 0.0, %v2893
  %v2895 = vpop.f32.mrb[0].mxu0
  %v2896 = vpop.f32.mrb[0].mxu0
  %v2897 = vadd.f32 0.0, %v2896
  %v2898 = vpop.f32.mrb[0].mxu0
  %2899 = vmatprep.mubr.bf16.mxu0 0
  %2900 = vmatmul.mubr.bf16.gmra.mrb[0].mxu0 %v2816
  %v2901 = vpop.f32.mrb[0].mxu0
  %v2902 = vadd.f32 0.0, %v2901
  %v2903 = vpop.f32.mrb[0].mxu0
  %v2904 = vpop.f32.mrb[0].mxu0
  %v2905 = vadd.f32 0.0, %v2904
  %v2906 = vpop.f32.mrb[0].mxu0
  %2907 = vmatprep.mubr.bf16.mxu0 0
  %2908 = vmatmul.mubr.bf16.gmra.mrb[0].mxu0 %v2819
  %v2909 = vpop.f32.mrb[0].mxu0
  %v2910 = vadd.f32 0.0, %v2909
  %v2911 = vpop.f32.mrb[0].mxu0
  %v2912 = vpop.f32.mrb[0].mxu0
  %v2913 = vadd.f32 0.0, %v2912
  %v2914 = vpop.f32.mrb[0].mxu0
  %2915 = vmatprep.mubr.bf16.mxu0 0
  %2916 = vmatmul.mubr.bf16.gmra.mrb[0].mxu0 %v2822
  %v2917 = vpop.f32.mrb[0].mxu0
  %v2918 = vadd.f32 0.0, %v2917
  %v2919 = vpop.f32.mrb[0].mxu0
  %v2920 = vpop.f32.mrb[0].mxu0
  %v2921 = vadd.f32 0.0, %v2920
  %v2922 = vpop.f32.mrb[0].mxu0
  %2923 = vdwg.mxu0
  %v2924 = vadd.f32 %v2757, %v2862
  %v2925 = vadd.f32 %v2758, %v2865
  %v2926 = vadd.f32 %v2759, %v2870
  %v2927 = vadd.f32 %v2760, %v2873
  %v2928 = vadd.f32 %v2761, %v2878
  %v2929 = vadd.f32 %v2762, %v2881
  %v2930 = vadd.f32 %v2763, %v2886
  %v2931 = vadd.f32 %v2764, %v2889
  %v2932 = vadd.f32 %v2765, %v2894
  %v2933 = vadd.f32 %v2766, %v2897
  %v2934 = vadd.f32 %v2767, %v2902
  %v2935 = vadd.f32 %v2768, %v2905
  %v2936 = vadd.f32 %v2769, %v2910
  %v2937 = vadd.f32 %v2770, %v2913
  %v2938 = vadd.f32 %v2771, %v2918
  %v2939 = vadd.f32 %v2772, %v2921
  %v2940 = vld [vmem:[%s2773 + $0x1] sm:$0xff]
  %v2941 = vld [vmem:[%s2773 + $0x11] sm:$0xff]
  %v2942 = vld [vmem:[%s2773 + $0x21] sm:$0xff]
  %v2943 = vld [vmem:[%s2773 + $0x31] sm:$0xff]
  %v2944 = vld [vmem:[%s2773 + $0x41] sm:$0xff]
  %v2945 = vld [vmem:[%s2773 + $0x51] sm:$0xff]
  %v2946 = vld [vmem:[%s2773 + $0x61] sm:$0xff]
  %v2947 = vld [vmem:[%s2773 + $0x71] sm:$0xff]
  %v2948 = vld [vmem:[%s2773 + $0xa1] sm:$0xff]
  %v2949 = vld [vmem:[%s2773 + $0xb1] sm:$0xff]
  %v2950 = vld [vmem:[%s2773 + $0xc1] sm:$0xff]
  %v2951 = vld [vmem:[%s2773 + $0xd1] sm:$0xff]
  %v2952 = vld [vmem:[%s2773 + $0xe1] sm:$0xff]
  %v2953 = vld [vmem:[%s2773 + $0xf1] sm:$0xff]
  %v2954 = vld [vmem:[%s2773 + $0x101] sm:$0xff]
  %v2955 = vld [vmem:[%s2773 + $0x111] sm:$0xff]
  %v2956 = vpack.c.bf16 %v2941, %v2940
  %v2957 = vpack.c.bf16 %v2943, %v2942
  %v2958 = vpack.c.bf16 %v2945, %v2944
  %v2959 = vpack.c.bf16 %v2947, %v2946
  %v2960 = vpack.c.bf16 %v2949, %v2948
  %v2961 = vpack.c.bf16 %v2951, %v2950
  %v2962 = vpack.c.bf16 %v2953, %v2952
  %v2963 = vpack.c.bf16 %v2955, %v2954
  %s2964 = scalar_lea.vmem %s6, 28
  %v2965 = vld [vmem:[%s2964] sm:$0xf]
  %v2967 = vsel %vm139, %v2956, 0
  %v2970 = vsel %vm139, %v2957, 0
  %v2973 = vsel %vm139, %v2958, 0
  %v2976 = vsel %vm139, %v2959, 0
  %v2979 = vsel %vm139, %v2960, 0
  %v2982 = vsel %vm139, %v2961, 0
  %v2985 = vsel %vm139, %v2962, 0
  %v2988 = vsel %vm139, %v2963, 0
  %v2991 = vsel %vm273, %v2965, 0
  %2993 = vmatprep.subr.bf16.mxu0 0
  %2994 = vmatpush1.bf16.msra.mxu0 %v2991
  %2995 = vmatprep.subr.bf16.mxu0 0
  %2996 = vmatpush1.bf16.msra.mxu0 0
  %2997 = vmatprep.subr.bf16.mxu0 0
  %2998 = vmatpush1.bf16.msra.mxu0 0
  %2999 = vmatprep.subr.bf16.mxu0 0
  %3000 = vmatpush1.bf16.msra.mxu0 0
  %3001 = vmatprep.subr.bf16.mxu0 0
  %3002 = vmatpush1.bf16.msra.mxu0 0
  %3003 = vmatprep.subr.bf16.mxu0 0
  %3004 = vmatpush1.bf16.msra.mxu0 0
  %3005 = vmatprep.subr.bf16.mxu0 0
  %3006 = vmatpush1.bf16.msra.mxu0 0
  %3007 = vmatprep.subr.bf16.mxu0 0
  %3008 = vmatpush1.bf16.msra.mxu0 0
  %3009 = vmatprep.subr.bf16.mxu0 0
  %3010 = vmatpush1.bf16.msra.mxu0 0
  %3011 = vmatprep.subr.bf16.mxu0 0
  %3012 = vmatpush1.bf16.msra.mxu0 0
  %3013 = vmatprep.subr.bf16.mxu0 0
  %3014 = vmatpush1.bf16.msra.mxu0 0
  %3015 = vmatprep.subr.bf16.mxu0 0
  %3016 = vmatpush1.bf16.msra.mxu0 0
  %3017 = vmatprep.subr.bf16.mxu0 0
  %3018 = vmatpush1.bf16.msra.mxu0 0
  %3019 = vmatprep.subr.bf16.mxu0 0
  %3020 = vmatpush1.bf16.msra.mxu0 0
  %3021 = vmatprep.subr.bf16.mxu0 0
  %3022 = vmatpush1.bf16.msra.mxu0 0
  %3023 = vmatprep.subr.bf16.mxu0 0
  %3024 = vmatpush1.bf16.msra.mxu0 0
  %3025 = vmatprep.mubr.bf16.mxu0 0
  %3026 = vmatmul.mubr.bf16.gmra.mrb[0].mxu0 %v2967
  %v3027 = vpop.f32.mrb[0].mxu0
  %v3028 = vadd.f32 0.0, %v3027
  %v3029 = vpop.f32.mrb[0].mxu0
  %v3030 = vpop.f32.mrb[0].mxu0
  %v3031 = vadd.f32 0.0, %v3030
  %v3032 = vpop.f32.mrb[0].mxu0
  %3033 = vmatprep.mubr.bf16.mxu0 0
  %3034 = vmatmul.mubr.bf16.gmra.mrb[0].mxu0 %v2970
  %v3035 = vpop.f32.mrb[0].mxu0
  %v3036 = vadd.f32 0.0, %v3035
  %v3037 = vpop.f32.mrb[0].mxu0
  %v3038 = vpop.f32.mrb[0].mxu0
  %v3039 = vadd.f32 0.0, %v3038
  %v3040 = vpop.f32.mrb[0].mxu0
  %3041 = vmatprep.mubr.bf16.mxu0 0
  %3042 = vmatmul.mubr.bf16.gmra.mrb[0].mxu0 %v2973
  %v3043 = vpop.f32.mrb[0].mxu0
  %v3044 = vadd.f32 0.0, %v3043
  %v3045 = vpop.f32.mrb[0].mxu0
  %v3046 = vpop.f32.mrb[0].mxu0
  %v3047 = vadd.f32 0.0, %v3046
  %v3048 = vpop.f32.mrb[0].mxu0
  %3049 = vmatprep.mubr.bf16.mxu0 0
  %3050 = vmatmul.mubr.bf16.gmra.mrb[0].mxu0 %v2976
  %v3051 = vpop.f32.mrb[0].mxu0
  %v3052 = vadd.f32 0.0, %v3051
  %v3053 = vpop.f32.mrb[0].mxu0
  %v3054 = vpop.f32.mrb[0].mxu0
  %v3055 = vadd.f32 0.0, %v3054
  %v3056 = vpop.f32.mrb[0].mxu0
  %3057 = vmatprep.mubr.bf16.mxu0 0
  %3058 = vmatmul.mubr.bf16.gmra.mrb[0].mxu0 %v2979
  %v3059 = vpop.f32.mrb[0].mxu0
  %v3060 = vadd.f32 0.0, %v3059
  %v3061 = vpop.f32.mrb[0].mxu0
  %v3062 = vpop.f32.mrb[0].mxu0
  %v3063 = vadd.f32 0.0, %v3062
  %v3064 = vpop.f32.mrb[0].mxu0
  %3065 = vmatprep.mubr.bf16.mxu0 0
  %3066 = vmatmul.mubr.bf16.gmra.mrb[0].mxu0 %v2982
  %v3067 = vpop.f32.mrb[0].mxu0
  %v3068 = vadd.f32 0.0, %v3067
  %v3069 = vpop.f32.mrb[0].mxu0
  %v3070 = vpop.f32.mrb[0].mxu0
  %v3071 = vadd.f32 0.0, %v3070
  %v3072 = vpop.f32.mrb[0].mxu0
  %3073 = vmatprep.mubr.bf16.mxu0 0
  %3074 = vmatmul.mubr.bf16.gmra.mrb[0].mxu0 %v2985
  %v3075 = vpop.f32.mrb[0].mxu0
  %v3076 = vadd.f32 0.0, %v3075
  %v3077 = vpop.f32.mrb[0].mxu0
  %v3078 = vpop.f32.mrb[0].mxu0
  %v3079 = vadd.f32 0.0, %v3078
  %v3080 = vpop.f32.mrb[0].mxu0
  %3081 = vmatprep.mubr.bf16.mxu0 0
  %3082 = vmatmul.mubr.bf16.gmra.mrb[0].mxu0 %v2988
  %v3083 = vpop.f32.mrb[0].mxu0
  %v3084 = vadd.f32 0.0, %v3083
  %v3085 = vpop.f32.mrb[0].mxu0
  %v3086 = vpop.f32.mrb[0].mxu0
  %v3087 = vadd.f32 0.0, %v3086
  %v3088 = vpop.f32.mrb[0].mxu0
  %3089 = vdwg.mxu0
  %v3090 = vadd.f32 %v2924, %v3028
  %v3091 = vadd.f32 %v2925, %v3031
  %v3092 = vadd.f32 %v2926, %v3036
  %v3093 = vadd.f32 %v2927, %v3039
  %v3094 = vadd.f32 %v2928, %v3044
  %v3095 = vadd.f32 %v2929, %v3047
  %v3096 = vadd.f32 %v2930, %v3052
  %v3097 = vadd.f32 %v2931, %v3055
  %v3098 = vadd.f32 %v2932, %v3060
  %v3099 = vadd.f32 %v2933, %v3063
  %v3100 = vadd.f32 %v2934, %v3068
  %v3101 = vadd.f32 %v2935, %v3071
  %v3102 = vadd.f32 %v2936, %v3076
  %v3103 = vadd.f32 %v2937, %v3079
  %v3104 = vadd.f32 %v2938, %v3084
  %v3105 = vadd.f32 %v2939, %v3087
  %v3106 = vld [vmem:[%s2773 + $0x2] sm:$0xff]
  %v3107 = vld [vmem:[%s2773 + $0x12] sm:$0xff]
  %v3108 = vld [vmem:[%s2773 + $0x22] sm:$0xff]
  %v3109 = vld [vmem:[%s2773 + $0x32] sm:$0xff]
  %v3110 = vld [vmem:[%s2773 + $0x42] sm:$0xff]
  %v3111 = vld [vmem:[%s2773 + $0x52] sm:$0xff]
  %v3112 = vld [vmem:[%s2773 + $0x62] sm:$0xff]
  %v3113 = vld [vmem:[%s2773 + $0x72] sm:$0xff]
  %v3114 = vld [vmem:[%s2773 + $0xa2] sm:$0xff]
  %v3115 = vld [vmem:[%s2773 + $0xb2] sm:$0xff]
  %v3116 = vld [vmem:[%s2773 + $0xc2] sm:$0xff]
  %v3117 = vld [vmem:[%s2773 + $0xd2] sm:$0xff]
  %v3118 = vld [vmem:[%s2773 + $0xe2] sm:$0xff]
  %v3119 = vld [vmem:[%s2773 + $0xf2] sm:$0xff]
  %v3120 = vld [vmem:[%s2773 + $0x102] sm:$0xff]
  %v3121 = vld [vmem:[%s2773 + $0x112] sm:$0xff]
  %v3122 = vpack.c.bf16 %v3107, %v3106
  %v3123 = vpack.c.bf16 %v3109, %v3108
  %v3124 = vpack.c.bf16 %v3111, %v3110
  %v3125 = vpack.c.bf16 %v3113, %v3112
  %v3126 = vpack.c.bf16 %v3115, %v3114
  %v3127 = vpack.c.bf16 %v3117, %v3116
  %v3128 = vpack.c.bf16 %v3119, %v3118
  %v3129 = vpack.c.bf16 %v3121, %v3120
  %s3130 = scalar_lea.vmem %s6, 32
  %v3131 = vld [vmem:[%s3130] sm:$0xf]
  %v3133 = vsel %vm139, %v3122, 0
  %v3136 = vsel %vm139, %v3123, 0
  %v3139 = vsel %vm139, %v3124, 0
  %v3142 = vsel %vm139, %v3125, 0
  %v3145 = vsel %vm139, %v3126, 0
  %v3148 = vsel %vm139, %v3127, 0
  %v3151 = vsel %vm139, %v3128, 0
  %v3154 = vsel %vm139, %v3129, 0
  %v3157 = vsel %vm273, %v3131, 0
  %3159 = vmatprep.subr.bf16.mxu0 0
  %3160 = vmatpush1.bf16.msra.mxu0 %v3157
  %3161 = vmatprep.subr.bf16.mxu0 0
  %3162 = vmatpush1.bf16.msra.mxu0 0
  %3163 = vmatprep.subr.bf16.mxu0 0
  %3164 = vmatpush1.bf16.msra.mxu0 0
  %3165 = vmatprep.subr.bf16.mxu0 0
  %3166 = vmatpush1.bf16.msra.mxu0 0
  %3167 = vmatprep.subr.bf16.mxu0 0
  %3168 = vmatpush1.bf16.msra.mxu0 0
  %3169 = vmatprep.subr.bf16.mxu0 0
  %3170 = vmatpush1.bf16.msra.mxu0 0
  %3171 = vmatprep.subr.bf16.mxu0 0
  %3172 = vmatpush1.bf16.msra.mxu0 0
  %3173 = vmatprep.subr.bf16.mxu0 0
  %3174 = vmatpush1.bf16.msra.mxu0 0
  %3175 = vmatprep.subr.bf16.mxu0 0
  %3176 = vmatpush1.bf16.msra.mxu0 0
  %3177 = vmatprep.subr.bf16.mxu0 0
  %3178 = vmatpush1.bf16.msra.mxu0 0
  %3179 = vmatprep.subr.bf16.mxu0 0
  %3180 = vmatpush1.bf16.msra.mxu0 0
  %3181 = vmatprep.subr.bf16.mxu0 0
  %3182 = vmatpush1.bf16.msra.mxu0 0
  %3183 = vmatprep.subr.bf16.mxu0 0
  %3184 = vmatpush1.bf16.msra.mxu0 0
  %3185 = vmatprep.subr.bf16.mxu0 0
  %3186 = vmatpush1.bf16.msra.mxu0 0
  %3187 = vmatprep.subr.bf16.mxu0 0
  %3188 = vmatpush1.bf16.msra.mxu0 0
  %3189 = vmatprep.subr.bf16.mxu0 0
  %3190 = vmatpush1.bf16.msra.mxu0 0
  %3191 = vmatprep.mubr.bf16.mxu0 0
  %3192 = vmatmul.mubr.bf16.gmra.mrb[0].mxu0 %v3133
  %v3193 = vpop.f32.mrb[0].mxu0
  %v3194 = vadd.f32 0.0, %v3193
  %v3195 = vpop.f32.mrb[0].mxu0
  %v3196 = vpop.f32.mrb[0].mxu0
  %v3197 = vadd.f32 0.0, %v3196
  %v3198 = vpop.f32.mrb[0].mxu0
  %3199 = vmatprep.mubr.bf16.mxu0 0
  %3200 = vmatmul.mubr.bf16.gmra.mrb[0].mxu0 %v3136
  %v3201 = vpop.f32.mrb[0].mxu0
  %v3202 = vadd.f32 0.0, %v3201
  %v3203 = vpop.f32.mrb[0].mxu0
  %v3204 = vpop.f32.mrb[0].mxu0
  %v3205 = vadd.f32 0.0, %v3204
  %v3206 = vpop.f32.mrb[0].mxu0
  %3207 = vmatprep.mubr.bf16.mxu0 0
  %3208 = vmatmul.mubr.bf16.gmra.mrb[0].mxu0 %v3139
  %v3209 = vpop.f32.mrb[0].mxu0
  %v3210 = vadd.f32 0.0, %v3209
  %v3211 = vpop.f32.mrb[0].mxu0
  %v3212 = vpop.f32.mrb[0].mxu0
  %v3213 = vadd.f32 0.0, %v3212
  %v3214 = vpop.f32.mrb[0].mxu0
  %3215 = vmatprep.mubr.bf16.mxu0 0
  %3216 = vmatmul.mubr.bf16.gmra.mrb[0].mxu0 %v3142
  %v3217 = vpop.f32.mrb[0].mxu0
  %v3218 = vadd.f32 0.0, %v3217
  %v3219 = vpop.f32.mrb[0].mxu0
  %v3220 = vpop.f32.mrb[0].mxu0
  %v3221 = vadd.f32 0.0, %v3220
  %v3222 = vpop.f32.mrb[0].mxu0
  %3223 = vmatprep.mubr.bf16.mxu0 0
  %3224 = vmatmul.mubr.bf16.gmra.mrb[0].mxu0 %v3145
  %v3225 = vpop.f32.mrb[0].mxu0
  %v3226 = vadd.f32 0.0, %v3225
  %v3227 = vpop.f32.mrb[0].mxu0
  %v3228 = vpop.f32.mrb[0].mxu0
  %v3229 = vadd.f32 0.0, %v3228
  %v3230 = vpop.f32.mrb[0].mxu0
  %3231 = vmatprep.mubr.bf16.mxu0 0
  %3232 = vmatmul.mubr.bf16.gmra.mrb[0].mxu0 %v3148
  %v3233 = vpop.f32.mrb[0].mxu0
  %v3234 = vadd.f32 0.0, %v3233
  %v3235 = vpop.f32.mrb[0].mxu0
  %v3236 = vpop.f32.mrb[0].mxu0
  %v3237 = vadd.f32 0.0, %v3236
  %v3238 = vpop.f32.mrb[0].mxu0
  %3239 = vmatprep.mubr.bf16.mxu0 0
  %3240 = vmatmul.mubr.bf16.gmra.mrb[0].mxu0 %v3151
  %v3241 = vpop.f32.mrb[0].mxu0
  %v3242 = vadd.f32 0.0, %v3241
  %v3243 = vpop.f32.mrb[0].mxu0
  %v3244 = vpop.f32.mrb[0].mxu0
  %v3245 = vadd.f32 0.0, %v3244
  %v3246 = vpop.f32.mrb[0].mxu0
  %3247 = vmatprep.mubr.bf16.mxu0 0
  %3248 = vmatmul.mubr.bf16.gmra.mrb[0].mxu0 %v3154
  %v3249 = vpop.f32.mrb[0].mxu0
  %v3250 = vadd.f32 0.0, %v3249
  %v3251 = vpop.f32.mrb[0].mxu0
  %v3252 = vpop.f32.mrb[0].mxu0
  %v3253 = vadd.f32 0.0, %v3252
  %v3254 = vpop.f32.mrb[0].mxu0
  %3255 = vdwg.mxu0
  %v3256 = vadd.f32 %v3090, %v3194
  %v3257 = vadd.f32 %v3091, %v3197
  %v3258 = vadd.f32 %v3092, %v3202
  %v3259 = vadd.f32 %v3093, %v3205
  %v3260 = vadd.f32 %v3094, %v3210
  %v3261 = vadd.f32 %v3095, %v3213
  %v3262 = vadd.f32 %v3096, %v3218
  %v3263 = vadd.f32 %v3097, %v3221
  %v3264 = vadd.f32 %v3098, %v3226
  %v3265 = vadd.f32 %v3099, %v3229
  %v3266 = vadd.f32 %v3100, %v3234
  %v3267 = vadd.f32 %v3101, %v3237
  %v3268 = vadd.f32 %v3102, %v3242
  %v3269 = vadd.f32 %v3103, %v3245
  %v3270 = vadd.f32 %v3104, %v3250
  %v3271 = vadd.f32 %v3105, %v3253
  %v3272 = vadd.f32 %v27, %v3256
  %v3273 = vadd.f32 %v28, %v3257
  %v3274 = vadd.f32 %v29, %v3258
  %v3275 = vadd.f32 %v30, %v3259
  %v3276 = vadd.f32 %v31, %v3260
  %v3277 = vadd.f32 %v32, %v3261
  %v3278 = vadd.f32 %v33, %v3262
  %v3279 = vadd.f32 %v34, %v3263
  %v3280 = vadd.f32 %v35, %v3264
  %v3281 = vadd.f32 %v36, %v3265
  %v3282 = vadd.f32 %v37, %v3266
  %v3283 = vadd.f32 %v38, %v3267
  %v3284 = vadd.f32 %v39, %v3268
  %v3285 = vadd.f32 %v40, %v3269
  %v3286 = vadd.f32 %v41, %v3270
  %v3287 = vadd.f32 %v42, %v3271
  %3288 = vst.msk [vmem:[%s7] sm:$0xff] %vm139, %v3272
  %3289 = vst.msk [vmem:[%s7 + $0x8] sm:$0xff] %vm139, %v3273
  %3290 = vst.msk [vmem:[%s7 + $0x10] sm:$0xff] %vm139, %v3274
  %3291 = vst.msk [vmem:[%s7 + $0x18] sm:$0xff] %vm139, %v3275
  %3292 = vst.msk [vmem:[%s7 + $0x20] sm:$0xff] %vm139, %v3276
  %3293 = vst.msk [vmem:[%s7 + $0x28] sm:$0xff] %vm139, %v3277
  %3294 = vst.msk [vmem:[%s7 + $0x30] sm:$0xff] %vm139, %v3278
  %3295 = vst.msk [vmem:[%s7 + $0x38] sm:$0xff] %vm139, %v3279
  %3296 = vst.msk [vmem:[%s7 + $0x40] sm:$0xff] %vm139, %v3280
  %3297 = vst.msk [vmem:[%s7 + $0x48] sm:$0xff] %vm139, %v3281
  %3298 = vst.msk [vmem:[%s7 + $0x50] sm:$0xff] %vm139, %v3282
  %3299 = vst.msk [vmem:[%s7 + $0x58] sm:$0xff] %vm139, %v3283
  %3300 = vst.msk [vmem:[%s7 + $0x60] sm:$0xff] %vm139, %v3284
  %3301 = vst.msk [vmem:[%s7 + $0x68] sm:$0xff] %vm139, %v3285
  %3302 = vst.msk [vmem:[%s7 + $0x70] sm:$0xff] %vm139, %v3286
  %3303 = vst.msk [vmem:[%s7 + $0x78] sm:$0xff] %vm139, %v3287
  // Predicated region
  $region30: #{network_block_forward.3} parent=0 // pred_check
    _
  $region31: #{network_block_forward.3} parent=0 // pred_check_branch
    %3305 = sbr.rel (0) target = $region33
  $region32: #{network_block_forward.3} parent=0 // pred_region
    _
  $region33: #{network_block_forward.3} parent=0 // pred_fallthru
    _
  // Predicated region
  $region34: #{network_block_forward.3} parent=0 // pred_check
    _
  $region35: #{network_block_forward.3} parent=0 // pred_check_branch
    %3307 = sbr.rel (0) target = $region37
  $region36: #{network_block_forward.3} parent=0 // pred_region
    _
  $region37: #{network_block_forward.3} parent=0 // pred_fallthru
    _

// kernel: network_block_forward.2
$region0: #{network_block_forward.2}
  #allocation0 [shape = 'u32[]', space=smem, size = 0x4, offset = 0x4, fixed_abs, tag = 'smem constant byte address 0x4 - core index']
  #allocation1 [shape = 'u32[144,128]{1,0:T(1,128)}', space=vmem, size = 0x12000, scoped, tag = 'internal scratch']
  #allocation2 [shape = 'f32[2,10,10,8]{3,2,1,0:T(8,128)}', space=vmem, size = 0x28000, scoped, tag = 'scratch operand']
  %s0 = inlined_call_operand.vmem [shape: f32[2,8,8,4], index: 0, kind: input, shape index: {}]
  %s1 = inlined_call_operand.vmem [shape: f32[2,8,9,4], index: 1, kind: input, shape index: {}]
  %s2 = inlined_call_operand.vmem [shape: f32[2,9,8,4], index: 2, kind: input, shape index: {}]
  %s3 = inlined_call_operand.vmem [shape: f32[2,9,9,4], index: 3, kind: input, shape index: {}]
  %s4 = inlined_call_operand.vmem [shape: f32[1,1,1,4], index: 4, kind: input, shape index: {}]
  %s5 = inlined_call_operand.vmem [shape: f32[1,1,1,4], index: 5, kind: input, shape index: {}]
  %s6 = inlined_call_operand.vmem [shape: bf16[9,4,8], index: 6, kind: input, shape index: {}]
  %s7 = inlined_call_operand.vmem [shape: f32[1,8], index: 7, kind: input, shape index: {}]
  %s8 = inlined_call_operand.vmem [shape: f32[1,8], index: 8, kind: input, shape index: {}]
  %s9 = inlined_call_operand.vmem [shape: bf16[9,8,8], index: 9, kind: input, shape index: {}]
  %s10 = inlined_call_operand.vmem [shape: bf16[4,8], index: 10, kind: input, shape index: {}]
  %s11 = inlined_call_operand.vmem [shape: f32[2,8,8,8], index: 11, kind: output, shape index: {}]
  %s12 = sld [smem:[#allocation0]]
  $region54: #{network_block_forward.2} parent=0
    _
  %s14 = ssub.s32 1, %s12
  %s15 = scalar_select 0, %s14, %s12
  // Predicated region
  $region2: #{network_block_forward.2} parent=0 // pred_check
    _
  $region3: #{network_block_forward.2} parent=0 // pred_check_branch
    %17 = sbr.rel (0) target = $region5
  $region4: #{network_block_forward.2} parent=0 // pred_region
    _
  $region5: #{network_block_forward.2} parent=0 // pred_fallthru
    _
  // Predicated region
  $region6: #{network_block_forward.2} parent=0 // pred_check
    _
  $region7: #{network_block_forward.2} parent=0 // pred_check_branch
    %19 = sbr.rel (0) target = $region9
  $region8: #{network_block_forward.2} parent=0 // pred_region
    _
  $region9: #{network_block_forward.2} parent=0 // pred_fallthru
    _
  // Predicated region
  $region10: #{network_block_forward.2} parent=0 // pred_check
    _
  $region11: #{network_block_forward.2} parent=0 // pred_check_branch
    %21 = sbr.rel (0) target = $region13
  $region12: #{network_block_forward.2} parent=0 // pred_region
    _
  $region13: #{network_block_forward.2} parent=0 // pred_fallthru
    _
  // Predicated region
  $region14: #{network_block_forward.2} parent=0 // pred_check
    _
  $region15: #{network_block_forward.2} parent=0 // pred_check_branch
    %23 = sbr.rel (0) target = $region17
  $region16: #{network_block_forward.2} parent=0 // pred_region
    _
  $region17: #{network_block_forward.2} parent=0 // pred_fallthru
    _
  // Predicated region
  $region18: #{network_block_forward.2} parent=0 // pred_check
    _
  $region19: #{network_block_forward.2} parent=0 // pred_check_branch
    %25 = sbr.rel (0) target = $region21
  $region20: #{network_block_forward.2} parent=0 // pred_region
    _
  $region21: #{network_block_forward.2} parent=0 // pred_fallthru
    _
  // Predicated region
  $region22: #{network_block_forward.2} parent=0 // pred_check
    _
  $region23: #{network_block_forward.2} parent=0 // pred_check_branch
    %27 = sbr.rel (0) target = $region25
  $region24: #{network_block_forward.2} parent=0 // pred_region
    _
  $region25: #{network_block_forward.2} parent=0 // pred_fallthru
    _
  // Predicated region
  $region26: #{network_block_forward.2} parent=0 // pred_check
    _
  $region27: #{network_block_forward.2} parent=0 // pred_check_branch
    %29 = sbr.rel (0) target = $region29
  $region28: #{network_block_forward.2} parent=0 // pred_region
    _
  $region29: #{network_block_forward.2} parent=0 // pred_fallthru
    _
  // Predicated region
  $region30: #{network_block_forward.2} parent=0 // pred_check
    _
  $region31: #{network_block_forward.2} parent=0 // pred_check_branch
    %31 = sbr.rel (0) target = $region33
  $region32: #{network_block_forward.2} parent=0 // pred_region
    _
  $region33: #{network_block_forward.2} parent=0 // pred_fallthru
    _
  // Predicated region
  $region34: #{network_block_forward.2} parent=0 // pred_check
    _
  $region35: #{network_block_forward.2} parent=0 // pred_check_branch
    %33 = sbr.rel (0) target = $region37
  $region36: #{network_block_forward.2} parent=0 // pred_region
    _
  $region37: #{network_block_forward.2} parent=0 // pred_fallthru
    _
  // Predicated region
  $region38: #{network_block_forward.2} parent=0 // pred_check
    _
  $region39: #{network_block_forward.2} parent=0 // pred_check_branch
    %35 = sbr.rel (0) target = $region41
  $region40: #{network_block_forward.2} parent=0 // pred_region
    _
  $region41: #{network_block_forward.2} parent=0 // pred_fallthru
    _
  // Predicated region
  $region42: #{network_block_forward.2} parent=0 // pred_check
    _
  $region43: #{network_block_forward.2} parent=0 // pred_check_branch
    %37 = sbr.rel (0) target = $region45
  $region44: #{network_block_forward.2} parent=0 // pred_region
    _
  $region45: #{network_block_forward.2} parent=0 // pred_fallthru
    _
  %v39 = vld [vmem:[%s0] sm:$0xff]
  %v40 = vld [vmem:[%s0 + $0x8] sm:$0xff]
  %v41 = vld [vmem:[%s0 + $0x10] sm:$0xff]
  %v42 = vld [vmem:[%s0 + $0x18] sm:$0xff]
  %v43 = vld [vmem:[%s0 + $0x20] sm:$0xff]
  %v44 = vld [vmem:[%s0 + $0x28] sm:$0xff]
  %v45 = vld [vmem:[%s0 + $0x30] sm:$0xff]
  %v46 = vld [vmem:[%s0 + $0x38] sm:$0xff]
  %v47 = vld [vmem:[%s0 + $0x40] sm:$0xff]
  %v48 = vld [vmem:[%s0 + $0x48] sm:$0xff]
  %v49 = vld [vmem:[%s0 + $0x50] sm:$0xff]
  %v50 = vld [vmem:[%s0 + $0x58] sm:$0xff]
  %v51 = vld [vmem:[%s0 + $0x60] sm:$0xff]
  %v52 = vld [vmem:[%s0 + $0x68] sm:$0xff]
  %v53 = vld [vmem:[%s0 + $0x70] sm:$0xff]
  %v54 = vld [vmem:[%s0 + $0x78] sm:$0xff]
  %v55 = vld [vmem:[%s1] sm:$0xff]
  %v56 = vld [vmem:[%s1 + $0x8] sm:$0x1]
  %v57 = vld [vmem:[%s1 + $0x10] sm:$0xff]
  %v58 = vld [vmem:[%s1 + $0x18] sm:$0x1]
  %v59 = vld [vmem:[%s1 + $0x20] sm:$0xff]
  %v60 = vld [vmem:[%s1 + $0x28] sm:$0x1]
  %v61 = vld [vmem:[%s1 + $0x30] sm:$0xff]
  %v62 = vld [vmem:[%s1 + $0x38] sm:$0x1]
  %v63 = vld [vmem:[%s1 + $0x40] sm:$0xff]
  %v64 = vld [vmem:[%s1 + $0x48] sm:$0x1]
  %v65 = vld [vmem:[%s1 + $0x50] sm:$0xff]
  %v66 = vld [vmem:[%s1 + $0x58] sm:$0x1]
  %v67 = vld [vmem:[%s1 + $0x60] sm:$0xff]
  %v68 = vld [vmem:[%s1 + $0x68] sm:$0x1]
  %v69 = vld [vmem:[%s1 + $0x70] sm:$0xff]
  %v70 = vld [vmem:[%s1 + $0x78] sm:$0x1]
  %v71 = vld [vmem:[%s1 + $0x80] sm:$0xff]
  %v72 = vld [vmem:[%s1 + $0x88] sm:$0x1]
  %v73 = vld [vmem:[%s1 + $0x90] sm:$0xff]
  %v74 = vld [vmem:[%s1 + $0x98] sm:$0x1]
  %v75 = vld [vmem:[%s1 + $0xa0] sm:$0xff]
  %v76 = vld [vmem:[%s1 + $0xa8] sm:$0x1]
  %v77 = vld [vmem:[%s1 + $0xb0] sm:$0xff]
  %v78 = vld [vmem:[%s1 + $0xb8] sm:$0x1]
  %v79 = vld [vmem:[%s1 + $0xc0] sm:$0xff]
  %v80 = vld [vmem:[%s1 + $0xc8] sm:$0x1]
  %v81 = vld [vmem:[%s1 + $0xd0] sm:$0xff]
  %v82 = vld [vmem:[%s1 + $0xd8] sm:$0x1]
  %v83 = vld [vmem:[%s1 + $0xe0] sm:$0xff]
  %v84 = vld [vmem:[%s1 + $0xe8] sm:$0x1]
  %v85 = vld [vmem:[%s1 + $0xf0] sm:$0xff]
  %v86 = vld [vmem:[%s1 + $0xf8] sm:$0x1]
  %v87 = vld [vmem:[%s2] sm:$0xff]
  %v88 = vld [vmem:[%s2 + $0x8] sm:$0xff]
  %v89 = vld [vmem:[%s2 + $0x10] sm:$0xff]
  %v90 = vld [vmem:[%s2 + $0x18] sm:$0xff]
  %v91 = vld [vmem:[%s2 + $0x20] sm:$0xff]
  %v92 = vld [vmem:[%s2 + $0x28] sm:$0xff]
  %v93 = vld [vmem:[%s2 + $0x30] sm:$0xff]
  %v94 = vld [vmem:[%s2 + $0x38] sm:$0xff]
  %v95 = vld [vmem:[%s2 + $0x40] sm:$0xff]
  %v96 = vld [vmem:[%s2 + $0x48] sm:$0xff]
  %v97 = vld [vmem:[%s2 + $0x50] sm:$0xff]
  %v98 = vld [vmem:[%s2 + $0x58] sm:$0xff]
  %v99 = vld [vmem:[%s2 + $0x60] sm:$0xff]
  %v100 = vld [vmem:[%s2 + $0x68] sm:$0xff]
  %v101 = vld [vmem:[%s2 + $0x70] sm:$0xff]
  %v102 = vld [vmem:[%s2 + $0x78] sm:$0xff]
  %v103 = vld [vmem:[%s2 + $0x80] sm:$0xff]
  %v104 = vld [vmem:[%s2 + $0x88] sm:$0xff]
  %v105 = vld [vmem:[%s3] sm:$0xff]
  %v106 = vld [vmem:[%s3 + $0x8] sm:$0x1]
  %v107 = vld [vmem:[%s3 + $0x10] sm:$0xff]
  %v108 = vld [vmem:[%s3 + $0x18] sm:$0x1]
  %v109 = vld [vmem:[%s3 + $0x20] sm:$0xff]
  %v110 = vld [vmem:[%s3 + $0x28] sm:$0x1]
  %v111 = vld [vmem:[%s3 + $0x30] sm:$0xff]
  %v112 = vld [vmem:[%s3 + $0x38] sm:$0x1]
  %v113 = vld [vmem:[%s3 + $0x40] sm:$0xff]
  %v114 = vld [vmem:[%s3 + $0x48] sm:$0x1]
  %v115 = vld [vmem:[%s3 + $0x50] sm:$0xff]
  %v116 = vld [vmem:[%s3 + $0x58] sm:$0x1]
  %v117 = vld [vmem:[%s3 + $0x60] sm:$0xff]
  %v118 = vld [vmem:[%s3 + $0x68] sm:$0x1]
  %v119 = vld [vmem:[%s3 + $0x70] sm:$0xff]
  %v120 = vld [vmem:[%s3 + $0x78] sm:$0x1]
  %v121 = vld [vmem:[%s3 + $0x80] sm:$0xff]
  %v122 = vld [vmem:[%s3 + $0x88] sm:$0x1]
  %v123 = vld [vmem:[%s3 + $0x90] sm:$0xff]
  %v124 = vld [vmem:[%s3 + $0x98] sm:$0x1]
  %v125 = vld [vmem:[%s3 + $0xa0] sm:$0xff]
  %v126 = vld [vmem:[%s3 + $0xa8] sm:$0x1]
  %v127 = vld [vmem:[%s3 + $0xb0] sm:$0xff]
  %v128 = vld [vmem:[%s3 + $0xb8] sm:$0x1]
  %v129 = vld [vmem:[%s3 + $0xc0] sm:$0xff]
  %v130 = vld [vmem:[%s3 + $0xc8] sm:$0x1]
  %v131 = vld [vmem:[%s3 + $0xd0] sm:$0xff]
  %v132 = vld [vmem:[%s3 + $0xd8] sm:$0x1]
  %v133 = vld [vmem:[%s3 + $0xe0] sm:$0xff]
  %v134 = vld [vmem:[%s3 + $0xe8] sm:$0x1]
  %v135 = vld [vmem:[%s3 + $0xf0] sm:$0xff]
  %v136 = vld [vmem:[%s3 + $0xf8] sm:$0x1]
  %v137 = vld [vmem:[%s3 + $0x100] sm:$0xff]
  %v138 = vld [vmem:[%s3 + $0x108] sm:$0x1]
  %v139 = vld [vmem:[%s3 + $0x110] sm:$0xff]
  %v140 = vld [vmem:[%s3 + $0x118] sm:$0x1]
  %v141 = vld [vmem:[%s4] sm:$0x1]
  %v142 = vld [vmem:[%s5] sm:$0x1]
  %v143 = vld [vmem:[%s7] sm:$0x1]
  %v144 = vld [vmem:[%s8] sm:$0x1]
  %v146 = vlaneseq
  %v147 = vshrl.u32 %v146, 7
  %v148 = vsub.s32 0, %v147
  %v149 = vrot.slane %v141, %v148
  %v151 = vmul.f32 %v39, %v149
  %v152 = vmul.f32 %v40, %v149
  %v153 = vmul.f32 %v41, %v149
  %v154 = vmul.f32 %v42, %v149
  %v155 = vmul.f32 %v43, %v149
  %v156 = vmul.f32 %v44, %v149
  %v157 = vmul.f32 %v45, %v149
  %v158 = vmul.f32 %v46, %v149
  %v159 = vmul.f32 %v47, %v149
  %v160 = vmul.f32 %v48, %v149
  %v161 = vmul.f32 %v49, %v149
  %v162 = vmul.f32 %v50, %v149
  %v163 = vmul.f32 %v51, %v149
  %v164 = vmul.f32 %v52, %v149
  %v165 = vmul.f32 %v53, %v149
  %v166 = vmul.f32 %v54, %v149
  %v168 = vlaneseq
  %v169 = vshrl.u32 %v168, 7
  %v170 = vsub.s32 0, %v169
  %v171 = vrot.slane %v142, %v170
  %v173 = vadd.f32 %v151, %v171
  %v174 = vadd.f32 %v152, %v171
  %v175 = vadd.f32 %v153, %v171
  %v176 = vadd.f32 %v154, %v171
  %v177 = vadd.f32 %v155, %v171
  %v178 = vadd.f32 %v156, %v171
  %v179 = vadd.f32 %v157, %v171
  %v180 = vadd.f32 %v158, %v171
  %v181 = vadd.f32 %v159, %v171
  %v182 = vadd.f32 %v160, %v171
  %v183 = vadd.f32 %v161, %v171
  %v184 = vadd.f32 %v162, %v171
  %v185 = vadd.f32 %v163, %v171
  %v186 = vadd.f32 %v164, %v171
  %v187 = vadd.f32 %v165, %v171
  %v188 = vadd.f32 %v166, %v171
  %vm189 = vcmp.gt.f32.partialorder %v173, 0.0
  %vm190 = vcmp.gt.f32.partialorder %v174, 0.0
  %vm191 = vcmp.gt.f32.partialorder %v175, 0.0
  %vm192 = vcmp.gt.f32.partialorder %v176, 0.0
  %vm193 = vcmp.gt.f32.partialorder %v177, 0.0
  %vm194 = vcmp.gt.f32.partialorder %v178, 0.0
  %vm195 = vcmp.gt.f32.partialorder %v179, 0.0
  %vm196 = vcmp.gt.f32.partialorder %v180, 0.0
  %vm197 = vcmp.gt.f32.partialorder %v181, 0.0
  %vm198 = vcmp.gt.f32.partialorder %v182, 0.0
  %vm199 = vcmp.gt.f32.partialorder %v183, 0.0
  %vm200 = vcmp.gt.f32.partialorder %v184, 0.0
  %vm201 = vcmp.gt.f32.partialorder %v185, 0.0
  %vm202 = vcmp.gt.f32.partialorder %v186, 0.0
  %vm203 = vcmp.gt.f32.partialorder %v187, 0.0
  %vm204 = vcmp.gt.f32.partialorder %v188, 0.0
  %v205 = vmul.f32 %v173, 0.1
  %v206 = vmul.f32 %v174, 0.1
  %v207 = vmul.f32 %v175, 0.1
  %v208 = vmul.f32 %v176, 0.1
  %v209 = vmul.f32 %v177, 0.1
  %v210 = vmul.f32 %v178, 0.1
  %v211 = vmul.f32 %v179, 0.1
  %v212 = vmul.f32 %v180, 0.1
  %v213 = vmul.f32 %v181, 0.1
  %v214 = vmul.f32 %v182, 0.1
  %v215 = vmul.f32 %v183, 0.1
  %v216 = vmul.f32 %v184, 0.1
  %v217 = vmul.f32 %v185, 0.1
  %v218 = vmul.f32 %v186, 0.1
  %v219 = vmul.f32 %v187, 0.1
  %v220 = vmul.f32 %v188, 0.1
  %v221 = vsel %vm189, %v173, %v205
  %v222 = vsel %vm190, %v174, %v206
  %v223 = vsel %vm191, %v175, %v207
  %v224 = vsel %vm192, %v176, %v208
  %v225 = vsel %vm193, %v177, %v209
  %v226 = vsel %vm194, %v178, %v210
  %v227 = vsel %vm195, %v179, %v211
  %v228 = vsel %vm196, %v180, %v212
  %v229 = vsel %vm197, %v181, %v213
  %v230 = vsel %vm198, %v182, %v214
  %v231 = vsel %vm199, %v183, %v215
  %v232 = vsel %vm200, %v184, %v216
  %v233 = vsel %vm201, %v185, %v217
  %v234 = vsel %vm202, %v186, %v218
  %v235 = vsel %vm203, %v187, %v219
  %v236 = vsel %vm204, %v188, %v220
  %v237 = vmul.f32 %v55, %v149
  %v238 = vmul.f32 %v56, %v149
  %v239 = vmul.f32 %v57, %v149
  %v240 = vmul.f32 %v58, %v149
  %v241 = vmul.f32 %v59, %v149
  %v242 = vmul.f32 %v60, %v149
  %v243 = vmul.f32 %v61, %v149
  %v244 = vmul.f32 %v62, %v149
  %v245 = vmul.f32 %v63, %v149
  %v246 = vmul.f32 %v64, %v149
  %v247 = vmul.f32 %v65, %v149
  %v248 = vmul.f32 %v66, %v149
  %v249 = vmul.f32 %v67, %v149
  %v250 = vmul.f32 %v68, %v149
  %v251 = vmul.f32 %v69, %v149
  %v252 = vmul.f32 %v70, %v149
  %v253 = vmul.f32 %v71, %v149
  %v254 = vmul.f32 %v72, %v149
  %v255 = vmul.f32 %v73, %v149
  %v256 = vmul.f32 %v74, %v149
  %v257 = vmul.f32 %v75, %v149
  %v258 = vmul.f32 %v76, %v149
  %v259 = vmul.f32 %v77, %v149
  %v260 = vmul.f32 %v78, %v149
  %v261 = vmul.f32 %v79, %v149
  %v262 = vmul.f32 %v80, %v149
  %v263 = vmul.f32 %v81, %v149
  %v264 = vmul.f32 %v82, %v149
  %v265 = vmul.f32 %v83, %v149
  %v266 = vmul.f32 %v84, %v149
  %v267 = vmul.f32 %v85, %v149
  %v268 = vmul.f32 %v86, %v149
  %v269 = vadd.f32 %v237, %v171
  %v270 = vadd.f32 %v238, %v171
  %v271 = vadd.f32 %v239, %v171
  %v272 = vadd.f32 %v240, %v171
  %v273 = vadd.f32 %v241, %v171
  %v274 = vadd.f32 %v242, %v171
  %v275 = vadd.f32 %v243, %v171
  %v276 = vadd.f32 %v244, %v171
  %v277 = vadd.f32 %v245, %v171
  %v278 = vadd.f32 %v246, %v171
  %v279 = vadd.f32 %v247, %v171
  %v280 = vadd.f32 %v248, %v171
  %v281 = vadd.f32 %v249, %v171
  %v282 = vadd.f32 %v250, %v171
  %v283 = vadd.f32 %v251, %v171
  %v284 = vadd.f32 %v252, %v171
  %v285 = vadd.f32 %v253, %v171
  %v286 = vadd.f32 %v254, %v171
  %v287 = vadd.f32 %v255, %v171
  %v288 = vadd.f32 %v256, %v171
  %v289 = vadd.f32 %v257, %v171
  %v290 = vadd.f32 %v258, %v171
  %v291 = vadd.f32 %v259, %v171
  %v292 = vadd.f32 %v260, %v171
  %v293 = vadd.f32 %v261, %v171
  %v294 = vadd.f32 %v262, %v171
  %v295 = vadd.f32 %v263, %v171
  %v296 = vadd.f32 %v264, %v171
  %v297 = vadd.f32 %v265, %v171
  %v298 = vadd.f32 %v266, %v171
  %v299 = vadd.f32 %v267, %v171
  %v300 = vadd.f32 %v268, %v171
  %vm301 = vcmp.gt.f32.partialorder %v269, 0.0
  %vm302 = vcmp.gt.f32.partialorder %v270, 0.0
  %vm303 = vcmp.gt.f32.partialorder %v271, 0.0
  %vm304 = vcmp.gt.f32.partialorder %v272, 0.0
  %vm305 = vcmp.gt.f32.partialorder %v273, 0.0
  %vm306 = vcmp.gt.f32.partialorder %v274, 0.0
  %vm307 = vcmp.gt.f32.partialorder %v275, 0.0
  %vm308 = vcmp.gt.f32.partialorder %v276, 0.0
  %vm309 = vcmp.gt.f32.partialorder %v277, 0.0
  %vm310 = vcmp.gt.f32.partialorder %v278, 0.0
  %vm311 = vcmp.gt.f32.partialorder %v279, 0.0
  %vm312 = vcmp.gt.f32.partialorder %v280, 0.0
  %vm313 = vcmp.gt.f32.partialorder %v281, 0.0
  %vm314 = vcmp.gt.f32.partialorder %v282, 0.0
  %vm315 = vcmp.gt.f32.partialorder %v283, 0.0
  %vm316 = vcmp.gt.f32.partialorder %v284, 0.0
  %vm317 = vcmp.gt.f32.partialorder %v285, 0.0
  %vm318 = vcmp.gt.f32.partialorder %v286, 0.0
  %vm319 = vcmp.gt.f32.partialorder %v287, 0.0
  %vm320 = vcmp.gt.f32.partialorder %v288, 0.0
  %vm321 = vcmp.gt.f32.partialorder %v289, 0.0
  %vm322 = vcmp.gt.f32.partialorder %v290, 0.0
  %vm323 = vcmp.gt.f32.partialorder %v291, 0.0
  %vm324 = vcmp.gt.f32.partialorder %v292, 0.0
  %vm325 = vcmp.gt.f32.partialorder %v293, 0.0
  %vm326 = vcmp.gt.f32.partialorder %v294, 0.0
  %vm327 = vcmp.gt.f32.partialorder %v295, 0.0
  %vm328 = vcmp.gt.f32.partialorder %v296, 0.0
  %vm329 = vcmp.gt.f32.partialorder %v297, 0.0
  %vm330 = vcmp.gt.f32.partialorder %v298, 0.0
  %vm331 = vcmp.gt.f32.partialorder %v299, 0.0
  %vm332 = vcmp.gt.f32.partialorder %v300, 0.0
  %v333 = vmul.f32 %v269, 0.1
  %v334 = vmul.f32 %v270, 0.1
  %v335 = vmul.f32 %v271, 0.1
  %v336 = vmul.f32 %v272, 0.1
  %v337 = vmul.f32 %v273, 0.1
  %v338 = vmul.f32 %v274, 0.1
  %v339 = vmul.f32 %v275, 0.1
  %v340 = vmul.f32 %v276, 0.1
  %v341 = vmul.f32 %v277, 0.1
  %v342 = vmul.f32 %v278, 0.1
  %v343 = vmul.f32 %v279, 0.1
  %v344 = vmul.f32 %v280, 0.1
  %v345 = vmul.f32 %v281, 0.1
  %v346 = vmul.f32 %v282, 0.1
  %v347 = vmul.f32 %v283, 0.1
  %v348 = vmul.f32 %v284, 0.1
  %v349 = vmul.f32 %v285, 0.1
  %v350 = vmul.f32 %v286, 0.1
  %v351 = vmul.f32 %v287, 0.1
  %v352 = vmul.f32 %v288, 0.1
  %v353 = vmul.f32 %v289, 0.1
  %v354 = vmul.f32 %v290, 0.1
  %v355 = vmul.f32 %v291, 0.1
  %v356 = vmul.f32 %v292, 0.1
  %v357 = vmul.f32 %v293, 0.1
  %v358 = vmul.f32 %v294, 0.1
  %v359 = vmul.f32 %v295, 0.1
  %v360 = vmul.f32 %v296, 0.1
  %v361 = vmul.f32 %v297, 0.1
  %v362 = vmul.f32 %v298, 0.1
  %v363 = vmul.f32 %v299, 0.1
  %v364 = vmul.f32 %v300, 0.1
  %v365 = vsel %vm301, %v269, %v333
  %v366 = vsel %vm302, %v270, %v334
  %v367 = vsel %vm303, %v271, %v335
  %v368 = vsel %vm304, %v272, %v336
  %v369 = vsel %vm305, %v273, %v337
  %v370 = vsel %vm306, %v274, %v338
  %v371 = vsel %vm307, %v275, %v339
  %v372 = vsel %vm308, %v276, %v340
  %v373 = vsel %vm309, %v277, %v341
  %v374 = vsel %vm310, %v278, %v342
  %v375 = vsel %vm311, %v279, %v343
  %v376 = vsel %vm312, %v280, %v344
  %v377 = vsel %vm313, %v281, %v345
  %v378 = vsel %vm314, %v282, %v346
  %v379 = vsel %vm315, %v283, %v347
  %v380 = vsel %vm316, %v284, %v348
  %v381 = vsel %vm317, %v285, %v349
  %v382 = vsel %vm318, %v286, %v350
  %v383 = vsel %vm319, %v287, %v351
  %v384 = vsel %vm320, %v288, %v352
  %v385 = vsel %vm321, %v289, %v353
  %v386 = vsel %vm322, %v290, %v354
  %v387 = vsel %vm323, %v291, %v355
  %v388 = vsel %vm324, %v292, %v356
  %v389 = vsel %vm325, %v293, %v357
  %v390 = vsel %vm326, %v294, %v358
  %v391 = vsel %vm327, %v295, %v359
  %v392 = vsel %vm328, %v296, %v360
  %v393 = vsel %vm329, %v297, %v361
  %v394 = vsel %vm330, %v298, %v362
  %v395 = vsel %vm331, %v299, %v363
  %v396 = vsel %vm332, %v300, %v364
  %v397 = vlaneseq
  %v398 = vshrl.u32 %v397, 7
  %v399 = vadd.s32 %v398, 8
  %vm400 = vcmp.eq.s32.totalorder %v398, 0
  %vm401 = vcmp.eq.s32.totalorder %v399, 0
  %v402 = vsel %vm400, 0.0, %v365
  %v403 = vsel %vm401, 0.0, %v366
  %v404 = vsel %vm400, 0.0, %v367
  %v405 = vsel %vm401, 0.0, %v368
  %v406 = vsel %vm400, 0.0, %v369
  %v407 = vsel %vm401, 0.0, %v370
  %v408 = vsel %vm400, 0.0, %v371
  %v409 = vsel %vm401, 0.0, %v372
  %v410 = vsel %vm400, 0.0, %v373
  %v411 = vsel %vm401, 0.0, %v374
  %v412 = vsel %vm400, 0.0, %v375
  %v413 = vsel %vm401, 0.0, %v376
  %v414 = vsel %vm400, 0.0, %v377
  %v415 = vsel %vm401, 0.0, %v378
  %v416 = vsel %vm400, 0.0, %v379
  %v417 = vsel %vm401, 0.0, %v380
  %v418 = vsel %vm400, 0.0, %v381
  %v419 = vsel %vm401, 0.0, %v382
  %v420 = vsel %vm400, 0.0, %v383
  %v421 = vsel %vm401, 0.0, %v384
  %v422 = vsel %vm400, 0.0, %v385
  %v423 = vsel %vm401, 0.0, %v386
  %v424 = vsel %vm400, 0.0, %v387
  %v425 = vsel %vm401, 0.0, %v388
  %v426 = vsel %vm400, 0.0, %v389
  %v427 = vsel %vm401, 0.0, %v390
  %v428 = vsel %vm400, 0.0, %v391
  %v429 = vsel %vm401, 0.0, %v392
  %v430 = vsel %vm400, 0.0, %v393
  %v431 = vsel %vm401, 0.0, %v394
  %v432 = vsel %vm400, 0.0, %v395
  %v433 = vsel %vm401, 0.0, %v396
  %v434 = vmul.f32 %v87, %v149
  %v435 = vmul.f32 %v88, %v149
  %v436 = vmul.f32 %v89, %v149
  %v437 = vmul.f32 %v90, %v149
  %v438 = vmul.f32 %v91, %v149
  %v439 = vmul.f32 %v92, %v149
  %v440 = vmul.f32 %v93, %v149
  %v441 = vmul.f32 %v94, %v149
  %v442 = vmul.f32 %v95, %v149
  %v443 = vmul.f32 %v96, %v149
  %v444 = vmul.f32 %v97, %v149
  %v445 = vmul.f32 %v98, %v149
  %v446 = vmul.f32 %v99, %v149
  %v447 = vmul.f32 %v100, %v149
  %v448 = vmul.f32 %v101, %v149
  %v449 = vmul.f32 %v102, %v149
  %v450 = vmul.f32 %v103, %v149
  %v451 = vmul.f32 %v104, %v149
  %v452 = vadd.f32 %v434, %v171
  %v453 = vadd.f32 %v435, %v171
  %v454 = vadd.f32 %v436, %v171
  %v455 = vadd.f32 %v437, %v171
  %v456 = vadd.f32 %v438, %v171
  %v457 = vadd.f32 %v439, %v171
  %v458 = vadd.f32 %v440, %v171
  %v459 = vadd.f32 %v441, %v171
  %v460 = vadd.f32 %v442, %v171
  %v461 = vadd.f32 %v443, %v171
  %v462 = vadd.f32 %v444, %v171
  %v463 = vadd.f32 %v445, %v171
  %v464 = vadd.f32 %v446, %v171
  %v465 = vadd.f32 %v447, %v171
  %v466 = vadd.f32 %v448, %v171
  %v467 = vadd.f32 %v449, %v171
  %v468 = vadd.f32 %v450, %v171
  %v469 = vadd.f32 %v451, %v171
  %vm470 = vcmp.gt.f32.partialorder %v452, 0.0
  %vm471 = vcmp.gt.f32.partialorder %v453, 0.0
  %vm472 = vcmp.gt.f32.partialorder %v454, 0.0
  %vm473 = vcmp.gt.f32.partialorder %v455, 0.0
  %vm474 = vcmp.gt.f32.partialorder %v456, 0.0
  %vm475 = vcmp.gt.f32.partialorder %v457, 0.0
  %vm476 = vcmp.gt.f32.partialorder %v458, 0.0
  %vm477 = vcmp.gt.f32.partialorder %v459, 0.0
  %vm478 = vcmp.gt.f32.partialorder %v460, 0.0
  %vm479 = vcmp.gt.f32.partialorder %v461, 0.0
  %vm480 = vcmp.gt.f32.partialorder %v462, 0.0
  %vm481 = vcmp.gt.f32.partialorder %v463, 0.0
  %vm482 = vcmp.gt.f32.partialorder %v464, 0.0
  %vm483 = vcmp.gt.f32.partialorder %v465, 0.0
  %vm484 = vcmp.gt.f32.partialorder %v466, 0.0
  %vm485 = vcmp.gt.f32.partialorder %v467, 0.0
  %vm486 = vcmp.gt.f32.partialorder %v468, 0.0
  %vm487 = vcmp.gt.f32.partialorder %v469, 0.0
  %v488 = vmul.f32 %v452, 0.1
  %v489 = vmul.f32 %v453, 0.1
  %v490 = vmul.f32 %v454, 0.1
  %v491 = vmul.f32 %v455, 0.1
  %v492 = vmul.f32 %v456, 0.1
  %v493 = vmul.f32 %v457, 0.1
  %v494 = vmul.f32 %v458, 0.1
  %v495 = vmul.f32 %v459, 0.1
  %v496 = vmul.f32 %v460, 0.1
  %v497 = vmul.f32 %v461, 0.1
  %v498 = vmul.f32 %v462, 0.1
  %v499 = vmul.f32 %v463, 0.1
  %v500 = vmul.f32 %v464, 0.1
  %v501 = vmul.f32 %v465, 0.1
  %v502 = vmul.f32 %v466, 0.1
  %v503 = vmul.f32 %v467, 0.1
  %v504 = vmul.f32 %v468, 0.1
  %v505 = vmul.f32 %v469, 0.1
  %v506 = vsel %vm470, %v452, %v488
  %v507 = vsel %vm471, %v453, %v489
  %v508 = vsel %vm472, %v454, %v490
  %v509 = vsel %vm473, %v455, %v491
  %v510 = vsel %vm474, %v456, %v492
  %v511 = vsel %vm475, %v457, %v493
  %v512 = vsel %vm476, %v458, %v494
  %v513 = vsel %vm477, %v459, %v495
  %v514 = vsel %vm478, %v460, %v496
  %v515 = vsel %vm479, %v461, %v497
  %v516 = vsel %vm480, %v462, %v498
  %v517 = vsel %vm481, %v463, %v499
  %v518 = vsel %vm482, %v464, %v500
  %v519 = vsel %vm483, %v465, %v501
  %v520 = vsel %vm484, %v466, %v502
  %v521 = vsel %vm485, %v467, %v503
  %v522 = vsel %vm486, %v468, %v504
  %v523 = vsel %vm487, %v469, %v505
  %v524 = vsel 1, 0.0, %v506
  %v525 = vsel 0, 0.0, %v507
  %v526 = vsel 0, 0.0, %v508
  %v527 = vsel 0, 0.0, %v509
  %v528 = vsel 0, 0.0, %v510
  %v529 = vsel 0, 0.0, %v511
  %v530 = vsel 0, 0.0, %v512
  %v531 = vsel 0, 0.0, %v513
  %v532 = vsel 0, 0.0, %v514
  %v533 = vsel 1, 0.0, %v515
  %v534 = vsel 0, 0.0, %v516
  %v535 = vsel 0, 0.0, %v517
  %v536 = vsel 0, 0.0, %v518
  %v537 = vsel 0, 0.0, %v519
  %v538 = vsel 0, 0.0, %v520
  %v539 = vsel 0, 0.0, %v521
  %v540 = vsel 0, 0.0, %v522
  %v541 = vsel 0, 0.0, %v523
  %v542 = vmul.f32 %v105, %v149
  %v543 = vmul.f32 %v106, %v149
  %v544 = vmul.f32 %v107, %v149
  %v545 = vmul.f32 %v108, %v149
  %v546 = vmul.f32 %v109, %v149
  %v547 = vmul.f32 %v110, %v149
  %v548 = vmul.f32 %v111, %v149
  %v549 = vmul.f32 %v112, %v149
  %v550 = vmul.f32 %v113, %v149
  %v551 = vmul.f32 %v114, %v149
  %v552 = vmul.f32 %v115, %v149
  %v553 = vmul.f32 %v116, %v149
  %v554 = vmul.f32 %v117, %v149
  %v555 = vmul.f32 %v118, %v149
  %v556 = vmul.f32 %v119, %v149
  %v557 = vmul.f32 %v120, %v149
  %v558 = vmul.f32 %v121, %v149
  %v559 = vmul.f32 %v122, %v149
  %v560 = vmul.f32 %v123, %v149
  %v561 = vmul.f32 %v124, %v149
  %v562 = vmul.f32 %v125, %v149
  %v563 = vmul.f32 %v126, %v149
  %v564 = vmul.f32 %v127, %v149
  %v565 = vmul.f32 %v128, %v149
  %v566 = vmul.f32 %v129, %v149
  %v567 = vmul.f32 %v130, %v149
  %v568 = vmul.f32 %v131, %v149
  %v569 = vmul.f32 %v132, %v149
  %v570 = vmul.f32 %v133, %v149
  %v571 = vmul.f32 %v134, %v149
  %v572 = vmul.f32 %v135, %v149
  %v573 = vmul.f32 %v136, %v149
  %v574 = vmul.f32 %v137, %v149
  %v575 = vmul.f32 %v138, %v149
  %v576 = vmul.f32 %v139, %v149
  %v577 = vmul.f32 %v140, %v149
  %v578 = vadd.f32 %v542, %v171
  %v579 = vadd.f32 %v543, %v171
  %v580 = vadd.f32 %v544, %v171
  %v581 = vadd.f32 %v545, %v171
  %v582 = vadd.f32 %v546, %v171
  %v583 = vadd.f32 %v547, %v171
  %v584 = vadd.f32 %v548, %v171
  %v585 = vadd.f32 %v549, %v171
  %v586 = vadd.f32 %v550, %v171
  %v587 = vadd.f32 %v551, %v171
  %v588 = vadd.f32 %v552, %v171
  %v589 = vadd.f32 %v553, %v171
  %v590 = vadd.f32 %v554, %v171
  %v591 = vadd.f32 %v555, %v171
  %v592 = vadd.f32 %v556, %v171
  %v593 = vadd.f32 %v557, %v171
  %v594 = vadd.f32 %v558, %v171
  %v595 = vadd.f32 %v559, %v171
  %v596 = vadd.f32 %v560, %v171
  %v597 = vadd.f32 %v561, %v171
  %v598 = vadd.f32 %v562, %v171
  %v599 = vadd.f32 %v563, %v171
  %v600 = vadd.f32 %v564, %v171
  %v601 = vadd.f32 %v565, %v171
  %v602 = vadd.f32 %v566, %v171
  %v603 = vadd.f32 %v567, %v171
  %v604 = vadd.f32 %v568, %v171
  %v605 = vadd.f32 %v569, %v171
  %v606 = vadd.f32 %v570, %v171
  %v607 = vadd.f32 %v571, %v171
  %v608 = vadd.f32 %v572, %v171
  %v609 = vadd.f32 %v573, %v171
  %v610 = vadd.f32 %v574, %v171
  %v611 = vadd.f32 %v575, %v171
  %v612 = vadd.f32 %v576, %v171
  %v613 = vadd.f32 %v577, %v171
  %vm614 = vcmp.gt.f32.partialorder %v578, 0.0
  %vm615 = vcmp.gt.f32.partialorder %v579, 0.0
  %vm616 = vcmp.gt.f32.partialorder %v580, 0.0
  %vm617 = vcmp.gt.f32.partialorder %v581, 0.0
  %vm618 = vcmp.gt.f32.partialorder %v582, 0.0
  %vm619 = vcmp.gt.f32.partialorder %v583, 0.0
  %vm620 = vcmp.gt.f32.partialorder %v584, 0.0
  %vm621 = vcmp.gt.f32.partialorder %v585, 0.0
  %vm622 = vcmp.gt.f32.partialorder %v586, 0.0
  %vm623 = vcmp.gt.f32.partialorder %v587, 0.0
  %vm624 = vcmp.gt.f32.partialorder %v588, 0.0
  %vm625 = vcmp.gt.f32.partialorder %v589, 0.0
  %vm626 = vcmp.gt.f32.partialorder %v590, 0.0
  %vm627 = vcmp.gt.f32.partialorder %v591, 0.0
  %vm628 = vcmp.gt.f32.partialorder %v592, 0.0
  %vm629 = vcmp.gt.f32.partialorder %v593, 0.0
  %vm630 = vcmp.gt.f32.partialorder %v594, 0.0
  %vm631 = vcmp.gt.f32.partialorder %v595, 0.0
  %vm632 = vcmp.gt.f32.partialorder %v596, 0.0
  %vm633 = vcmp.gt.f32.partialorder %v597, 0.0
  %vm634 = vcmp.gt.f32.partialorder %v598, 0.0
  %vm635 = vcmp.gt.f32.partialorder %v599, 0.0
  %vm636 = vcmp.gt.f32.partialorder %v600, 0.0
  %vm637 = vcmp.gt.f32.partialorder %v601, 0.0
  %vm638 = vcmp.gt.f32.partialorder %v602, 0.0
  %vm639 = vcmp.gt.f32.partialorder %v603, 0.0
  %vm640 = vcmp.gt.f32.partialorder %v604, 0.0
  %vm641 = vcmp.gt.f32.partialorder %v605, 0.0
  %vm642 = vcmp.gt.f32.partialorder %v606, 0.0
  %vm643 = vcmp.gt.f32.partialorder %v607, 0.0
  %vm644 = vcmp.gt.f32.partialorder %v608, 0.0
  %vm645 = vcmp.gt.f32.partialorder %v609, 0.0
  %vm646 = vcmp.gt.f32.partialorder %v610, 0.0
  %vm647 = vcmp.gt.f32.partialorder %v611, 0.0
  %vm648 = vcmp.gt.f32.partialorder %v612, 0.0
  %vm649 = vcmp.gt.f32.partialorder %v613, 0.0
  %v650 = vmul.f32 %v578, 0.1
  %v651 = vmul.f32 %v579, 0.1
  %v652 = vmul.f32 %v580, 0.1
  %v653 = vmul.f32 %v581, 0.1
  %v654 = vmul.f32 %v582, 0.1
  %v655 = vmul.f32 %v583, 0.1
  %v656 = vmul.f32 %v584, 0.1
  %v657 = vmul.f32 %v585, 0.1
  %v658 = vmul.f32 %v586, 0.1
  %v659 = vmul.f32 %v587, 0.1
  %v660 = vmul.f32 %v588, 0.1
  %v661 = vmul.f32 %v589, 0.1
  %v662 = vmul.f32 %v590, 0.1
  %v663 = vmul.f32 %v591, 0.1
  %v664 = vmul.f32 %v592, 0.1
  %v665 = vmul.f32 %v593, 0.1
  %v666 = vmul.f32 %v594, 0.1
  %v667 = vmul.f32 %v595, 0.1
  %v668 = vmul.f32 %v596, 0.1
  %v669 = vmul.f32 %v597, 0.1
  %v670 = vmul.f32 %v598, 0.1
  %v671 = vmul.f32 %v599, 0.1
  %v672 = vmul.f32 %v600, 0.1
  %v673 = vmul.f32 %v601, 0.1
  %v674 = vmul.f32 %v602, 0.1
  %v675 = vmul.f32 %v603, 0.1
  %v676 = vmul.f32 %v604, 0.1
  %v677 = vmul.f32 %v605, 0.1
  %v678 = vmul.f32 %v606, 0.1
  %v679 = vmul.f32 %v607, 0.1
  %v680 = vmul.f32 %v608, 0.1
  %v681 = vmul.f32 %v609, 0.1
  %v682 = vmul.f32 %v610, 0.1
  %v683 = vmul.f32 %v611, 0.1
  %v684 = vmul.f32 %v612, 0.1
  %v685 = vmul.f32 %v613, 0.1
  %v686 = vsel %vm614, %v578, %v650
  %v687 = vsel %vm615, %v579, %v651
  %v688 = vsel %vm616, %v580, %v652
  %v689 = vsel %vm617, %v581, %v653
  %v690 = vsel %vm618, %v582, %v654
  %v691 = vsel %vm619, %v583, %v655
  %v692 = vsel %vm620, %v584, %v656
  %v693 = vsel %vm621, %v585, %v657
  %v694 = vsel %vm622, %v586, %v658
  %v695 = vsel %vm623, %v587, %v659
  %v696 = vsel %vm624, %v588, %v660
  %v697 = vsel %vm625, %v589, %v661
  %v698 = vsel %vm626, %v590, %v662
  %v699 = vsel %vm627, %v591, %v663
  %v700 = vsel %vm628, %v592, %v664
  %v701 = vsel %vm629, %v593, %v665
  %v702 = vsel %vm630, %v594, %v666
  %v703 = vsel %vm631, %v595, %v667
  %v704 = vsel %vm632, %v596, %v668
  %v705 = vsel %vm633, %v597, %v669
  %v706 = vsel %vm634, %v598, %v670
  %v707 = vsel %vm635, %v599, %v671
  %v708 = vsel %vm636, %v600, %v672
  %v709 = vsel %vm637, %v601, %v673
  %v710 = vsel %vm638, %v602, %v674
  %v711 = vsel %vm639, %v603, %v675
  %v712 = vsel %vm640, %v604, %v676
  %v713 = vsel %vm641, %v605, %v677
  %v714 = vsel %vm642, %v606, %v678
  %v715 = vsel %vm643, %v607, %v679
  %v716 = vsel %vm644, %v608, %v680
  %v717 = vsel %vm645, %v609, %v681
  %v718 = vsel %vm646, %v610, %v682
  %v719 = vsel %vm647, %v611, %v683
  %v720 = vsel %vm648, %v612, %v684
  %v721 = vsel %vm649, %v613, %v685
  %v722 = vsel 1, 0.0, %v686
  %v723 = vsel 1, 0.0, %v687
  %v724 = vsel 0, 0.0, %v688
  %v725 = vsel 0, 0.0, %v689
  %v726 = vsel 0, 0.0, %v690
  %v727 = vsel 0, 0.0, %v691
  %v728 = vsel 0, 0.0, %v692
  %v729 = vsel 0, 0.0, %v693
  %v730 = vsel 0, 0.0, %v694
  %v731 = vsel 0, 0.0, %v695
  %v732 = vsel 0, 0.0, %v696
  %v733 = vsel 0, 0.0, %v697
  %v734 = vsel 0, 0.0, %v698
  %v735 = vsel 0, 0.0, %v699
  %v736 = vsel 0, 0.0, %v700
  %v737 = vsel 0, 0.0, %v701
  %v738 = vsel 0, 0.0, %v702
  %v739 = vsel 0, 0.0, %v703
  %v740 = vsel 1, 0.0, %v704
  %v741 = vsel 1, 0.0, %v705
  %v742 = vsel 0, 0.0, %v706
  %v743 = vsel 0, 0.0, %v707
  %v744 = vsel 0, 0.0, %v708
  %v745 = vsel 0, 0.0, %v709
  %v746 = vsel 0, 0.0, %v710
  %v747 = vsel 0, 0.0, %v711
  %v748 = vsel 0, 0.0, %v712
  %v749 = vsel 0, 0.0, %v713
  %v750 = vsel 0, 0.0, %v714
  %v751 = vsel 0, 0.0, %v715
  %v752 = vsel 0, 0.0, %v716
  %v753 = vsel 0, 0.0, %v717
  %v754 = vsel 0, 0.0, %v718
  %v755 = vsel 0, 0.0, %v719
  %v756 = vsel 0, 0.0, %v720
  %v757 = vsel 0, 0.0, %v721
  %v758 = vsel %vm400, 0.0, %v722
  %v759 = vsel %vm401, 0.0, %v723
  %v760 = vsel %vm400, 0.0, %v724
  %v761 = vsel %vm401, 0.0, %v725
  %v762 = vsel %vm400, 0.0, %v726
  %v763 = vsel %vm401, 0.0, %v727
  %v764 = vsel %vm400, 0.0, %v728
  %v765 = vsel %vm401, 0.0, %v729
  %v766 = vsel %vm400, 0.0, %v730
  %v767 = vsel %vm401, 0.0, %v731
  %v768 = vsel %vm400, 0.0, %v732
  %v769 = vsel %vm401, 0.0, %v733
  %v770 = vsel %vm400, 0.0, %v734
  %v771 = vsel %vm401, 0.0, %v735
  %v772 = vsel %vm400, 0.0, %v736
  %v773 = vsel %vm401, 0.0, %v737
  %v774 = vsel %vm400, 0.0, %v738
  %v775 = vsel %vm401, 0.0, %v739
  %v776 = vsel %vm400, 0.0, %v740
  %v777 = vsel %vm401, 0.0, %v741
  %v778 = vsel %vm400, 0.0, %v742
  %v779 = vsel %vm401, 0.0, %v743
  %v780 = vsel %vm400, 0.0, %v744
  %v781 = vsel %vm401, 0.0, %v745
  %v782 = vsel %vm400, 0.0, %v746
  %v783 = vsel %vm401, 0.0, %v747
  %v784 = vsel %vm400, 0.0, %v748
  %v785 = vsel %vm401, 0.0, %v749
  %v786 = vsel %vm400, 0.0, %v750
  %v787 = vsel %vm401, 0.0, %v751
  %v788 = vsel %vm400, 0.0, %v752
  %v789 = vsel %vm401, 0.0, %v753
  %v790 = vsel %vm400, 0.0, %v754
  %v791 = vsel %vm401, 0.0, %v755
  %v792 = vsel %vm400, 0.0, %v756
  %v793 = vsel %vm401, 0.0, %v757
  %v794 = vpack.c.bf16 %v760, %v758
  %v795 = vpack.c.bf16 %v764, %v762
  %v796 = vpack.c.bf16 %v768, %v766
  %v797 = vpack.c.bf16 %v772, %v770
  %v798 = vpack.c.bf16 %v778, %v776
  %v799 = vpack.c.bf16 %v782, %v780
  %v800 = vpack.c.bf16 %v786, %v784
  %v801 = vpack.c.bf16 %v790, %v788
  %v802 = vld [vmem:[%s6] sm:$0x3]
  %v803 = vpack.c.bf16 %v525, %v524
  %v804 = vpack.c.bf16 %v527, %v526
  %v805 = vpack.c.bf16 %v529, %v528
  %v806 = vpack.c.bf16 %v531, %v530
  %v807 = vpack.c.bf16 %v534, %v533
  %v808 = vpack.c.bf16 %v536, %v535
  %v809 = vpack.c.bf16 %v538, %v537
  %v810 = vpack.c.bf16 %v540, %v539
  %s811 = scalar_lea.vmem %s6, 2
  %v812 = vld [vmem:[%s811] sm:$0x3]
  %vm813 = vcmask 31744
  %v815 = vsel %vm813, %v803, 0
  %v818 = vsel %vm813, %v804, 0
  %v821 = vsel %vm813, %v805, 0
  %v824 = vsel %vm813, %v806, 0
  %v827 = vsel %vm813, %v807, 0
  %v830 = vsel %vm813, %v808, 0
  %v833 = vsel %vm813, %v809, 0
  %v836 = vsel %vm813, %v810, 0
  %vm838 = vcmask 1041408
  %v840 = vsel %vm838, %v812, 0
  %842 = vmatprep.subr.bf16.mxu0 0
  %843 = vmatpush1.bf16.msra.mxu0 %v840
  %844 = vmatprep.subr.bf16.mxu0 0
  %845 = vmatpush1.bf16.msra.mxu0 0
  %846 = vmatprep.subr.bf16.mxu0 0
  %847 = vmatpush1.bf16.msra.mxu0 0
  %848 = vmatprep.subr.bf16.mxu0 0
  %849 = vmatpush1.bf16.msra.mxu0 0
  %850 = vmatprep.subr.bf16.mxu0 0
  %851 = vmatpush1.bf16.msra.mxu0 0
  %852 = vmatprep.subr.bf16.mxu0 0
  %853 = vmatpush1.bf16.msra.mxu0 0
  %854 = vmatprep.subr.bf16.mxu0 0
  %855 = vmatpush1.bf16.msra.mxu0 0
  %856 = vmatprep.subr.bf16.mxu0 0
  %857 = vmatpush1.bf16.msra.mxu0 0
  %858 = vmatprep.subr.bf16.mxu0 0
  %859 = vmatpush1.bf16.msra.mxu0 0
  %860 = vmatprep.subr.bf16.mxu0 0
  %861 = vmatpush1.bf16.msra.mxu0 0
  %862 = vmatprep.subr.bf16.mxu0 0
  %863 = vmatpush1.bf16.msra.mxu0 0
  %864 = vmatprep.subr.bf16.mxu0 0
  %865 = vmatpush1.bf16.msra.mxu0 0
  %866 = vmatprep.subr.bf16.mxu0 0
  %867 = vmatpush1.bf16.msra.mxu0 0
  %868 = vmatprep.subr.bf16.mxu0 0
  %869 = vmatpush1.bf16.msra.mxu0 0
  %870 = vmatprep.subr.bf16.mxu0 0
  %871 = vmatpush1.bf16.msra.mxu0 0
  %872 = vmatprep.subr.bf16.mxu0 0
  %873 = vmatpush1.bf16.msra.mxu0 0
  %874 = vmatprep.mubr.bf16.mxu0 0
  %875 = vmatmul.mubr.bf16.gmra.mrb[0].mxu0 %v815
  %v876 = vpop.f32.mrb[0].mxu0
  %v877 = vadd.f32 0.0, %v876
  %v878 = vpop.f32.mrb[0].mxu0
  %v879 = vpop.f32.mrb[0].mxu0
  %v880 = vadd.f32 0.0, %v879
  %v881 = vpop.f32.mrb[0].mxu0
  %882 = vmatprep.mubr.bf16.mxu0 0
  %883 = vmatmul.mubr.bf16.gmra.mrb[0].mxu0 %v818
  %v884 = vpop.f32.mrb[0].mxu0
  %v885 = vadd.f32 0.0, %v884
  %v886 = vpop.f32.mrb[0].mxu0
  %v887 = vpop.f32.mrb[0].mxu0
  %v888 = vadd.f32 0.0, %v887
  %v889 = vpop.f32.mrb[0].mxu0
  %890 = vmatprep.mubr.bf16.mxu0 0
  %891 = vmatmul.mubr.bf16.gmra.mrb[0].mxu0 %v821
  %v892 = vpop.f32.mrb[0].mxu0
  %v893 = vadd.f32 0.0, %v892
  %v894 = vpop.f32.mrb[0].mxu0
  %v895 = vpop.f32.mrb[0].mxu0
  %v896 = vadd.f32 0.0, %v895
  %v897 = vpop.f32.mrb[0].mxu0
  %898 = vmatprep.mubr.bf16.mxu0 0
  %899 = vmatmul.mubr.bf16.gmra.mrb[0].mxu0 %v824
  %v900 = vpop.f32.mrb[0].mxu0
  %v901 = vadd.f32 0.0, %v900
  %v902 = vpop.f32.mrb[0].mxu0
  %v903 = vpop.f32.mrb[0].mxu0
  %v904 = vadd.f32 0.0, %v903
  %v905 = vpop.f32.mrb[0].mxu0
  %906 = vmatprep.mubr.bf16.mxu0 0
  %907 = vmatmul.mubr.bf16.gmra.mrb[0].mxu0 %v827
  %v908 = vpop.f32.mrb[0].mxu0
  %v909 = vadd.f32 0.0, %v908
  %v910 = vpop.f32.mrb[0].mxu0
  %v911 = vpop.f32.mrb[0].mxu0
  %v912 = vadd.f32 0.0, %v911
  %v913 = vpop.f32.mrb[0].mxu0
  %914 = vmatprep.mubr.bf16.mxu0 0
  %915 = vmatmul.mubr.bf16.gmra.mrb[0].mxu0 %v830
  %v916 = vpop.f32.mrb[0].mxu0
  %v917 = vadd.f32 0.0, %v916
  %v918 = vpop.f32.mrb[0].mxu0
  %v919 = vpop.f32.mrb[0].mxu0
  %v920 = vadd.f32 0.0, %v919
  %v921 = vpop.f32.mrb[0].mxu0
  %922 = vmatprep.mubr.bf16.mxu0 0
  %923 = vmatmul.mubr.bf16.gmra.mrb[0].mxu0 %v833
  %v924 = vpop.f32.mrb[0].mxu0
  %v925 = vadd.f32 0.0, %v924
  %v926 = vpop.f32.mrb[0].mxu0
  %v927 = vpop.f32.mrb[0].mxu0
  %v928 = vadd.f32 0.0, %v927
  %v929 = vpop.f32.mrb[0].mxu0
  %930 = vmatprep.mubr.bf16.mxu0 0
  %931 = vmatmul.mubr.bf16.gmra.mrb[0].mxu0 %v836
  %v932 = vpop.f32.mrb[0].mxu0
  %v933 = vadd.f32 0.0, %v932
  %v934 = vpop.f32.mrb[0].mxu0
  %v935 = vpop.f32.mrb[0].mxu0
  %v936 = vadd.f32 0.0, %v935
  %v937 = vpop.f32.mrb[0].mxu0
  %938 = vdwg.mxu0
  %v940 = vsel %vm813, %v794, 0
  %v943 = vsel %vm813, %v795, 0
  %v946 = vsel %vm813, %v796, 0
  %v949 = vsel %vm813, %v797, 0
  %v952 = vsel %vm813, %v798, 0
  %v955 = vsel %vm813, %v799, 0
  %v958 = vsel %vm813, %v800, 0
  %v961 = vsel %vm813, %v801, 0
  %v964 = vsel %vm838, %v802, 0
  %966 = vmatprep.subr.bf16.mxu0 0
  %967 = vmatpush1.bf16.msra.mxu0 %v964
  %968 = vmatprep.subr.bf16.mxu0 0
  %969 = vmatpush1.bf16.msra.mxu0 0
  %970 = vmatprep.subr.bf16.mxu0 0
  %971 = vmatpush1.bf16.msra.mxu0 0
  %972 = vmatprep.subr.bf16.mxu0 0
  %973 = vmatpush1.bf16.msra.mxu0 0
  %974 = vmatprep.subr.bf16.mxu0 0
  %975 = vmatpush1.bf16.msra.mxu0 0
  %976 = vmatprep.subr.bf16.mxu0 0
  %977 = vmatpush1.bf16.msra.mxu0 0
  %978 = vmatprep.subr.bf16.mxu0 0
  %979 = vmatpush1.bf16.msra.mxu0 0
  %980 = vmatprep.subr.bf16.mxu0 0
  %981 = vmatpush1.bf16.msra.mxu0 0
  %982 = vmatprep.subr.bf16.mxu0 0
  %983 = vmatpush1.bf16.msra.mxu0 0
  %984 = vmatprep.subr.bf16.mxu0 0
  %985 = vmatpush1.bf16.msra.mxu0 0
  %986 = vmatprep.subr.bf16.mxu0 0
  %987 = vmatpush1.bf16.msra.mxu0 0
  %988 = vmatprep.subr.bf16.mxu0 0
  %989 = vmatpush1.bf16.msra.mxu0 0
  %990 = vmatprep.subr.bf16.mxu0 0
  %991 = vmatpush1.bf16.msra.mxu0 0
  %992 = vmatprep.subr.bf16.mxu0 0
  %993 = vmatpush1.bf16.msra.mxu0 0
  %994 = vmatprep.subr.bf16.mxu0 0
  %995 = vmatpush1.bf16.msra.mxu0 0
  %996 = vmatprep.subr.bf16.mxu0 0
  %997 = vmatpush1.bf16.msra.mxu0 0
  %998 = vmatprep.mubr.bf16.mxu0 0
  %999 = vmatmul.mubr.bf16.gmra.mrb[0].mxu0 %v940
  %v1000 = vpop.f32.mrb[0].mxu0
  %v1001 = vadd.f32 %v877, %v1000
  %v1002 = vpop.f32.mrb[0].mxu0
  %v1003 = vpop.f32.mrb[0].mxu0
  %v1004 = vadd.f32 %v880, %v1003
  %v1005 = vpop.f32.mrb[0].mxu0
  %1006 = vmatprep.mubr.bf16.mxu0 0
  %1007 = vmatmul.mubr.bf16.gmra.mrb[0].mxu0 %v943
  %v1008 = vpop.f32.mrb[0].mxu0
  %v1009 = vadd.f32 %v885, %v1008
  %v1010 = vpop.f32.mrb[0].mxu0
  %v1011 = vpop.f32.mrb[0].mxu0
  %v1012 = vadd.f32 %v888, %v1011
  %v1013 = vpop.f32.mrb[0].mxu0
  %1014 = vmatprep.mubr.bf16.mxu0 0
  %1015 = vmatmul.mubr.bf16.gmra.mrb[0].mxu0 %v946
  %v1016 = vpop.f32.mrb[0].mxu0
  %v1017 = vadd.f32 %v893, %v1016
  %v1018 = vpop.f32.mrb[0].mxu0
  %v1019 = vpop.f32.mrb[0].mxu0
  %v1020 = vadd.f32 %v896, %v1019
  %v1021 = vpop.f32.mrb[0].mxu0
  %1022 = vmatprep.mubr.bf16.mxu0 0
  %1023 = vmatmul.mubr.bf16.gmra.mrb[0].mxu0 %v949
  %v1024 = vpop.f32.mrb[0].mxu0
  %v1025 = vadd.f32 %v901, %v1024
  %v1026 = vpop.f32.mrb[0].mxu0
  %v1027 = vpop.f32.mrb[0].mxu0
  %v1028 = vadd.f32 %v904, %v1027
  %v1029 = vpop.f32.mrb[0].mxu0
  %1030 = vmatprep.mubr.bf16.mxu0 0
  %1031 = vmatmul.mubr.bf16.gmra.mrb[0].mxu0 %v952
  %v1032 = vpop.f32.mrb[0].mxu0
  %v1033 = vadd.f32 %v909, %v1032
  %v1034 = vpop.f32.mrb[0].mxu0
  %v1035 = vpop.f32.mrb[0].mxu0
  %v1036 = vadd.f32 %v912, %v1035
  %v1037 = vpop.f32.mrb[0].mxu0
  %1038 = vmatprep.mubr.bf16.mxu0 0
  %1039 = vmatmul.mubr.bf16.gmra.mrb[0].mxu0 %v955
  %v1040 = vpop.f32.mrb[0].mxu0
  %v1041 = vadd.f32 %v917, %v1040
  %v1042 = vpop.f32.mrb[0].mxu0
  %v1043 = vpop.f32.mrb[0].mxu0
  %v1044 = vadd.f32 %v920, %v1043
  %v1045 = vpop.f32.mrb[0].mxu0
  %1046 = vmatprep.mubr.bf16.mxu0 0
  %1047 = vmatmul.mubr.bf16.gmra.mrb[0].mxu0 %v958
  %v1048 = vpop.f32.mrb[0].mxu0
  %v1049 = vadd.f32 %v925, %v1048
  %v1050 = vpop.f32.mrb[0].mxu0
  %v1051 = vpop.f32.mrb[0].mxu0
  %v1052 = vadd.f32 %v928, %v1051
  %v1053 = vpop.f32.mrb[0].mxu0
  %1054 = vmatprep.mubr.bf16.mxu0 0
  %1055 = vmatmul.mubr.bf16.gmra.mrb[0].mxu0 %v961
  %v1056 = vpop.f32.mrb[0].mxu0
  %v1057 = vadd.f32 %v933, %v1056
  %v1058 = vpop.f32.mrb[0].mxu0
  %v1059 = vpop.f32.mrb[0].mxu0
  %v1060 = vadd.f32 %v936, %v1059
  %v1061 = vpop.f32.mrb[0].mxu0
  %1062 = vdwg.mxu0
  %vm1095 = vcmask 1046528
  %v1096 = vrot.slane %v758, 1
  %v1097 = vrot.slane %v759, 1
  %v1098 = vsel %vm1095, %v1096, %v1097
  %v1099 = vrot.slane %v760, 1
  %v1100 = vrot.slane %v761, 1
  %v1101 = vsel %vm1095, %v1099, %v1100
  %v1102 = vrot.slane %v762, 1
  %v1103 = vrot.slane %v763, 1
  %v1104 = vsel %vm1095, %v1102, %v1103
  %v1105 = vrot.slane %v764, 1
  %v1106 = vrot.slane %v765, 1
  %v1107 = vsel %vm1095, %v1105, %v1106
  %v1108 = vrot.slane %v766, 1
  %v1109 = vrot.slane %v767, 1
  %v1110 = vsel %vm1095, %v1108, %v1109
  %v1111 = vrot.slane %v768, 1
  %v1112 = vrot.slane %v769, 1
  %v1113 = vsel %vm1095, %v1111, %v1112
  %v1114 = vrot.slane %v770, 1
  %v1115 = vrot.slane %v771, 1
  %v1116 = vsel %vm1095, %v1114, %v1115
  %v1117 = vrot.slane %v772, 1
  %v1118 = vrot.slane %v773, 1
  %v1119 = vsel %vm1095, %v1117, %v1118
  %v1120 = vrot.slane %v776, 1
  %v1121 = vrot.slane %v777, 1
  %v1122 = vsel %vm1095, %v1120, %v1121
  %v1123 = vrot.slane %v778, 1
  %v1124 = vrot.slane %v779, 1
  %v1125 = vsel %vm1095, %v1123, %v1124
  %v1126 = vrot.slane %v780, 1
  %v1127 = vrot.slane %v781, 1
  %v1128 = vsel %vm1095, %v1126, %v1127
  %v1129 = vrot.slane %v782, 1
  %v1130 = vrot.slane %v783, 1
  %v1131 = vsel %vm1095, %v1129, %v1130
  %v1132 = vrot.slane %v784, 1
  %v1133 = vrot.slane %v785, 1
  %v1134 = vsel %vm1095, %v1132, %v1133
  %v1135 = vrot.slane %v786, 1
  %v1136 = vrot.slane %v787, 1
  %v1137 = vsel %vm1095, %v1135, %v1136
  %v1138 = vrot.slane %v788, 1
  %v1139 = vrot.slane %v789, 1
  %v1140 = vsel %vm1095, %v1138, %v1139
  %v1141 = vrot.slane %v790, 1
  %v1142 = vrot.slane %v791, 1
  %v1143 = vsel %vm1095, %v1141, %v1142
  %v1160 = vpack.c.bf16 %v1101, %v1098
  %v1161 = vpack.c.bf16 %v1107, %v1104
  %v1162 = vpack.c.bf16 %v1113, %v1110
  %v1163 = vpack.c.bf16 %v1119, %v1116
  %v1164 = vpack.c.bf16 %v1125, %v1122
  %v1165 = vpack.c.bf16 %v1131, %v1128
  %v1166 = vpack.c.bf16 %v1137, %v1134
  %v1167 = vpack.c.bf16 %v1143, %v1140
  %s1168 = scalar_lea.vmem %s6, 4
  %v1169 = vld [vmem:[%s1168] sm:$0x3]
  %v1171 = vsel %vm813, %v1160, 0
  %v1174 = vsel %vm813, %v1161, 0
  %v1177 = vsel %vm813, %v1162, 0
  %v1180 = vsel %vm813, %v1163, 0
  %v1183 = vsel %vm813, %v1164, 0
  %v1186 = vsel %vm813, %v1165, 0
  %v1189 = vsel %vm813, %v1166, 0
  %v1192 = vsel %vm813, %v1167, 0
  %v1195 = vsel %vm838, %v1169, 0
  %1197 = vmatprep.subr.bf16.mxu0 0
  %1198 = vmatpush1.bf16.msra.mxu0 %v1195
  %1199 = vmatprep.subr.bf16.mxu0 0
  %1200 = vmatpush1.bf16.msra.mxu0 0
  %1201 = vmatprep.subr.bf16.mxu0 0
  %1202 = vmatpush1.bf16.msra.mxu0 0
  %1203 = vmatprep.subr.bf16.mxu0 0
  %1204 = vmatpush1.bf16.msra.mxu0 0
  %1205 = vmatprep.subr.bf16.mxu0 0
  %1206 = vmatpush1.bf16.msra.mxu0 0
  %1207 = vmatprep.subr.bf16.mxu0 0
  %1208 = vmatpush1.bf16.msra.mxu0 0
  %1209 = vmatprep.subr.bf16.mxu0 0
  %1210 = vmatpush1.bf16.msra.mxu0 0
  %1211 = vmatprep.subr.bf16.mxu0 0
  %1212 = vmatpush1.bf16.msra.mxu0 0
  %1213 = vmatprep.subr.bf16.mxu0 0
  %1214 = vmatpush1.bf16.msra.mxu0 0
  %1215 = vmatprep.subr.bf16.mxu0 0
  %1216 = vmatpush1.bf16.msra.mxu0 0
  %1217 = vmatprep.subr.bf16.mxu0 0
  %1218 = vmatpush1.bf16.msra.mxu0 0
  %1219 = vmatprep.subr.bf16.mxu0 0
  %1220 = vmatpush1.bf16.msra.mxu0 0
  %1221 = vmatprep.subr.bf16.mxu0 0
  %1222 = vmatpush1.bf16.msra.mxu0 0
  %1223 = vmatprep.subr.bf16.mxu0 0
  %1224 = vmatpush1.bf16.msra.mxu0 0
  %1225 = vmatprep.subr.bf16.mxu0 0
  %1226 = vmatpush1.bf16.msra.mxu0 0
  %1227 = vmatprep.subr.bf16.mxu0 0
  %1228 = vmatpush1.bf16.msra.mxu0 0
  %1229 = vmatprep.mubr.bf16.mxu0 0
  %1230 = vmatmul.mubr.bf16.gmra.mrb[0].mxu0 %v1171
  %v1231 = vpop.f32.mrb[0].mxu0
  %v1232 = vadd.f32 0.0, %v1231
  %v1233 = vpop.f32.mrb[0].mxu0
  %v1234 = vpop.f32.mrb[0].mxu0
  %v1235 = vadd.f32 0.0, %v1234
  %v1236 = vpop.f32.mrb[0].mxu0
  %1237 = vmatprep.mubr.bf16.mxu0 0
  %1238 = vmatmul.mubr.bf16.gmra.mrb[0].mxu0 %v1174
  %v1239 = vpop.f32.mrb[0].mxu0
  %v1240 = vadd.f32 0.0, %v1239
  %v1241 = vpop.f32.mrb[0].mxu0
  %v1242 = vpop.f32.mrb[0].mxu0
  %v1243 = vadd.f32 0.0, %v1242
  %v1244 = vpop.f32.mrb[0].mxu0
  %1245 = vmatprep.mubr.bf16.mxu0 0
  %1246 = vmatmul.mubr.bf16.gmra.mrb[0].mxu0 %v1177
  %v1247 = vpop.f32.mrb[0].mxu0
  %v1248 = vadd.f32 0.0, %v1247
  %v1249 = vpop.f32.mrb[0].mxu0
  %v1250 = vpop.f32.mrb[0].mxu0
  %v1251 = vadd.f32 0.0, %v1250
  %v1252 = vpop.f32.mrb[0].mxu0
  %1253 = vmatprep.mubr.bf16.mxu0 0
  %1254 = vmatmul.mubr.bf16.gmra.mrb[0].mxu0 %v1180
  %v1255 = vpop.f32.mrb[0].mxu0
  %v1256 = vadd.f32 0.0, %v1255
  %v1257 = vpop.f32.mrb[0].mxu0
  %v1258 = vpop.f32.mrb[0].mxu0
  %v1259 = vadd.f32 0.0, %v1258
  %v1260 = vpop.f32.mrb[0].mxu0
  %1261 = vmatprep.mubr.bf16.mxu0 0
  %1262 = vmatmul.mubr.bf16.gmra.mrb[0].mxu0 %v1183
  %v1263 = vpop.f32.mrb[0].mxu0
  %v1264 = vadd.f32 0.0, %v1263
  %v1265 = vpop.f32.mrb[0].mxu0
  %v1266 = vpop.f32.mrb[0].mxu0
  %v1267 = vadd.f32 0.0, %v1266
  %v1268 = vpop.f32.mrb[0].mxu0
  %1269 = vmatprep.mubr.bf16.mxu0 0
  %1270 = vmatmul.mubr.bf16.gmra.mrb[0].mxu0 %v1186
  %v1271 = vpop.f32.mrb[0].mxu0
  %v1272 = vadd.f32 0.0, %v1271
  %v1273 = vpop.f32.mrb[0].mxu0
  %v1274 = vpop.f32.mrb[0].mxu0
  %v1275 = vadd.f32 0.0, %v1274
  %v1276 = vpop.f32.mrb[0].mxu0
  %1277 = vmatprep.mubr.bf16.mxu0 0
  %1278 = vmatmul.mubr.bf16.gmra.mrb[0].mxu0 %v1189
  %v1279 = vpop.f32.mrb[0].mxu0
  %v1280 = vadd.f32 0.0, %v1279
  %v1281 = vpop.f32.mrb[0].mxu0
  %v1282 = vpop.f32.mrb[0].mxu0
  %v1283 = vadd.f32 0.0, %v1282
  %v1284 = vpop.f32.mrb[0].mxu0
  %1285 = vmatprep.mubr.bf16.mxu0 0
  %1286 = vmatmul.mubr.bf16.gmra.mrb[0].mxu0 %v1192
  %v1287 = vpop.f32.mrb[0].mxu0
  %v1288 = vadd.f32 0.0, %v1287
  %v1289 = vpop.f32.mrb[0].mxu0
  %v1290 = vpop.f32.mrb[0].mxu0
  %v1291 = vadd.f32 0.0, %v1290
  %v1292 = vpop.f32.mrb[0].mxu0
  %1293 = vdwg.mxu0
  %v1294 = vadd.f32 %v1001, %v1232
  %v1295 = vadd.f32 %v1004, %v1235
  %v1296 = vadd.f32 %v1009, %v1240
  %v1297 = vadd.f32 %v1012, %v1243
  %v1298 = vadd.f32 %v1017, %v1248
  %v1299 = vadd.f32 %v1020, %v1251
  %v1300 = vadd.f32 %v1025, %v1256
  %v1301 = vadd.f32 %v1028, %v1259
  %v1302 = vadd.f32 %v1033, %v1264
  %v1303 = vadd.f32 %v1036, %v1267
  %v1304 = vadd.f32 %v1041, %v1272
  %v1305 = vadd.f32 %v1044, %v1275
  %v1306 = vadd.f32 %v1049, %v1280
  %v1307 = vadd.f32 %v1052, %v1283
  %v1308 = vadd.f32 %v1057, %v1288
  %v1309 = vadd.f32 %v1060, %v1291
  %v1310 = vpack.c.bf16 %v404, %v402
  %v1311 = vpack.c.bf16 %v408, %v406
  %v1312 = vpack.c.bf16 %v412, %v410
  %v1313 = vpack.c.bf16 %v416, %v414
  %v1314 = vpack.c.bf16 %v420, %v418
  %v1315 = vpack.c.bf16 %v424, %v422
  %v1316 = vpack.c.bf16 %v428, %v426
  %v1317 = vpack.c.bf16 %v432, %v430
  %s1318 = scalar_lea.vmem %s6, 6
  %v1319 = vld [vmem:[%s1318] sm:$0x3]
  %v1321 = vsel %vm813, %v1310, 0
  %v1324 = vsel %vm813, %v1311, 0
  %v1327 = vsel %vm813, %v1312, 0
  %v1330 = vsel %vm813, %v1313, 0
  %v1333 = vsel %vm813, %v1314, 0
  %v1336 = vsel %vm813, %v1315, 0
  %v1339 = vsel %vm813, %v1316, 0
  %v1342 = vsel %vm813, %v1317, 0
  %v1345 = vsel %vm838, %v1319, 0
  %1347 = vmatprep.subr.bf16.mxu0 0
  %1348 = vmatpush1.bf16.msra.mxu0 %v1345
  %1349 = vmatprep.subr.bf16.mxu0 0
  %1350 = vmatpush1.bf16.msra.mxu0 0
  %1351 = vmatprep.subr.bf16.mxu0 0
  %1352 = vmatpush1.bf16.msra.mxu0 0
  %1353 = vmatprep.subr.bf16.mxu0 0
  %1354 = vmatpush1.bf16.msra.mxu0 0
  %1355 = vmatprep.subr.bf16.mxu0 0
  %1356 = vmatpush1.bf16.msra.mxu0 0
  %1357 = vmatprep.subr.bf16.mxu0 0
  %1358 = vmatpush1.bf16.msra.mxu0 0
  %1359 = vmatprep.subr.bf16.mxu0 0
  %1360 = vmatpush1.bf16.msra.mxu0 0
  %1361 = vmatprep.subr.bf16.mxu0 0
  %1362 = vmatpush1.bf16.msra.mxu0 0
  %1363 = vmatprep.subr.bf16.mxu0 0
  %1364 = vmatpush1.bf16.msra.mxu0 0
  %1365 = vmatprep.subr.bf16.mxu0 0
  %1366 = vmatpush1.bf16.msra.mxu0 0
  %1367 = vmatprep.subr.bf16.mxu0 0
  %1368 = vmatpush1.bf16.msra.mxu0 0
  %1369 = vmatprep.subr.bf16.mxu0 0
  %1370 = vmatpush1.bf16.msra.mxu0 0
  %1371 = vmatprep.subr.bf16.mxu0 0
  %1372 = vmatpush1.bf16.msra.mxu0 0
  %1373 = vmatprep.subr.bf16.mxu0 0
  %1374 = vmatpush1.bf16.msra.mxu0 0
  %1375 = vmatprep.subr.bf16.mxu0 0
  %1376 = vmatpush1.bf16.msra.mxu0 0
  %1377 = vmatprep.subr.bf16.mxu0 0
  %1378 = vmatpush1.bf16.msra.mxu0 0
  %1379 = vmatprep.mubr.bf16.mxu0 0
  %1380 = vmatmul.mubr.bf16.gmra.mrb[0].mxu0 %v1321
  %v1381 = vpop.f32.mrb[0].mxu0
  %v1382 = vadd.f32 0.0, %v1381
  %v1383 = vpop.f32.mrb[0].mxu0
  %v1384 = vpop.f32.mrb[0].mxu0
  %v1385 = vadd.f32 0.0, %v1384
  %v1386 = vpop.f32.mrb[0].mxu0
  %1387 = vmatprep.mubr.bf16.mxu0 0
  %1388 = vmatmul.mubr.bf16.gmra.mrb[0].mxu0 %v1324
  %v1389 = vpop.f32.mrb[0].mxu0
  %v1390 = vadd.f32 0.0, %v1389
  %v1391 = vpop.f32.mrb[0].mxu0
  %v1392 = vpop.f32.mrb[0].mxu0
  %v1393 = vadd.f32 0.0, %v1392
  %v1394 = vpop.f32.mrb[0].mxu0
  %1395 = vmatprep.mubr.bf16.mxu0 0
  %1396 = vmatmul.mubr.bf16.gmra.mrb[0].mxu0 %v1327
  %v1397 = vpop.f32.mrb[0].mxu0
  %v1398 = vadd.f32 0.0, %v1397
  %v1399 = vpop.f32.mrb[0].mxu0
  %v1400 = vpop.f32.mrb[0].mxu0
  %v1401 = vadd.f32 0.0, %v1400
  %v1402 = vpop.f32.mrb[0].mxu0
  %1403 = vmatprep.mubr.bf16.mxu0 0
  %1404 = vmatmul.mubr.bf16.gmra.mrb[0].mxu0 %v1330
  %v1405 = vpop.f32.mrb[0].mxu0
  %v1406 = vadd.f32 0.0, %v1405
  %v1407 = vpop.f32.mrb[0].mxu0
  %v1408 = vpop.f32.mrb[0].mxu0
  %v1409 = vadd.f32 0.0, %v1408
  %v1410 = vpop.f32.mrb[0].mxu0
  %1411 = vmatprep.mubr.bf16.mxu0 0
  %1412 = vmatmul.mubr.bf16.gmra.mrb[0].mxu0 %v1333
  %v1413 = vpop.f32.mrb[0].mxu0
  %v1414 = vadd.f32 0.0, %v1413
  %v1415 = vpop.f32.mrb[0].mxu0
  %v1416 = vpop.f32.mrb[0].mxu0
  %v1417 = vadd.f32 0.0, %v1416
  %v1418 = vpop.f32.mrb[0].mxu0
  %1419 = vmatprep.mubr.bf16.mxu0 0
  %1420 = vmatmul.mubr.bf16.gmra.mrb[0].mxu0 %v1336
  %v1421 = vpop.f32.mrb[0].mxu0
  %v1422 = vadd.f32 0.0, %v1421
  %v1423 = vpop.f32.mrb[0].mxu0
  %v1424 = vpop.f32.mrb[0].mxu0
  %v1425 = vadd.f32 0.0, %v1424
  %v1426 = vpop.f32.mrb[0].mxu0
  %1427 = vmatprep.mubr.bf16.mxu0 0
  %1428 = vmatmul.mubr.bf16.gmra.mrb[0].mxu0 %v1339
  %v1429 = vpop.f32.mrb[0].mxu0
  %v1430 = vadd.f32 0.0, %v1429
  %v1431 = vpop.f32.mrb[0].mxu0
  %v1432 = vpop.f32.mrb[0].mxu0
  %v1433 = vadd.f32 0.0, %v1432
  %v1434 = vpop.f32.mrb[0].mxu0
  %1435 = vmatprep.mubr.bf16.mxu0 0
  %1436 = vmatmul.mubr.bf16.gmra.mrb[0].mxu0 %v1342
  %v1437 = vpop.f32.mrb[0].mxu0
  %v1438 = vadd.f32 0.0, %v1437
  %v1439 = vpop.f32.mrb[0].mxu0
  %v1440 = vpop.f32.mrb[0].mxu0
  %v1441 = vadd.f32 0.0, %v1440
  %v1442 = vpop.f32.mrb[0].mxu0
  %1443 = vdwg.mxu0
  %v1444 = vadd.f32 %v1294, %v1382
  %v1445 = vadd.f32 %v1295, %v1385
  %v1446 = vadd.f32 %v1296, %v1390
  %v1447 = vadd.f32 %v1297, %v1393
  %v1448 = vadd.f32 %v1298, %v1398
  %v1449 = vadd.f32 %v1299, %v1401
  %v1450 = vadd.f32 %v1300, %v1406
  %v1451 = vadd.f32 %v1301, %v1409
  %v1452 = vadd.f32 %v1302, %v1414
  %v1453 = vadd.f32 %v1303, %v1417
  %v1454 = vadd.f32 %v1304, %v1422
  %v1455 = vadd.f32 %v1305, %v1425
  %v1456 = vadd.f32 %v1306, %v1430
  %v1457 = vadd.f32 %v1307, %v1433
  %v1458 = vadd.f32 %v1308, %v1438
  %v1459 = vadd.f32 %v1309, %v1441
  %v1460 = vpack.c.bf16 %v222, %v221
  %v1461 = vpack.c.bf16 %v224, %v223
  %v1462 = vpack.c.bf16 %v226, %v225
  %v1463 = vpack.c.bf16 %v228, %v227
  %v1464 = vpack.c.bf16 %v230, %v229
  %v1465 = vpack.c.bf16 %v232, %v231
  %v1466 = vpack.c.bf16 %v234, %v233
  %v1467 = vpack.c.bf16 %v236, %v235
  %s1468 = scalar_lea.vmem %s6, 8
  %v1469 = vld [vmem:[%s1468] sm:$0x3]
  %v1471 = vsel %vm813, %v1460, 0
  %v1474 = vsel %vm813, %v1461, 0
  %v1477 = vsel %vm813, %v1462, 0
  %v1480 = vsel %vm813, %v1463, 0
  %v1483 = vsel %vm813, %v1464, 0
  %v1486 = vsel %vm813, %v1465, 0
  %v1489 = vsel %vm813, %v1466, 0
  %v1492 = vsel %vm813, %v1467, 0
  %v1495 = vsel %vm838, %v1469, 0
  %1497 = vmatprep.subr.bf16.mxu0 0
  %1498 = vmatpush1.bf16.msra.mxu0 %v1495
  %1499 = vmatprep.subr.bf16.mxu0 0
  %1500 = vmatpush1.bf16.msra.mxu0 0
  %1501 = vmatprep.subr.bf16.mxu0 0
  %1502 = vmatpush1.bf16.msra.mxu0 0
  %1503 = vmatprep.subr.bf16.mxu0 0
  %1504 = vmatpush1.bf16.msra.mxu0 0
  %1505 = vmatprep.subr.bf16.mxu0 0
  %1506 = vmatpush1.bf16.msra.mxu0 0
  %1507 = vmatprep.subr.bf16.mxu0 0
  %1508 = vmatpush1.bf16.msra.mxu0 0
  %1509 = vmatprep.subr.bf16.mxu0 0
  %1510 = vmatpush1.bf16.msra.mxu0 0
  %1511 = vmatprep.subr.bf16.mxu0 0
  %1512 = vmatpush1.bf16.msra.mxu0 0
  %1513 = vmatprep.subr.bf16.mxu0 0
  %1514 = vmatpush1.bf16.msra.mxu0 0
  %1515 = vmatprep.subr.bf16.mxu0 0
  %1516 = vmatpush1.bf16.msra.mxu0 0
  %1517 = vmatprep.subr.bf16.mxu0 0
  %1518 = vmatpush1.bf16.msra.mxu0 0
  %1519 = vmatprep.subr.bf16.mxu0 0
  %1520 = vmatpush1.bf16.msra.mxu0 0
  %1521 = vmatprep.subr.bf16.mxu0 0
  %1522 = vmatpush1.bf16.msra.mxu0 0
  %1523 = vmatprep.subr.bf16.mxu0 0
  %1524 = vmatpush1.bf16.msra.mxu0 0
  %1525 = vmatprep.subr.bf16.mxu0 0
  %1526 = vmatpush1.bf16.msra.mxu0 0
  %1527 = vmatprep.subr.bf16.mxu0 0
  %1528 = vmatpush1.bf16.msra.mxu0 0
  %1529 = vmatprep.mubr.bf16.mxu0 0
  %1530 = vmatmul.mubr.bf16.gmra.mrb[0].mxu0 %v1471
  %v1531 = vpop.f32.mrb[0].mxu0
  %v1532 = vadd.f32 0.0, %v1531
  %v1533 = vpop.f32.mrb[0].mxu0
  %v1534 = vpop.f32.mrb[0].mxu0
  %v1535 = vadd.f32 0.0, %v1534
  %v1536 = vpop.f32.mrb[0].mxu0
  %1537 = vmatprep.mubr.bf16.mxu0 0
  %1538 = vmatmul.mubr.bf16.gmra.mrb[0].mxu0 %v1474
  %v1539 = vpop.f32.mrb[0].mxu0
  %v1540 = vadd.f32 0.0, %v1539
  %v1541 = vpop.f32.mrb[0].mxu0
  %v1542 = vpop.f32.mrb[0].mxu0
  %v1543 = vadd.f32 0.0, %v1542
  %v1544 = vpop.f32.mrb[0].mxu0
  %1545 = vmatprep.mubr.bf16.mxu0 0
  %1546 = vmatmul.mubr.bf16.gmra.mrb[0].mxu0 %v1477
  %v1547 = vpop.f32.mrb[0].mxu0
  %v1548 = vadd.f32 0.0, %v1547
  %v1549 = vpop.f32.mrb[0].mxu0
  %v1550 = vpop.f32.mrb[0].mxu0
  %v1551 = vadd.f32 0.0, %v1550
  %v1552 = vpop.f32.mrb[0].mxu0
  %1553 = vmatprep.mubr.bf16.mxu0 0
  %1554 = vmatmul.mubr.bf16.gmra.mrb[0].mxu0 %v1480
  %v1555 = vpop.f32.mrb[0].mxu0
  %v1556 = vadd.f32 0.0, %v1555
  %v1557 = vpop.f32.mrb[0].mxu0
  %v1558 = vpop.f32.mrb[0].mxu0
  %v1559 = vadd.f32 0.0, %v1558
  %v1560 = vpop.f32.mrb[0].mxu0
  %1561 = vmatprep.mubr.bf16.mxu0 0
  %1562 = vmatmul.mubr.bf16.gmra.mrb[0].mxu0 %v1483
  %v1563 = vpop.f32.mrb[0].mxu0
  %v1564 = vadd.f32 0.0, %v1563
  %v1565 = vpop.f32.mrb[0].mxu0
  %v1566 = vpop.f32.mrb[0].mxu0
  %v1567 = vadd.f32 0.0, %v1566
  %v1568 = vpop.f32.mrb[0].mxu0
  %1569 = vmatprep.mubr.bf16.mxu0 0
  %1570 = vmatmul.mubr.bf16.gmra.mrb[0].mxu0 %v1486
  %v1571 = vpop.f32.mrb[0].mxu0
  %v1572 = vadd.f32 0.0, %v1571
  %v1573 = vpop.f32.mrb[0].mxu0
  %v1574 = vpop.f32.mrb[0].mxu0
  %v1575 = vadd.f32 0.0, %v1574
  %v1576 = vpop.f32.mrb[0].mxu0
  %1577 = vmatprep.mubr.bf16.mxu0 0
  %1578 = vmatmul.mubr.bf16.gmra.mrb[0].mxu0 %v1489
  %v1579 = vpop.f32.mrb[0].mxu0
  %v1580 = vadd.f32 0.0, %v1579
  %v1581 = vpop.f32.mrb[0].mxu0
  %v1582 = vpop.f32.mrb[0].mxu0
  %v1583 = vadd.f32 0.0, %v1582
  %v1584 = vpop.f32.mrb[0].mxu0
  %1585 = vmatprep.mubr.bf16.mxu0 0
  %1586 = vmatmul.mubr.bf16.gmra.mrb[0].mxu0 %v1492
  %v1587 = vpop.f32.mrb[0].mxu0
  %v1588 = vadd.f32 0.0, %v1587
  %v1589 = vpop.f32.mrb[0].mxu0
  %v1590 = vpop.f32.mrb[0].mxu0
  %v1591 = vadd.f32 0.0, %v1590
  %v1592 = vpop.f32.mrb[0].mxu0
  %1593 = vdwg.mxu0
  %v1594 = vadd.f32 %v1444, %v1532
  %v1595 = vadd.f32 %v1445, %v1535
  %v1596 = vadd.f32 %v1446, %v1540
  %v1597 = vadd.f32 %v1447, %v1543
  %v1598 = vadd.f32 %v1448, %v1548
  %v1599 = vadd.f32 %v1449, %v1551
  %v1600 = vadd.f32 %v1450, %v1556
  %v1601 = vadd.f32 %v1451, %v1559
  %v1602 = vadd.f32 %v1452, %v1564
  %v1603 = vadd.f32 %v1453, %v1567
  %v1604 = vadd.f32 %v1454, %v1572
  %v1605 = vadd.f32 %v1455, %v1575
  %v1606 = vadd.f32 %v1456, %v1580
  %v1607 = vadd.f32 %v1457, %v1583
  %v1608 = vadd.f32 %v1458, %v1588
  %v1609 = vadd.f32 %v1459, %v1591
  %v1642 = vrot.slane %v402, 1
  %v1643 = vrot.slane %v403, 1
  %v1644 = vsel %vm1095, %v1642, %v1643
  %v1645 = vrot.slane %v404, 1
  %v1646 = vrot.slane %v405, 1
  %v1647 = vsel %vm1095, %v1645, %v1646
  %v1648 = vrot.slane %v406, 1
  %v1649 = vrot.slane %v407, 1
  %v1650 = vsel %vm1095, %v1648, %v1649
  %v1651 = vrot.slane %v408, 1
  %v1652 = vrot.slane %v409, 1
  %v1653 = vsel %vm1095, %v1651, %v1652
  %v1654 = vrot.slane %v410, 1
  %v1655 = vrot.slane %v411, 1
  %v1656 = vsel %vm1095, %v1654, %v1655
  %v1657 = vrot.slane %v412, 1
  %v1658 = vrot.slane %v413, 1
  %v1659 = vsel %vm1095, %v1657, %v1658
  %v1660 = vrot.slane %v414, 1
  %v1661 = vrot.slane %v415, 1
  %v1662 = vsel %vm1095, %v1660, %v1661
  %v1663 = vrot.slane %v416, 1
  %v1664 = vrot.slane %v417, 1
  %v1665 = vsel %vm1095, %v1663, %v1664
  %v1666 = vrot.slane %v418, 1
  %v1667 = vrot.slane %v419, 1
  %v1668 = vsel %vm1095, %v1666, %v1667
  %v1669 = vrot.slane %v420, 1
  %v1670 = vrot.slane %v421, 1
  %v1671 = vsel %vm1095, %v1669, %v1670
  %v1672 = vrot.slane %v422, 1
  %v1673 = vrot.slane %v423, 1
  %v1674 = vsel %vm1095, %v1672, %v1673
  %v1675 = vrot.slane %v424, 1
  %v1676 = vrot.slane %v425, 1
  %v1677 = vsel %vm1095, %v1675, %v1676
  %v1678 = vrot.slane %v426, 1
  %v1679 = vrot.slane %v427, 1
  %v1680 = vsel %vm1095, %v1678, %v1679
  %v1681 = vrot.slane %v428, 1
  %v1682 = vrot.slane %v429, 1
  %v1683 = vsel %vm1095, %v1681, %v1682
  %v1684 = vrot.slane %v430, 1
  %v1685 = vrot.slane %v431, 1
  %v1686 = vsel %vm1095, %v1684, %v1685
  %v1687 = vrot.slane %v432, 1
  %v1688 = vrot.slane %v433, 1
  %v1689 = vsel %vm1095, %v1687, %v1688
  %v1706 = vpack.c.bf16 %v1647, %v1644
  %v1707 = vpack.c.bf16 %v1653, %v1650
  %v1708 = vpack.c.bf16 %v1659, %v1656
  %v1709 = vpack.c.bf16 %v1665, %v1662
  %v1710 = vpack.c.bf16 %v1671, %v1668
  %v1711 = vpack.c.bf16 %v1677, %v1674
  %v1712 = vpack.c.bf16 %v1683, %v1680
  %v1713 = vpack.c.bf16 %v1689, %v1686
  %s1714 = scalar_lea.vmem %s6, 10
  %v1715 = vld [vmem:[%s1714] sm:$0x3]
  %v1717 = vsel %vm813, %v1706, 0
  %v1720 = vsel %vm813, %v1707, 0
  %v1723 = vsel %vm813, %v1708, 0
  %v1726 = vsel %vm813, %v1709, 0
  %v1729 = vsel %vm813, %v1710, 0
  %v1732 = vsel %vm813, %v1711, 0
  %v1735 = vsel %vm813, %v1712, 0
  %v1738 = vsel %vm813, %v1713, 0
  %v1741 = vsel %vm838, %v1715, 0
  %1743 = vmatprep.subr.bf16.mxu0 0
  %1744 = vmatpush1.bf16.msra.mxu0 %v1741
  %1745 = vmatprep.subr.bf16.mxu0 0
  %1746 = vmatpush1.bf16.msra.mxu0 0
  %1747 = vmatprep.subr.bf16.mxu0 0
  %1748 = vmatpush1.bf16.msra.mxu0 0
  %1749 = vmatprep.subr.bf16.mxu0 0
  %1750 = vmatpush1.bf16.msra.mxu0 0
  %1751 = vmatprep.subr.bf16.mxu0 0
  %1752 = vmatpush1.bf16.msra.mxu0 0
  %1753 = vmatprep.subr.bf16.mxu0 0
  %1754 = vmatpush1.bf16.msra.mxu0 0
  %1755 = vmatprep.subr.bf16.mxu0 0
  %1756 = vmatpush1.bf16.msra.mxu0 0
  %1757 = vmatprep.subr.bf16.mxu0 0
  %1758 = vmatpush1.bf16.msra.mxu0 0
  %1759 = vmatprep.subr.bf16.mxu0 0
  %1760 = vmatpush1.bf16.msra.mxu0 0
  %1761 = vmatprep.subr.bf16.mxu0 0
  %1762 = vmatpush1.bf16.msra.mxu0 0
  %1763 = vmatprep.subr.bf16.mxu0 0
  %1764 = vmatpush1.bf16.msra.mxu0 0
  %1765 = vmatprep.subr.bf16.mxu0 0
  %1766 = vmatpush1.bf16.msra.mxu0 0
  %1767 = vmatprep.subr.bf16.mxu0 0
  %1768 = vmatpush1.bf16.msra.mxu0 0
  %1769 = vmatprep.subr.bf16.mxu0 0
  %1770 = vmatpush1.bf16.msra.mxu0 0
  %1771 = vmatprep.subr.bf16.mxu0 0
  %1772 = vmatpush1.bf16.msra.mxu0 0
  %1773 = vmatprep.subr.bf16.mxu0 0
  %1774 = vmatpush1.bf16.msra.mxu0 0
  %1775 = vmatprep.mubr.bf16.mxu0 0
  %1776 = vmatmul.mubr.bf16.gmra.mrb[0].mxu0 %v1717
  %v1777 = vpop.f32.mrb[0].mxu0
  %v1778 = vadd.f32 0.0, %v1777
  %v1779 = vpop.f32.mrb[0].mxu0
  %v1780 = vpop.f32.mrb[0].mxu0
  %v1781 = vadd.f32 0.0, %v1780
  %v1782 = vpop.f32.mrb[0].mxu0
  %1783 = vmatprep.mubr.bf16.mxu0 0
  %1784 = vmatmul.mubr.bf16.gmra.mrb[0].mxu0 %v1720
  %v1785 = vpop.f32.mrb[0].mxu0
  %v1786 = vadd.f32 0.0, %v1785
  %v1787 = vpop.f32.mrb[0].mxu0
  %v1788 = vpop.f32.mrb[0].mxu0
  %v1789 = vadd.f32 0.0, %v1788
  %v1790 = vpop.f32.mrb[0].mxu0
  %1791 = vmatprep.mubr.bf16.mxu0 0
  %1792 = vmatmul.mubr.bf16.gmra.mrb[0].mxu0 %v1723
  %v1793 = vpop.f32.mrb[0].mxu0
  %v1794 = vadd.f32 0.0, %v1793
  %v1795 = vpop.f32.mrb[0].mxu0
  %v1796 = vpop.f32.mrb[0].mxu0
  %v1797 = vadd.f32 0.0, %v1796
  %v1798 = vpop.f32.mrb[0].mxu0
  %1799 = vmatprep.mubr.bf16.mxu0 0
  %1800 = vmatmul.mubr.bf16.gmra.mrb[0].mxu0 %v1726
  %v1801 = vpop.f32.mrb[0].mxu0
  %v1802 = vadd.f32 0.0, %v1801
  %v1803 = vpop.f32.mrb[0].mxu0
  %v1804 = vpop.f32.mrb[0].mxu0
  %v1805 = vadd.f32 0.0, %v1804
  %v1806 = vpop.f32.mrb[0].mxu0
  %1807 = vmatprep.mubr.bf16.mxu0 0
  %1808 = vmatmul.mubr.bf16.gmra.mrb[0].mxu0 %v1729
  %v1809 = vpop.f32.mrb[0].mxu0
  %v1810 = vadd.f32 0.0, %v1809
  %v1811 = vpop.f32.mrb[0].mxu0
  %v1812 = vpop.f32.mrb[0].mxu0
  %v1813 = vadd.f32 0.0, %v1812
  %v1814 = vpop.f32.mrb[0].mxu0
  %1815 = vmatprep.mubr.bf16.mxu0 0
  %1816 = vmatmul.mubr.bf16.gmra.mrb[0].mxu0 %v1732
  %v1817 = vpop.f32.mrb[0].mxu0
  %v1818 = vadd.f32 0.0, %v1817
  %v1819 = vpop.f32.mrb[0].mxu0
  %v1820 = vpop.f32.mrb[0].mxu0
  %v1821 = vadd.f32 0.0, %v1820
  %v1822 = vpop.f32.mrb[0].mxu0
  %1823 = vmatprep.mubr.bf16.mxu0 0
  %1824 = vmatmul.mubr.bf16.gmra.mrb[0].mxu0 %v1735
  %v1825 = vpop.f32.mrb[0].mxu0
  %v1826 = vadd.f32 0.0, %v1825
  %v1827 = vpop.f32.mrb[0].mxu0
  %v1828 = vpop.f32.mrb[0].mxu0
  %v1829 = vadd.f32 0.0, %v1828
  %v1830 = vpop.f32.mrb[0].mxu0
  %1831 = vmatprep.mubr.bf16.mxu0 0
  %1832 = vmatmul.mubr.bf16.gmra.mrb[0].mxu0 %v1738
  %v1833 = vpop.f32.mrb[0].mxu0
  %v1834 = vadd.f32 0.0, %v1833
  %v1835 = vpop.f32.mrb[0].mxu0
  %v1836 = vpop.f32.mrb[0].mxu0
  %v1837 = vadd.f32 0.0, %v1836
  %v1838 = vpop.f32.mrb[0].mxu0
  %1839 = vdwg.mxu0
  %v1840 = vadd.f32 %v1594, %v1778
  %v1841 = vadd.f32 %v1595, %v1781
  %v1842 = vadd.f32 %v1596, %v1786
  %v1843 = vadd.f32 %v1597, %v1789
  %v1844 = vadd.f32 %v1598, %v1794
  %v1845 = vadd.f32 %v1599, %v1797
  %v1846 = vadd.f32 %v1600, %v1802
  %v1847 = vadd.f32 %v1601, %v1805
  %v1848 = vadd.f32 %v1602, %v1810
  %v1849 = vadd.f32 %v1603, %v1813
  %v1850 = vadd.f32 %v1604, %v1818
  %v1851 = vadd.f32 %v1605, %v1821
  %v1852 = vadd.f32 %v1606, %v1826
  %v1853 = vadd.f32 %v1607, %v1829
  %v1854 = vadd.f32 %v1608, %v1834
  %v1855 = vadd.f32 %v1609, %v1837
  %v1856 = vpack.c.bf16 %v762, %v760
  %v1857 = vpack.c.bf16 %v766, %v764
  %v1858 = vpack.c.bf16 %v770, %v768
  %v1859 = vpack.c.bf16 %v774, %v772
  %v1860 = vpack.c.bf16 %v780, %v778
  %v1861 = vpack.c.bf16 %v784, %v782
  %v1862 = vpack.c.bf16 %v788, %v786
  %v1863 = vpack.c.bf16 %v792, %v790
  %s1864 = scalar_lea.vmem %s6, 12
  %v1865 = vld [vmem:[%s1864] sm:$0x3]
  %v1867 = vsel %vm813, %v1856, 0
  %v1870 = vsel %vm813, %v1857, 0
  %v1873 = vsel %vm813, %v1858, 0
  %v1876 = vsel %vm813, %v1859, 0
  %v1879 = vsel %vm813, %v1860, 0
  %v1882 = vsel %vm813, %v1861, 0
  %v1885 = vsel %vm813, %v1862, 0
  %v1888 = vsel %vm813, %v1863, 0
  %v1891 = vsel %vm838, %v1865, 0
  %1893 = vmatprep.subr.bf16.mxu0 0
  %1894 = vmatpush1.bf16.msra.mxu0 %v1891
  %1895 = vmatprep.subr.bf16.mxu0 0
  %1896 = vmatpush1.bf16.msra.mxu0 0
  %1897 = vmatprep.subr.bf16.mxu0 0
  %1898 = vmatpush1.bf16.msra.mxu0 0
  %1899 = vmatprep.subr.bf16.mxu0 0
  %1900 = vmatpush1.bf16.msra.mxu0 0
  %1901 = vmatprep.subr.bf16.mxu0 0
  %1902 = vmatpush1.bf16.msra.mxu0 0
  %1903 = vmatprep.subr.bf16.mxu0 0
  %1904 = vmatpush1.bf16.msra.mxu0 0
  %1905 = vmatprep.subr.bf16.mxu0 0
  %1906 = vmatpush1.bf16.msra.mxu0 0
  %1907 = vmatprep.subr.bf16.mxu0 0
  %1908 = vmatpush1.bf16.msra.mxu0 0
  %1909 = vmatprep.subr.bf16.mxu0 0
  %1910 = vmatpush1.bf16.msra.mxu0 0
  %1911 = vmatprep.subr.bf16.mxu0 0
  %1912 = vmatpush1.bf16.msra.mxu0 0
  %1913 = vmatprep.subr.bf16.mxu0 0
  %1914 = vmatpush1.bf16.msra.mxu0 0
  %1915 = vmatprep.subr.bf16.mxu0 0
  %1916 = vmatpush1.bf16.msra.mxu0 0
  %1917 = vmatprep.subr.bf16.mxu0 0
  %1918 = vmatpush1.bf16.msra.mxu0 0
  %1919 = vmatprep.subr.bf16.mxu0 0
  %1920 = vmatpush1.bf16.msra.mxu0 0
  %1921 = vmatprep.subr.bf16.mxu0 0
  %1922 = vmatpush1.bf16.msra.mxu0 0
  %1923 = vmatprep.subr.bf16.mxu0 0
  %1924 = vmatpush1.bf16.msra.mxu0 0
  %1925 = vmatprep.mubr.bf16.mxu0 0
  %1926 = vmatmul.mubr.bf16.gmra.mrb[0].mxu0 %v1867
  %v1927 = vpop.f32.mrb[0].mxu0
  %v1928 = vadd.f32 0.0, %v1927
  %v1929 = vpop.f32.mrb[0].mxu0
  %v1930 = vpop.f32.mrb[0].mxu0
  %v1931 = vadd.f32 0.0, %v1930
  %v1932 = vpop.f32.mrb[0].mxu0
  %1933 = vmatprep.mubr.bf16.mxu0 0
  %1934 = vmatmul.mubr.bf16.gmra.mrb[0].mxu0 %v1870
  %v1935 = vpop.f32.mrb[0].mxu0
  %v1936 = vadd.f32 0.0, %v1935
  %v1937 = vpop.f32.mrb[0].mxu0
  %v1938 = vpop.f32.mrb[0].mxu0
  %v1939 = vadd.f32 0.0, %v1938
  %v1940 = vpop.f32.mrb[0].mxu0
  %1941 = vmatprep.mubr.bf16.mxu0 0
  %1942 = vmatmul.mubr.bf16.gmra.mrb[0].mxu0 %v1873
  %v1943 = vpop.f32.mrb[0].mxu0
  %v1944 = vadd.f32 0.0, %v1943
  %v1945 = vpop.f32.mrb[0].mxu0
  %v1946 = vpop.f32.mrb[0].mxu0
  %v1947 = vadd.f32 0.0, %v1946
  %v1948 = vpop.f32.mrb[0].mxu0
  %1949 = vmatprep.mubr.bf16.mxu0 0
  %1950 = vmatmul.mubr.bf16.gmra.mrb[0].mxu0 %v1876
  %v1951 = vpop.f32.mrb[0].mxu0
  %v1952 = vadd.f32 0.0, %v1951
  %v1953 = vpop.f32.mrb[0].mxu0
  %v1954 = vpop.f32.mrb[0].mxu0
  %v1955 = vadd.f32 0.0, %v1954
  %v1956 = vpop.f32.mrb[0].mxu0
  %1957 = vmatprep.mubr.bf16.mxu0 0
  %1958 = vmatmul.mubr.bf16.gmra.mrb[0].mxu0 %v1879
  %v1959 = vpop.f32.mrb[0].mxu0
  %v1960 = vadd.f32 0.0, %v1959
  %v1961 = vpop.f32.mrb[0].mxu0
  %v1962 = vpop.f32.mrb[0].mxu0
  %v1963 = vadd.f32 0.0, %v1962
  %v1964 = vpop.f32.mrb[0].mxu0
  %1965 = vmatprep.mubr.bf16.mxu0 0
  %1966 = vmatmul.mubr.bf16.gmra.mrb[0].mxu0 %v1882
  %v1967 = vpop.f32.mrb[0].mxu0
  %v1968 = vadd.f32 0.0, %v1967
  %v1969 = vpop.f32.mrb[0].mxu0
  %v1970 = vpop.f32.mrb[0].mxu0
  %v1971 = vadd.f32 0.0, %v1970
  %v1972 = vpop.f32.mrb[0].mxu0
  %1973 = vmatprep.mubr.bf16.mxu0 0
  %1974 = vmatmul.mubr.bf16.gmra.mrb[0].mxu0 %v1885
  %v1975 = vpop.f32.mrb[0].mxu0
  %v1976 = vadd.f32 0.0, %v1975
  %v1977 = vpop.f32.mrb[0].mxu0
  %v1978 = vpop.f32.mrb[0].mxu0
  %v1979 = vadd.f32 0.0, %v1978
  %v1980 = vpop.f32.mrb[0].mxu0
  %1981 = vmatprep.mubr.bf16.mxu0 0
  %1982 = vmatmul.mubr.bf16.gmra.mrb[0].mxu0 %v1888
  %v1983 = vpop.f32.mrb[0].mxu0
  %v1984 = vadd.f32 0.0, %v1983
  %v1985 = vpop.f32.mrb[0].mxu0
  %v1986 = vpop.f32.mrb[0].mxu0
  %v1987 = vadd.f32 0.0, %v1986
  %v1988 = vpop.f32.mrb[0].mxu0
  %1989 = vdwg.mxu0
  %v1990 = vadd.f32 %v1840, %v1928
  %v1991 = vadd.f32 %v1841, %v1931
  %v1992 = vadd.f32 %v1842, %v1936
  %v1993 = vadd.f32 %v1843, %v1939
  %v1994 = vadd.f32 %v1844, %v1944
  %v1995 = vadd.f32 %v1845, %v1947
  %v1996 = vadd.f32 %v1846, %v1952
  %v1997 = vadd.f32 %v1847, %v1955
  %v1998 = vadd.f32 %v1848, %v1960
  %v1999 = vadd.f32 %v1849, %v1963
  %v2000 = vadd.f32 %v1850, %v1968
  %v2001 = vadd.f32 %v1851, %v1971
  %v2002 = vadd.f32 %v1852, %v1976
  %v2003 = vadd.f32 %v1853, %v1979
  %v2004 = vadd.f32 %v1854, %v1984
  %v2005 = vadd.f32 %v1855, %v1987
  %v2006 = vpack.c.bf16 %v526, %v525
  %v2007 = vpack.c.bf16 %v528, %v527
  %v2008 = vpack.c.bf16 %v530, %v529
  %v2009 = vpack.c.bf16 %v532, %v531
  %v2010 = vpack.c.bf16 %v535, %v534
  %v2011 = vpack.c.bf16 %v537, %v536
  %v2012 = vpack.c.bf16 %v539, %v538
  %v2013 = vpack.c.bf16 %v541, %v540
  %s2014 = scalar_lea.vmem %s6, 14
  %v2015 = vld [vmem:[%s2014] sm:$0x3]
  %v2017 = vsel %vm813, %v2006, 0
  %v2020 = vsel %vm813, %v2007, 0
  %v2023 = vsel %vm813, %v2008, 0
  %v2026 = vsel %vm813, %v2009, 0
  %v2029 = vsel %vm813, %v2010, 0
  %v2032 = vsel %vm813, %v2011, 0
  %v2035 = vsel %vm813, %v2012, 0
  %v2038 = vsel %vm813, %v2013, 0
  %v2041 = vsel %vm838, %v2015, 0
  %2043 = vmatprep.subr.bf16.mxu0 0
  %2044 = vmatpush1.bf16.msra.mxu0 %v2041
  %2045 = vmatprep.subr.bf16.mxu0 0
  %2046 = vmatpush1.bf16.msra.mxu0 0
  %2047 = vmatprep.subr.bf16.mxu0 0
  %2048 = vmatpush1.bf16.msra.mxu0 0
  %2049 = vmatprep.subr.bf16.mxu0 0
  %2050 = vmatpush1.bf16.msra.mxu0 0
  %2051 = vmatprep.subr.bf16.mxu0 0
  %2052 = vmatpush1.bf16.msra.mxu0 0
  %2053 = vmatprep.subr.bf16.mxu0 0
  %2054 = vmatpush1.bf16.msra.mxu0 0
  %2055 = vmatprep.subr.bf16.mxu0 0
  %2056 = vmatpush1.bf16.msra.mxu0 0
  %2057 = vmatprep.subr.bf16.mxu0 0
  %2058 = vmatpush1.bf16.msra.mxu0 0
  %2059 = vmatprep.subr.bf16.mxu0 0
  %2060 = vmatpush1.bf16.msra.mxu0 0
  %2061 = vmatprep.subr.bf16.mxu0 0
  %2062 = vmatpush1.bf16.msra.mxu0 0
  %2063 = vmatprep.subr.bf16.mxu0 0
  %2064 = vmatpush1.bf16.msra.mxu0 0
  %2065 = vmatprep.subr.bf16.mxu0 0
  %2066 = vmatpush1.bf16.msra.mxu0 0
  %2067 = vmatprep.subr.bf16.mxu0 0
  %2068 = vmatpush1.bf16.msra.mxu0 0
  %2069 = vmatprep.subr.bf16.mxu0 0
  %2070 = vmatpush1.bf16.msra.mxu0 0
  %2071 = vmatprep.subr.bf16.mxu0 0
  %2072 = vmatpush1.bf16.msra.mxu0 0
  %2073 = vmatprep.subr.bf16.mxu0 0
  %2074 = vmatpush1.bf16.msra.mxu0 0
  %2075 = vmatprep.mubr.bf16.mxu0 0
  %2076 = vmatmul.mubr.bf16.gmra.mrb[0].mxu0 %v2017
  %v2077 = vpop.f32.mrb[0].mxu0
  %v2078 = vadd.f32 0.0, %v2077
  %v2079 = vpop.f32.mrb[0].mxu0
  %v2080 = vpop.f32.mrb[0].mxu0
  %v2081 = vadd.f32 0.0, %v2080
  %v2082 = vpop.f32.mrb[0].mxu0
  %2083 = vmatprep.mubr.bf16.mxu0 0
  %2084 = vmatmul.mubr.bf16.gmra.mrb[0].mxu0 %v2020
  %v2085 = vpop.f32.mrb[0].mxu0
  %v2086 = vadd.f32 0.0, %v2085
  %v2087 = vpop.f32.mrb[0].mxu0
  %v2088 = vpop.f32.mrb[0].mxu0
  %v2089 = vadd.f32 0.0, %v2088
  %v2090 = vpop.f32.mrb[0].mxu0
  %2091 = vmatprep.mubr.bf16.mxu0 0
  %2092 = vmatmul.mubr.bf16.gmra.mrb[0].mxu0 %v2023
  %v2093 = vpop.f32.mrb[0].mxu0
  %v2094 = vadd.f32 0.0, %v2093
  %v2095 = vpop.f32.mrb[0].mxu0
  %v2096 = vpop.f32.mrb[0].mxu0
  %v2097 = vadd.f32 0.0, %v2096
  %v2098 = vpop.f32.mrb[0].mxu0
  %2099 = vmatprep.mubr.bf16.mxu0 0
  %2100 = vmatmul.mubr.bf16.gmra.mrb[0].mxu0 %v2026
  %v2101 = vpop.f32.mrb[0].mxu0
  %v2102 = vadd.f32 0.0, %v2101
  %v2103 = vpop.f32.mrb[0].mxu0
  %v2104 = vpop.f32.mrb[0].mxu0
  %v2105 = vadd.f32 0.0, %v2104
  %v2106 = vpop.f32.mrb[0].mxu0
  %2107 = vmatprep.mubr.bf16.mxu0 0
  %2108 = vmatmul.mubr.bf16.gmra.mrb[0].mxu0 %v2029
  %v2109 = vpop.f32.mrb[0].mxu0
  %v2110 = vadd.f32 0.0, %v2109
  %v2111 = vpop.f32.mrb[0].mxu0
  %v2112 = vpop.f32.mrb[0].mxu0
  %v2113 = vadd.f32 0.0, %v2112
  %v2114 = vpop.f32.mrb[0].mxu0
  %2115 = vmatprep.mubr.bf16.mxu0 0
  %2116 = vmatmul.mubr.bf16.gmra.mrb[0].mxu0 %v2032
  %v2117 = vpop.f32.mrb[0].mxu0
  %v2118 = vadd.f32 0.0, %v2117
  %v2119 = vpop.f32.mrb[0].mxu0
  %v2120 = vpop.f32.mrb[0].mxu0
  %v2121 = vadd.f32 0.0, %v2120
  %v2122 = vpop.f32.mrb[0].mxu0
  %2123 = vmatprep.mubr.bf16.mxu0 0
  %2124 = vmatmul.mubr.bf16.gmra.mrb[0].mxu0 %v2035
  %v2125 = vpop.f32.mrb[0].mxu0
  %v2126 = vadd.f32 0.0, %v2125
  %v2127 = vpop.f32.mrb[0].mxu0
  %v2128 = vpop.f32.mrb[0].mxu0
  %v2129 = vadd.f32 0.0, %v2128
  %v2130 = vpop.f32.mrb[0].mxu0
  %2131 = vmatprep.mubr.bf16.mxu0 0
  %2132 = vmatmul.mubr.bf16.gmra.mrb[0].mxu0 %v2038
  %v2133 = vpop.f32.mrb[0].mxu0
  %v2134 = vadd.f32 0.0, %v2133
  %v2135 = vpop.f32.mrb[0].mxu0
  %v2136 = vpop.f32.mrb[0].mxu0
  %v2137 = vadd.f32 0.0, %v2136
  %v2138 = vpop.f32.mrb[0].mxu0
  %2139 = vdwg.mxu0
  %v2140 = vadd.f32 %v1990, %v2078
  %v2141 = vadd.f32 %v1991, %v2081
  %v2142 = vadd.f32 %v1992, %v2086
  %v2143 = vadd.f32 %v1993, %v2089
  %v2144 = vadd.f32 %v1994, %v2094
  %v2145 = vadd.f32 %v1995, %v2097
  %v2146 = vadd.f32 %v1996, %v2102
  %v2147 = vadd.f32 %v1997, %v2105
  %v2148 = vadd.f32 %v1998, %v2110
  %v2149 = vadd.f32 %v1999, %v2113
  %v2150 = vadd.f32 %v2000, %v2118
  %v2151 = vadd.f32 %v2001, %v2121
  %v2152 = vadd.f32 %v2002, %v2126
  %v2153 = vadd.f32 %v2003, %v2129
  %v2154 = vadd.f32 %v2004, %v2134
  %v2155 = vadd.f32 %v2005, %v2137
  %v2160 = vrot.slane %v774, 1
  %v2161 = vrot.slane %v775, 1
  %v2162 = vsel %vm1095, %v2160, %v2161
  %v2163 = vrot.slane %v792, 1
  %v2164 = vrot.slane %v793, 1
  %v2165 = vsel %vm1095, %v2163, %v2164
  %v2168 = vpack.c.bf16 %v1104, %v1101
  %v2169 = vpack.c.bf16 %v1110, %v1107
  %v2170 = vpack.c.bf16 %v1116, %v1113
  %v2171 = vpack.c.bf16 %v2162, %v1119
  %v2172 = vpack.c.bf16 %v1128, %v1125
  %v2173 = vpack.c.bf16 %v1134, %v1131
  %v2174 = vpack.c.bf16 %v1140, %v1137
  %v2175 = vpack.c.bf16 %v2165, %v1143
  %s2176 = scalar_lea.vmem %s6, 16
  %v2177 = vld [vmem:[%s2176] sm:$0x3]
  %v2179 = vsel %vm813, %v2168, 0
  %v2182 = vsel %vm813, %v2169, 0
  %v2185 = vsel %vm813, %v2170, 0
  %v2188 = vsel %vm813, %v2171, 0
  %v2191 = vsel %vm813, %v2172, 0
  %v2194 = vsel %vm813, %v2173, 0
  %v2197 = vsel %vm813, %v2174, 0
  %v2200 = vsel %vm813, %v2175, 0
  %v2203 = vsel %vm838, %v2177, 0
  %2205 = vmatprep.subr.bf16.mxu0 0
  %2206 = vmatpush1.bf16.msra.mxu0 %v2203
  %2207 = vmatprep.subr.bf16.mxu0 0
  %2208 = vmatpush1.bf16.msra.mxu0 0
  %2209 = vmatprep.subr.bf16.mxu0 0
  %2210 = vmatpush1.bf16.msra.mxu0 0
  %2211 = vmatprep.subr.bf16.mxu0 0
  %2212 = vmatpush1.bf16.msra.mxu0 0
  %2213 = vmatprep.subr.bf16.mxu0 0
  %2214 = vmatpush1.bf16.msra.mxu0 0
  %2215 = vmatprep.subr.bf16.mxu0 0
  %2216 = vmatpush1.bf16.msra.mxu0 0
  %2217 = vmatprep.subr.bf16.mxu0 0
  %2218 = vmatpush1.bf16.msra.mxu0 0
  %2219 = vmatprep.subr.bf16.mxu0 0
  %2220 = vmatpush1.bf16.msra.mxu0 0
  %2221 = vmatprep.subr.bf16.mxu0 0
  %2222 = vmatpush1.bf16.msra.mxu0 0
  %2223 = vmatprep.subr.bf16.mxu0 0
  %2224 = vmatpush1.bf16.msra.mxu0 0
  %2225 = vmatprep.subr.bf16.mxu0 0
  %2226 = vmatpush1.bf16.msra.mxu0 0
  %2227 = vmatprep.subr.bf16.mxu0 0
  %2228 = vmatpush1.bf16.msra.mxu0 0
  %2229 = vmatprep.subr.bf16.mxu0 0
  %2230 = vmatpush1.bf16.msra.mxu0 0
  %2231 = vmatprep.subr.bf16.mxu0 0
  %2232 = vmatpush1.bf16.msra.mxu0 0
  %2233 = vmatprep.subr.bf16.mxu0 0
  %2234 = vmatpush1.bf16.msra.mxu0 0
  %2235 = vmatprep.subr.bf16.mxu0 0
  %2236 = vmatpush1.bf16.msra.mxu0 0
  %2237 = vmatprep.mubr.bf16.mxu0 0
  %2238 = vmatmul.mubr.bf16.gmra.mrb[0].mxu0 %v2179
  %v2239 = vpop.f32.mrb[0].mxu0
  %v2240 = vadd.f32 0.0, %v2239
  %v2241 = vpop.f32.mrb[0].mxu0
  %v2242 = vpop.f32.mrb[0].mxu0
  %v2243 = vadd.f32 0.0, %v2242
  %v2244 = vpop.f32.mrb[0].mxu0
  %2245 = vmatprep.mubr.bf16.mxu0 0
  %2246 = vmatmul.mubr.bf16.gmra.mrb[0].mxu0 %v2182
  %v2247 = vpop.f32.mrb[0].mxu0
  %v2248 = vadd.f32 0.0, %v2247
  %v2249 = vpop.f32.mrb[0].mxu0
  %v2250 = vpop.f32.mrb[0].mxu0
  %v2251 = vadd.f32 0.0, %v2250
  %v2252 = vpop.f32.mrb[0].mxu0
  %2253 = vmatprep.mubr.bf16.mxu0 0
  %2254 = vmatmul.mubr.bf16.gmra.mrb[0].mxu0 %v2185
  %v2255 = vpop.f32.mrb[0].mxu0
  %v2256 = vadd.f32 0.0, %v2255
  %v2257 = vpop.f32.mrb[0].mxu0
  %v2258 = vpop.f32.mrb[0].mxu0
  %v2259 = vadd.f32 0.0, %v2258
  %v2260 = vpop.f32.mrb[0].mxu0
  %2261 = vmatprep.mubr.bf16.mxu0 0
  %2262 = vmatmul.mubr.bf16.gmra.mrb[0].mxu0 %v2188
  %v2263 = vpop.f32.mrb[0].mxu0
  %v2264 = vadd.f32 0.0, %v2263
  %v2265 = vpop.f32.mrb[0].mxu0
  %v2266 = vpop.f32.mrb[0].mxu0
  %v2267 = vadd.f32 0.0, %v2266
  %v2268 = vpop.f32.mrb[0].mxu0
  %2269 = vmatprep.mubr.bf16.mxu0 0
  %2270 = vmatmul.mubr.bf16.gmra.mrb[0].mxu0 %v2191
  %v2271 = vpop.f32.mrb[0].mxu0
  %v2272 = vadd.f32 0.0, %v2271
  %v2273 = vpop.f32.mrb[0].mxu0
  %v2274 = vpop.f32.mrb[0].mxu0
  %v2275 = vadd.f32 0.0, %v2274
  %v2276 = vpop.f32.mrb[0].mxu0
  %2277 = vmatprep.mubr.bf16.mxu0 0
  %2278 = vmatmul.mubr.bf16.gmra.mrb[0].mxu0 %v2194
  %v2279 = vpop.f32.mrb[0].mxu0
  %v2280 = vadd.f32 0.0, %v2279
  %v2281 = vpop.f32.mrb[0].mxu0
  %v2282 = vpop.f32.mrb[0].mxu0
  %v2283 = vadd.f32 0.0, %v2282
  %v2284 = vpop.f32.mrb[0].mxu0
  %2285 = vmatprep.mubr.bf16.mxu0 0
  %2286 = vmatmul.mubr.bf16.gmra.mrb[0].mxu0 %v2197
  %v2287 = vpop.f32.mrb[0].mxu0
  %v2288 = vadd.f32 0.0, %v2287
  %v2289 = vpop.f32.mrb[0].mxu0
  %v2290 = vpop.f32.mrb[0].mxu0
  %v2291 = vadd.f32 0.0, %v2290
  %v2292 = vpop.f32.mrb[0].mxu0
  %2293 = vmatprep.mubr.bf16.mxu0 0
  %2294 = vmatmul.mubr.bf16.gmra.mrb[0].mxu0 %v2200
  %v2295 = vpop.f32.mrb[0].mxu0
  %v2296 = vadd.f32 0.0, %v2295
  %v2297 = vpop.f32.mrb[0].mxu0
  %v2298 = vpop.f32.mrb[0].mxu0
  %v2299 = vadd.f32 0.0, %v2298
  %v2300 = vpop.f32.mrb[0].mxu0
  %2301 = vdwg.mxu0
  %v2302 = vadd.f32 %v2140, %v2240
  %v2303 = vadd.f32 %v2141, %v2243
  %v2304 = vadd.f32 %v2142, %v2248
  %v2305 = vadd.f32 %v2143, %v2251
  %v2306 = vadd.f32 %v2144, %v2256
  %v2307 = vadd.f32 %v2145, %v2259
  %v2308 = vadd.f32 %v2146, %v2264
  %v2309 = vadd.f32 %v2147, %v2267
  %v2310 = vadd.f32 %v2148, %v2272
  %v2311 = vadd.f32 %v2149, %v2275
  %v2312 = vadd.f32 %v2150, %v2280
  %v2313 = vadd.f32 %v2151, %v2283
  %v2314 = vadd.f32 %v2152, %v2288
  %v2315 = vadd.f32 %v2153, %v2291
  %v2316 = vadd.f32 %v2154, %v2296
  %v2317 = vadd.f32 %v2155, %v2299
  %v2319 = vlaneseq
  %v2320 = vshrl.u32 %v2319, 7
  %v2321 = vsub.s32 0, %v2320
  %v2322 = vrot.slane %v143, %v2321
  %v2324 = vmul.f32 %v2302, %v2322
  %v2325 = vmul.f32 %v2303, %v2322
  %v2326 = vmul.f32 %v2304, %v2322
  %v2327 = vmul.f32 %v2305, %v2322
  %v2328 = vmul.f32 %v2306, %v2322
  %v2329 = vmul.f32 %v2307, %v2322
  %v2330 = vmul.f32 %v2308, %v2322
  %v2331 = vmul.f32 %v2309, %v2322
  %v2332 = vmul.f32 %v2310, %v2322
  %v2333 = vmul.f32 %v2311, %v2322
  %v2334 = vmul.f32 %v2312, %v2322
  %v2335 = vmul.f32 %v2313, %v2322
  %v2336 = vmul.f32 %v2314, %v2322
  %v2337 = vmul.f32 %v2315, %v2322
  %v2338 = vmul.f32 %v2316, %v2322
  %v2339 = vmul.f32 %v2317, %v2322
  %v2341 = vlaneseq
  %v2342 = vshrl.u32 %v2341, 7
  %v2343 = vsub.s32 0, %v2342
  %v2344 = vrot.slane %v144, %v2343
  %v2346 = vadd.f32 %v2324, %v2344
  %v2347 = vadd.f32 %v2325, %v2344
  %v2348 = vadd.f32 %v2326, %v2344
  %v2349 = vadd.f32 %v2327, %v2344
  %v2350 = vadd.f32 %v2328, %v2344
  %v2351 = vadd.f32 %v2329, %v2344
  %v2352 = vadd.f32 %v2330, %v2344
  %v2353 = vadd.f32 %v2331, %v2344
  %v2354 = vadd.f32 %v2332, %v2344
  %v2355 = vadd.f32 %v2333, %v2344
  %v2356 = vadd.f32 %v2334, %v2344
  %v2357 = vadd.f32 %v2335, %v2344
  %v2358 = vadd.f32 %v2336, %v2344
  %v2359 = vadd.f32 %v2337, %v2344
  %v2360 = vadd.f32 %v2338, %v2344
  %v2361 = vadd.f32 %v2339, %v2344
  %vm2362 = vcmp.gt.f32.partialorder %v2346, 0.0
  %vm2363 = vcmp.gt.f32.partialorder %v2347, 0.0
  %vm2364 = vcmp.gt.f32.partialorder %v2348, 0.0
  %vm2365 = vcmp.gt.f32.partialorder %v2349, 0.0
  %vm2366 = vcmp.gt.f32.partialorder %v2350, 0.0
  %vm2367 = vcmp.gt.f32.partialorder %v2351, 0.0
  %vm2368 = vcmp.gt.f32.partialorder %v2352, 0.0
  %vm2369 = vcmp.gt.f32.partialorder %v2353, 0.0
  %vm2370 = vcmp.gt.f32.partialorder %v2354, 0.0
  %vm2371 = vcmp.gt.f32.partialorder %v2355, 0.0
  %vm2372 = vcmp.gt.f32.partialorder %v2356, 0.0
  %vm2373 = vcmp.gt.f32.partialorder %v2357, 0.0
  %vm2374 = vcmp.gt.f32.partialorder %v2358, 0.0
  %vm2375 = vcmp.gt.f32.partialorder %v2359, 0.0
  %vm2376 = vcmp.gt.f32.partialorder %v2360, 0.0
  %vm2377 = vcmp.gt.f32.partialorder %v2361, 0.0
  %v2378 = vmul.f32 %v2346, 0.1
  %v2379 = vmul.f32 %v2347, 0.1
  %v2380 = vmul.f32 %v2348, 0.1
  %v2381 = vmul.f32 %v2349, 0.1
  %v2382 = vmul.f32 %v2350, 0.1
  %v2383 = vmul.f32 %v2351, 0.1
  %v2384 = vmul.f32 %v2352, 0.1
  %v2385 = vmul.f32 %v2353, 0.1
  %v2386 = vmul.f32 %v2354, 0.1
  %v2387 = vmul.f32 %v2355, 0.1
  %v2388 = vmul.f32 %v2356, 0.1
  %v2389 = vmul.f32 %v2357, 0.1
  %v2390 = vmul.f32 %v2358, 0.1
  %v2391 = vmul.f32 %v2359, 0.1
  %v2392 = vmul.f32 %v2360, 0.1
  %v2393 = vmul.f32 %v2361, 0.1
  %v2394 = vsel %vm2362, %v2346, %v2378
  %v2395 = vsel %vm2363, %v2347, %v2379
  %v2396 = vsel %vm2364, %v2348, %v2380
  %v2397 = vsel %vm2365, %v2349, %v2381
  %v2398 = vsel %vm2366, %v2350, %v2382
  %v2399 = vsel %vm2367, %v2351, %v2383
  %v2400 = vsel %vm2368, %v2352, %v2384
  %v2401 = vsel %vm2369, %v2353, %v2385
  %v2402 = vsel %vm2370, %v2354, %v2386
  %v2403 = vsel %vm2371, %v2355, %v2387
  %v2404 = vsel %vm2372, %v2356, %v2388
  %v2405 = vsel %vm2373, %v2357, %v2389
  %v2406 = vsel %vm2374, %v2358, %v2390
  %v2407 = vsel %vm2375, %v2359, %v2391
  %v2408 = vsel %vm2376, %v2360, %v2392
  %v2409 = vsel %vm2377, %v2361, %v2393
  %vm2410 = vcmask 64512
  %2411 = vst.msk [vmem:[#allocation2] sm:$0xff] %vm2410, 0.0
  %vm2412 = vcmask 58368
  %2413 = vst.msk [vmem:[#allocation2 + $0x8] sm:$0x3] %vm2412, 0.0
  %2414 = vst.msk [vmem:[#allocation2 + $0x10] sm:$0xff] %vm2410, 0.0
  %2415 = vst.msk [vmem:[#allocation2 + $0x18] sm:$0x3] %vm2412, 0.0
  %2416 = vst.msk [vmem:[#allocation2 + $0x20] sm:$0xff] %vm2410, 0.0
  %2417 = vst.msk [vmem:[#allocation2 + $0x28] sm:$0x3] %vm2412, 0.0
  %2418 = vst.msk [vmem:[#allocation2 + $0x30] sm:$0xff] %vm2410, 0.0
  %2419 = vst.msk [vmem:[#allocation2 + $0x38] sm:$0x3] %vm2412, 0.0
  %2420 = vst.msk [vmem:[#allocation2 + $0x40] sm:$0xff] %vm2410, 0.0
  %2421 = vst.msk [vmem:[#allocation2 + $0x48] sm:$0x3] %vm2412, 0.0
  %2422 = vst.msk [vmem:[#allocation2 + $0x50] sm:$0xff] %vm2410, 0.0
  %2423 = vst.msk [vmem:[#allocation2 + $0x58] sm:$0x3] %vm2412, 0.0
  %2424 = vst.msk [vmem:[#allocation2 + $0x60] sm:$0xff] %vm2410, 0.0
  %2425 = vst.msk [vmem:[#allocation2 + $0x68] sm:$0x3] %vm2412, 0.0
  %2426 = vst.msk [vmem:[#allocation2 + $0x70] sm:$0xff] %vm2410, 0.0
  %2427 = vst.msk [vmem:[#allocation2 + $0x78] sm:$0x3] %vm2412, 0.0
  %2428 = vst.msk [vmem:[#allocation2 + $0x80] sm:$0xff] %vm2410, 0.0
  %2429 = vst.msk [vmem:[#allocation2 + $0x88] sm:$0x3] %vm2412, 0.0
  %2430 = vst.msk [vmem:[#allocation2 + $0x90] sm:$0xff] %vm2410, 0.0
  %2431 = vst.msk [vmem:[#allocation2 + $0x98] sm:$0x3] %vm2412, 0.0
  %2432 = vst.msk [vmem:[#allocation2 + $0xa0] sm:$0xff] %vm2410, 0.0
  %2433 = vst.msk [vmem:[#allocation2 + $0xa8] sm:$0x3] %vm2412, 0.0
  %2434 = vst.msk [vmem:[#allocation2 + $0xb0] sm:$0xff] %vm2410, 0.0
  %2435 = vst.msk [vmem:[#allocation2 + $0xb8] sm:$0x3] %vm2412, 0.0
  %2436 = vst.msk [vmem:[#allocation2 + $0xc0] sm:$0xff] %vm2410, 0.0
  %2437 = vst.msk [vmem:[#allocation2 + $0xc8] sm:$0x3] %vm2412, 0.0
  %2438 = vst.msk [vmem:[#allocation2 + $0xd0] sm:$0xff] %vm2410, 0.0
  %2439 = vst.msk [vmem:[#allocation2 + $0xd8] sm:$0x3] %vm2412, 0.0
  %2440 = vst.msk [vmem:[#allocation2 + $0xe0] sm:$0xff] %vm2410, 0.0
  %2441 = vst.msk [vmem:[#allocation2 + $0xe8] sm:$0x3] %vm2412, 0.0
  %2442 = vst.msk [vmem:[#allocation2 + $0xf0] sm:$0xff] %vm2410, 0.0
  %2443 = vst.msk [vmem:[#allocation2 + $0xf8] sm:$0x3] %vm2412, 0.0
  %2444 = vst.msk [vmem:[#allocation2 + $0x100] sm:$0xff] %vm2410, 0.0
  %2445 = vst.msk [vmem:[#allocation2 + $0x108] sm:$0x3] %vm2412, 0.0
  %2446 = vst.msk [vmem:[#allocation2 + $0x110] sm:$0xff] %vm2410, 0.0
  %2447 = vst.msk [vmem:[#allocation2 + $0x118] sm:$0x3] %vm2412, 0.0
  %2448 = vst.msk [vmem:[#allocation2 + $0x120] sm:$0xff] %vm2410, 0.0
  %2449 = vst.msk [vmem:[#allocation2 + $0x128] sm:$0x3] %vm2412, 0.0
  %2450 = vst.msk [vmem:[#allocation2 + $0x130] sm:$0xff] %vm2410, 0.0
  %2451 = vst.msk [vmem:[#allocation2 + $0x138] sm:$0x3] %vm2412, 0.0
  %s2452 = scalar_lea.vmem [#allocation2], 16
  %2453 = vst.msk [vmem:[%s2452 + $0x1] sm:$0xff] %vm2410, %v2394
  %2454 = vst.msk [vmem:[%s2452 + $0x11] sm:$0xff] %vm2410, %v2395
  %2455 = vst.msk [vmem:[%s2452 + $0x21] sm:$0xff] %vm2410, %v2396
  %2456 = vst.msk [vmem:[%s2452 + $0x31] sm:$0xff] %vm2410, %v2397
  %2457 = vst.msk [vmem:[%s2452 + $0x41] sm:$0xff] %vm2410, %v2398
  %2458 = vst.msk [vmem:[%s2452 + $0x51] sm:$0xff] %vm2410, %v2399
  %2459 = vst.msk [vmem:[%s2452 + $0x61] sm:$0xff] %vm2410, %v2400
  %2460 = vst.msk [vmem:[%s2452 + $0x71] sm:$0xff] %vm2410, %v2401
  %2461 = vst.msk [vmem:[%s2452 + $0xa1] sm:$0xff] %vm2410, %v2402
  %2462 = vst.msk [vmem:[%s2452 + $0xb1] sm:$0xff] %vm2410, %v2403
  %2463 = vst.msk [vmem:[%s2452 + $0xc1] sm:$0xff] %vm2410, %v2404
  %2464 = vst.msk [vmem:[%s2452 + $0xd1] sm:$0xff] %vm2410, %v2405
  %2465 = vst.msk [vmem:[%s2452 + $0xe1] sm:$0xff] %vm2410, %v2406
  %2466 = vst.msk [vmem:[%s2452 + $0xf1] sm:$0xff] %vm2410, %v2407
  %2467 = vst.msk [vmem:[%s2452 + $0x101] sm:$0xff] %vm2410, %v2408
  %2468 = vst.msk [vmem:[%s2452 + $0x111] sm:$0xff] %vm2410, %v2409
  %v2469 = vld [vmem:[#allocation2] sm:$0xff]
  %v2470 = vld [vmem:[#allocation2 + $0x10] sm:$0xff]
  %v2471 = vld [vmem:[#allocation2 + $0x20] sm:$0xff]
  %v2472 = vld [vmem:[#allocation2 + $0x30] sm:$0xff]
  %v2473 = vld [vmem:[#allocation2 + $0x40] sm:$0xff]
  %v2474 = vld [vmem:[#allocation2 + $0x50] sm:$0xff]
  %v2475 = vld [vmem:[#allocation2 + $0x60] sm:$0xff]
  %v2476 = vld [vmem:[#allocation2 + $0x70] sm:$0xff]
  %v2477 = vld [vmem:[#allocation2 + $0xa0] sm:$0xff]
  %v2478 = vld [vmem:[#allocation2 + $0xb0] sm:$0xff]
  %v2479 = vld [vmem:[#allocation2 + $0xc0] sm:$0xff]
  %v2480 = vld [vmem:[#allocation2 + $0xd0] sm:$0xff]
  %v2481 = vld [vmem:[#allocation2 + $0xe0] sm:$0xff]
  %v2482 = vld [vmem:[#allocation2 + $0xf0] sm:$0xff]
  %v2483 = vld [vmem:[#allocation2 + $0x100] sm:$0xff]
  %v2484 = vld [vmem:[#allocation2 + $0x110] sm:$0xff]
  %v2485 = vpack.c.bf16 %v2470, %v2469
  %v2486 = vpack.c.bf16 %v2472, %v2471
  %v2487 = vpack.c.bf16 %v2474, %v2473
  %v2488 = vpack.c.bf16 %v2476, %v2475
  %v2489 = vpack.c.bf16 %v2478, %v2477
  %v2490 = vpack.c.bf16 %v2480, %v2479
  %v2491 = vpack.c.bf16 %v2482, %v2481
  %v2492 = vpack.c.bf16 %v2484, %v2483
  %v2493 = vld [vmem:[%s9] sm:$0xf]
  %v2494 = vld [vmem:[#allocation2 + $0x1] sm:$0xff]
  %v2495 = vld [vmem:[#allocation2 + $0x11] sm:$0xff]
  %v2496 = vld [vmem:[#allocation2 + $0x21] sm:$0xff]
  %v2497 = vld [vmem:[#allocation2 + $0x31] sm:$0xff]
  %v2498 = vld [vmem:[#allocation2 + $0x41] sm:$0xff]
  %v2499 = vld [vmem:[#allocation2 + $0x51] sm:$0xff]
  %v2500 = vld [vmem:[#allocation2 + $0x61] sm:$0xff]
  %v2501 = vld [vmem:[#allocation2 + $0x71] sm:$0xff]
  %v2502 = vld [vmem:[#allocation2 + $0xa1] sm:$0xff]
  %v2503 = vld [vmem:[#allocation2 + $0xb1] sm:$0xff]
  %v2504 = vld [vmem:[#allocation2 + $0xc1] sm:$0xff]
  %v2505 = vld [vmem:[#allocation2 + $0xd1] sm:$0xff]
  %v2506 = vld [vmem:[#allocation2 + $0xe1] sm:$0xff]
  %v2507 = vld [vmem:[#allocation2 + $0xf1] sm:$0xff]
  %v2508 = vld [vmem:[#allocation2 + $0x101] sm:$0xff]
  %v2509 = vld [vmem:[#allocation2 + $0x111] sm:$0xff]
  %v2510 = vpack.c.bf16 %v2495, %v2494
  %v2511 = vpack.c.bf16 %v2497, %v2496
  %v2512 = vpack.c.bf16 %v2499, %v2498
  %v2513 = vpack.c.bf16 %v2501, %v2500
  %v2514 = vpack.c.bf16 %v2503, %v2502
  %v2515 = vpack.c.bf16 %v2505, %v2504
  %v2516 = vpack.c.bf16 %v2507, %v2506
  %v2517 = vpack.c.bf16 %v2509, %v2508
  %s2518 = scalar_lea.vmem %s9, 4
  %v2519 = vld [vmem:[%s2518] sm:$0xf]
  %v2521 = vsel %vm2410, %v2510, 0
  %v2524 = vsel %vm2410, %v2511, 0
  %v2527 = vsel %vm2410, %v2512, 0
  %v2530 = vsel %vm2410, %v2513, 0
  %v2533 = vsel %vm2410, %v2514, 0
  %v2536 = vsel %vm2410, %v2515, 0
  %v2539 = vsel %vm2410, %v2516, 0
  %v2542 = vsel %vm2410, %v2517, 0
  %vm2544 = vcmask 1043456
  %v2546 = vsel %vm2544, %v2519, 0
  %2548 = vmatprep.subr.bf16.mxu0 0
  %2549 = vmatpush1.bf16.msra.mxu0 %v2546
  %2550 = vmatprep.subr.bf16.mxu0 0
  %2551 = vmatpush1.bf16.msra.mxu0 0
  %2552 = vmatprep.subr.bf16.mxu0 0
  %2553 = vmatpush1.bf16.msra.mxu0 0
  %2554 = vmatprep.subr.bf16.mxu0 0
  %2555 = vmatpush1.bf16.msra.mxu0 0
  %2556 = vmatprep.subr.bf16.mxu0 0
  %2557 = vmatpush1.bf16.msra.mxu0 0
  %2558 = vmatprep.subr.bf16.mxu0 0
  %2559 = vmatpush1.bf16.msra.mxu0 0
  %2560 = vmatprep.subr.bf16.mxu0 0
  %2561 = vmatpush1.bf16.msra.mxu0 0
  %2562 = vmatprep.subr.bf16.mxu0 0
  %2563 = vmatpush1.bf16.msra.mxu0 0
  %2564 = vmatprep.subr.bf16.mxu0 0
  %2565 = vmatpush1.bf16.msra.mxu0 0
  %2566 = vmatprep.subr.bf16.mxu0 0
  %2567 = vmatpush1.bf16.msra.mxu0 0
  %2568 = vmatprep.subr.bf16.mxu0 0
  %2569 = vmatpush1.bf16.msra.mxu0 0
  %2570 = vmatprep.subr.bf16.mxu0 0
  %2571 = vmatpush1.bf16.msra.mxu0 0
  %2572 = vmatprep.subr.bf16.mxu0 0
  %2573 = vmatpush1.bf16.msra.mxu0 0
  %2574 = vmatprep.subr.bf16.mxu0 0
  %2575 = vmatpush1.bf16.msra.mxu0 0
  %2576 = vmatprep.subr.bf16.mxu0 0
  %2577 = vmatpush1.bf16.msra.mxu0 0
  %2578 = vmatprep.subr.bf16.mxu0 0
  %2579 = vmatpush1.bf16.msra.mxu0 0
  %2580 = vmatprep.mubr.bf16.mxu0 0
  %2581 = vmatmul.mubr.bf16.gmra.mrb[0].mxu0 %v2521
  %v2582 = vpop.f32.mrb[0].mxu0
  %v2583 = vadd.f32 0.0, %v2582
  %v2584 = vpop.f32.mrb[0].mxu0
  %v2585 = vpop.f32.mrb[0].mxu0
  %v2586 = vadd.f32 0.0, %v2585
  %v2587 = vpop.f32.mrb[0].mxu0
  %2588 = vmatprep.mubr.bf16.mxu0 0
  %2589 = vmatmul.mubr.bf16.gmra.mrb[0].mxu0 %v2524
  %v2590 = vpop.f32.mrb[0].mxu0
  %v2591 = vadd.f32 0.0, %v2590
  %v2592 = vpop.f32.mrb[0].mxu0
  %v2593 = vpop.f32.mrb[0].mxu0
  %v2594 = vadd.f32 0.0, %v2593
  %v2595 = vpop.f32.mrb[0].mxu0
  %2596 = vmatprep.mubr.bf16.mxu0 0
  %2597 = vmatmul.mubr.bf16.gmra.mrb[0].mxu0 %v2527
  %v2598 = vpop.f32.mrb[0].mxu0
  %v2599 = vadd.f32 0.0, %v2598
  %v2600 = vpop.f32.mrb[0].mxu0
  %v2601 = vpop.f32.mrb[0].mxu0
  %v2602 = vadd.f32 0.0, %v2601
  %v2603 = vpop.f32.mrb[0].mxu0
  %2604 = vmatprep.mubr.bf16.mxu0 0
  %2605 = vmatmul.mubr.bf16.gmra.mrb[0].mxu0 %v2530
  %v2606 = vpop.f32.mrb[0].mxu0
  %v2607 = vadd.f32 0.0, %v2606
  %v2608 = vpop.f32.mrb[0].mxu0
  %v2609 = vpop.f32.mrb[0].mxu0
  %v2610 = vadd.f32 0.0, %v2609
  %v2611 = vpop.f32.mrb[0].mxu0
  %2612 = vmatprep.mubr.bf16.mxu0 0
  %2613 = vmatmul.mubr.bf16.gmra.mrb[0].mxu0 %v2533
  %v2614 = vpop.f32.mrb[0].mxu0
  %v2615 = vadd.f32 0.0, %v2614
  %v2616 = vpop.f32.mrb[0].mxu0
  %v2617 = vpop.f32.mrb[0].mxu0
  %v2618 = vadd.f32 0.0, %v2617
  %v2619 = vpop.f32.mrb[0].mxu0
  %2620 = vmatprep.mubr.bf16.mxu0 0
  %2621 = vmatmul.mubr.bf16.gmra.mrb[0].mxu0 %v2536
  %v2622 = vpop.f32.mrb[0].mxu0
  %v2623 = vadd.f32 0.0, %v2622
  %v2624 = vpop.f32.mrb[0].mxu0
  %v2625 = vpop.f32.mrb[0].mxu0
  %v2626 = vadd.f32 0.0, %v2625
  %v2627 = vpop.f32.mrb[0].mxu0
  %2628 = vmatprep.mubr.bf16.mxu0 0
  %2629 = vmatmul.mubr.bf16.gmra.mrb[0].mxu0 %v2539
  %v2630 = vpop.f32.mrb[0].mxu0
  %v2631 = vadd.f32 0.0, %v2630
  %v2632 = vpop.f32.mrb[0].mxu0
  %v2633 = vpop.f32.mrb[0].mxu0
  %v2634 = vadd.f32 0.0, %v2633
  %v2635 = vpop.f32.mrb[0].mxu0
  %2636 = vmatprep.mubr.bf16.mxu0 0
  %2637 = vmatmul.mubr.bf16.gmra.mrb[0].mxu0 %v2542
  %v2638 = vpop.f32.mrb[0].mxu0
  %v2639 = vadd.f32 0.0, %v2638
  %v2640 = vpop.f32.mrb[0].mxu0
  %v2641 = vpop.f32.mrb[0].mxu0
  %v2642 = vadd.f32 0.0, %v2641
  %v2643 = vpop.f32.mrb[0].mxu0
  %2644 = vdwg.mxu0
  %v2646 = vsel %vm2410, %v2485, 0
  %v2649 = vsel %vm2410, %v2486, 0
  %v2652 = vsel %vm2410, %v2487, 0
  %v2655 = vsel %vm2410, %v2488, 0
  %v2658 = vsel %vm2410, %v2489, 0
  %v2661 = vsel %vm2410, %v2490, 0
  %v2664 = vsel %vm2410, %v2491, 0
  %v2667 = vsel %vm2410, %v2492, 0
  %v2670 = vsel %vm2544, %v2493, 0
  %2672 = vmatprep.subr.bf16.mxu0 0
  %2673 = vmatpush1.bf16.msra.mxu0 %v2670
  %2674 = vmatprep.subr.bf16.mxu0 0
  %2675 = vmatpush1.bf16.msra.mxu0 0
  %2676 = vmatprep.subr.bf16.mxu0 0
  %2677 = vmatpush1.bf16.msra.mxu0 0
  %2678 = vmatprep.subr.bf16.mxu0 0
  %2679 = vmatpush1.bf16.msra.mxu0 0
  %2680 = vmatprep.subr.bf16.mxu0 0
  %2681 = vmatpush1.bf16.msra.mxu0 0
  %2682 = vmatprep.subr.bf16.mxu0 0
  %2683 = vmatpush1.bf16.msra.mxu0 0
  %2684 = vmatprep.subr.bf16.mxu0 0
  %2685 = vmatpush1.bf16.msra.mxu0 0
  %2686 = vmatprep.subr.bf16.mxu0 0
  %2687 = vmatpush1.bf16.msra.mxu0 0
  %2688 = vmatprep.subr.bf16.mxu0 0
  %2689 = vmatpush1.bf16.msra.mxu0 0
  %2690 = vmatprep.subr.bf16.mxu0 0
  %2691 = vmatpush1.bf16.msra.mxu0 0
  %2692 = vmatprep.subr.bf16.mxu0 0
  %2693 = vmatpush1.bf16.msra.mxu0 0
  %2694 = vmatprep.subr.bf16.mxu0 0
  %2695 = vmatpush1.bf16.msra.mxu0 0
  %2696 = vmatprep.subr.bf16.mxu0 0
  %2697 = vmatpush1.bf16.msra.mxu0 0
  %2698 = vmatprep.subr.bf16.mxu0 0
  %2699 = vmatpush1.bf16.msra.mxu0 0
  %2700 = vmatprep.subr.bf16.mxu0 0
  %2701 = vmatpush1.bf16.msra.mxu0 0
  %2702 = vmatprep.subr.bf16.mxu0 0
  %2703 = vmatpush1.bf16.msra.mxu0 0
  %2704 = vmatprep.mubr.bf16.mxu0 0
  %2705 = vmatmul.mubr.bf16.gmra.mrb[0].mxu0 %v2646
  %v2706 = vpop.f32.mrb[0].mxu0
  %v2707 = vadd.f32 %v2583, %v2706
  %v2708 = vpop.f32.mrb[0].mxu0
  %v2709 = vpop.f32.mrb[0].mxu0
  %v2710 = vadd.f32 %v2586, %v2709
  %v2711 = vpop.f32.mrb[0].mxu0
  %2712 = vmatprep.mubr.bf16.mxu0 0
  %2713 = vmatmul.mubr.bf16.gmra.mrb[0].mxu0 %v2649
  %v2714 = vpop.f32.mrb[0].mxu0
  %v2715 = vadd.f32 %v2591, %v2714
  %v2716 = vpop.f32.mrb[0].mxu0
  %v2717 = vpop.f32.mrb[0].mxu0
  %v2718 = vadd.f32 %v2594, %v2717
  %v2719 = vpop.f32.mrb[0].mxu0
  %2720 = vmatprep.mubr.bf16.mxu0 0
  %2721 = vmatmul.mubr.bf16.gmra.mrb[0].mxu0 %v2652
  %v2722 = vpop.f32.mrb[0].mxu0
  %v2723 = vadd.f32 %v2599, %v2722
  %v2724 = vpop.f32.mrb[0].mxu0
  %v2725 = vpop.f32.mrb[0].mxu0
  %v2726 = vadd.f32 %v2602, %v2725
  %v2727 = vpop.f32.mrb[0].mxu0
  %2728 = vmatprep.mubr.bf16.mxu0 0
  %2729 = vmatmul.mubr.bf16.gmra.mrb[0].mxu0 %v2655
  %v2730 = vpop.f32.mrb[0].mxu0
  %v2731 = vadd.f32 %v2607, %v2730
  %v2732 = vpop.f32.mrb[0].mxu0
  %v2733 = vpop.f32.mrb[0].mxu0
  %v2734 = vadd.f32 %v2610, %v2733
  %v2735 = vpop.f32.mrb[0].mxu0
  %2736 = vmatprep.mubr.bf16.mxu0 0
  %2737 = vmatmul.mubr.bf16.gmra.mrb[0].mxu0 %v2658
  %v2738 = vpop.f32.mrb[0].mxu0
  %v2739 = vadd.f32 %v2615, %v2738
  %v2740 = vpop.f32.mrb[0].mxu0
  %v2741 = vpop.f32.mrb[0].mxu0
  %v2742 = vadd.f32 %v2618, %v2741
  %v2743 = vpop.f32.mrb[0].mxu0
  %2744 = vmatprep.mubr.bf16.mxu0 0
  %2745 = vmatmul.mubr.bf16.gmra.mrb[0].mxu0 %v2661
  %v2746 = vpop.f32.mrb[0].mxu0
  %v2747 = vadd.f32 %v2623, %v2746
  %v2748 = vpop.f32.mrb[0].mxu0
  %v2749 = vpop.f32.mrb[0].mxu0
  %v2750 = vadd.f32 %v2626, %v2749
  %v2751 = vpop.f32.mrb[0].mxu0
  %2752 = vmatprep.mubr.bf16.mxu0 0
  %2753 = vmatmul.mubr.bf16.gmra.mrb[0].mxu0 %v2664
  %v2754 = vpop.f32.mrb[0].mxu0
  %v2755 = vadd.f32 %v2631, %v2754
  %v2756 = vpop.f32.mrb[0].mxu0
  %v2757 = vpop.f32.mrb[0].mxu0
  %v2758 = vadd.f32 %v2634, %v2757
  %v2759 = vpop.f32.mrb[0].mxu0
  %2760 = vmatprep.mubr.bf16.mxu0 0
  %2761 = vmatmul.mubr.bf16.gmra.mrb[0].mxu0 %v2667
  %v2762 = vpop.f32.mrb[0].mxu0
  %v2763 = vadd.f32 %v2639, %v2762
  %v2764 = vpop.f32.mrb[0].mxu0
  %v2765 = vpop.f32.mrb[0].mxu0
  %v2766 = vadd.f32 %v2642, %v2765
  %v2767 = vpop.f32.mrb[0].mxu0
  %2768 = vdwg.mxu0
  %v2769 = vld [vmem:[#allocation2 + $0x2] sm:$0xff]
  %v2770 = vld [vmem:[#allocation2 + $0x12] sm:$0xff]
  %v2771 = vld [vmem:[#allocation2 + $0x22] sm:$0xff]
  %v2772 = vld [vmem:[#allocation2 + $0x32] sm:$0xff]
  %v2773 = vld [vmem:[#allocation2 + $0x42] sm:$0xff]
  %v2774 = vld [vmem:[#allocation2 + $0x52] sm:$0xff]
  %v2775 = vld [vmem:[#allocation2 + $0x62] sm:$0xff]
  %v2776 = vld [vmem:[#allocation2 + $0x72] sm:$0xff]
  %v2777 = vld [vmem:[#allocation2 + $0xa2] sm:$0xff]
  %v2778 = vld [vmem:[#allocation2 + $0xb2] sm:$0xff]
  %v2779 = vld [vmem:[#allocation2 + $0xc2] sm:$0xff]
  %v2780 = vld [vmem:[#allocation2 + $0xd2] sm:$0xff]
  %v2781 = vld [vmem:[#allocation2 + $0xe2] sm:$0xff]
  %v2782 = vld [vmem:[#allocation2 + $0xf2] sm:$0xff]
  %v2783 = vld [vmem:[#allocation2 + $0x102] sm:$0xff]
  %v2784 = vld [vmem:[#allocation2 + $0x112] sm:$0xff]
  %v2785 = vpack.c.bf16 %v2770, %v2769
  %v2786 = vpack.c.bf16 %v2772, %v2771
  %v2787 = vpack.c.bf16 %v2774, %v2773
  %v2788 = vpack.c.bf16 %v2776, %v2775
  %v2789 = vpack.c.bf16 %v2778, %v2777
  %v2790 = vpack.c.bf16 %v2780, %v2779
  %v2791 = vpack.c.bf16 %v2782, %v2781
  %v2792 = vpack.c.bf16 %v2784, %v2783
  %s2793 = scalar_lea.vmem %s9, 8
  %v2794 = vld [vmem:[%s2793] sm:$0xf]
  %v2796 = vsel %vm2410, %v2785, 0
  %v2799 = vsel %vm2410, %v2786, 0
  %v2802 = vsel %vm2410, %v2787, 0
  %v2805 = vsel %vm2410, %v2788, 0
  %v2808 = vsel %vm2410, %v2789, 0
  %v2811 = vsel %vm2410, %v2790, 0
  %v2814 = vsel %vm2410, %v2791, 0
  %v2817 = vsel %vm2410, %v2792, 0
  %v2820 = vsel %vm2544, %v2794, 0
  %2822 = vmatprep.subr.bf16.mxu0 0
  %2823 = vmatpush1.bf16.msra.mxu0 %v2820
  %2824 = vmatprep.subr.bf16.mxu0 0
  %2825 = vmatpush1.bf16.msra.mxu0 0
  %2826 = vmatprep.subr.bf16.mxu0 0
  %2827 = vmatpush1.bf16.msra.mxu0 0
  %2828 = vmatprep.subr.bf16.mxu0 0
  %2829 = vmatpush1.bf16.msra.mxu0 0
  %2830 = vmatprep.subr.bf16.mxu0 0
  %2831 = vmatpush1.bf16.msra.mxu0 0
  %2832 = vmatprep.subr.bf16.mxu0 0
  %2833 = vmatpush1.bf16.msra.mxu0 0
  %2834 = vmatprep.subr.bf16.mxu0 0
  %2835 = vmatpush1.bf16.msra.mxu0 0
  %2836 = vmatprep.subr.bf16.mxu0 0
  %2837 = vmatpush1.bf16.msra.mxu0 0
  %2838 = vmatprep.subr.bf16.mxu0 0
  %2839 = vmatpush1.bf16.msra.mxu0 0
  %2840 = vmatprep.subr.bf16.mxu0 0
  %2841 = vmatpush1.bf16.msra.mxu0 0
  %2842 = vmatprep.subr.bf16.mxu0 0
  %2843 = vmatpush1.bf16.msra.mxu0 0
  %2844 = vmatprep.subr.bf16.mxu0 0
  %2845 = vmatpush1.bf16.msra.mxu0 0
  %2846 = vmatprep.subr.bf16.mxu0 0
  %2847 = vmatpush1.bf16.msra.mxu0 0
  %2848 = vmatprep.subr.bf16.mxu0 0
  %2849 = vmatpush1.bf16.msra.mxu0 0
  %2850 = vmatprep.subr.bf16.mxu0 0
  %2851 = vmatpush1.bf16.msra.mxu0 0
  %2852 = vmatprep.subr.bf16.mxu0 0
  %2853 = vmatpush1.bf16.msra.mxu0 0
  %2854 = vmatprep.mubr.bf16.mxu0 0
  %2855 = vmatmul.mubr.bf16.gmra.mrb[0].mxu0 %v2796
  %v2856 = vpop.f32.mrb[0].mxu0
  %v2857 = vadd.f32 0.0, %v2856
  %v2858 = vpop.f32.mrb[0].mxu0
  %v2859 = vpop.f32.mrb[0].mxu0
  %v2860 = vadd.f32 0.0, %v2859
  %v2861 = vpop.f32.mrb[0].mxu0
  %2862 = vmatprep.mubr.bf16.mxu0 0
  %2863 = vmatmul.mubr.bf16.gmra.mrb[0].mxu0 %v2799
  %v2864 = vpop.f32.mrb[0].mxu0
  %v2865 = vadd.f32 0.0, %v2864
  %v2866 = vpop.f32.mrb[0].mxu0
  %v2867 = vpop.f32.mrb[0].mxu0
  %v2868 = vadd.f32 0.0, %v2867
  %v2869 = vpop.f32.mrb[0].mxu0
  %2870 = vmatprep.mubr.bf16.mxu0 0
  %2871 = vmatmul.mubr.bf16.gmra.mrb[0].mxu0 %v2802
  %v2872 = vpop.f32.mrb[0].mxu0
  %v2873 = vadd.f32 0.0, %v2872
  %v2874 = vpop.f32.mrb[0].mxu0
  %v2875 = vpop.f32.mrb[0].mxu0
  %v2876 = vadd.f32 0.0, %v2875
  %v2877 = vpop.f32.mrb[0].mxu0
  %2878 = vmatprep.mubr.bf16.mxu0 0
  %2879 = vmatmul.mubr.bf16.gmra.mrb[0].mxu0 %v2805
  %v2880 = vpop.f32.mrb[0].mxu0
  %v2881 = vadd.f32 0.0, %v2880
  %v2882 = vpop.f32.mrb[0].mxu0
  %v2883 = vpop.f32.mrb[0].mxu0
  %v2884 = vadd.f32 0.0, %v2883
  %v2885 = vpop.f32.mrb[0].mxu0
  %2886 = vmatprep.mubr.bf16.mxu0 0
  %2887 = vmatmul.mubr.bf16.gmra.mrb[0].mxu0 %v2808
  %v2888 = vpop.f32.mrb[0].mxu0
  %v2889 = vadd.f32 0.0, %v2888
  %v2890 = vpop.f32.mrb[0].mxu0
  %v2891 = vpop.f32.mrb[0].mxu0
  %v2892 = vadd.f32 0.0, %v2891
  %v2893 = vpop.f32.mrb[0].mxu0
  %2894 = vmatprep.mubr.bf16.mxu0 0
  %2895 = vmatmul.mubr.bf16.gmra.mrb[0].mxu0 %v2811
  %v2896 = vpop.f32.mrb[0].mxu0
  %v2897 = vadd.f32 0.0, %v2896
  %v2898 = vpop.f32.mrb[0].mxu0
  %v2899 = vpop.f32.mrb[0].mxu0
  %v2900 = vadd.f32 0.0, %v2899
  %v2901 = vpop.f32.mrb[0].mxu0
  %2902 = vmatprep.mubr.bf16.mxu0 0
  %2903 = vmatmul.mubr.bf16.gmra.mrb[0].mxu0 %v2814
  %v2904 = vpop.f32.mrb[0].mxu0
  %v2905 = vadd.f32 0.0, %v2904
  %v2906 = vpop.f32.mrb[0].mxu0
  %v2907 = vpop.f32.mrb[0].mxu0
  %v2908 = vadd.f32 0.0, %v2907
  %v2909 = vpop.f32.mrb[0].mxu0
  %2910 = vmatprep.mubr.bf16.mxu0 0
  %2911 = vmatmul.mubr.bf16.gmra.mrb[0].mxu0 %v2817
  %v2912 = vpop.f32.mrb[0].mxu0
  %v2913 = vadd.f32 0.0, %v2912
  %v2914 = vpop.f32.mrb[0].mxu0
  %v2915 = vpop.f32.mrb[0].mxu0
  %v2916 = vadd.f32 0.0, %v2915
  %v2917 = vpop.f32.mrb[0].mxu0
  %2918 = vdwg.mxu0
  %v2919 = vadd.f32 %v2707, %v2857
  %v2920 = vadd.f32 %v2710, %v2860
  %v2921 = vadd.f32 %v2715, %v2865
  %v2922 = vadd.f32 %v2718, %v2868
  %v2923 = vadd.f32 %v2723, %v2873
  %v2924 = vadd.f32 %v2726, %v2876
  %v2925 = vadd.f32 %v2731, %v2881
  %v2926 = vadd.f32 %v2734, %v2884
  %v2927 = vadd.f32 %v2739, %v2889
  %v2928 = vadd.f32 %v2742, %v2892
  %v2929 = vadd.f32 %v2747, %v2897
  %v2930 = vadd.f32 %v2750, %v2900
  %v2931 = vadd.f32 %v2755, %v2905
  %v2932 = vadd.f32 %v2758, %v2908
  %v2933 = vadd.f32 %v2763, %v2913
  %v2934 = vadd.f32 %v2766, %v2916
  %v2935 = vld [vmem:[%s2452] sm:$0xff]
  %v2936 = vld [vmem:[%s2452 + $0x10] sm:$0xff]
  %v2937 = vld [vmem:[%s2452 + $0x20] sm:$0xff]
  %v2938 = vld [vmem:[%s2452 + $0x30] sm:$0xff]
  %v2939 = vld [vmem:[%s2452 + $0x40] sm:$0xff]
  %v2940 = vld [vmem:[%s2452 + $0x50] sm:$0xff]
  %v2941 = vld [vmem:[%s2452 + $0x60] sm:$0xff]
  %v2942 = vld [vmem:[%s2452 + $0x70] sm:$0xff]
  %v2943 = vld [vmem:[%s2452 + $0xa0] sm:$0xff]
  %v2944 = vld [vmem:[%s2452 + $0xb0] sm:$0xff]
  %v2945 = vld [vmem:[%s2452 + $0xc0] sm:$0xff]
  %v2946 = vld [vmem:[%s2452 + $0xd0] sm:$0xff]
  %v2947 = vld [vmem:[%s2452 + $0xe0] sm:$0xff]
  %v2948 = vld [vmem:[%s2452 + $0xf0] sm:$0xff]
  %v2949 = vld [vmem:[%s2452 + $0x100] sm:$0xff]
  %v2950 = vld [vmem:[%s2452 + $0x110] sm:$0xff]
  %v2951 = vpack.c.bf16 %v2936, %v2935
  %v2952 = vpack.c.bf16 %v2938, %v2937
  %v2953 = vpack.c.bf16 %v2940, %v2939
  %v2954 = vpack.c.bf16 %v2942, %v2941
  %v2955 = vpack.c.bf16 %v2944, %v2943
  %v2956 = vpack.c.bf16 %v2946, %v2945
  %v2957 = vpack.c.bf16 %v2948, %v2947
  %v2958 = vpack.c.bf16 %v2950, %v2949
  %s2959 = scalar_lea.vmem %s9, 12
  %v2960 = vld [vmem:[%s2959] sm:$0xf]
  %v2962 = vsel %vm2410, %v2951, 0
  %v2965 = vsel %vm2410, %v2952, 0
  %v2968 = vsel %vm2410, %v2953, 0
  %v2971 = vsel %vm2410, %v2954, 0
  %v2974 = vsel %vm2410, %v2955, 0
  %v2977 = vsel %vm2410, %v2956, 0
  %v2980 = vsel %vm2410, %v2957, 0
  %v2983 = vsel %vm2410, %v2958, 0
  %v2986 = vsel %vm2544, %v2960, 0
  %2988 = vmatprep.subr.bf16.mxu0 0
  %2989 = vmatpush1.bf16.msra.mxu0 %v2986
  %2990 = vmatprep.subr.bf16.mxu0 0
  %2991 = vmatpush1.bf16.msra.mxu0 0
  %2992 = vmatprep.subr.bf16.mxu0 0
  %2993 = vmatpush1.bf16.msra.mxu0 0
  %2994 = vmatprep.subr.bf16.mxu0 0
  %2995 = vmatpush1.bf16.msra.mxu0 0
  %2996 = vmatprep.subr.bf16.mxu0 0
  %2997 = vmatpush1.bf16.msra.mxu0 0
  %2998 = vmatprep.subr.bf16.mxu0 0
  %2999 = vmatpush1.bf16.msra.mxu0 0
  %3000 = vmatprep.subr.bf16.mxu0 0
  %3001 = vmatpush1.bf16.msra.mxu0 0
  %3002 = vmatprep.subr.bf16.mxu0 0
  %3003 = vmatpush1.bf16.msra.mxu0 0
  %3004 = vmatprep.subr.bf16.mxu0 0
  %3005 = vmatpush1.bf16.msra.mxu0 0
  %3006 = vmatprep.subr.bf16.mxu0 0
  %3007 = vmatpush1.bf16.msra.mxu0 0
  %3008 = vmatprep.subr.bf16.mxu0 0
  %3009 = vmatpush1.bf16.msra.mxu0 0
  %3010 = vmatprep.subr.bf16.mxu0 0
  %3011 = vmatpush1.bf16.msra.mxu0 0
  %3012 = vmatprep.subr.bf16.mxu0 0
  %3013 = vmatpush1.bf16.msra.mxu0 0
  %3014 = vmatprep.subr.bf16.mxu0 0
  %3015 = vmatpush1.bf16.msra.mxu0 0
  %3016 = vmatprep.subr.bf16.mxu0 0
  %3017 = vmatpush1.bf16.msra.mxu0 0
  %3018 = vmatprep.subr.bf16.mxu0 0
  %3019 = vmatpush1.bf16.msra.mxu0 0
  %3020 = vmatprep.mubr.bf16.mxu0 0
  %3021 = vmatmul.mubr.bf16.gmra.mrb[0].mxu0 %v2962
  %v3022 = vpop.f32.mrb[0].mxu0
  %v3023 = vadd.f32 0.0, %v3022
  %v3024 = vpop.f32.mrb[0].mxu0
  %v3025 = vpop.f32.mrb[0].mxu0
  %v3026 = vadd.f32 0.0, %v3025
  %v3027 = vpop.f32.mrb[0].mxu0
  %3028 = vmatprep.mubr.bf16.mxu0 0
  %3029 = vmatmul.mubr.bf16.gmra.mrb[0].mxu0 %v2965
  %v3030 = vpop.f32.mrb[0].mxu0
  %v3031 = vadd.f32 0.0, %v3030
  %v3032 = vpop.f32.mrb[0].mxu0
  %v3033 = vpop.f32.mrb[0].mxu0
  %v3034 = vadd.f32 0.0, %v3033
  %v3035 = vpop.f32.mrb[0].mxu0
  %3036 = vmatprep.mubr.bf16.mxu0 0
  %3037 = vmatmul.mubr.bf16.gmra.mrb[0].mxu0 %v2968
  %v3038 = vpop.f32.mrb[0].mxu0
  %v3039 = vadd.f32 0.0, %v3038
  %v3040 = vpop.f32.mrb[0].mxu0
  %v3041 = vpop.f32.mrb[0].mxu0
  %v3042 = vadd.f32 0.0, %v3041
  %v3043 = vpop.f32.mrb[0].mxu0
  %3044 = vmatprep.mubr.bf16.mxu0 0
  %3045 = vmatmul.mubr.bf16.gmra.mrb[0].mxu0 %v2971
  %v3046 = vpop.f32.mrb[0].mxu0
  %v3047 = vadd.f32 0.0, %v3046
  %v3048 = vpop.f32.mrb[0].mxu0
  %v3049 = vpop.f32.mrb[0].mxu0
  %v3050 = vadd.f32 0.0, %v3049
  %v3051 = vpop.f32.mrb[0].mxu0
  %3052 = vmatprep.mubr.bf16.mxu0 0
  %3053 = vmatmul.mubr.bf16.gmra.mrb[0].mxu0 %v2974
  %v3054 = vpop.f32.mrb[0].mxu0
  %v3055 = vadd.f32 0.0, %v3054
  %v3056 = vpop.f32.mrb[0].mxu0
  %v3057 = vpop.f32.mrb[0].mxu0
  %v3058 = vadd.f32 0.0, %v3057
  %v3059 = vpop.f32.mrb[0].mxu0
  %3060 = vmatprep.mubr.bf16.mxu0 0
  %3061 = vmatmul.mubr.bf16.gmra.mrb[0].mxu0 %v2977
  %v3062 = vpop.f32.mrb[0].mxu0
  %v3063 = vadd.f32 0.0, %v3062
  %v3064 = vpop.f32.mrb[0].mxu0
  %v3065 = vpop.f32.mrb[0].mxu0
  %v3066 = vadd.f32 0.0, %v3065
  %v3067 = vpop.f32.mrb[0].mxu0
  %3068 = vmatprep.mubr.bf16.mxu0 0
  %3069 = vmatmul.mubr.bf16.gmra.mrb[0].mxu0 %v2980
  %v3070 = vpop.f32.mrb[0].mxu0
  %v3071 = vadd.f32 0.0, %v3070
  %v3072 = vpop.f32.mrb[0].mxu0
  %v3073 = vpop.f32.mrb[0].mxu0
  %v3074 = vadd.f32 0.0, %v3073
  %v3075 = vpop.f32.mrb[0].mxu0
  %3076 = vmatprep.mubr.bf16.mxu0 0
  %3077 = vmatmul.mubr.bf16.gmra.mrb[0].mxu0 %v2983
  %v3078 = vpop.f32.mrb[0].mxu0
  %v3079 = vadd.f32 0.0, %v3078
  %v3080 = vpop.f32.mrb[0].mxu0
  %v3081 = vpop.f32.mrb[0].mxu0
  %v3082 = vadd.f32 0.0, %v3081
  %v3083 = vpop.f32.mrb[0].mxu0
  %3084 = vdwg.mxu0
  %v3085 = vadd.f32 %v2919, %v3023
  %v3086 = vadd.f32 %v2920, %v3026
  %v3087 = vadd.f32 %v2921, %v3031
  %v3088 = vadd.f32 %v2922, %v3034
  %v3089 = vadd.f32 %v2923, %v3039
  %v3090 = vadd.f32 %v2924, %v3042
  %v3091 = vadd.f32 %v2925, %v3047
  %v3092 = vadd.f32 %v2926, %v3050
  %v3093 = vadd.f32 %v2927, %v3055
  %v3094 = vadd.f32 %v2928, %v3058
  %v3095 = vadd.f32 %v2929, %v3063
  %v3096 = vadd.f32 %v2930, %v3066
  %v3097 = vadd.f32 %v2931, %v3071
  %v3098 = vadd.f32 %v2932, %v3074
  %v3099 = vadd.f32 %v2933, %v3079
  %v3100 = vadd.f32 %v2934, %v3082
  %v3101 = vld [vmem:[%s2452 + $0x1] sm:$0xff]
  %v3102 = vld [vmem:[%s2452 + $0x11] sm:$0xff]
  %v3103 = vld [vmem:[%s2452 + $0x21] sm:$0xff]
  %v3104 = vld [vmem:[%s2452 + $0x31] sm:$0xff]
  %v3105 = vld [vmem:[%s2452 + $0x41] sm:$0xff]
  %v3106 = vld [vmem:[%s2452 + $0x51] sm:$0xff]
  %v3107 = vld [vmem:[%s2452 + $0x61] sm:$0xff]
  %v3108 = vld [vmem:[%s2452 + $0x71] sm:$0xff]
  %v3109 = vld [vmem:[%s2452 + $0xa1] sm:$0xff]
  %v3110 = vld [vmem:[%s2452 + $0xb1] sm:$0xff]
  %v3111 = vld [vmem:[%s2452 + $0xc1] sm:$0xff]
  %v3112 = vld [vmem:[%s2452 + $0xd1] sm:$0xff]
  %v3113 = vld [vmem:[%s2452 + $0xe1] sm:$0xff]
  %v3114 = vld [vmem:[%s2452 + $0xf1] sm:$0xff]
  %v3115 = vld [vmem:[%s2452 + $0x101] sm:$0xff]
  %v3116 = vld [vmem:[%s2452 + $0x111] sm:$0xff]
  %v3117 = vpack.c.bf16 %v3102, %v3101
  %v3118 = vpack.c.bf16 %v3104, %v3103
  %v3119 = vpack.c.bf16 %v3106, %v3105
  %v3120 = vpack.c.bf16 %v3108, %v3107
  %v3121 = vpack.c.bf16 %v3110, %v3109
  %v3122 = vpack.c.bf16 %v3112, %v3111
  %v3123 = vpack.c.bf16 %v3114, %v3113
  %v3124 = vpack.c.bf16 %v3116, %v3115
  %s3125 = scalar_lea.vmem %s9, 16
  %v3126 = vld [vmem:[%s3125] sm:$0xf]
  %v3128 = vsel %vm2410, %v3117, 0
  %v3131 = vsel %vm2410, %v3118, 0
  %v3134 = vsel %vm2410, %v3119, 0
  %v3137 = vsel %vm2410, %v3120, 0
  %v3140 = vsel %vm2410, %v3121, 0
  %v3143 = vsel %vm2410, %v3122, 0
  %v3146 = vsel %vm2410, %v3123, 0
  %v3149 = vsel %vm2410, %v3124, 0
  %v3152 = vsel %vm2544, %v3126, 0
  %3154 = vmatprep.subr.bf16.mxu0 0
  %3155 = vmatpush1.bf16.msra.mxu0 %v3152
  %3156 = vmatprep.subr.bf16.mxu0 0
  %3157 = vmatpush1.bf16.msra.mxu0 0
  %3158 = vmatprep.subr.bf16.mxu0 0
  %3159 = vmatpush1.bf16.msra.mxu0 0
  %3160 = vmatprep.subr.bf16.mxu0 0
  %3161 = vmatpush1.bf16.msra.mxu0 0
  %3162 = vmatprep.subr.bf16.mxu0 0
  %3163 = vmatpush1.bf16.msra.mxu0 0
  %3164 = vmatprep.subr.bf16.mxu0 0
  %3165 = vmatpush1.bf16.msra.mxu0 0
  %3166 = vmatprep.subr.bf16.mxu0 0
  %3167 = vmatpush1.bf16.msra.mxu0 0
  %3168 = vmatprep.subr.bf16.mxu0 0
  %3169 = vmatpush1.bf16.msra.mxu0 0
  %3170 = vmatprep.subr.bf16.mxu0 0
  %3171 = vmatpush1.bf16.msra.mxu0 0
  %3172 = vmatprep.subr.bf16.mxu0 0
  %3173 = vmatpush1.bf16.msra.mxu0 0
  %3174 = vmatprep.subr.bf16.mxu0 0
  %3175 = vmatpush1.bf16.msra.mxu0 0
  %3176 = vmatprep.subr.bf16.mxu0 0
  %3177 = vmatpush1.bf16.msra.mxu0 0
  %3178 = vmatprep.subr.bf16.mxu0 0
  %3179 = vmatpush1.bf16.msra.mxu0 0
  %3180 = vmatprep.subr.bf16.mxu0 0
  %3181 = vmatpush1.bf16.msra.mxu0 0
  %3182 = vmatprep.subr.bf16.mxu0 0
  %3183 = vmatpush1.bf16.msra.mxu0 0
  %3184 = vmatprep.subr.bf16.mxu0 0
  %3185 = vmatpush1.bf16.msra.mxu0 0
  %3186 = vmatprep.mubr.bf16.mxu0 0
  %3187 = vmatmul.mubr.bf16.gmra.mrb[0].mxu0 %v3128
  %v3188 = vpop.f32.mrb[0].mxu0
  %v3189 = vadd.f32 0.0, %v3188
  %v3190 = vpop.f32.mrb[0].mxu0
  %v3191 = vpop.f32.mrb[0].mxu0
  %v3192 = vadd.f32 0.0, %v3191
  %v3193 = vpop.f32.mrb[0].mxu0
  %3194 = vmatprep.mubr.bf16.mxu0 0
  %3195 = vmatmul.mubr.bf16.gmra.mrb[0].mxu0 %v3131
  %v3196 = vpop.f32.mrb[0].mxu0
  %v3197 = vadd.f32 0.0, %v3196
  %v3198 = vpop.f32.mrb[0].mxu0
  %v3199 = vpop.f32.mrb[0].mxu0
  %v3200 = vadd.f32 0.0, %v3199
  %v3201 = vpop.f32.mrb[0].mxu0
  %3202 = vmatprep.mubr.bf16.mxu0 0
  %3203 = vmatmul.mubr.bf16.gmra.mrb[0].mxu0 %v3134
  %v3204 = vpop.f32.mrb[0].mxu0
  %v3205 = vadd.f32 0.0, %v3204
  %v3206 = vpop.f32.mrb[0].mxu0
  %v3207 = vpop.f32.mrb[0].mxu0
  %v3208 = vadd.f32 0.0, %v3207
  %v3209 = vpop.f32.mrb[0].mxu0
  %3210 = vmatprep.mubr.bf16.mxu0 0
  %3211 = vmatmul.mubr.bf16.gmra.mrb[0].mxu0 %v3137
  %v3212 = vpop.f32.mrb[0].mxu0
  %v3213 = vadd.f32 0.0, %v3212
  %v3214 = vpop.f32.mrb[0].mxu0
  %v3215 = vpop.f32.mrb[0].mxu0
  %v3216 = vadd.f32 0.0, %v3215
  %v3217 = vpop.f32.mrb[0].mxu0
  %3218 = vmatprep.mubr.bf16.mxu0 0
  %3219 = vmatmul.mubr.bf16.gmra.mrb[0].mxu0 %v3140
  %v3220 = vpop.f32.mrb[0].mxu0
  %v3221 = vadd.f32 0.0, %v3220
  %v3222 = vpop.f32.mrb[0].mxu0
  %v3223 = vpop.f32.mrb[0].mxu0
  %v3224 = vadd.f32 0.0, %v3223
  %v3225 = vpop.f32.mrb[0].mxu0
  %3226 = vmatprep.mubr.bf16.mxu0 0
  %3227 = vmatmul.mubr.bf16.gmra.mrb[0].mxu0 %v3143
  %v3228 = vpop.f32.mrb[0].mxu0
  %v3229 = vadd.f32 0.0, %v3228
  %v3230 = vpop.f32.mrb[0].mxu0
  %v3231 = vpop.f32.mrb[0].mxu0
  %v3232 = vadd.f32 0.0, %v3231
  %v3233 = vpop.f32.mrb[0].mxu0
  %3234 = vmatprep.mubr.bf16.mxu0 0
  %3235 = vmatmul.mubr.bf16.gmra.mrb[0].mxu0 %v3146
  %v3236 = vpop.f32.mrb[0].mxu0
  %v3237 = vadd.f32 0.0, %v3236
  %v3238 = vpop.f32.mrb[0].mxu0
  %v3239 = vpop.f32.mrb[0].mxu0
  %v3240 = vadd.f32 0.0, %v3239
  %v3241 = vpop.f32.mrb[0].mxu0
  %3242 = vmatprep.mubr.bf16.mxu0 0
  %3243 = vmatmul.mubr.bf16.gmra.mrb[0].mxu0 %v3149
  %v3244 = vpop.f32.mrb[0].mxu0
  %v3245 = vadd.f32 0.0, %v3244
  %v3246 = vpop.f32.mrb[0].mxu0
  %v3247 = vpop.f32.mrb[0].mxu0
  %v3248 = vadd.f32 0.0, %v3247
  %v3249 = vpop.f32.mrb[0].mxu0
  %3250 = vdwg.mxu0
  %v3251 = vadd.f32 %v3085, %v3189
  %v3252 = vadd.f32 %v3086, %v3192
  %v3253 = vadd.f32 %v3087, %v3197
  %v3254 = vadd.f32 %v3088, %v3200
  %v3255 = vadd.f32 %v3089, %v3205
  %v3256 = vadd.f32 %v3090, %v3208
  %v3257 = vadd.f32 %v3091, %v3213
  %v3258 = vadd.f32 %v3092, %v3216
  %v3259 = vadd.f32 %v3093, %v3221
  %v3260 = vadd.f32 %v3094, %v3224
  %v3261 = vadd.f32 %v3095, %v3229
  %v3262 = vadd.f32 %v3096, %v3232
  %v3263 = vadd.f32 %v3097, %v3237
  %v3264 = vadd.f32 %v3098, %v3240
  %v3265 = vadd.f32 %v3099, %v3245
  %v3266 = vadd.f32 %v3100, %v3248
  %v3267 = vld [vmem:[%s2452 + $0x2] sm:$0xff]
  %v3268 = vld [vmem:[%s2452 + $0x12] sm:$0xff]
  %v3269 = vld [vmem:[%s2452 + $0x22] sm:$0xff]
  %v3270 = vld [vmem:[%s2452 + $0x32] sm:$0xff]
  %v3271 = vld [vmem:[%s2452 + $0x42] sm:$0xff]
  %v3272 = vld [vmem:[%s2452 + $0x52] sm:$0xff]
  %v3273 = vld [vmem:[%s2452 + $0x62] sm:$0xff]
  %v3274 = vld [vmem:[%s2452 + $0x72] sm:$0xff]
  %v3275 = vld [vmem:[%s2452 + $0xa2] sm:$0xff]
  %v3276 = vld [vmem:[%s2452 + $0xb2] sm:$0xff]
  %v3277 = vld [vmem:[%s2452 + $0xc2] sm:$0xff]
  %v3278 = vld [vmem:[%s2452 + $0xd2] sm:$0xff]
  %v3279 = vld [vmem:[%s2452 + $0xe2] sm:$0xff]
  %v3280 = vld [vmem:[%s2452 + $0xf2] sm:$0xff]
  %v3281 = vld [vmem:[%s2452 + $0x102] sm:$0xff]
  %v3282 = vld [vmem:[%s2452 + $0x112] sm:$0xff]
  %v3283 = vpack.c.bf16 %v3268, %v3267
  %v3284 = vpack.c.bf16 %v3270, %v3269
  %v3285 = vpack.c.bf16 %v3272, %v3271
  %v3286 = vpack.c.bf16 %v3274, %v3273
  %v3287 = vpack.c.bf16 %v3276, %v3275
  %v3288 = vpack.c.bf16 %v3278, %v3277
  %v3289 = vpack.c.bf16 %v3280, %v3279
  %v3290 = vpack.c.bf16 %v3282, %v3281
  %s3291 = scalar_lea.vmem %s9, 20
  %v3292 = vld [vmem:[%s3291] sm:$0xf]
  %v3294 = vsel %vm2410, %v3283, 0
  %v3297 = vsel %vm2410, %v3284, 0
  %v3300 = vsel %vm2410, %v3285, 0
  %v3303 = vsel %vm2410, %v3286, 0
  %v3306 = vsel %vm2410, %v3287, 0
  %v3309 = vsel %vm2410, %v3288, 0
  %v3312 = vsel %vm2410, %v3289, 0
  %v3315 = vsel %vm2410, %v3290, 0
  %v3318 = vsel %vm2544, %v3292, 0
  %3320 = vmatprep.subr.bf16.mxu0 0
  %3321 = vmatpush1.bf16.msra.mxu0 %v3318
  %3322 = vmatprep.subr.bf16.mxu0 0
  %3323 = vmatpush1.bf16.msra.mxu0 0
  %3324 = vmatprep.subr.bf16.mxu0 0
  %3325 = vmatpush1.bf16.msra.mxu0 0
  %3326 = vmatprep.subr.bf16.mxu0 0
  %3327 = vmatpush1.bf16.msra.mxu0 0
  %3328 = vmatprep.subr.bf16.mxu0 0
  %3329 = vmatpush1.bf16.msra.mxu0 0
  %3330 = vmatprep.subr.bf16.mxu0 0
  %3331 = vmatpush1.bf16.msra.mxu0 0
  %3332 = vmatprep.subr.bf16.mxu0 0
  %3333 = vmatpush1.bf16.msra.mxu0 0
  %3334 = vmatprep.subr.bf16.mxu0 0
  %3335 = vmatpush1.bf16.msra.mxu0 0
  %3336 = vmatprep.subr.bf16.mxu0 0
  %3337 = vmatpush1.bf16.msra.mxu0 0
  %3338 = vmatprep.subr.bf16.mxu0 0
  %3339 = vmatpush1.bf16.msra.mxu0 0
  %3340 = vmatprep.subr.bf16.mxu0 0
  %3341 = vmatpush1.bf16.msra.mxu0 0
  %3342 = vmatprep.subr.bf16.mxu0 0
  %3343 = vmatpush1.bf16.msra.mxu0 0
  %3344 = vmatprep.subr.bf16.mxu0 0
  %3345 = vmatpush1.bf16.msra.mxu0 0
  %3346 = vmatprep.subr.bf16.mxu0 0
  %3347 = vmatpush1.bf16.msra.mxu0 0
  %3348 = vmatprep.subr.bf16.mxu0 0
  %3349 = vmatpush1.bf16.msra.mxu0 0
  %3350 = vmatprep.subr.bf16.mxu0 0
  %3351 = vmatpush1.bf16.msra.mxu0 0
  %3352 = vmatprep.mubr.bf16.mxu0 0
  %3353 = vmatmul.mubr.bf16.gmra.mrb[0].mxu0 %v3294
  %v3354 = vpop.f32.mrb[0].mxu0
  %v3355 = vadd.f32 0.0, %v3354
  %v3356 = vpop.f32.mrb[0].mxu0
  %v3357 = vpop.f32.mrb[0].mxu0
  %v3358 = vadd.f32 0.0, %v3357
  %v3359 = vpop.f32.mrb[0].mxu0
  %3360 = vmatprep.mubr.bf16.mxu0 0
  %3361 = vmatmul.mubr.bf16.gmra.mrb[0].mxu0 %v3297
  %v3362 = vpop.f32.mrb[0].mxu0
  %v3363 = vadd.f32 0.0, %v3362
  %v3364 = vpop.f32.mrb[0].mxu0
  %v3365 = vpop.f32.mrb[0].mxu0
  %v3366 = vadd.f32 0.0, %v3365
  %v3367 = vpop.f32.mrb[0].mxu0
  %3368 = vmatprep.mubr.bf16.mxu0 0
  %3369 = vmatmul.mubr.bf16.gmra.mrb[0].mxu0 %v3300
  %v3370 = vpop.f32.mrb[0].mxu0
  %v3371 = vadd.f32 0.0, %v3370
  %v3372 = vpop.f32.mrb[0].mxu0
  %v3373 = vpop.f32.mrb[0].mxu0
  %v3374 = vadd.f32 0.0, %v3373
  %v3375 = vpop.f32.mrb[0].mxu0
  %3376 = vmatprep.mubr.bf16.mxu0 0
  %3377 = vmatmul.mubr.bf16.gmra.mrb[0].mxu0 %v3303
  %v3378 = vpop.f32.mrb[0].mxu0
  %v3379 = vadd.f32 0.0, %v3378
  %v3380 = vpop.f32.mrb[0].mxu0
  %v3381 = vpop.f32.mrb[0].mxu0
  %v3382 = vadd.f32 0.0, %v3381
  %v3383 = vpop.f32.mrb[0].mxu0
  %3384 = vmatprep.mubr.bf16.mxu0 0
  %3385 = vmatmul.mubr.bf16.gmra.mrb[0].mxu0 %v3306
  %v3386 = vpop.f32.mrb[0].mxu0
  %v3387 = vadd.f32 0.0, %v3386
  %v3388 = vpop.f32.mrb[0].mxu0
  %v3389 = vpop.f32.mrb[0].mxu0
  %v3390 = vadd.f32 0.0, %v3389
  %v3391 = vpop.f32.mrb[0].mxu0
  %3392 = vmatprep.mubr.bf16.mxu0 0
  %3393 = vmatmul.mubr.bf16.gmra.mrb[0].mxu0 %v3309
  %v3394 = vpop.f32.mrb[0].mxu0
  %v3395 = vadd.f32 0.0, %v3394
  %v3396 = vpop.f32.mrb[0].mxu0
  %v3397 = vpop.f32.mrb[0].mxu0
  %v3398 = vadd.f32 0.0, %v3397
  %v3399 = vpop.f32.mrb[0].mxu0
  %3400 = vmatprep.mubr.bf16.mxu0 0
  %3401 = vmatmul.mubr.bf16.gmra.mrb[0].mxu0 %v3312
  %v3402 = vpop.f32.mrb[0].mxu0
  %v3403 = vadd.f32 0.0, %v3402
  %v3404 = vpop.f32.mrb[0].mxu0
  %v3405 = vpop.f32.mrb[0].mxu0
  %v3406 = vadd.f32 0.0, %v3405
  %v3407 = vpop.f32.mrb[0].mxu0
  %3408 = vmatprep.mubr.bf16.mxu0 0
  %3409 = vmatmul.mubr.bf16.gmra.mrb[0].mxu0 %v3315
  %v3410 = vpop.f32.mrb[0].mxu0
  %v3411 = vadd.f32 0.0, %v3410
  %v3412 = vpop.f32.mrb[0].mxu0
  %v3413 = vpop.f32.mrb[0].mxu0
  %v3414 = vadd.f32 0.0, %v3413
  %v3415 = vpop.f32.mrb[0].mxu0
  %3416 = vdwg.mxu0
  %v3417 = vadd.f32 %v3251, %v3355
  %v3418 = vadd.f32 %v3252, %v3358
  %v3419 = vadd.f32 %v3253, %v3363
  %v3420 = vadd.f32 %v3254, %v3366
  %v3421 = vadd.f32 %v3255, %v3371
  %v3422 = vadd.f32 %v3256, %v3374
  %v3423 = vadd.f32 %v3257, %v3379
  %v3424 = vadd.f32 %v3258, %v3382
  %v3425 = vadd.f32 %v3259, %v3387
  %v3426 = vadd.f32 %v3260, %v3390
  %v3427 = vadd.f32 %v3261, %v3395
  %v3428 = vadd.f32 %v3262, %v3398
  %v3429 = vadd.f32 %v3263, %v3403
  %v3430 = vadd.f32 %v3264, %v3406
  %v3431 = vadd.f32 %v3265, %v3411
  %v3432 = vadd.f32 %v3266, %v3414
  %s3433 = scalar_lea.vmem [#allocation2], 32
  %v3434 = vld [vmem:[%s3433] sm:$0xff]
  %v3435 = vld [vmem:[%s3433 + $0x10] sm:$0xff]
  %v3436 = vld [vmem:[%s3433 + $0x20] sm:$0xff]
  %v3437 = vld [vmem:[%s3433 + $0x30] sm:$0xff]
  %v3438 = vld [vmem:[%s3433 + $0x40] sm:$0xff]
  %v3439 = vld [vmem:[%s3433 + $0x50] sm:$0xff]
  %v3440 = vld [vmem:[%s3433 + $0x60] sm:$0xff]
  %v3441 = vld [vmem:[%s3433 + $0x70] sm:$0xff]
  %v3442 = vld [vmem:[%s3433 + $0xa0] sm:$0xff]
  %v3443 = vld [vmem:[%s3433 + $0xb0] sm:$0xff]
  %v3444 = vld [vmem:[%s3433 + $0xc0] sm:$0xff]
  %v3445 = vld [vmem:[%s3433 + $0xd0] sm:$0xff]
  %v3446 = vld [vmem:[%s3433 + $0xe0] sm:$0xff]
  %v3447 = vld [vmem:[%s3433 + $0xf0] sm:$0xff]
  %v3448 = vld [vmem:[%s3433 + $0x100] sm:$0xff]
  %v3449 = vld [vmem:[%s3433 + $0x110] sm:$0xff]
  %v3450 = vpack.c.bf16 %v3435, %v3434
  %v3451 = vpack.c.bf16 %v3437, %v3436
  %v3452 = vpack.c.bf16 %v3439, %v3438
  %v3453 = vpack.c.bf16 %v3441, %v3440
  %v3454 = vpack.c.bf16 %v3443, %v3442
  %v3455 = vpack.c.bf16 %v3445, %v3444
  %v3456 = vpack.c.bf16 %v3447, %v3446
  %v3457 = vpack.c.bf16 %v3449, %v3448
  %s3458 = scalar_lea.vmem %s9, 24
  %v3459 = vld [vmem:[%s3458] sm:$0xf]
  %v3461 = vsel %vm2410, %v3450, 0
  %v3464 = vsel %vm2410, %v3451, 0
  %v3467 = vsel %vm2410, %v3452, 0
  %v3470 = vsel %vm2410, %v3453, 0
  %v3473 = vsel %vm2410, %v3454, 0
  %v3476 = vsel %vm2410, %v3455, 0
  %v3479 = vsel %vm2410, %v3456, 0
  %v3482 = vsel %vm2410, %v3457, 0
  %v3485 = vsel %vm2544, %v3459, 0
  %3487 = vmatprep.subr.bf16.mxu0 0
  %3488 = vmatpush1.bf16.msra.mxu0 %v3485
  %3489 = vmatprep.subr.bf16.mxu0 0
  %3490 = vmatpush1.bf16.msra.mxu0 0
  %3491 = vmatprep.subr.bf16.mxu0 0
  %3492 = vmatpush1.bf16.msra.mxu0 0
  %3493 = vmatprep.subr.bf16.mxu0 0
  %3494 = vmatpush1.bf16.msra.mxu0 0
  %3495 = vmatprep.subr.bf16.mxu0 0
  %3496 = vmatpush1.bf16.msra.mxu0 0
  %3497 = vmatprep.subr.bf16.mxu0 0
  %3498 = vmatpush1.bf16.msra.mxu0 0
  %3499 = vmatprep.subr.bf16.mxu0 0
  %3500 = vmatpush1.bf16.msra.mxu0 0
  %3501 = vmatprep.subr.bf16.mxu0 0
  %3502 = vmatpush1.bf16.msra.mxu0 0
  %3503 = vmatprep.subr.bf16.mxu0 0
  %3504 = vmatpush1.bf16.msra.mxu0 0
  %3505 = vmatprep.subr.bf16.mxu0 0
  %3506 = vmatpush1.bf16.msra.mxu0 0
  %3507 = vmatprep.subr.bf16.mxu0 0
  %3508 = vmatpush1.bf16.msra.mxu0 0
  %3509 = vmatprep.subr.bf16.mxu0 0
  %3510 = vmatpush1.bf16.msra.mxu0 0
  %3511 = vmatprep.subr.bf16.mxu0 0
  %3512 = vmatpush1.bf16.msra.mxu0 0
  %3513 = vmatprep.subr.bf16.mxu0 0
  %3514 = vmatpush1.bf16.msra.mxu0 0
  %3515 = vmatprep.subr.bf16.mxu0 0
  %3516 = vmatpush1.bf16.msra.mxu0 0
  %3517 = vmatprep.subr.bf16.mxu0 0
  %3518 = vmatpush1.bf16.msra.mxu0 0
  %3519 = vmatprep.mubr.bf16.mxu0 0
  %3520 = vmatmul.mubr.bf16.gmra.mrb[0].mxu0 %v3461
  %v3521 = vpop.f32.mrb[0].mxu0
  %v3522 = vadd.f32 0.0, %v3521
  %v3523 = vpop.f32.mrb[0].mxu0
  %v3524 = vpop.f32.mrb[0].mxu0
  %v3525 = vadd.f32 0.0, %v3524
  %v3526 = vpop.f32.mrb[0].mxu0
  %3527 = vmatprep.mubr.bf16.mxu0 0
  %3528 = vmatmul.mubr.bf16.gmra.mrb[0].mxu0 %v3464
  %v3529 = vpop.f32.mrb[0].mxu0
  %v3530 = vadd.f32 0.0, %v3529
  %v3531 = vpop.f32.mrb[0].mxu0
  %v3532 = vpop.f32.mrb[0].mxu0
  %v3533 = vadd.f32 0.0, %v3532
  %v3534 = vpop.f32.mrb[0].mxu0
  %3535 = vmatprep.mubr.bf16.mxu0 0
  %3536 = vmatmul.mubr.bf16.gmra.mrb[0].mxu0 %v3467
  %v3537 = vpop.f32.mrb[0].mxu0
  %v3538 = vadd.f32 0.0, %v3537
  %v3539 = vpop.f32.mrb[0].mxu0
  %v3540 = vpop.f32.mrb[0].mxu0
  %v3541 = vadd.f32 0.0, %v3540
  %v3542 = vpop.f32.mrb[0].mxu0
  %3543 = vmatprep.mubr.bf16.mxu0 0
  %3544 = vmatmul.mubr.bf16.gmra.mrb[0].mxu0 %v3470
  %v3545 = vpop.f32.mrb[0].mxu0
  %v3546 = vadd.f32 0.0, %v3545
  %v3547 = vpop.f32.mrb[0].mxu0
  %v3548 = vpop.f32.mrb[0].mxu0
  %v3549 = vadd.f32 0.0, %v3548
  %v3550 = vpop.f32.mrb[0].mxu0
  %3551 = vmatprep.mubr.bf16.mxu0 0
  %3552 = vmatmul.mubr.bf16.gmra.mrb[0].mxu0 %v3473
  %v3553 = vpop.f32.mrb[0].mxu0
  %v3554 = vadd.f32 0.0, %v3553
  %v3555 = vpop.f32.mrb[0].mxu0
  %v3556 = vpop.f32.mrb[0].mxu0
  %v3557 = vadd.f32 0.0, %v3556
  %v3558 = vpop.f32.mrb[0].mxu0
  %3559 = vmatprep.mubr.bf16.mxu0 0
  %3560 = vmatmul.mubr.bf16.gmra.mrb[0].mxu0 %v3476
  %v3561 = vpop.f32.mrb[0].mxu0
  %v3562 = vadd.f32 0.0, %v3561
  %v3563 = vpop.f32.mrb[0].mxu0
  %v3564 = vpop.f32.mrb[0].mxu0
  %v3565 = vadd.f32 0.0, %v3564
  %v3566 = vpop.f32.mrb[0].mxu0
  %3567 = vmatprep.mubr.bf16.mxu0 0
  %3568 = vmatmul.mubr.bf16.gmra.mrb[0].mxu0 %v3479
  %v3569 = vpop.f32.mrb[0].mxu0
  %v3570 = vadd.f32 0.0, %v3569
  %v3571 = vpop.f32.mrb[0].mxu0
  %v3572 = vpop.f32.mrb[0].mxu0
  %v3573 = vadd.f32 0.0, %v3572
  %v3574 = vpop.f32.mrb[0].mxu0
  %3575 = vmatprep.mubr.bf16.mxu0 0
  %3576 = vmatmul.mubr.bf16.gmra.mrb[0].mxu0 %v3482
  %v3577 = vpop.f32.mrb[0].mxu0
  %v3578 = vadd.f32 0.0, %v3577
  %v3579 = vpop.f32.mrb[0].mxu0
  %v3580 = vpop.f32.mrb[0].mxu0
  %v3581 = vadd.f32 0.0, %v3580
  %v3582 = vpop.f32.mrb[0].mxu0
  %3583 = vdwg.mxu0
  %v3584 = vadd.f32 %v3417, %v3522
  %v3585 = vadd.f32 %v3418, %v3525
  %v3586 = vadd.f32 %v3419, %v3530
  %v3587 = vadd.f32 %v3420, %v3533
  %v3588 = vadd.f32 %v3421, %v3538
  %v3589 = vadd.f32 %v3422, %v3541
  %v3590 = vadd.f32 %v3423, %v3546
  %v3591 = vadd.f32 %v3424, %v3549
  %v3592 = vadd.f32 %v3425, %v3554
  %v3593 = vadd.f32 %v3426, %v3557
  %v3594 = vadd.f32 %v3427, %v3562
  %v3595 = vadd.f32 %v3428, %v3565
  %v3596 = vadd.f32 %v3429, %v3570
  %v3597 = vadd.f32 %v3430, %v3573
  %v3598 = vadd.f32 %v3431, %v3578
  %v3599 = vadd.f32 %v3432, %v3581
  %v3600 = vld [vmem:[%s3433 + $0x1] sm:$0xff]
  %v3601 = vld [vmem:[%s3433 + $0x11] sm:$0xff]
  %v3602 = vld [vmem:[%s3433 + $0x21] sm:$0xff]
  %v3603 = vld [vmem:[%s3433 + $0x31] sm:$0xff]
  %v3604 = vld [vmem:[%s3433 + $0x41] sm:$0xff]
  %v3605 = vld [vmem:[%s3433 + $0x51] sm:$0xff]
  %v3606 = vld [vmem:[%s3433 + $0x61] sm:$0xff]
  %v3607 = vld [vmem:[%s3433 + $0x71] sm:$0xff]
  %v3608 = vld [vmem:[%s3433 + $0xa1] sm:$0xff]
  %v3609 = vld [vmem:[%s3433 + $0xb1] sm:$0xff]
  %v3610 = vld [vmem:[%s3433 + $0xc1] sm:$0xff]
  %v3611 = vld [vmem:[%s3433 + $0xd1] sm:$0xff]
  %v3612 = vld [vmem:[%s3433 + $0xe1] sm:$0xff]
  %v3613 = vld [vmem:[%s3433 + $0xf1] sm:$0xff]
  %v3614 = vld [vmem:[%s3433 + $0x101] sm:$0xff]
  %v3615 = vld [vmem:[%s3433 + $0x111] sm:$0xff]
  %v3616 = vpack.c.bf16 %v3601, %v3600
  %v3617 = vpack.c.bf16 %v3603, %v3602
  %v3618 = vpack.c.bf16 %v3605, %v3604
  %v3619 = vpack.c.bf16 %v3607, %v3606
  %v3620 = vpack.c.bf16 %v3609, %v3608
  %v3621 = vpack.c.bf16 %v3611, %v3610
  %v3622 = vpack.c.bf16 %v3613, %v3612
  %v3623 = vpack.c.bf16 %v3615, %v3614
  %s3624 = scalar_lea.vmem %s9, 28
  %v3625 = vld [vmem:[%s3624] sm:$0xf]
  %v3627 = vsel %vm2410, %v3616, 0
  %v3630 = vsel %vm2410, %v3617, 0
  %v3633 = vsel %vm2410, %v3618, 0
  %v3636 = vsel %vm2410, %v3619, 0
  %v3639 = vsel %vm2410, %v3620, 0
  %v3642 = vsel %vm2410, %v3621, 0
  %v3645 = vsel %vm2410, %v3622, 0
  %v3648 = vsel %vm2410, %v3623, 0
  %v3651 = vsel %vm2544, %v3625, 0
  %3653 = vmatprep.subr.bf16.mxu0 0
  %3654 = vmatpush1.bf16.msra.mxu0 %v3651
  %3655 = vmatprep.subr.bf16.mxu0 0
  %3656 = vmatpush1.bf16.msra.mxu0 0
  %3657 = vmatprep.subr.bf16.mxu0 0
  %3658 = vmatpush1.bf16.msra.mxu0 0
  %3659 = vmatprep.subr.bf16.mxu0 0
  %3660 = vmatpush1.bf16.msra.mxu0 0
  %3661 = vmatprep.subr.bf16.mxu0 0
  %3662 = vmatpush1.bf16.msra.mxu0 0
  %3663 = vmatprep.subr.bf16.mxu0 0
  %3664 = vmatpush1.bf16.msra.mxu0 0
  %3665 = vmatprep.subr.bf16.mxu0 0
  %3666 = vmatpush1.bf16.msra.mxu0 0
  %3667 = vmatprep.subr.bf16.mxu0 0
  %3668 = vmatpush1.bf16.msra.mxu0 0
  %3669 = vmatprep.subr.bf16.mxu0 0
  %3670 = vmatpush1.bf16.msra.mxu0 0
  %3671 = vmatprep.subr.bf16.mxu0 0
  %3672 = vmatpush1.bf16.msra.mxu0 0
  %3673 = vmatprep.subr.bf16.mxu0 0
  %3674 = vmatpush1.bf16.msra.mxu0 0
  %3675 = vmatprep.subr.bf16.mxu0 0
  %3676 = vmatpush1.bf16.msra.mxu0 0
  %3677 = vmatprep.subr.bf16.mxu0 0
  %3678 = vmatpush1.bf16.msra.mxu0 0
  %3679 = vmatprep.subr.bf16.mxu0 0
  %3680 = vmatpush1.bf16.msra.mxu0 0
  %3681 = vmatprep.subr.bf16.mxu0 0
  %3682 = vmatpush1.bf16.msra.mxu0 0
  %3683 = vmatprep.subr.bf16.mxu0 0
  %3684 = vmatpush1.bf16.msra.mxu0 0
  %3685 = vmatprep.mubr.bf16.mxu0 0
  %3686 = vmatmul.mubr.bf16.gmra.mrb[0].mxu0 %v3627
  %v3687 = vpop.f32.mrb[0].mxu0
  %v3688 = vadd.f32 0.0, %v3687
  %v3689 = vpop.f32.mrb[0].mxu0
  %v3690 = vpop.f32.mrb[0].mxu0
  %v3691 = vadd.f32 0.0, %v3690
  %v3692 = vpop.f32.mrb[0].mxu0
  %3693 = vmatprep.mubr.bf16.mxu0 0
  %3694 = vmatmul.mubr.bf16.gmra.mrb[0].mxu0 %v3630
  %v3695 = vpop.f32.mrb[0].mxu0
  %v3696 = vadd.f32 0.0, %v3695
  %v3697 = vpop.f32.mrb[0].mxu0
  %v3698 = vpop.f32.mrb[0].mxu0
  %v3699 = vadd.f32 0.0, %v3698
  %v3700 = vpop.f32.mrb[0].mxu0
  %3701 = vmatprep.mubr.bf16.mxu0 0
  %3702 = vmatmul.mubr.bf16.gmra.mrb[0].mxu0 %v3633
  %v3703 = vpop.f32.mrb[0].mxu0
  %v3704 = vadd.f32 0.0, %v3703
  %v3705 = vpop.f32.mrb[0].mxu0
  %v3706 = vpop.f32.mrb[0].mxu0
  %v3707 = vadd.f32 0.0, %v3706
  %v3708 = vpop.f32.mrb[0].mxu0
  %3709 = vmatprep.mubr.bf16.mxu0 0
  %3710 = vmatmul.mubr.bf16.gmra.mrb[0].mxu0 %v3636
  %v3711 = vpop.f32.mrb[0].mxu0
  %v3712 = vadd.f32 0.0, %v3711
  %v3713 = vpop.f32.mrb[0].mxu0
  %v3714 = vpop.f32.mrb[0].mxu0
  %v3715 = vadd.f32 0.0, %v3714
  %v3716 = vpop.f32.mrb[0].mxu0
  %3717 = vmatprep.mubr.bf16.mxu0 0
  %3718 = vmatmul.mubr.bf16.gmra.mrb[0].mxu0 %v3639
  %v3719 = vpop.f32.mrb[0].mxu0
  %v3720 = vadd.f32 0.0, %v3719
  %v3721 = vpop.f32.mrb[0].mxu0
  %v3722 = vpop.f32.mrb[0].mxu0
  %v3723 = vadd.f32 0.0, %v3722
  %v3724 = vpop.f32.mrb[0].mxu0
  %3725 = vmatprep.mubr.bf16.mxu0 0
  %3726 = vmatmul.mubr.bf16.gmra.mrb[0].mxu0 %v3642
  %v3727 = vpop.f32.mrb[0].mxu0
  %v3728 = vadd.f32 0.0, %v3727
  %v3729 = vpop.f32.mrb[0].mxu0
  %v3730 = vpop.f32.mrb[0].mxu0
  %v3731 = vadd.f32 0.0, %v3730
  %v3732 = vpop.f32.mrb[0].mxu0
  %3733 = vmatprep.mubr.bf16.mxu0 0
  %3734 = vmatmul.mubr.bf16.gmra.mrb[0].mxu0 %v3645
  %v3735 = vpop.f32.mrb[0].mxu0
  %v3736 = vadd.f32 0.0, %v3735
  %v3737 = vpop.f32.mrb[0].mxu0
  %v3738 = vpop.f32.mrb[0].mxu0
  %v3739 = vadd.f32 0.0, %v3738
  %v3740 = vpop.f32.mrb[0].mxu0
  %3741 = vmatprep.mubr.bf16.mxu0 0
  %3742 = vmatmul.mubr.bf16.gmra.mrb[0].mxu0 %v3648
  %v3743 = vpop.f32.mrb[0].mxu0
  %v3744 = vadd.f32 0.0, %v3743
  %v3745 = vpop.f32.mrb[0].mxu0
  %v3746 = vpop.f32.mrb[0].mxu0
  %v3747 = vadd.f32 0.0, %v3746
  %v3748 = vpop.f32.mrb[0].mxu0
  %3749 = vdwg.mxu0
  %v3750 = vadd.f32 %v3584, %v3688
  %v3751 = vadd.f32 %v3585, %v3691
  %v3752 = vadd.f32 %v3586, %v3696
  %v3753 = vadd.f32 %v3587, %v3699
  %v3754 = vadd.f32 %v3588, %v3704
  %v3755 = vadd.f32 %v3589, %v3707
  %v3756 = vadd.f32 %v3590, %v3712
  %v3757 = vadd.f32 %v3591, %v3715
  %v3758 = vadd.f32 %v3592, %v3720
  %v3759 = vadd.f32 %v3593, %v3723
  %v3760 = vadd.f32 %v3594, %v3728
  %v3761 = vadd.f32 %v3595, %v3731
  %v3762 = vadd.f32 %v3596, %v3736
  %v3763 = vadd.f32 %v3597, %v3739
  %v3764 = vadd.f32 %v3598, %v3744
  %v3765 = vadd.f32 %v3599, %v3747
  %v3766 = vld [vmem:[%s3433 + $0x2] sm:$0xff]
  %v3767 = vld [vmem:[%s3433 + $0x12] sm:$0xff]
  %v3768 = vld [vmem:[%s3433 + $0x22] sm:$0xff]
  %v3769 = vld [vmem:[%s3433 + $0x32] sm:$0xff]
  %v3770 = vld [vmem:[%s3433 + $0x42] sm:$0xff]
  %v3771 = vld [vmem:[%s3433 + $0x52] sm:$0xff]
  %v3772 = vld [vmem:[%s3433 + $0x62] sm:$0xff]
  %v3773 = vld [vmem:[%s3433 + $0x72] sm:$0xff]
  %v3774 = vld [vmem:[%s3433 + $0xa2] sm:$0xff]
  %v3775 = vld [vmem:[%s3433 + $0xb2] sm:$0xff]
  %v3776 = vld [vmem:[%s3433 + $0xc2] sm:$0xff]
  %v3777 = vld [vmem:[%s3433 + $0xd2] sm:$0xff]
  %v3778 = vld [vmem:[%s3433 + $0xe2] sm:$0xff]
  %v3779 = vld [vmem:[%s3433 + $0xf2] sm:$0xff]
  %v3780 = vld [vmem:[%s3433 + $0x102] sm:$0xff]
  %v3781 = vld [vmem:[%s3433 + $0x112] sm:$0xff]
  %v3782 = vpack.c.bf16 %v3767, %v3766
  %v3783 = vpack.c.bf16 %v3769, %v3768
  %v3784 = vpack.c.bf16 %v3771, %v3770
  %v3785 = vpack.c.bf16 %v3773, %v3772
  %v3786 = vpack.c.bf16 %v3775, %v3774
  %v3787 = vpack.c.bf16 %v3777, %v3776
  %v3788 = vpack.c.bf16 %v3779, %v3778
  %v3789 = vpack.c.bf16 %v3781, %v3780
  %s3790 = scalar_lea.vmem %s9, 32
  %v3791 = vld [vmem:[%s3790] sm:$0xf]
  %v3793 = vsel %vm2410, %v3782, 0
  %v3796 = vsel %vm2410, %v3783, 0
  %v3799 = vsel %vm2410, %v3784, 0
  %v3802 = vsel %vm2410, %v3785, 0
  %v3805 = vsel %vm2410, %v3786, 0
  %v3808 = vsel %vm2410, %v3787, 0
  %v3811 = vsel %vm2410, %v3788, 0
  %v3814 = vsel %vm2410, %v3789, 0
  %v3817 = vsel %vm2544, %v3791, 0
  %3819 = vmatprep.subr.bf16.mxu0 0
  %3820 = vmatpush1.bf16.msra.mxu0 %v3817
  %3821 = vmatprep.subr.bf16.mxu0 0
  %3822 = vmatpush1.bf16.msra.mxu0 0
  %3823 = vmatprep.subr.bf16.mxu0 0
  %3824 = vmatpush1.bf16.msra.mxu0 0
  %3825 = vmatprep.subr.bf16.mxu0 0
  %3826 = vmatpush1.bf16.msra.mxu0 0
  %3827 = vmatprep.subr.bf16.mxu0 0
  %3828 = vmatpush1.bf16.msra.mxu0 0
  %3829 = vmatprep.subr.bf16.mxu0 0
  %3830 = vmatpush1.bf16.msra.mxu0 0
  %3831 = vmatprep.subr.bf16.mxu0 0
  %3832 = vmatpush1.bf16.msra.mxu0 0
  %3833 = vmatprep.subr.bf16.mxu0 0
  %3834 = vmatpush1.bf16.msra.mxu0 0
  %3835 = vmatprep.subr.bf16.mxu0 0
  %3836 = vmatpush1.bf16.msra.mxu0 0
  %3837 = vmatprep.subr.bf16.mxu0 0
  %3838 = vmatpush1.bf16.msra.mxu0 0
  %3839 = vmatprep.subr.bf16.mxu0 0
  %3840 = vmatpush1.bf16.msra.mxu0 0
  %3841 = vmatprep.subr.bf16.mxu0 0
  %3842 = vmatpush1.bf16.msra.mxu0 0
  %3843 = vmatprep.subr.bf16.mxu0 0
  %3844 = vmatpush1.bf16.msra.mxu0 0
  %3845 = vmatprep.subr.bf16.mxu0 0
  %3846 = vmatpush1.bf16.msra.mxu0 0
  %3847 = vmatprep.subr.bf16.mxu0 0
  %3848 = vmatpush1.bf16.msra.mxu0 0
  %3849 = vmatprep.subr.bf16.mxu0 0
  %3850 = vmatpush1.bf16.msra.mxu0 0
  %3851 = vmatprep.mubr.bf16.mxu0 0
  %3852 = vmatmul.mubr.bf16.gmra.mrb[0].mxu0 %v3793
  %v3853 = vpop.f32.mrb[0].mxu0
  %v3854 = vadd.f32 0.0, %v3853
  %v3855 = vpop.f32.mrb[0].mxu0
  %v3856 = vpop.f32.mrb[0].mxu0
  %v3857 = vadd.f32 0.0, %v3856
  %v3858 = vpop.f32.mrb[0].mxu0
  %3859 = vmatprep.mubr.bf16.mxu0 0
  %3860 = vmatmul.mubr.bf16.gmra.mrb[0].mxu0 %v3796
  %v3861 = vpop.f32.mrb[0].mxu0
  %v3862 = vadd.f32 0.0, %v3861
  %v3863 = vpop.f32.mrb[0].mxu0
  %v3864 = vpop.f32.mrb[0].mxu0
  %v3865 = vadd.f32 0.0, %v3864
  %v3866 = vpop.f32.mrb[0].mxu0
  %3867 = vmatprep.mubr.bf16.mxu0 0
  %3868 = vmatmul.mubr.bf16.gmra.mrb[0].mxu0 %v3799
  %v3869 = vpop.f32.mrb[0].mxu0
  %v3870 = vadd.f32 0.0, %v3869
  %v3871 = vpop.f32.mrb[0].mxu0
  %v3872 = vpop.f32.mrb[0].mxu0
  %v3873 = vadd.f32 0.0, %v3872
  %v3874 = vpop.f32.mrb[0].mxu0
  %3875 = vmatprep.mubr.bf16.mxu0 0
  %3876 = vmatmul.mubr.bf16.gmra.mrb[0].mxu0 %v3802
  %v3877 = vpop.f32.mrb[0].mxu0
  %v3878 = vadd.f32 0.0, %v3877
  %v3879 = vpop.f32.mrb[0].mxu0
  %v3880 = vpop.f32.mrb[0].mxu0
  %v3881 = vadd.f32 0.0, %v3880
  %v3882 = vpop.f32.mrb[0].mxu0
  %3883 = vmatprep.mubr.bf16.mxu0 0
  %3884 = vmatmul.mubr.bf16.gmra.mrb[0].mxu0 %v3805
  %v3885 = vpop.f32.mrb[0].mxu0
  %v3886 = vadd.f32 0.0, %v3885
  %v3887 = vpop.f32.mrb[0].mxu0
  %v3888 = vpop.f32.mrb[0].mxu0
  %v3889 = vadd.f32 0.0, %v3888
  %v3890 = vpop.f32.mrb[0].mxu0
  %3891 = vmatprep.mubr.bf16.mxu0 0
  %3892 = vmatmul.mubr.bf16.gmra.mrb[0].mxu0 %v3808
  %v3893 = vpop.f32.mrb[0].mxu0
  %v3894 = vadd.f32 0.0, %v3893
  %v3895 = vpop.f32.mrb[0].mxu0
  %v3896 = vpop.f32.mrb[0].mxu0
  %v3897 = vadd.f32 0.0, %v3896
  %v3898 = vpop.f32.mrb[0].mxu0
  %3899 = vmatprep.mubr.bf16.mxu0 0
  %3900 = vmatmul.mubr.bf16.gmra.mrb[0].mxu0 %v3811
  %v3901 = vpop.f32.mrb[0].mxu0
  %v3902 = vadd.f32 0.0, %v3901
  %v3903 = vpop.f32.mrb[0].mxu0
  %v3904 = vpop.f32.mrb[0].mxu0
  %v3905 = vadd.f32 0.0, %v3904
  %v3906 = vpop.f32.mrb[0].mxu0
  %3907 = vmatprep.mubr.bf16.mxu0 0
  %3908 = vmatmul.mubr.bf16.gmra.mrb[0].mxu0 %v3814
  %v3909 = vpop.f32.mrb[0].mxu0
  %v3910 = vadd.f32 0.0, %v3909
  %v3911 = vpop.f32.mrb[0].mxu0
  %v3912 = vpop.f32.mrb[0].mxu0
  %v3913 = vadd.f32 0.0, %v3912
  %v3914 = vpop.f32.mrb[0].mxu0
  %3915 = vdwg.mxu0
  %v3916 = vadd.f32 %v3750, %v3854
  %v3917 = vadd.f32 %v3751, %v3857
  %v3918 = vadd.f32 %v3752, %v3862
  %v3919 = vadd.f32 %v3753, %v3865
  %v3920 = vadd.f32 %v3754, %v3870
  %v3921 = vadd.f32 %v3755, %v3873
  %v3922 = vadd.f32 %v3756, %v3878
  %v3923 = vadd.f32 %v3757, %v3881
  %v3924 = vadd.f32 %v3758, %v3886
  %v3925 = vadd.f32 %v3759, %v3889
  %v3926 = vadd.f32 %v3760, %v3894
  %v3927 = vadd.f32 %v3761, %v3897
  %v3928 = vadd.f32 %v3762, %v3902
  %v3929 = vadd.f32 %v3763, %v3905
  %v3930 = vadd.f32 %v3764, %v3910
  %v3931 = vadd.f32 %v3765, %v3913
  %v3932 = vld [vmem:[%s10] sm:$0x3]
  %v3934 = vsel %vm838, %v3932, 0
  %3936 = vmatprep.subr.bf16.mxu0 0
  %3937 = vmatpush1.bf16.msra.mxu0 %v3934
  %3938 = vmatprep.subr.bf16.mxu0 0
  %3939 = vmatpush1.bf16.msra.mxu0 0
  %3940 = vmatprep.subr.bf16.mxu0 0
  %3941 = vmatpush1.bf16.msra.mxu0 0
  %3942 = vmatprep.subr.bf16.mxu0 0
  %3943 = vmatpush1.bf16.msra.mxu0 0
  %3944 = vmatprep.subr.bf16.mxu0 0
  %3945 = vmatpush1.bf16.msra.mxu0 0
  %3946 = vmatprep.subr.bf16.mxu0 0
  %3947 = vmatpush1.bf16.msra.mxu0 0
  %3948 = vmatprep.subr.bf16.mxu0 0
  %3949 = vmatpush1.bf16.msra.mxu0 0
  %3950 = vmatprep.subr.bf16.mxu0 0
  %3951 = vmatpush1.bf16.msra.mxu0 0
  %3952 = vmatprep.subr.bf16.mxu0 0
  %3953 = vmatpush1.bf16.msra.mxu0 0
  %3954 = vmatprep.subr.bf16.mxu0 0
  %3955 = vmatpush1.bf16.msra.mxu0 0
  %3956 = vmatprep.subr.bf16.mxu0 0
  %3957 = vmatpush1.bf16.msra.mxu0 0
  %3958 = vmatprep.subr.bf16.mxu0 0
  %3959 = vmatpush1.bf16.msra.mxu0 0
  %3960 = vmatprep.subr.bf16.mxu0 0
  %3961 = vmatpush1.bf16.msra.mxu0 0
  %3962 = vmatprep.subr.bf16.mxu0 0
  %3963 = vmatpush1.bf16.msra.mxu0 0
  %3964 = vmatprep.subr.bf16.mxu0 0
  %3965 = vmatpush1.bf16.msra.mxu0 0
  %3966 = vmatprep.subr.bf16.mxu0 0
  %3967 = vmatpush1.bf16.msra.mxu0 0
  %3968 = vmatprep.mubr.bf16.mxu0 0
  %3969 = vmatmul.mubr.bf16.gmra.mrb[0].mxu0 %v1471
  %v3970 = vpop.f32.mrb[0].mxu0
  %v3971 = vadd.f32 %v3916, %v3970
  %v3972 = vpop.f32.mrb[0].mxu0
  %v3973 = vpop.f32.mrb[0].mxu0
  %v3974 = vadd.f32 %v3917, %v3973
  %v3975 = vpop.f32.mrb[0].mxu0
  %3976 = vmatprep.mubr.bf16.mxu0 0
  %3977 = vmatmul.mubr.bf16.gmra.mrb[0].mxu0 %v1474
  %v3978 = vpop.f32.mrb[0].mxu0
  %v3979 = vadd.f32 %v3918, %v3978
  %v3980 = vpop.f32.mrb[0].mxu0
  %v3981 = vpop.f32.mrb[0].mxu0
  %v3982 = vadd.f32 %v3919, %v3981
  %v3983 = vpop.f32.mrb[0].mxu0
  %3984 = vmatprep.mubr.bf16.mxu0 0
  %3985 = vmatmul.mubr.bf16.gmra.mrb[0].mxu0 %v1477
  %v3986 = vpop.f32.mrb[0].mxu0
  %v3987 = vadd.f32 %v3920, %v3986
  %v3988 = vpop.f32.mrb[0].mxu0
  %v3989 = vpop.f32.mrb[0].mxu0
  %v3990 = vadd.f32 %v3921, %v3989
  %v3991 = vpop.f32.mrb[0].mxu0
  %3992 = vmatprep.mubr.bf16.mxu0 0
  %3993 = vmatmul.mubr.bf16.gmra.mrb[0].mxu0 %v1480
  %v3994 = vpop.f32.mrb[0].mxu0
  %v3995 = vadd.f32 %v3922, %v3994
  %v3996 = vpop.f32.mrb[0].mxu0
  %v3997 = vpop.f32.mrb[0].mxu0
  %v3998 = vadd.f32 %v3923, %v3997
  %v3999 = vpop.f32.mrb[0].mxu0
  %4000 = vmatprep.mubr.bf16.mxu0 0
  %4001 = vmatmul.mubr.bf16.gmra.mrb[0].mxu0 %v1483
  %v4002 = vpop.f32.mrb[0].mxu0
  %v4003 = vadd.f32 %v3924, %v4002
  %v4004 = vpop.f32.mrb[0].mxu0
  %v4005 = vpop.f32.mrb[0].mxu0
  %v4006 = vadd.f32 %v3925, %v4005
  %v4007 = vpop.f32.mrb[0].mxu0
  %4008 = vmatprep.mubr.bf16.mxu0 0
  %4009 = vmatmul.mubr.bf16.gmra.mrb[0].mxu0 %v1486
  %v4010 = vpop.f32.mrb[0].mxu0
  %v4011 = vadd.f32 %v3926, %v4010
  %v4012 = vpop.f32.mrb[0].mxu0
  %v4013 = vpop.f32.mrb[0].mxu0
  %v4014 = vadd.f32 %v3927, %v4013
  %v4015 = vpop.f32.mrb[0].mxu0
  %4016 = vmatprep.mubr.bf16.mxu0 0
  %4017 = vmatmul.mubr.bf16.gmra.mrb[0].mxu0 %v1489
  %v4018 = vpop.f32.mrb[0].mxu0
  %v4019 = vadd.f32 %v3928, %v4018
  %v4020 = vpop.f32.mrb[0].mxu0
  %v4021 = vpop.f32.mrb[0].mxu0
  %v4022 = vadd.f32 %v3929, %v4021
  %v4023 = vpop.f32.mrb[0].mxu0
  %4024 = vmatprep.mubr.bf16.mxu0 0
  %4025 = vmatmul.mubr.bf16.gmra.mrb[0].mxu0 %v1492
  %v4026 = vpop.f32.mrb[0].mxu0
  %v4027 = vadd.f32 %v3930, %v4026
  %v4028 = vpop.f32.mrb[0].mxu0
  %v4029 = vpop.f32.mrb[0].mxu0
  %v4030 = vadd.f32 %v3931, %v4029
  %v4031 = vpop.f32.mrb[0].mxu0
  %4032 = vdwg.mxu0
  %4033 = vst.msk [vmem:[%s11] sm:$0xff] %vm2410, %v3971
  %4034 = vst.msk [vmem:[%s11 + $0x8] sm:$0xff] %vm2410, %v3974
  %4035 = vst.msk [vmem:[%s11 + $0x10] sm:$0xff] %vm2410, %v3979
  %4036 = vst.msk [vmem:[%s11 + $0x18] sm:$0xff] %vm2410, %v3982
  %4037 = vst.msk [vmem:[%s11 + $0x20] sm:$0xff] %vm2410, %v3987
  %4038 = vst.msk [vmem:[%s11 + $0x28] sm:$0xff] %vm2410, %v3990
  %4039 = vst.msk [vmem:[%s11 + $0x30] sm:$0xff] %vm2410, %v3995
  %4040 = vst.msk [vmem:[%s11 + $0x38] sm:$0xff] %vm2410, %v3998
  %4041 = vst.msk [vmem:[%s11 + $0x40] sm:$0xff] %vm2410, %v4003
  %4042 = vst.msk [vmem:[%s11 + $0x48] sm:$0xff] %vm2410, %v4006
  %4043 = vst.msk [vmem:[%s11 + $0x50] sm:$0xff] %vm2410, %v4011
  %4044 = vst.msk [vmem:[%s11 + $0x58] sm:$0xff] %vm2410, %v4014
  %4045 = vst.msk [vmem:[%s11 + $0x60] sm:$0xff] %vm2410, %v4019
  %4046 = vst.msk [vmem:[%s11 + $0x68] sm:$0xff] %vm2410, %v4022
  %4047 = vst.msk [vmem:[%s11 + $0x70] sm:$0xff] %vm2410, %v4027
  %4048 = vst.msk [vmem:[%s11 + $0x78] sm:$0xff] %vm2410, %v4030
  // Predicated region
  $region46: #{network_block_forward.2} parent=0 // pred_check
    _
  $region47: #{network_block_forward.2} parent=0 // pred_check_branch
    %4050 = sbr.rel (0) target = $region49
  $region48: #{network_block_forward.2} parent=0 // pred_region
    _
  $region49: #{network_block_forward.2} parent=0 // pred_fallthru
    _
  // Predicated region
  $region50: #{network_block_forward.2} parent=0 // pred_check
    _
  $region51: #{network_block_forward.2} parent=0 // pred_check_branch
    %4052 = sbr.rel (0) target = $region53
  $region52: #{network_block_forward.2} parent=0 // pred_region
    _
  $region53: #{network_block_forward.2} parent=0 // pred_fallthru
    _

</llo_original>
